<compile_context>
chip_gen: v6e
topology: v6e:2x2x1
jax: 0.10.0
libtpu: 0.0.40
codegen_flags: <defaults>
</compile_context>

<pallas_src>
import functools
import math

import jax
import jax.numpy as jnp
from jax.experimental import pallas as pl
from jax.experimental.pallas import tpu as pltpu

VMEM = pltpu.MemorySpace.VMEM

# ----------------------------- model config (small demo sizes) ---------------
B = 2                      # batch
FEAT_MAX_LEN = 8           # opt.feature_max_len (sequence length)
INPUT_DIM_A = 16           # opt.input_dim_a
INPUT_DIM_V = 16           # opt.input_dim_v
EMBD_A = 16                # opt.embd_size_a
EMBD_V = 16                # opt.embd_size_v
HIDDEN = EMBD_A + EMBD_V   # opt.hidden_size (= 32, d_model of the Transformer)
NHEAD = 2                  # opt.Transformer_head
NLAYERS = 1                # opt.Transformer_layers
FF_DIM = 2048              # nn.TransformerEncoderLayer default dim_feedforward
CLS_LAYERS = [32, 16]      # opt.cls_layers = "32,16"
EMO_OUT = 4                # opt.emo_output_dim
PERSONALIZED_DIM = 1024    # hard-coded "+ 1024" in cls_input_size
SPARSE_HIDDEN = 256        # SparseEncoder(hidden_dim=256)
CLS_INPUT = FEAT_MAX_LEN * HIDDEN + PERSONALIZED_DIM

BPAD = 8                   # batch padded to one sublane tile inside the kernel
CLS_PAD = 128              # first classifier layer padded to one lane tile
SMALL_W = 16               # packed small-output slab width


# ----------------------------- small in-kernel helpers -----------------------
def _ln(x, g, b, eps=1e-5):
    mu = jnp.mean(x, axis=-1, keepdims=True)
    xc = x - mu
    var = jnp.mean(xc * xc, axis=-1, keepdims=True)
    return xc * jax.lax.rsqrt(var + eps) * g + b


def _softmax_last(x):
    m = jnp.max(x, axis=-1, keepdims=True)
    e = jnp.exp(x - m)
    return e / jnp.sum(e, axis=-1, keepdims=True)


# ----------------------------- the fused forward kernel ----------------------
def _forward_kernel(*refs, n_layers, batch, seqlen, nhead):
    # ---- argument layout --------------------------------------------------
    (x_a_ref, x_v_ref, pers_ref, bias_ref,
     aw1_ref, ab1_ref, aw2_ref, ab2_ref,
     vw1_ref, vb1_ref, vw2_ref, vb2_ref,
     a_wih_ref, a_b_ref, a_whh_ref,
     v_wih_ref, v_b_ref, v_whh_ref) = refs[:18]
    t_base = 18
    h_base = t_base + 12 * n_layers
    (w1s_ref, w1p_ref, b1_ref, wdec_ref, bdec_ref,
     wcf2_ref, bcf2_ref, wcfo_ref, bcfo_ref,
     wc2_ref, bc2_ref, wco_ref, bco_ref) = refs[h_base:h_base + 13]
    recon_ref, small_ref = refs[h_base + 13:h_base + 15]

    # ---- hybrid frame attention (both modalities), time-major padded rows ---
    # TODO(synk): HybridAttention source not provided; implemented as learned per-frame
    # attention (tanh projection -> scalar score -> softmax over time -> frame rescale).
    x_a = x_a_ref[...]                                   # (S*BPAD, Da), row = t*BPAD + b
    x_v = x_v_ref[...]
    proj_a = jnp.tanh(jnp.dot(x_a, aw1_ref[...],
                              preferred_element_type=jnp.float32) + ab1_ref[...])
    proj_v = jnp.tanh(jnp.dot(x_v, vw1_ref[...],
                              preferred_element_type=jnp.float32) + vb1_ref[...])
    sc_a = jnp.sum(proj_a * aw2_ref[...], axis=-1, keepdims=True) + ab2_ref[...]
    sc_v = jnp.sum(proj_v * vw2_ref[...], axis=-1, keepdims=True) + vb2_ref[...]
    sc = jnp.concatenate([sc_a, sc_v], axis=1)           # (S*BPAD, 2)
    # per-batch softmax over time: global (per-column) max is a valid shift; the
    # per-batch denominator is a sum of aligned 8-row tiles (padded rows never mix in).
    e = jnp.exp(sc - jnp.max(sc, axis=0, keepdims=True))
    denom = e[0:BPAD, :]
    for t in range(1, seqlen):
        denom = denom + e[t * BPAD:(t + 1) * BPAD, :]
    wts = e / jnp.concatenate([denom] * seqlen, axis=0)  # (S*BPAD, 2)
    x_a = x_a * wts[:, 0:1]
    x_v = x_v * wts[:, 1:2]

    # ---- two interleaved LSTM recurrences (batch padded to 8 sublanes) ------
    # TODO(synk): LSTMEncoder source not provided; implemented as a single-layer batch_first
    # LSTM returning the full hidden-state sequence (PyTorch i,f,g,o gate order).
    ha = a_whh_ref.shape[0]
    hv = v_whh_ref.shape[0]
    pre_a = jnp.dot(x_a, a_wih_ref[...],
                    preferred_element_type=jnp.float32) + a_b_ref[...]       # (S*BPAD, 4Ha)
    pre_v = jnp.dot(x_v, v_wih_ref[...],
                    preferred_element_type=jnp.float32) + v_b_ref[...]
    whh_a = a_whh_ref[...]
    whh_v = v_whh_ref[...]
    h_a = jnp.zeros((BPAD, ha), jnp.float32)
    c_a = jnp.zeros((BPAD, ha), jnp.float32)
    h_v = jnp.zeros((BPAD, hv), jnp.float32)
    c_v = jnp.zeros((BPAD, hv), jnp.float32)
    y_parts = []
    for t in range(seqlen):                              # static, tile-aligned per-step slices
        g_a = pre_a[t * BPAD:(t + 1) * BPAD, :] + jnp.dot(
            h_a, whh_a, preferred_element_type=jnp.float32)
        g_v = pre_v[t * BPAD:(t + 1) * BPAD, :] + jnp.dot(
            h_v, whh_v, preferred_element_type=jnp.float32)
        i_a = jax.nn.sigmoid(g_a[:, 0:ha])
        f_a = jax.nn.sigmoid(g_a[:, ha:2 * ha])
        gg_a = jnp.tanh(g_a[:, 2 * ha:3 * ha])
        o_a = jax.nn.sigmoid(g_a[:, 3 * ha:4 * ha])
        c_a = f_a * c_a + i_a * gg_a
        h_a = o_a * jnp.tanh(c_a)
        i_v = jax.nn.sigmoid(g_v[:, 0:hv])
        f_v = jax.nn.sigmoid(g_v[:, hv:2 * hv])
        gg_v = jnp.tanh(g_v[:, 2 * hv:3 * hv])
        o_v = jax.nn.sigmoid(g_v[:, 3 * hv:4 * hv])
        c_v = f_v * c_v + i_v * gg_v
        h_v = o_v * jnp.tanh(c_v)
        # torch.cat((emo_feat_V, emo_feat_A), -1): visual first; keep only true batch rows.
        y_parts.append(jnp.concatenate([h_v[0:batch, :], h_a[0:batch, :]], axis=1))
    y = jnp.concatenate(y_parts, axis=0)                 # (S*B, hidden), row = t*B + b

    # ---- transformer encoder layer(s): batched attention with batch mask ----
    # nn.TransformerEncoderLayer (norm_first=False, relu FFN); dropout omitted (inference).
    d = y.shape[-1]
    dh = d // nhead
    scale = 1.0 / math.sqrt(dh)
    bias = bias_ref[...]                                 # (S*B, S*B) additive batch mask
    for l in range(n_layers):
        (w_in_r, b_in_r, w_out_r, b_out_r, w_ff1_r, b_ff1_r, w_ff2_r, b_ff2_r,
         ln1_g_r, ln1_b_r, ln2_g_r, ln2_b_r) = refs[t_base + 12 * l:t_base + 12 * (l + 1)]
        qkv = jnp.dot(y, w_in_r[...], preferred_element_type=jnp.float32) + b_in_r[...]
        head_outs = []
        for h in range(nhead):
            q = qkv[:, h * dh:(h + 1) * dh]
            k = qkv[:, d + h * dh:d + (h + 1) * dh]
            v = qkv[:, 2 * d + h * dh:2 * d + (h + 1) * dh]
            s = jax.lax.dot_general(q, k, (((1,), (1,)), ((), ())),
                                    preferred_element_type=jnp.float32) * scale + bias
            head_outs.append(jnp.dot(_softmax_last(s), v,
                                     preferred_element_type=jnp.float32))
        attn = jnp.concatenate(head_outs, axis=1)
        attn = jnp.dot(attn, w_out_r[...], preferred_element_type=jnp.float32) + b_out_r[...]
        x1 = _ln(y + attn, ln1_g_r[...], ln1_b_r[...])
        # FFN: bf16 weights stored in HBM, f32 accumulation (only the tiny activation is cast).
        ff = jnp.dot(x1.astype(jnp.bfloat16), w_ff1_r[...],
                     preferred_element_type=jnp.float32) + b_ff1_r[...]
        ff = jnp.maximum(ff, 0.0)
        ff = jnp.dot(ff.astype(jnp.bfloat16), w_ff2_r[...],
                     preferred_element_type=jnp.float32) + b_ff2_r[...]
        y = _ln(x1 + ff, ln2_g_r[...], ln2_b_r[...])

    # ---- exact torch flatten: permute(1,0,2).reshape(B, -1) ------------------
    # fusion_flat[bi, jb*H:(jb+1)*H] = y_time_major[bi*S + jb]
    blocks = []
    for jb in range(seqlen):
        blocks.append(jnp.concatenate(
            [y[bi * seqlen + jb:bi * seqlen + jb + 1, :] for bi in range(batch)], axis=0))
    fusion_seq = jnp.concatenate(blocks, axis=1)         # (B, S*H)
    pers = pers_ref[...]                                 # (B, 1024) f32 (also used by the loss)

    # ---- fused heads: sparse AE + emo_CF + emo_C + softmax -------------------
    # TODO(synk): SparseEncoder / FcClassifier sources not provided; implemented as ReLU
    # autoencoder (MSE + 1e-3*L1(code)) and Linear->ReLU stacks (use_bn=False, no dropout).
    sparse_h = wdec_ref.shape[0]
    cls_pad = wcf2_ref.shape[0]
    h_all = (jnp.dot(fusion_seq.astype(jnp.bfloat16), w1s_ref[...],
                     preferred_element_type=jnp.float32)
             + jnp.dot(pers.astype(jnp.bfloat16), w1p_ref[...],
                       preferred_element_type=jnp.float32)
             + b1_ref[...])
    h_all = jnp.maximum(h_all, 0.0)                      # (B, 256 | 128 | 128)
    h_sp = h_all[:, 0:sparse_h]

    # NOTE: bf16 decoder weights introduce ~1e-2-level relative deviation in recon/loss
    # vs. an fp32 torch reference (accepted per perf review; keep f32 if bit-parity needed).
    recon = jnp.dot(h_sp.astype(jnp.bfloat16), wdec_ref[...],
                    preferred_element_type=jnp.float32) + bdec_ref[...]      # (B, 1280)
    recon_ref[...] = recon

    seq_w = fusion_seq.shape[-1]
    d1 = recon[:, 0:seq_w] - fusion_seq
    d2 = recon[:, seq_w:] - pers
    sq = (jnp.sum(d1 * d1, axis=-1, keepdims=True)
          + jnp.sum(d2 * d2, axis=-1, keepdims=True))                        # (B, 1)
    mse = jnp.sum(sq, axis=0, keepdims=True) / float(batch * recon.shape[-1])
    l1 = jnp.sum(jnp.abs(h_sp), axis=-1, keepdims=True)
    l1m = jnp.sum(l1, axis=0, keepdims=True) / float(batch * sparse_h)
    loss = mse + 1e-3 * l1m                              # (1, 1)

    h_cf = h_all[:, sparse_h:sparse_h + cls_pad]         # lane-tile aligned slices
    h_c = h_all[:, sparse_h + cls_pad:sparse_h + 2 * cls_pad]
    f_cf = jnp.maximum(jnp.dot(h_cf, wcf2_ref[...],
                               preferred_element_type=jnp.float32) + bcf2_ref[...], 0.0)
    logits_f = jnp.dot(f_cf, wcfo_ref[...],
                       preferred_element_type=jnp.float32) + bcfo_ref[...]   # (B, 4)
    f_c = jnp.maximum(jnp.dot(h_c, wc2_ref[...],
                              preferred_element_type=jnp.float32) + bc2_ref[...], 0.0)
    logits = jnp.dot(f_c, wco_ref[...],
                     preferred_element_type=jnp.float32) + bco_ref[...]      # (B, 4)
    pred = _softmax_last(logits)

    # ---- packed small outputs ------------------------------------------------
    n_out = logits.shape[-1]
    small_ref[...] = jnp.zeros(small_ref.shape, jnp.float32)
    small_ref[:, 0:2] = wts                                     # frame-attn weights (a, v)
    small_ref[0:batch, 2:2 + n_out] = logits                    # emo_logits
    small_ref[0:batch, 2 + n_out:2 + 2 * n_out] = logits_f      # emo_logits_fusion
    small_ref[0:batch, 2 + 2 * n_out:2 + 3 * n_out] = pred      # emo_pred
    small_ref[0:1, 2 + 3 * n_out:3 + 3 * n_out] = loss          # sparse_loss


# ----------------------------- full forward (wrapper) -------------------------
def our_model_forward(pp, acoustic, visual, personalized):
    """Mirrors ourModel.forward() (inference semantics; dropout omitted)."""
    bsz, s, _ = acoustic.shape

    def to_time_major_padded(x):
        xt = jnp.transpose(x, (1, 0, 2))                       # (S, B, D)
        xt = jnp.pad(xt, ((0, 0), (0, BPAD - bsz), (0, 0)))    # (S, 8, D)
        return xt.reshape(s * BPAD, x.shape[-1])

    x_a = to_time_major_padded(acoustic)
    x_v = to_time_major_padded(visual)

    args = [x_a, x_v, personalized, pp["attn_bias"]]
    args += pp["attn_a"] + pp["attn_v"] + pp["lstm_a"] + pp["lstm_v"]
    for lyr in pp["layers"]:
        args += lyr
    args += pp["heads"]

    n_layers = len(pp["layers"])
    kernel = functools.partial(_forward_kernel, n_layers=n_layers, batch=bsz,
                               seqlen=s, nhead=NHEAD)
    recon, small = pl.pallas_call(
        kernel,
        out_shape=(jax.ShapeDtypeStruct((bsz, CLS_INPUT), jnp.float32),
                   jax.ShapeDtypeStruct((s * BPAD, SMALL_W), jnp.float32)),
        in_specs=[pl.BlockSpec(memory_space=VMEM)] * len(args),
        out_specs=(pl.BlockSpec(memory_space=VMEM),
                   pl.BlockSpec(memory_space=VMEM)),
    )(*args)

    wts = small[:, 0:2].reshape(s, BPAD, 2)[:, :bsz, :]        # (S, B, 2)
    audio_weights = wts[:, :, 0].T                             # (B, S)
    visual_weights = wts[:, :, 1].T
    emo_logits = small[0:bsz, 2:2 + EMO_OUT]
    emo_logits_fusion = small[0:bsz, 2 + EMO_OUT:2 + 2 * EMO_OUT]
    emo_pred = small[0:bsz, 2 + 2 * EMO_OUT:2 + 3 * EMO_OUT]
    sparse_loss = small[0, 2 + 3 * EMO_OUT]

    return {
        "emo_logits": emo_logits,
        "emo_logits_fusion": emo_logits_fusion,
        "emo_pred": emo_pred,
        "sparse_recon": recon,
        "sparse_loss": sparse_loss,
        "audio_weights": audio_weights,
        "visual_weights": visual_weights,
    }


# ----------------------------- parameter init + one-time packing --------------
def init_params(key):
    keys = iter(jax.random.split(key, 64))

    def lin(din, dout):
        kw, kb = jax.random.split(next(keys))
        sc = 1.0 / math.sqrt(din)
        return (
            jax.random.uniform(kw, (din, dout), jnp.float32, -sc, sc),
            jax.random.uniform(kb, (dout,), jnp.float32, -sc, sc),
        )

    def attn_p(d):
        w1, b1 = lin(d, d)
        w2, b2 = lin(d, 1)
        return dict(w1=w1, b1=b1, w2=w2, b2=b2)

    def lstm_p(d, h):
        w_ih, b_ih = lin(d, 4 * h)
        w_hh, b_hh = lin(h, 4 * h)
        return dict(w_ih=w_ih, b_ih=b_ih, w_hh=w_hh, b_hh=b_hh)

    def trans_p(d, ff):
        w_in, b_in = lin(d, 3 * d)
        w_out, b_out = lin(d, d)
        w_ff1, b_ff1 = lin(d, ff)
        w_ff2, b_ff2 = lin(ff, d)
        return dict(
            w_in=w_in, b_in=b_in, w_out=w_out, b_out=b_out,
            w_ff1=w_ff1, b_ff1=b_ff1, w_ff2=w_ff2, b_ff2=b_ff2,
            ln1_g=jnp.ones((d,), jnp.float32), ln1_b=jnp.zeros((d,), jnp.float32),
            ln2_g=jnp.ones((d,), jnp.float32), ln2_b=jnp.zeros((d,), jnp.float32),
        )

    def cls_p(din, layers, dout):
        hidden = []
        prev = din
        for width in layers:
            hidden.append(lin(prev, width))
            prev = width
        w_out, b_out = lin(prev, dout)
        return dict(hidden=hidden, w_out=w_out, b_out=b_out)

    def sparse_p(din, dh):
        w_enc, b_enc = lin(din, dh)
        w_dec, b_dec = lin(dh, din)
        return dict(w_enc=w_enc, b_enc=b_enc, w_dec=w_dec, b_dec=b_dec)

    return dict(
        audio_attn=attn_p(INPUT_DIM_A),
        visual_attn=attn_p(INPUT_DIM_V),
        lstm_a=lstm_p(INPUT_DIM_A, EMBD_A),
        lstm_v=lstm_p(INPUT_DIM_V, EMBD_V),
        transformer=[trans_p(HIDDEN, FF_DIM) for _ in range(NLAYERS)],
        emo_c=cls_p(CLS_INPUT, CLS_LAYERS, EMO_OUT),
        emo_cf=cls_p(CLS_INPUT, CLS_LAYERS, EMO_OUT),
        sparse=sparse_p(CLS_INPUT, SPARSE_HIDDEN),
    )


def pack_params(p):
    """One-time packing: weight fusion/padding, bf16 casts, reshapes.  Not per-forward."""
    bf16 = jnp.bfloat16

    def attn_pack(a):
        return [a["w1"], a["b1"].reshape(1, -1), a["w2"].reshape(1, -1), a["b2"].reshape(1, 1)]

    def lstm_pack(l):
        return [l["w_ih"], (l["b_ih"] + l["b_hh"]).reshape(1, -1), l["w_hh"]]

    def layer_pack(t):
        return [t["w_in"], t["b_in"].reshape(1, -1), t["w_out"], t["b_out"].reshape(1, -1),
                t["w_ff1"].astype(bf16), t["b_ff1"].reshape(1, -1),
                t["w_ff2"].astype(bf16), t["b_ff2"].reshape(1, -1),
                t["ln1_g"].reshape(1, -1), t["ln1_b"].reshape(1, -1),
                t["ln2_g"].reshape(1, -1), t["ln2_b"].reshape(1, -1)]

    sp, cf, c = p["sparse"], p["emo_cf"], p["emo_c"]
    cls1 = cf["hidden"][0][0].shape[1]
    k_in = sp["w_enc"].shape[0]
    seq_k = k_in - PERSONALIZED_DIM

    def pad_cols(w):
        return jnp.pad(w, ((0, 0), (0, CLS_PAD - w.shape[1])))

    def pad_rows(w):
        return jnp.pad(w, ((0, CLS_PAD - w.shape[0]), (0, 0)))

    # column-fused + lane-padded first layer: [ sparse(256) | emo_CF(128) | emo_C(128) ]
    w1 = jnp.concatenate([sp["w_enc"], pad_cols(cf["hidden"][0][0]),
                          pad_cols(c["hidden"][0][0])], axis=1)
    b1 = jnp.concatenate([sp["b_enc"],
                          jnp.pad(cf["hidden"][0][1], (0, CLS_PAD - cls1)),
                          jnp.pad(c["hidden"][0][1], (0, CLS_PAD - cls1))], axis=0)
    heads = [w1[:seq_k].astype(bf16), w1[seq_k:].astype(bf16), b1.reshape(1, -1),
             sp["w_dec"].astype(bf16), sp["b_dec"].reshape(1, -1),
             pad_rows(cf["hidden"][1][0]), cf["hidden"][1][1].reshape(1, -1),
             cf["w_out"], cf["b_out"].reshape(1, -1),
             pad_rows(c["hidden"][1][0]), c["hidden"][1][1].reshape(1, -1),
             c["w_out"], c["b_out"].reshape(1, -1)]

    # additive block-diagonal batch mask for attention over time-major (S*B) rows
    n = FEAT_MAX_LEN * B
    r = jnp.arange(n) % B
    attn_bias = jnp.where(r[:, None] == r[None, :], 0.0, -1e9).astype(jnp.float32)

    return dict(
        attn_a=attn_pack(p["audio_attn"]), attn_v=attn_pack(p["visual_attn"]),
        lstm_a=lstm_pack(p["lstm_a"]), lstm_v=lstm_pack(p["lstm_v"]),
        layers=[layer_pack(t) for t in p["transformer"]],
        heads=heads, attn_bias=attn_bias)


# ----------------------------- main -------------------------------------------
if __name__ == "__main__":
    key = jax.random.PRNGKey(0)
    k_params, k_a, k_v, k_p = jax.random.split(key, 4)

    raw_params = init_params(k_params)
    packed = pack_params(raw_params)          # one-time; not part of the per-forward cost

    acoustic = jax.random.normal(k_a, (B, FEAT_MAX_LEN, INPUT_DIM_A), jnp.float32)
    visual = jax.random.normal(k_v, (B, FEAT_MAX_LEN, INPUT_DIM_V), jnp.float32)
    personalized = jax.random.normal(k_p, (B, PERSONALIZED_DIM), jnp.float32)

    out = jax.jit(our_model_forward)(packed, acoustic, visual, personalized)
    out = jax.tree_util.tree_map(jax.block_until_ready, out)

    assert out["emo_pred"].shape == (B, EMO_OUT)
    assert out["emo_logits"].shape == (B, EMO_OUT)
    assert out["emo_logits_fusion"].shape == (B, EMO_OUT)
    assert out["sparse_recon"].shape == (B, CLS_INPUT)
    assert out["audio_weights"].shape == (B, FEAT_MAX_LEN)
    assert out["visual_weights"].shape == (B, FEAT_MAX_LEN)
    assert out["sparse_loss"].shape == ()
    print("KERNEL_OK")
</pallas_src>

<mosaic_0001>
module attributes {stable_mosaic.version = 11 : i64} {
  func.func @_forward_kernel(%arg0: memref<64x16xf32, #tpu.memory_space<vmem>>, %arg1: memref<64x16xf32, #tpu.memory_space<vmem>>, %arg2: memref<2x1024xf32, #tpu.memory_space<vmem>>, %arg3: memref<16x16xf32, #tpu.memory_space<vmem>>, %arg4: memref<16x16xf32, #tpu.memory_space<vmem>>, %arg5: memref<1x16xf32, #tpu.memory_space<vmem>>, %arg6: memref<1x16xf32, #tpu.memory_space<vmem>>, %arg7: memref<1x1xf32, #tpu.memory_space<vmem>>, %arg8: memref<16x16xf32, #tpu.memory_space<vmem>>, %arg9: memref<1x16xf32, #tpu.memory_space<vmem>>, %arg10: memref<1x16xf32, #tpu.memory_space<vmem>>, %arg11: memref<1x1xf32, #tpu.memory_space<vmem>>, %arg12: memref<16x64xf32, #tpu.memory_space<vmem>>, %arg13: memref<1x64xf32, #tpu.memory_space<vmem>>, %arg14: memref<16x64xf32, #tpu.memory_space<vmem>>, %arg15: memref<16x64xf32, #tpu.memory_space<vmem>>, %arg16: memref<1x64xf32, #tpu.memory_space<vmem>>, %arg17: memref<16x64xf32, #tpu.memory_space<vmem>>, %arg18: memref<32x96xf32, #tpu.memory_space<vmem>>, %arg19: memref<1x96xf32, #tpu.memory_space<vmem>>, %arg20: memref<32x32xf32, #tpu.memory_space<vmem>>, %arg21: memref<1x32xf32, #tpu.memory_space<vmem>>, %arg22: memref<32x2048xbf16, #tpu.memory_space<vmem>>, %arg23: memref<1x2048xf32, #tpu.memory_space<vmem>>, %arg24: memref<2048x32xbf16, #tpu.memory_space<vmem>>, %arg25: memref<1x32xf32, #tpu.memory_space<vmem>>, %arg26: memref<1x32xf32, #tpu.memory_space<vmem>>, %arg27: memref<1x32xf32, #tpu.memory_space<vmem>>, %arg28: memref<1x32xf32, #tpu.memory_space<vmem>>, %arg29: memref<1x32xf32, #tpu.memory_space<vmem>>, %arg30: memref<256x512xbf16, #tpu.memory_space<vmem>>, %arg31: memref<1024x512xbf16, #tpu.memory_space<vmem>>, %arg32: memref<1x512xf32, #tpu.memory_space<vmem>>, %arg33: memref<256x1280xbf16, #tpu.memory_space<vmem>>, %arg34: memref<1x1280xf32, #tpu.memory_space<vmem>>, %arg35: memref<128x16xf32, #tpu.memory_space<vmem>>, %arg36: memref<1x16xf32, #tpu.memory_space<vmem>>, %arg37: memref<16x4xf32, #tpu.memory_space<vmem>>, %arg38: memref<1x4xf32, #tpu.memory_space<vmem>>, %arg39: memref<128x16xf32, #tpu.memory_space<vmem>>, %arg40: memref<1x16xf32, #tpu.memory_space<vmem>>, %arg41: memref<16x4xf32, #tpu.memory_space<vmem>>, %arg42: memref<1x4xf32, #tpu.memory_space<vmem>>, %arg43: memref<2x1280xf32, #tpu.memory_space<vmem>>, %arg44: memref<64x16xf32, #tpu.memory_space<vmem>>) attributes {dimension_semantics = [], scalar_prefetch = 0 : i64, scratch_operands = 0 : i64, tpu.core_type = #tpu.core_type<tc>} {
    %c0 = arith.constant 0 : index
    %c0_0 = arith.constant 0 : index
    %0 = vector.load %arg0[%c0, %c0_0] : memref<64x16xf32, #tpu.memory_space<vmem>>, vector<64x16xf32>
    %c0_1 = arith.constant 0 : index
    %c0_2 = arith.constant 0 : index
    %1 = vector.load %arg1[%c0_1, %c0_2] : memref<64x16xf32, #tpu.memory_space<vmem>>, vector<64x16xf32>
    %c0_3 = arith.constant 0 : index
    %c0_4 = arith.constant 0 : index
    %2 = vector.load %arg4[%c0_3, %c0_4] : memref<16x16xf32, #tpu.memory_space<vmem>>, vector<16x16xf32>
    %cst = arith.constant dense<0.000000e+00> : vector<64x16xf32>
    %3 = tpu.matmul %0, %2, %cst {dimension_numbers = #tpu.dot_dimension_numbers<[1], [0], [0], [1], [0, 0, 1, 1], [], []>} : vector<64x16xf32>, vector<16x16xf32>, vector<64x16xf32> -> vector<64x16xf32>
    %c0_5 = arith.constant 0 : index
    %c0_6 = arith.constant 0 : index
    %4 = vector.load %arg5[%c0_5, %c0_6] : memref<1x16xf32, #tpu.memory_space<vmem>>, vector<1x16xf32>
    %5 = vector.broadcast %4 : vector<1x16xf32> to vector<64x16xf32>
    %6 = arith.addf %3, %5 : vector<64x16xf32>
    %7 = math.tanh %6 : vector<64x16xf32>
    %c0_7 = arith.constant 0 : index
    %c0_8 = arith.constant 0 : index
    %8 = vector.load %arg8[%c0_7, %c0_8] : memref<16x16xf32, #tpu.memory_space<vmem>>, vector<16x16xf32>
    %cst_9 = arith.constant dense<0.000000e+00> : vector<64x16xf32>
    %9 = tpu.matmul %1, %8, %cst_9 {dimension_numbers = #tpu.dot_dimension_numbers<[1], [0], [0], [1], [0, 0, 1, 1], [], []>} : vector<64x16xf32>, vector<16x16xf32>, vector<64x16xf32> -> vector<64x16xf32>
    %c0_10 = arith.constant 0 : index
    %c0_11 = arith.constant 0 : index
    %10 = vector.load %arg9[%c0_10, %c0_11] : memref<1x16xf32, #tpu.memory_space<vmem>>, vector<1x16xf32>
    %11 = vector.broadcast %10 : vector<1x16xf32> to vector<64x16xf32>
    %12 = arith.addf %9, %11 : vector<64x16xf32>
    %13 = math.tanh %12 : vector<64x16xf32>
    %c0_12 = arith.constant 0 : index
    %c0_13 = arith.constant 0 : index
    %14 = vector.load %arg6[%c0_12, %c0_13] : memref<1x16xf32, #tpu.memory_space<vmem>>, vector<1x16xf32>
    %15 = vector.broadcast %14 : vector<1x16xf32> to vector<64x16xf32>
    %16 = arith.mulf %7, %15 : vector<64x16xf32>
    %cst_14 = arith.constant dense<0.000000e+00> : vector<64xf32>
    %17 = vector.multi_reduction <add>, %16, %cst_14 [1] : vector<64x16xf32> to vector<64xf32>
    %18 = vector.shape_cast %17 : vector<64xf32> to vector<64x1xf32>
    %c0_15 = arith.constant 0 : index
    %c0_16 = arith.constant 0 : index
    %19 = vector.load %arg7[%c0_15, %c0_16] : memref<1x1xf32, #tpu.memory_space<vmem>>, vector<1x1xf32>
    %20 = vector.broadcast %19 : vector<1x1xf32> to vector<64x1xf32>
    %21 = arith.addf %18, %20 : vector<64x1xf32>
    %c0_17 = arith.constant 0 : index
    %c0_18 = arith.constant 0 : index
    %22 = vector.load %arg10[%c0_17, %c0_18] : memref<1x16xf32, #tpu.memory_space<vmem>>, vector<1x16xf32>
    %23 = vector.broadcast %22 : vector<1x16xf32> to vector<64x16xf32>
    %24 = arith.mulf %13, %23 : vector<64x16xf32>
    %cst_19 = arith.constant dense<0.000000e+00> : vector<64xf32>
    %25 = vector.multi_reduction <add>, %24, %cst_19 [1] : vector<64x16xf32> to vector<64xf32>
    %26 = vector.shape_cast %25 : vector<64xf32> to vector<64x1xf32>
    %c0_20 = arith.constant 0 : index
    %c0_21 = arith.constant 0 : index
    %27 = vector.load %arg11[%c0_20, %c0_21] : memref<1x1xf32, #tpu.memory_space<vmem>>, vector<1x1xf32>
    %28 = vector.broadcast %27 : vector<1x1xf32> to vector<64x1xf32>
    %29 = arith.addf %26, %28 : vector<64x1xf32>
    %30 = tpu.concatenate %21, %29 in 1 : vector<64x1xf32>, vector<64x1xf32> -> vector<64x2xf32>
    %cst_22 = arith.constant dense<0xFF800000> : vector<2xf32>
    %31 = vector.multi_reduction <maximumf>, %30, %cst_22 [0] : vector<64x2xf32> to vector<2xf32>
    %32 = vector.shape_cast %31 : vector<2xf32> to vector<1x2xf32>
    %33 = vector.broadcast %32 : vector<1x2xf32> to vector<64x2xf32>
    %34 = arith.subf %30, %33 : vector<64x2xf32>
    %35 = math.exp %34 : vector<64x2xf32>
    %36 = vector.extract_strided_slice %35 {offsets = [0, 0], sizes = [8, 2], strides = [1, 1]} : vector<64x2xf32> to vector<8x2xf32>
    %37 = vector.extract_strided_slice %35 {offsets = [8, 0], sizes = [8, 2], strides = [1, 1]} : vector<64x2xf32> to vector<8x2xf32>
    %38 = arith.addf %36, %37 : vector<8x2xf32>
    %39 = vector.extract_strided_slice %35 {offsets = [16, 0], sizes = [8, 2], strides = [1, 1]} : vector<64x2xf32> to vector<8x2xf32>
    %40 = arith.addf %38, %39 : vector<8x2xf32>
    %41 = vector.extract_strided_slice %35 {offsets = [24, 0], sizes = [8, 2], strides = [1, 1]} : vector<64x2xf32> to vector<8x2xf32>
    %42 = arith.addf %40, %41 : vector<8x2xf32>
    %43 = vector.extract_strided_slice %35 {offsets = [32, 0], sizes = [8, 2], strides = [1, 1]} : vector<64x2xf32> to vector<8x2xf32>
    %44 = arith.addf %42, %43 : vector<8x2xf32>
    %45 = vector.extract_strided_slice %35 {offsets = [40, 0], sizes = [8, 2], strides = [1, 1]} : vector<64x2xf32> to vector<8x2xf32>
    %46 = arith.addf %44, %45 : vector<8x2xf32>
    %47 = vector.extract_strided_slice %35 {offsets = [48, 0], sizes = [8, 2], strides = [1, 1]} : vector<64x2xf32> to vector<8x2xf32>
    %48 = arith.addf %46, %47 : vector<8x2xf32>
    %49 = vector.extract_strided_slice %35 {offsets = [56, 0], sizes = [8, 2], strides = [1, 1]} : vector<64x2xf32> to vector<8x2xf32>
    %50 = arith.addf %48, %49 : vector<8x2xf32>
    %51 = tpu.concatenate %50, %50, %50, %50, %50, %50, %50, %50 in 0 : vector<8x2xf32>, vector<8x2xf32>, vector<8x2xf32>, vector<8x2xf32>, vector<8x2xf32>, vector<8x2xf32>, vector<8x2xf32>, vector<8x2xf32> -> vector<64x2xf32>
    %52 = arith.divf %35, %51 : vector<64x2xf32>
    %53 = vector.extract_strided_slice %52 {offsets = [0, 0], sizes = [64, 1], strides = [1, 1]} : vector<64x2xf32> to vector<64x1xf32>
    %54 = vector.broadcast %53 : vector<64x1xf32> to vector<64x16xf32>
    %55 = arith.mulf %0, %54 : vector<64x16xf32>
    %56 = vector.extract_strided_slice %52 {offsets = [0, 1], sizes = [64, 1], strides = [1, 1]} : vector<64x2xf32> to vector<64x1xf32>
    %57 = vector.broadcast %56 : vector<64x1xf32> to vector<64x16xf32>
    %58 = arith.mulf %1, %57 : vector<64x16xf32>
    %c0_23 = arith.constant 0 : index
    %c0_24 = arith.constant 0 : index
    %59 = vector.load %arg12[%c0_23, %c0_24] : memref<16x64xf32, #tpu.memory_space<vmem>>, vector<16x64xf32>
    %cst_25 = arith.constant dense<0.000000e+00> : vector<64x64xf32>
    %60 = tpu.matmul %55, %59, %cst_25 {dimension_numbers = #tpu.dot_dimension_numbers<[1], [0], [0], [1], [0, 0, 1, 1], [], []>} : vector<64x16xf32>, vector<16x64xf32>, vector<64x64xf32> -> vector<64x64xf32>
    %c0_26 = arith.constant 0 : index
    %c0_27 = arith.constant 0 : index
    %61 = vector.load %arg13[%c0_26, %c0_27] : memref<1x64xf32, #tpu.memory_space<vmem>>, vector<1x64xf32>
    %62 = vector.broadcast %61 : vector<1x64xf32> to vector<64x64xf32>
    %63 = arith.addf %60, %62 : vector<64x64xf32>
    %c0_28 = arith.constant 0 : index
    %c0_29 = arith.constant 0 : index
    %64 = vector.load %arg15[%c0_28, %c0_29] : memref<16x64xf32, #tpu.memory_space<vmem>>, vector<16x64xf32>
    %cst_30 = arith.constant dense<0.000000e+00> : vector<64x64xf32>
    %65 = tpu.matmul %58, %64, %cst_30 {dimension_numbers = #tpu.dot_dimension_numbers<[1], [0], [0], [1], [0, 0, 1, 1], [], []>} : vector<64x16xf32>, vector<16x64xf32>, vector<64x64xf32> -> vector<64x64xf32>
    %c0_31 = arith.constant 0 : index
    %c0_32 = arith.constant 0 : index
    %66 = vector.load %arg16[%c0_31, %c0_32] : memref<1x64xf32, #tpu.memory_space<vmem>>, vector<1x64xf32>
    %67 = vector.broadcast %66 : vector<1x64xf32> to vector<64x64xf32>
    %68 = arith.addf %65, %67 : vector<64x64xf32>
    %c0_33 = arith.constant 0 : index
    %c0_34 = arith.constant 0 : index
    %69 = vector.load %arg14[%c0_33, %c0_34] : memref<16x64xf32, #tpu.memory_space<vmem>>, vector<16x64xf32>
    %c0_35 = arith.constant 0 : index
    %c0_36 = arith.constant 0 : index
    %70 = vector.load %arg17[%c0_35, %c0_36] : memref<16x64xf32, #tpu.memory_space<vmem>>, vector<16x64xf32>
    %cst_37 = arith.constant 0.000000e+00 : f32
    %71 = vector.broadcast %cst_37 : f32 to vector<8x16xf32>
    %cst_38 = arith.constant 0.000000e+00 : f32
    %72 = vector.broadcast %cst_38 : f32 to vector<8x16xf32>
    %cst_39 = arith.constant 0.000000e+00 : f32
    %73 = vector.broadcast %cst_39 : f32 to vector<8x16xf32>
    %cst_40 = arith.constant 0.000000e+00 : f32
    %74 = vector.broadcast %cst_40 : f32 to vector<8x16xf32>
    %75 = vector.extract_strided_slice %63 {offsets = [0, 0], sizes = [8, 64], strides = [1, 1]} : vector<64x64xf32> to vector<8x64xf32>
    %cst_41 = arith.constant dense<0.000000e+00> : vector<8x64xf32>
    %76 = tpu.matmul %71, %69, %cst_41 {dimension_numbers = #tpu.dot_dimension_numbers<[1], [0], [0], [1], [0, 0, 1, 1], [], []>} : vector<8x16xf32>, vector<16x64xf32>, vector<8x64xf32> -> vector<8x64xf32>
    %77 = arith.addf %75, %76 : vector<8x64xf32>
    %78 = vector.extract_strided_slice %68 {offsets = [0, 0], sizes = [8, 64], strides = [1, 1]} : vector<64x64xf32> to vector<8x64xf32>
    %cst_42 = arith.constant dense<0.000000e+00> : vector<8x64xf32>
    %79 = tpu.matmul %73, %70, %cst_42 {dimension_numbers = #tpu.dot_dimension_numbers<[1], [0], [0], [1], [0, 0, 1, 1], [], []>} : vector<8x16xf32>, vector<16x64xf32>, vector<8x64xf32> -> vector<8x64xf32>
    %80 = arith.addf %78, %79 : vector<8x64xf32>
    %81 = vector.extract_strided_slice %77 {offsets = [0, 0], sizes = [8, 16], strides = [1, 1]} : vector<8x64xf32> to vector<8x16xf32>
    %82 = arith.negf %81 : vector<8x16xf32>
    %83 = math.exp %82 : vector<8x16xf32>
    %cst_43 = arith.constant 1.000000e+00 : f32
    %84 = vector.broadcast %cst_43 : f32 to vector<8x16xf32>
    %85 = arith.addf %84, %83 : vector<8x16xf32>
    %86 = arith.divf %84, %85 : vector<8x16xf32>
    %87 = vector.extract_strided_slice %77 {offsets = [0, 16], sizes = [8, 16], strides = [1, 1]} : vector<8x64xf32> to vector<8x16xf32>
    %88 = arith.negf %87 : vector<8x16xf32>
    %89 = math.exp %88 : vector<8x16xf32>
    %cst_44 = arith.constant 1.000000e+00 : f32
    %90 = vector.broadcast %cst_44 : f32 to vector<8x16xf32>
    %91 = arith.addf %90, %89 : vector<8x16xf32>
    %92 = arith.divf %90, %91 : vector<8x16xf32>
    %93 = vector.extract_strided_slice %77 {offsets = [0, 32], sizes = [8, 16], strides = [1, 1]} : vector<8x64xf32> to vector<8x16xf32>
    %94 = math.tanh %93 : vector<8x16xf32>
    %95 = vector.extract_strided_slice %77 {offsets = [0, 48], sizes = [8, 16], strides = [1, 1]} : vector<8x64xf32> to vector<8x16xf32>
    %96 = arith.negf %95 : vector<8x16xf32>
    %97 = math.exp %96 : vector<8x16xf32>
    %cst_45 = arith.constant 1.000000e+00 : f32
    %98 = vector.broadcast %cst_45 : f32 to vector<8x16xf32>
    %99 = arith.addf %98, %97 : vector<8x16xf32>
    %100 = arith.divf %98, %99 : vector<8x16xf32>
    %101 = arith.mulf %92, %72 : vector<8x16xf32>
    %102 = arith.mulf %86, %94 : vector<8x16xf32>
    %103 = arith.addf %101, %102 : vector<8x16xf32>
    %104 = math.tanh %103 : vector<8x16xf32>
    %105 = arith.mulf %100, %104 : vector<8x16xf32>
    %106 = vector.extract_strided_slice %80 {offsets = [0, 0], sizes = [8, 16], strides = [1, 1]} : vector<8x64xf32> to vector<8x16xf32>
    %107 = arith.negf %106 : vector<8x16xf32>
    %108 = math.exp %107 : vector<8x16xf32>
    %cst_46 = arith.constant 1.000000e+00 : f32
    %109 = vector.broadcast %cst_46 : f32 to vector<8x16xf32>
    %110 = arith.addf %109, %108 : vector<8x16xf32>
    %111 = arith.divf %109, %110 : vector<8x16xf32>
    %112 = vector.extract_strided_slice %80 {offsets = [0, 16], sizes = [8, 16], strides = [1, 1]} : vector<8x64xf32> to vector<8x16xf32>
    %113 = arith.negf %112 : vector<8x16xf32>
    %114 = math.exp %113 : vector<8x16xf32>
    %cst_47 = arith.constant 1.000000e+00 : f32
    %115 = vector.broadcast %cst_47 : f32 to vector<8x16xf32>
    %116 = arith.addf %115, %114 : vector<8x16xf32>
    %117 = arith.divf %115, %116 : vector<8x16xf32>
    %118 = vector.extract_strided_slice %80 {offsets = [0, 32], sizes = [8, 16], strides = [1, 1]} : vector<8x64xf32> to vector<8x16xf32>
    %119 = math.tanh %118 : vector<8x16xf32>
    %120 = vector.extract_strided_slice %80 {offsets = [0, 48], sizes = [8, 16], strides = [1, 1]} : vector<8x64xf32> to vector<8x16xf32>
    %121 = arith.negf %120 : vector<8x16xf32>
    %122 = math.exp %121 : vector<8x16xf32>
    %cst_48 = arith.constant 1.000000e+00 : f32
    %123 = vector.broadcast %cst_48 : f32 to vector<8x16xf32>
    %124 = arith.addf %123, %122 : vector<8x16xf32>
    %125 = arith.divf %123, %124 : vector<8x16xf32>
    %126 = arith.mulf %117, %74 : vector<8x16xf32>
    %127 = arith.mulf %111, %119 : vector<8x16xf32>
    %128 = arith.addf %126, %127 : vector<8x16xf32>
    %129 = math.tanh %128 : vector<8x16xf32>
    %130 = arith.mulf %125, %129 : vector<8x16xf32>
    %131 = vector.extract_strided_slice %130 {offsets = [0, 0], sizes = [2, 16], strides = [1, 1]} : vector<8x16xf32> to vector<2x16xf32>
    %132 = vector.extract_strided_slice %105 {offsets = [0, 0], sizes = [2, 16], strides = [1, 1]} : vector<8x16xf32> to vector<2x16xf32>
    %133 = tpu.concatenate %131, %132 in 1 : vector<2x16xf32>, vector<2x16xf32> -> vector<2x32xf32>
    %134 = vector.extract_strided_slice %63 {offsets = [8, 0], sizes = [8, 64], strides = [1, 1]} : vector<64x64xf32> to vector<8x64xf32>
    %cst_49 = arith.constant dense<0.000000e+00> : vector<8x64xf32>
    %135 = tpu.matmul %105, %69, %cst_49 {dimension_numbers = #tpu.dot_dimension_numbers<[1], [0], [0], [1], [0, 0, 1, 1], [], []>} : vector<8x16xf32>, vector<16x64xf32>, vector<8x64xf32> -> vector<8x64xf32>
    %136 = arith.addf %134, %135 : vector<8x64xf32>
    %137 = vector.extract_strided_slice %68 {offsets = [8, 0], sizes = [8, 64], strides = [1, 1]} : vector<64x64xf32> to vector<8x64xf32>
    %cst_50 = arith.constant dense<0.000000e+00> : vector<8x64xf32>
    %138 = tpu.matmul %130, %70, %cst_50 {dimension_numbers = #tpu.dot_dimension_numbers<[1], [0], [0], [1], [0, 0, 1, 1], [], []>} : vector<8x16xf32>, vector<16x64xf32>, vector<8x64xf32> -> vector<8x64xf32>
    %139 = arith.addf %137, %138 : vector<8x64xf32>
    %140 = vector.extract_strided_slice %136 {offsets = [0, 0], sizes = [8, 16], strides = [1, 1]} : vector<8x64xf32> to vector<8x16xf32>
    %141 = arith.negf %140 : vector<8x16xf32>
    %142 = math.exp %141 : vector<8x16xf32>
    %cst_51 = arith.constant 1.000000e+00 : f32
    %143 = vector.broadcast %cst_51 : f32 to vector<8x16xf32>
    %144 = arith.addf %143, %142 : vector<8x16xf32>
    %145 = arith.divf %143, %144 : vector<8x16xf32>
    %146 = vector.extract_strided_slice %136 {offsets = [0, 16], sizes = [8, 16], strides = [1, 1]} : vector<8x64xf32> to vector<8x16xf32>
    %147 = arith.negf %146 : vector<8x16xf32>
    %148 = math.exp %147 : vector<8x16xf32>
    %cst_52 = arith.constant 1.000000e+00 : f32
    %149 = vector.broadcast %cst_52 : f32 to vector<8x16xf32>
    %150 = arith.addf %149, %148 : vector<8x16xf32>
    %151 = arith.divf %149, %150 : vector<8x16xf32>
    %152 = vector.extract_strided_slice %136 {offsets = [0, 32], sizes = [8, 16], strides = [1, 1]} : vector<8x64xf32> to vector<8x16xf32>
    %153 = math.tanh %152 : vector<8x16xf32>
    %154 = vector.extract_strided_slice %136 {offsets = [0, 48], sizes = [8, 16], strides = [1, 1]} : vector<8x64xf32> to vector<8x16xf32>
    %155 = arith.negf %154 : vector<8x16xf32>
    %156 = math.exp %155 : vector<8x16xf32>
    %cst_53 = arith.constant 1.000000e+00 : f32
    %157 = vector.broadcast %cst_53 : f32 to vector<8x16xf32>
    %158 = arith.addf %157, %156 : vector<8x16xf32>
    %159 = arith.divf %157, %158 : vector<8x16xf32>
    %160 = arith.mulf %151, %103 : vector<8x16xf32>
    %161 = arith.mulf %145, %153 : vector<8x16xf32>
    %162 = arith.addf %160, %161 : vector<8x16xf32>
    %163 = math.tanh %162 : vector<8x16xf32>
    %164 = arith.mulf %159, %163 : vector<8x16xf32>
    %165 = vector.extract_strided_slice %139 {offsets = [0, 0], sizes = [8, 16], strides = [1, 1]} : vector<8x64xf32> to vector<8x16xf32>
    %166 = arith.negf %165 : vector<8x16xf32>
    %167 = math.exp %166 : vector<8x16xf32>
    %cst_54 = arith.constant 1.000000e+00 : f32
    %168 = vector.broadcast %cst_54 : f32 to vector<8x16xf32>
    %169 = arith.addf %168, %167 : vector<8x16xf32>
    %170 = arith.divf %168, %169 : vector<8x16xf32>
    %171 = vector.extract_strided_slice %139 {offsets = [0, 16], sizes = [8, 16], strides = [1, 1]} : vector<8x64xf32> to vector<8x16xf32>
    %172 = arith.negf %171 : vector<8x16xf32>
    %173 = math.exp %172 : vector<8x16xf32>
    %cst_55 = arith.constant 1.000000e+00 : f32
    %174 = vector.broadcast %cst_55 : f32 to vector<8x16xf32>
    %175 = arith.addf %174, %173 : vector<8x16xf32>
    %176 = arith.divf %174, %175 : vector<8x16xf32>
    %177 = vector.extract_strided_slice %139 {offsets = [0, 32], sizes = [8, 16], strides = [1, 1]} : vector<8x64xf32> to vector<8x16xf32>
    %178 = math.tanh %177 : vector<8x16xf32>
    %179 = vector.extract_strided_slice %139 {offsets = [0, 48], sizes = [8, 16], strides = [1, 1]} : vector<8x64xf32> to vector<8x16xf32>
    %180 = arith.negf %179 : vector<8x16xf32>
    %181 = math.exp %180 : vector<8x16xf32>
    %cst_56 = arith.constant 1.000000e+00 : f32
    %182 = vector.broadcast %cst_56 : f32 to vector<8x16xf32>
    %183 = arith.addf %182, %181 : vector<8x16xf32>
    %184 = arith.divf %182, %183 : vector<8x16xf32>
    %185 = arith.mulf %176, %128 : vector<8x16xf32>
    %186 = arith.mulf %170, %178 : vector<8x16xf32>
    %187 = arith.addf %185, %186 : vector<8x16xf32>
    %188 = math.tanh %187 : vector<8x16xf32>
    %189 = arith.mulf %184, %188 : vector<8x16xf32>
    %190 = vector.extract_strided_slice %189 {offsets = [0, 0], sizes = [2, 16], strides = [1, 1]} : vector<8x16xf32> to vector<2x16xf32>
    %191 = vector.extract_strided_slice %164 {offsets = [0, 0], sizes = [2, 16], strides = [1, 1]} : vector<8x16xf32> to vector<2x16xf32>
    %192 = tpu.concatenate %190, %191 in 1 : vector<2x16xf32>, vector<2x16xf32> -> vector<2x32xf32>
    %193 = vector.extract_strided_slice %63 {offsets = [16, 0], sizes = [8, 64], strides = [1, 1]} : vector<64x64xf32> to vector<8x64xf32>
    %cst_57 = arith.constant dense<0.000000e+00> : vector<8x64xf32>
    %194 = tpu.matmul %164, %69, %cst_57 {dimension_numbers = #tpu.dot_dimension_numbers<[1], [0], [0], [1], [0, 0, 1, 1], [], []>} : vector<8x16xf32>, vector<16x64xf32>, vector<8x64xf32> -> vector<8x64xf32>
    %195 = arith.addf %193, %194 : vector<8x64xf32>
    %196 = vector.extract_strided_slice %68 {offsets = [16, 0], sizes = [8, 64], strides = [1, 1]} : vector<64x64xf32> to vector<8x64xf32>
    %cst_58 = arith.constant dense<0.000000e+00> : vector<8x64xf32>
    %197 = tpu.matmul %189, %70, %cst_58 {dimension_numbers = #tpu.dot_dimension_numbers<[1], [0], [0], [1], [0, 0, 1, 1], [], []>} : vector<8x16xf32>, vector<16x64xf32>, vector<8x64xf32> -> vector<8x64xf32>
    %198 = arith.addf %196, %197 : vector<8x64xf32>
    %199 = vector.extract_strided_slice %195 {offsets = [0, 0], sizes = [8, 16], strides = [1, 1]} : vector<8x64xf32> to vector<8x16xf32>
    %200 = arith.negf %199 : vector<8x16xf32>
    %201 = math.exp %200 : vector<8x16xf32>
    %cst_59 = arith.constant 1.000000e+00 : f32
    %202 = vector.broadcast %cst_59 : f32 to vector<8x16xf32>
    %203 = arith.addf %202, %201 : vector<8x16xf32>
    %204 = arith.divf %202, %203 : vector<8x16xf32>
    %205 = vector.extract_strided_slice %195 {offsets = [0, 16], sizes = [8, 16], strides = [1, 1]} : vector<8x64xf32> to vector<8x16xf32>
    %206 = arith.negf %205 : vector<8x16xf32>
    %207 = math.exp %206 : vector<8x16xf32>
    %cst_60 = arith.constant 1.000000e+00 : f32
    %208 = vector.broadcast %cst_60 : f32 to vector<8x16xf32>
    %209 = arith.addf %208, %207 : vector<8x16xf32>
    %210 = arith.divf %208, %209 : vector<8x16xf32>
    %211 = vector.extract_strided_slice %195 {offsets = [0, 32], sizes = [8, 16], strides = [1, 1]} : vector<8x64xf32> to vector<8x16xf32>
    %212 = math.tanh %211 : vector<8x16xf32>
    %213 = vector.extract_strided_slice %195 {offsets = [0, 48], sizes = [8, 16], strides = [1, 1]} : vector<8x64xf32> to vector<8x16xf32>
    %214 = arith.negf %213 : vector<8x16xf32>
    %215 = math.exp %214 : vector<8x16xf32>
    %cst_61 = arith.constant 1.000000e+00 : f32
    %216 = vector.broadcast %cst_61 : f32 to vector<8x16xf32>
    %217 = arith.addf %216, %215 : vector<8x16xf32>
    %218 = arith.divf %216, %217 : vector<8x16xf32>
    %219 = arith.mulf %210, %162 : vector<8x16xf32>
    %220 = arith.mulf %204, %212 : vector<8x16xf32>
    %221 = arith.addf %219, %220 : vector<8x16xf32>
    %222 = math.tanh %221 : vector<8x16xf32>
    %223 = arith.mulf %218, %222 : vector<8x16xf32>
    %224 = vector.extract_strided_slice %198 {offsets = [0, 0], sizes = [8, 16], strides = [1, 1]} : vector<8x64xf32> to vector<8x16xf32>
    %225 = arith.negf %224 : vector<8x16xf32>
    %226 = math.exp %225 : vector<8x16xf32>
    %cst_62 = arith.constant 1.000000e+00 : f32
    %227 = vector.broadcast %cst_62 : f32 to vector<8x16xf32>
    %228 = arith.addf %227, %226 : vector<8x16xf32>
    %229 = arith.divf %227, %228 : vector<8x16xf32>
    %230 = vector.extract_strided_slice %198 {offsets = [0, 16], sizes = [8, 16], strides = [1, 1]} : vector<8x64xf32> to vector<8x16xf32>
    %231 = arith.negf %230 : vector<8x16xf32>
    %232 = math.exp %231 : vector<8x16xf32>
    %cst_63 = arith.constant 1.000000e+00 : f32
    %233 = vector.broadcast %cst_63 : f32 to vector<8x16xf32>
    %234 = arith.addf %233, %232 : vector<8x16xf32>
    %235 = arith.divf %233, %234 : vector<8x16xf32>
    %236 = vector.extract_strided_slice %198 {offsets = [0, 32], sizes = [8, 16], strides = [1, 1]} : vector<8x64xf32> to vector<8x16xf32>
    %237 = math.tanh %236 : vector<8x16xf32>
    %238 = vector.extract_strided_slice %198 {offsets = [0, 48], sizes = [8, 16], strides = [1, 1]} : vector<8x64xf32> to vector<8x16xf32>
    %239 = arith.negf %238 : vector<8x16xf32>
    %240 = math.exp %239 : vector<8x16xf32>
    %cst_64 = arith.constant 1.000000e+00 : f32
    %241 = vector.broadcast %cst_64 : f32 to vector<8x16xf32>
    %242 = arith.addf %241, %240 : vector<8x16xf32>
    %243 = arith.divf %241, %242 : vector<8x16xf32>
    %244 = arith.mulf %235, %187 : vector<8x16xf32>
    %245 = arith.mulf %229, %237 : vector<8x16xf32>
    %246 = arith.addf %244, %245 : vector<8x16xf32>
    %247 = math.tanh %246 : vector<8x16xf32>
    %248 = arith.mulf %243, %247 : vector<8x16xf32>
    %249 = vector.extract_strided_slice %248 {offsets = [0, 0], sizes = [2, 16], strides = [1, 1]} : vector<8x16xf32> to vector<2x16xf32>
    %250 = vector.extract_strided_slice %223 {offsets = [0, 0], sizes = [2, 16], strides = [1, 1]} : vector<8x16xf32> to vector<2x16xf32>
    %251 = tpu.concatenate %249, %250 in 1 : vector<2x16xf32>, vector<2x16xf32> -> vector<2x32xf32>
    %252 = vector.extract_strided_slice %63 {offsets = [24, 0], sizes = [8, 64], strides = [1, 1]} : vector<64x64xf32> to vector<8x64xf32>
    %cst_65 = arith.constant dense<0.000000e+00> : vector<8x64xf32>
    %253 = tpu.matmul %223, %69, %cst_65 {dimension_numbers = #tpu.dot_dimension_numbers<[1], [0], [0], [1], [0, 0, 1, 1], [], []>} : vector<8x16xf32>, vector<16x64xf32>, vector<8x64xf32> -> vector<8x64xf32>
    %254 = arith.addf %252, %253 : vector<8x64xf32>
    %255 = vector.extract_strided_slice %68 {offsets = [24, 0], sizes = [8, 64], strides = [1, 1]} : vector<64x64xf32> to vector<8x64xf32>
    %cst_66 = arith.constant dense<0.000000e+00> : vector<8x64xf32>
    %256 = tpu.matmul %248, %70, %cst_66 {dimension_numbers = #tpu.dot_dimension_numbers<[1], [0], [0], [1], [0, 0, 1, 1], [], []>} : vector<8x16xf32>, vector<16x64xf32>, vector<8x64xf32> -> vector<8x64xf32>
    %257 = arith.addf %255, %256 : vector<8x64xf32>
    %258 = vector.extract_strided_slice %254 {offsets = [0, 0], sizes = [8, 16], strides = [1, 1]} : vector<8x64xf32> to vector<8x16xf32>
    %259 = arith.negf %258 : vector<8x16xf32>
    %260 = math.exp %259 : vector<8x16xf32>
    %cst_67 = arith.constant 1.000000e+00 : f32
    %261 = vector.broadcast %cst_67 : f32 to vector<8x16xf32>
    %262 = arith.addf %261, %260 : vector<8x16xf32>
    %263 = arith.divf %261, %262 : vector<8x16xf32>
    %264 = vector.extract_strided_slice %254 {offsets = [0, 16], sizes = [8, 16], strides = [1, 1]} : vector<8x64xf32> to vector<8x16xf32>
    %265 = arith.negf %264 : vector<8x16xf32>
    %266 = math.exp %265 : vector<8x16xf32>
    %cst_68 = arith.constant 1.000000e+00 : f32
    %267 = vector.broadcast %cst_68 : f32 to vector<8x16xf32>
    %268 = arith.addf %267, %266 : vector<8x16xf32>
    %269 = arith.divf %267, %268 : vector<8x16xf32>
    %270 = vector.extract_strided_slice %254 {offsets = [0, 32], sizes = [8, 16], strides = [1, 1]} : vector<8x64xf32> to vector<8x16xf32>
    %271 = math.tanh %270 : vector<8x16xf32>
    %272 = vector.extract_strided_slice %254 {offsets = [0, 48], sizes = [8, 16], strides = [1, 1]} : vector<8x64xf32> to vector<8x16xf32>
    %273 = arith.negf %272 : vector<8x16xf32>
    %274 = math.exp %273 : vector<8x16xf32>
    %cst_69 = arith.constant 1.000000e+00 : f32
    %275 = vector.broadcast %cst_69 : f32 to vector<8x16xf32>
    %276 = arith.addf %275, %274 : vector<8x16xf32>
    %277 = arith.divf %275, %276 : vector<8x16xf32>
    %278 = arith.mulf %269, %221 : vector<8x16xf32>
    %279 = arith.mulf %263, %271 : vector<8x16xf32>
    %280 = arith.addf %278, %279 : vector<8x16xf32>
    %281 = math.tanh %280 : vector<8x16xf32>
    %282 = arith.mulf %277, %281 : vector<8x16xf32>
    %283 = vector.extract_strided_slice %257 {offsets = [0, 0], sizes = [8, 16], strides = [1, 1]} : vector<8x64xf32> to vector<8x16xf32>
    %284 = arith.negf %283 : vector<8x16xf32>
    %285 = math.exp %284 : vector<8x16xf32>
    %cst_70 = arith.constant 1.000000e+00 : f32
    %286 = vector.broadcast %cst_70 : f32 to vector<8x16xf32>
    %287 = arith.addf %286, %285 : vector<8x16xf32>
    %288 = arith.divf %286, %287 : vector<8x16xf32>
    %289 = vector.extract_strided_slice %257 {offsets = [0, 16], sizes = [8, 16], strides = [1, 1]} : vector<8x64xf32> to vector<8x16xf32>
    %290 = arith.negf %289 : vector<8x16xf32>
    %291 = math.exp %290 : vector<8x16xf32>
    %cst_71 = arith.constant 1.000000e+00 : f32
    %292 = vector.broadcast %cst_71 : f32 to vector<8x16xf32>
    %293 = arith.addf %292, %291 : vector<8x16xf32>
    %294 = arith.divf %292, %293 : vector<8x16xf32>
    %295 = vector.extract_strided_slice %257 {offsets = [0, 32], sizes = [8, 16], strides = [1, 1]} : vector<8x64xf32> to vector<8x16xf32>
    %296 = math.tanh %295 : vector<8x16xf32>
    %297 = vector.extract_strided_slice %257 {offsets = [0, 48], sizes = [8, 16], strides = [1, 1]} : vector<8x64xf32> to vector<8x16xf32>
    %298 = arith.negf %297 : vector<8x16xf32>
    %299 = math.exp %298 : vector<8x16xf32>
    %cst_72 = arith.constant 1.000000e+00 : f32
    %300 = vector.broadcast %cst_72 : f32 to vector<8x16xf32>
    %301 = arith.addf %300, %299 : vector<8x16xf32>
    %302 = arith.divf %300, %301 : vector<8x16xf32>
    %303 = arith.mulf %294, %246 : vector<8x16xf32>
    %304 = arith.mulf %288, %296 : vector<8x16xf32>
    %305 = arith.addf %303, %304 : vector<8x16xf32>
    %306 = math.tanh %305 : vector<8x16xf32>
    %307 = arith.mulf %302, %306 : vector<8x16xf32>
    %308 = vector.extract_strided_slice %307 {offsets = [0, 0], sizes = [2, 16], strides = [1, 1]} : vector<8x16xf32> to vector<2x16xf32>
    %309 = vector.extract_strided_slice %282 {offsets = [0, 0], sizes = [2, 16], strides = [1, 1]} : vector<8x16xf32> to vector<2x16xf32>
    %310 = tpu.concatenate %308, %309 in 1 : vector<2x16xf32>, vector<2x16xf32> -> vector<2x32xf32>
    %311 = vector.extract_strided_slice %63 {offsets = [32, 0], sizes = [8, 64], strides = [1, 1]} : vector<64x64xf32> to vector<8x64xf32>
    %cst_73 = arith.constant dense<0.000000e+00> : vector<8x64xf32>
    %312 = tpu.matmul %282, %69, %cst_73 {dimension_numbers = #tpu.dot_dimension_numbers<[1], [0], [0], [1], [0, 0, 1, 1], [], []>} : vector<8x16xf32>, vector<16x64xf32>, vector<8x64xf32> -> vector<8x64xf32>
    %313 = arith.addf %311, %312 : vector<8x64xf32>
    %314 = vector.extract_strided_slice %68 {offsets = [32, 0], sizes = [8, 64], strides = [1, 1]} : vector<64x64xf32> to vector<8x64xf32>
    %cst_74 = arith.constant dense<0.000000e+00> : vector<8x64xf32>
    %315 = tpu.matmul %307, %70, %cst_74 {dimension_numbers = #tpu.dot_dimension_numbers<[1], [0], [0], [1], [0, 0, 1, 1], [], []>} : vector<8x16xf32>, vector<16x64xf32>, vector<8x64xf32> -> vector<8x64xf32>
    %316 = arith.addf %314, %315 : vector<8x64xf32>
    %317 = vector.extract_strided_slice %313 {offsets = [0, 0], sizes = [8, 16], strides = [1, 1]} : vector<8x64xf32> to vector<8x16xf32>
    %318 = arith.negf %317 : vector<8x16xf32>
    %319 = math.exp %318 : vector<8x16xf32>
    %cst_75 = arith.constant 1.000000e+00 : f32
    %320 = vector.broadcast %cst_75 : f32 to vector<8x16xf32>
    %321 = arith.addf %320, %319 : vector<8x16xf32>
    %322 = arith.divf %320, %321 : vector<8x16xf32>
    %323 = vector.extract_strided_slice %313 {offsets = [0, 16], sizes = [8, 16], strides = [1, 1]} : vector<8x64xf32> to vector<8x16xf32>
    %324 = arith.negf %323 : vector<8x16xf32>
    %325 = math.exp %324 : vector<8x16xf32>
    %cst_76 = arith.constant 1.000000e+00 : f32
    %326 = vector.broadcast %cst_76 : f32 to vector<8x16xf32>
    %327 = arith.addf %326, %325 : vector<8x16xf32>
    %328 = arith.divf %326, %327 : vector<8x16xf32>
    %329 = vector.extract_strided_slice %313 {offsets = [0, 32], sizes = [8, 16], strides = [1, 1]} : vector<8x64xf32> to vector<8x16xf32>
    %330 = math.tanh %329 : vector<8x16xf32>
    %331 = vector.extract_strided_slice %313 {offsets = [0, 48], sizes = [8, 16], strides = [1, 1]} : vector<8x64xf32> to vector<8x16xf32>
    %332 = arith.negf %331 : vector<8x16xf32>
    %333 = math.exp %332 : vector<8x16xf32>
    %cst_77 = arith.constant 1.000000e+00 : f32
    %334 = vector.broadcast %cst_77 : f32 to vector<8x16xf32>
    %335 = arith.addf %334, %333 : vector<8x16xf32>
    %336 = arith.divf %334, %335 : vector<8x16xf32>
    %337 = arith.mulf %328, %280 : vector<8x16xf32>
    %338 = arith.mulf %322, %330 : vector<8x16xf32>
    %339 = arith.addf %337, %338 : vector<8x16xf32>
    %340 = math.tanh %339 : vector<8x16xf32>
    %341 = arith.mulf %336, %340 : vector<8x16xf32>
    %342 = vector.extract_strided_slice %316 {offsets = [0, 0], sizes = [8, 16], strides = [1, 1]} : vector<8x64xf32> to vector<8x16xf32>
    %343 = arith.negf %342 : vector<8x16xf32>
    %344 = math.exp %343 : vector<8x16xf32>
    %cst_78 = arith.constant 1.000000e+00 : f32
    %345 = vector.broadcast %cst_78 : f32 to vector<8x16xf32>
    %346 = arith.addf %345, %344 : vector<8x16xf32>
    %347 = arith.divf %345, %346 : vector<8x16xf32>
    %348 = vector.extract_strided_slice %316 {offsets = [0, 16], sizes = [8, 16], strides = [1, 1]} : vector<8x64xf32> to vector<8x16xf32>
    %349 = arith.negf %348 : vector<8x16xf32>
    %350 = math.exp %349 : vector<8x16xf32>
    %cst_79 = arith.constant 1.000000e+00 : f32
    %351 = vector.broadcast %cst_79 : f32 to vector<8x16xf32>
    %352 = arith.addf %351, %350 : vector<8x16xf32>
    %353 = arith.divf %351, %352 : vector<8x16xf32>
    %354 = vector.extract_strided_slice %316 {offsets = [0, 32], sizes = [8, 16], strides = [1, 1]} : vector<8x64xf32> to vector<8x16xf32>
    %355 = math.tanh %354 : vector<8x16xf32>
    %356 = vector.extract_strided_slice %316 {offsets = [0, 48], sizes = [8, 16], strides = [1, 1]} : vector<8x64xf32> to vector<8x16xf32>
    %357 = arith.negf %356 : vector<8x16xf32>
    %358 = math.exp %357 : vector<8x16xf32>
    %cst_80 = arith.constant 1.000000e+00 : f32
    %359 = vector.broadcast %cst_80 : f32 to vector<8x16xf32>
    %360 = arith.addf %359, %358 : vector<8x16xf32>
    %361 = arith.divf %359, %360 : vector<8x16xf32>
    %362 = arith.mulf %353, %305 : vector<8x16xf32>
    %363 = arith.mulf %347, %355 : vector<8x16xf32>
    %364 = arith.addf %362, %363 : vector<8x16xf32>
    %365 = math.tanh %364 : vector<8x16xf32>
    %366 = arith.mulf %361, %365 : vector<8x16xf32>
    %367 = vector.extract_strided_slice %366 {offsets = [0, 0], sizes = [2, 16], strides = [1, 1]} : vector<8x16xf32> to vector<2x16xf32>
    %368 = vector.extract_strided_slice %341 {offsets = [0, 0], sizes = [2, 16], strides = [1, 1]} : vector<8x16xf32> to vector<2x16xf32>
    %369 = tpu.concatenate %367, %368 in 1 : vector<2x16xf32>, vector<2x16xf32> -> vector<2x32xf32>
    %370 = vector.extract_strided_slice %63 {offsets = [40, 0], sizes = [8, 64], strides = [1, 1]} : vector<64x64xf32> to vector<8x64xf32>
    %cst_81 = arith.constant dense<0.000000e+00> : vector<8x64xf32>
    %371 = tpu.matmul %341, %69, %cst_81 {dimension_numbers = #tpu.dot_dimension_numbers<[1], [0], [0], [1], [0, 0, 1, 1], [], []>} : vector<8x16xf32>, vector<16x64xf32>, vector<8x64xf32> -> vector<8x64xf32>
    %372 = arith.addf %370, %371 : vector<8x64xf32>
    %373 = vector.extract_strided_slice %68 {offsets = [40, 0], sizes = [8, 64], strides = [1, 1]} : vector<64x64xf32> to vector<8x64xf32>
    %cst_82 = arith.constant dense<0.000000e+00> : vector<8x64xf32>
    %374 = tpu.matmul %366, %70, %cst_82 {dimension_numbers = #tpu.dot_dimension_numbers<[1], [0], [0], [1], [0, 0, 1, 1], [], []>} : vector<8x16xf32>, vector<16x64xf32>, vector<8x64xf32> -> vector<8x64xf32>
    %375 = arith.addf %373, %374 : vector<8x64xf32>
    %376 = vector.extract_strided_slice %372 {offsets = [0, 0], sizes = [8, 16], strides = [1, 1]} : vector<8x64xf32> to vector<8x16xf32>
    %377 = arith.negf %376 : vector<8x16xf32>
    %378 = math.exp %377 : vector<8x16xf32>
    %cst_83 = arith.constant 1.000000e+00 : f32
    %379 = vector.broadcast %cst_83 : f32 to vector<8x16xf32>
    %380 = arith.addf %379, %378 : vector<8x16xf32>
    %381 = arith.divf %379, %380 : vector<8x16xf32>
    %382 = vector.extract_strided_slice %372 {offsets = [0, 16], sizes = [8, 16], strides = [1, 1]} : vector<8x64xf32> to vector<8x16xf32>
    %383 = arith.negf %382 : vector<8x16xf32>
    %384 = math.exp %383 : vector<8x16xf32>
    %cst_84 = arith.constant 1.000000e+00 : f32
    %385 = vector.broadcast %cst_84 : f32 to vector<8x16xf32>
    %386 = arith.addf %385, %384 : vector<8x16xf32>
    %387 = arith.divf %385, %386 : vector<8x16xf32>
    %388 = vector.extract_strided_slice %372 {offsets = [0, 32], sizes = [8, 16], strides = [1, 1]} : vector<8x64xf32> to vector<8x16xf32>
    %389 = math.tanh %388 : vector<8x16xf32>
    %390 = vector.extract_strided_slice %372 {offsets = [0, 48], sizes = [8, 16], strides = [1, 1]} : vector<8x64xf32> to vector<8x16xf32>
    %391 = arith.negf %390 : vector<8x16xf32>
    %392 = math.exp %391 : vector<8x16xf32>
    %cst_85 = arith.constant 1.000000e+00 : f32
    %393 = vector.broadcast %cst_85 : f32 to vector<8x16xf32>
    %394 = arith.addf %393, %392 : vector<8x16xf32>
    %395 = arith.divf %393, %394 : vector<8x16xf32>
    %396 = arith.mulf %387, %339 : vector<8x16xf32>
    %397 = arith.mulf %381, %389 : vector<8x16xf32>
    %398 = arith.addf %396, %397 : vector<8x16xf32>
    %399 = math.tanh %398 : vector<8x16xf32>
    %400 = arith.mulf %395, %399 : vector<8x16xf32>
    %401 = vector.extract_strided_slice %375 {offsets = [0, 0], sizes = [8, 16], strides = [1, 1]} : vector<8x64xf32> to vector<8x16xf32>
    %402 = arith.negf %401 : vector<8x16xf32>
    %403 = math.exp %402 : vector<8x16xf32>
    %cst_86 = arith.constant 1.000000e+00 : f32
    %404 = vector.broadcast %cst_86 : f32 to vector<8x16xf32>
    %405 = arith.addf %404, %403 : vector<8x16xf32>
    %406 = arith.divf %404, %405 : vector<8x16xf32>
    %407 = vector.extract_strided_slice %375 {offsets = [0, 16], sizes = [8, 16], strides = [1, 1]} : vector<8x64xf32> to vector<8x16xf32>
    %408 = arith.negf %407 : vector<8x16xf32>
    %409 = math.exp %408 : vector<8x16xf32>
    %cst_87 = arith.constant 1.000000e+00 : f32
    %410 = vector.broadcast %cst_87 : f32 to vector<8x16xf32>
    %411 = arith.addf %410, %409 : vector<8x16xf32>
    %412 = arith.divf %410, %411 : vector<8x16xf32>
    %413 = vector.extract_strided_slice %375 {offsets = [0, 32], sizes = [8, 16], strides = [1, 1]} : vector<8x64xf32> to vector<8x16xf32>
    %414 = math.tanh %413 : vector<8x16xf32>
    %415 = vector.extract_strided_slice %375 {offsets = [0, 48], sizes = [8, 16], strides = [1, 1]} : vector<8x64xf32> to vector<8x16xf32>
    %416 = arith.negf %415 : vector<8x16xf32>
    %417 = math.exp %416 : vector<8x16xf32>
    %cst_88 = arith.constant 1.000000e+00 : f32
    %418 = vector.broadcast %cst_88 : f32 to vector<8x16xf32>
    %419 = arith.addf %418, %417 : vector<8x16xf32>
    %420 = arith.divf %418, %419 : vector<8x16xf32>
    %421 = arith.mulf %412, %364 : vector<8x16xf32>
    %422 = arith.mulf %406, %414 : vector<8x16xf32>
    %423 = arith.addf %421, %422 : vector<8x16xf32>
    %424 = math.tanh %423 : vector<8x16xf32>
    %425 = arith.mulf %420, %424 : vector<8x16xf32>
    %426 = vector.extract_strided_slice %425 {offsets = [0, 0], sizes = [2, 16], strides = [1, 1]} : vector<8x16xf32> to vector<2x16xf32>
    %427 = vector.extract_strided_slice %400 {offsets = [0, 0], sizes = [2, 16], strides = [1, 1]} : vector<8x16xf32> to vector<2x16xf32>
    %428 = tpu.concatenate %426, %427 in 1 : vector<2x16xf32>, vector<2x16xf32> -> vector<2x32xf32>
    %429 = vector.extract_strided_slice %63 {offsets = [48, 0], sizes = [8, 64], strides = [1, 1]} : vector<64x64xf32> to vector<8x64xf32>
    %cst_89 = arith.constant dense<0.000000e+00> : vector<8x64xf32>
    %430 = tpu.matmul %400, %69, %cst_89 {dimension_numbers = #tpu.dot_dimension_numbers<[1], [0], [0], [1], [0, 0, 1, 1], [], []>} : vector<8x16xf32>, vector<16x64xf32>, vector<8x64xf32> -> vector<8x64xf32>
    %431 = arith.addf %429, %430 : vector<8x64xf32>
    %432 = vector.extract_strided_slice %68 {offsets = [48, 0], sizes = [8, 64], strides = [1, 1]} : vector<64x64xf32> to vector<8x64xf32>
    %cst_90 = arith.constant dense<0.000000e+00> : vector<8x64xf32>
    %433 = tpu.matmul %425, %70, %cst_90 {dimension_numbers = #tpu.dot_dimension_numbers<[1], [0], [0], [1], [0, 0, 1, 1], [], []>} : vector<8x16xf32>, vector<16x64xf32>, vector<8x64xf32> -> vector<8x64xf32>
    %434 = arith.addf %432, %433 : vector<8x64xf32>
    %435 = vector.extract_strided_slice %431 {offsets = [0, 0], sizes = [8, 16], strides = [1, 1]} : vector<8x64xf32> to vector<8x16xf32>
    %436 = arith.negf %435 : vector<8x16xf32>
    %437 = math.exp %436 : vector<8x16xf32>
    %cst_91 = arith.constant 1.000000e+00 : f32
    %438 = vector.broadcast %cst_91 : f32 to vector<8x16xf32>
    %439 = arith.addf %438, %437 : vector<8x16xf32>
    %440 = arith.divf %438, %439 : vector<8x16xf32>
    %441 = vector.extract_strided_slice %431 {offsets = [0, 16], sizes = [8, 16], strides = [1, 1]} : vector<8x64xf32> to vector<8x16xf32>
    %442 = arith.negf %441 : vector<8x16xf32>
    %443 = math.exp %442 : vector<8x16xf32>
    %cst_92 = arith.constant 1.000000e+00 : f32
    %444 = vector.broadcast %cst_92 : f32 to vector<8x16xf32>
    %445 = arith.addf %444, %443 : vector<8x16xf32>
    %446 = arith.divf %444, %445 : vector<8x16xf32>
    %447 = vector.extract_strided_slice %431 {offsets = [0, 32], sizes = [8, 16], strides = [1, 1]} : vector<8x64xf32> to vector<8x16xf32>
    %448 = math.tanh %447 : vector<8x16xf32>
    %449 = vector.extract_strided_slice %431 {offsets = [0, 48], sizes = [8, 16], strides = [1, 1]} : vector<8x64xf32> to vector<8x16xf32>
    %450 = arith.negf %449 : vector<8x16xf32>
    %451 = math.exp %450 : vector<8x16xf32>
    %cst_93 = arith.constant 1.000000e+00 : f32
    %452 = vector.broadcast %cst_93 : f32 to vector<8x16xf32>
    %453 = arith.addf %452, %451 : vector<8x16xf32>
    %454 = arith.divf %452, %453 : vector<8x16xf32>
    %455 = arith.mulf %446, %398 : vector<8x16xf32>
    %456 = arith.mulf %440, %448 : vector<8x16xf32>
    %457 = arith.addf %455, %456 : vector<8x16xf32>
    %458 = math.tanh %457 : vector<8x16xf32>
    %459 = arith.mulf %454, %458 : vector<8x16xf32>
    %460 = vector.extract_strided_slice %434 {offsets = [0, 0], sizes = [8, 16], strides = [1, 1]} : vector<8x64xf32> to vector<8x16xf32>
    %461 = arith.negf %460 : vector<8x16xf32>
    %462 = math.exp %461 : vector<8x16xf32>
    %cst_94 = arith.constant 1.000000e+00 : f32
    %463 = vector.broadcast %cst_94 : f32 to vector<8x16xf32>
    %464 = arith.addf %463, %462 : vector<8x16xf32>
    %465 = arith.divf %463, %464 : vector<8x16xf32>
    %466 = vector.extract_strided_slice %434 {offsets = [0, 16], sizes = [8, 16], strides = [1, 1]} : vector<8x64xf32> to vector<8x16xf32>
    %467 = arith.negf %466 : vector<8x16xf32>
    %468 = math.exp %467 : vector<8x16xf32>
    %cst_95 = arith.constant 1.000000e+00 : f32
    %469 = vector.broadcast %cst_95 : f32 to vector<8x16xf32>
    %470 = arith.addf %469, %468 : vector<8x16xf32>
    %471 = arith.divf %469, %470 : vector<8x16xf32>
    %472 = vector.extract_strided_slice %434 {offsets = [0, 32], sizes = [8, 16], strides = [1, 1]} : vector<8x64xf32> to vector<8x16xf32>
    %473 = math.tanh %472 : vector<8x16xf32>
    %474 = vector.extract_strided_slice %434 {offsets = [0, 48], sizes = [8, 16], strides = [1, 1]} : vector<8x64xf32> to vector<8x16xf32>
    %475 = arith.negf %474 : vector<8x16xf32>
    %476 = math.exp %475 : vector<8x16xf32>
    %cst_96 = arith.constant 1.000000e+00 : f32
    %477 = vector.broadcast %cst_96 : f32 to vector<8x16xf32>
    %478 = arith.addf %477, %476 : vector<8x16xf32>
    %479 = arith.divf %477, %478 : vector<8x16xf32>
    %480 = arith.mulf %471, %423 : vector<8x16xf32>
    %481 = arith.mulf %465, %473 : vector<8x16xf32>
    %482 = arith.addf %480, %481 : vector<8x16xf32>
    %483 = math.tanh %482 : vector<8x16xf32>
    %484 = arith.mulf %479, %483 : vector<8x16xf32>
    %485 = vector.extract_strided_slice %484 {offsets = [0, 0], sizes = [2, 16], strides = [1, 1]} : vector<8x16xf32> to vector<2x16xf32>
    %486 = vector.extract_strided_slice %459 {offsets = [0, 0], sizes = [2, 16], strides = [1, 1]} : vector<8x16xf32> to vector<2x16xf32>
    %487 = tpu.concatenate %485, %486 in 1 : vector<2x16xf32>, vector<2x16xf32> -> vector<2x32xf32>
    %488 = vector.extract_strided_slice %63 {offsets = [56, 0], sizes = [8, 64], strides = [1, 1]} : vector<64x64xf32> to vector<8x64xf32>
    %cst_97 = arith.constant dense<0.000000e+00> : vector<8x64xf32>
    %489 = tpu.matmul %459, %69, %cst_97 {dimension_numbers = #tpu.dot_dimension_numbers<[1], [0], [0], [1], [0, 0, 1, 1], [], []>} : vector<8x16xf32>, vector<16x64xf32>, vector<8x64xf32> -> vector<8x64xf32>
    %490 = arith.addf %488, %489 : vector<8x64xf32>
    %491 = vector.extract_strided_slice %68 {offsets = [56, 0], sizes = [8, 64], strides = [1, 1]} : vector<64x64xf32> to vector<8x64xf32>
    %cst_98 = arith.constant dense<0.000000e+00> : vector<8x64xf32>
    %492 = tpu.matmul %484, %70, %cst_98 {dimension_numbers = #tpu.dot_dimension_numbers<[1], [0], [0], [1], [0, 0, 1, 1], [], []>} : vector<8x16xf32>, vector<16x64xf32>, vector<8x64xf32> -> vector<8x64xf32>
    %493 = arith.addf %491, %492 : vector<8x64xf32>
    %494 = vector.extract_strided_slice %490 {offsets = [0, 0], sizes = [8, 16], strides = [1, 1]} : vector<8x64xf32> to vector<8x16xf32>
    %495 = arith.negf %494 : vector<8x16xf32>
    %496 = math.exp %495 : vector<8x16xf32>
    %cst_99 = arith.constant 1.000000e+00 : f32
    %497 = vector.broadcast %cst_99 : f32 to vector<8x16xf32>
    %498 = arith.addf %497, %496 : vector<8x16xf32>
    %499 = arith.divf %497, %498 : vector<8x16xf32>
    %500 = vector.extract_strided_slice %490 {offsets = [0, 16], sizes = [8, 16], strides = [1, 1]} : vector<8x64xf32> to vector<8x16xf32>
    %501 = arith.negf %500 : vector<8x16xf32>
    %502 = math.exp %501 : vector<8x16xf32>
    %cst_100 = arith.constant 1.000000e+00 : f32
    %503 = vector.broadcast %cst_100 : f32 to vector<8x16xf32>
    %504 = arith.addf %503, %502 : vector<8x16xf32>
    %505 = arith.divf %503, %504 : vector<8x16xf32>
    %506 = vector.extract_strided_slice %490 {offsets = [0, 32], sizes = [8, 16], strides = [1, 1]} : vector<8x64xf32> to vector<8x16xf32>
    %507 = math.tanh %506 : vector<8x16xf32>
    %508 = vector.extract_strided_slice %490 {offsets = [0, 48], sizes = [8, 16], strides = [1, 1]} : vector<8x64xf32> to vector<8x16xf32>
    %509 = arith.negf %508 : vector<8x16xf32>
    %510 = math.exp %509 : vector<8x16xf32>
    %cst_101 = arith.constant 1.000000e+00 : f32
    %511 = vector.broadcast %cst_101 : f32 to vector<8x16xf32>
    %512 = arith.addf %511, %510 : vector<8x16xf32>
    %513 = arith.divf %511, %512 : vector<8x16xf32>
    %514 = arith.mulf %505, %457 : vector<8x16xf32>
    %515 = arith.mulf %499, %507 : vector<8x16xf32>
    %516 = arith.addf %514, %515 : vector<8x16xf32>
    %517 = math.tanh %516 : vector<8x16xf32>
    %518 = arith.mulf %513, %517 : vector<8x16xf32>
    %519 = vector.extract_strided_slice %493 {offsets = [0, 0], sizes = [8, 16], strides = [1, 1]} : vector<8x64xf32> to vector<8x16xf32>
    %520 = arith.negf %519 : vector<8x16xf32>
    %521 = math.exp %520 : vector<8x16xf32>
    %cst_102 = arith.constant 1.000000e+00 : f32
    %522 = vector.broadcast %cst_102 : f32 to vector<8x16xf32>
    %523 = arith.addf %522, %521 : vector<8x16xf32>
    %524 = arith.divf %522, %523 : vector<8x16xf32>
    %525 = vector.extract_strided_slice %493 {offsets = [0, 16], sizes = [8, 16], strides = [1, 1]} : vector<8x64xf32> to vector<8x16xf32>
    %526 = arith.negf %525 : vector<8x16xf32>
    %527 = math.exp %526 : vector<8x16xf32>
    %cst_103 = arith.constant 1.000000e+00 : f32
    %528 = vector.broadcast %cst_103 : f32 to vector<8x16xf32>
    %529 = arith.addf %528, %527 : vector<8x16xf32>
    %530 = arith.divf %528, %529 : vector<8x16xf32>
    %531 = vector.extract_strided_slice %493 {offsets = [0, 32], sizes = [8, 16], strides = [1, 1]} : vector<8x64xf32> to vector<8x16xf32>
    %532 = math.tanh %531 : vector<8x16xf32>
    %533 = vector.extract_strided_slice %493 {offsets = [0, 48], sizes = [8, 16], strides = [1, 1]} : vector<8x64xf32> to vector<8x16xf32>
    %534 = arith.negf %533 : vector<8x16xf32>
    %535 = math.exp %534 : vector<8x16xf32>
    %cst_104 = arith.constant 1.000000e+00 : f32
    %536 = vector.broadcast %cst_104 : f32 to vector<8x16xf32>
    %537 = arith.addf %536, %535 : vector<8x16xf32>
    %538 = arith.divf %536, %537 : vector<8x16xf32>
    %539 = arith.mulf %530, %482 : vector<8x16xf32>
    %540 = arith.mulf %524, %532 : vector<8x16xf32>
    %541 = arith.addf %539, %540 : vector<8x16xf32>
    %542 = math.tanh %541 : vector<8x16xf32>
    %543 = arith.mulf %538, %542 : vector<8x16xf32>
    %544 = vector.extract_strided_slice %543 {offsets = [0, 0], sizes = [2, 16], strides = [1, 1]} : vector<8x16xf32> to vector<2x16xf32>
    %545 = vector.extract_strided_slice %518 {offsets = [0, 0], sizes = [2, 16], strides = [1, 1]} : vector<8x16xf32> to vector<2x16xf32>
    %546 = tpu.concatenate %544, %545 in 1 : vector<2x16xf32>, vector<2x16xf32> -> vector<2x32xf32>
    %547 = tpu.concatenate %133, %192, %251, %310, %369, %428, %487, %546 in 0 : vector<2x32xf32>, vector<2x32xf32>, vector<2x32xf32>, vector<2x32xf32>, vector<2x32xf32>, vector<2x32xf32>, vector<2x32xf32>, vector<2x32xf32> -> vector<16x32xf32>
    %c0_105 = arith.constant 0 : index
    %c0_106 = arith.constant 0 : index
    %548 = vector.load %arg3[%c0_105, %c0_106] : memref<16x16xf32, #tpu.memory_space<vmem>>, vector<16x16xf32>
    %c0_107 = arith.constant 0 : index
    %c0_108 = arith.constant 0 : index
    %549 = vector.load %arg18[%c0_107, %c0_108] : memref<32x96xf32, #tpu.memory_space<vmem>>, vector<32x96xf32>
    %cst_109 = arith.constant dense<0.000000e+00> : vector<16x96xf32>
    %550 = tpu.matmul %547, %549, %cst_109 {dimension_numbers = #tpu.dot_dimension_numbers<[1], [0], [0], [1], [0, 0, 1, 1], [], []>} : vector<16x32xf32>, vector<32x96xf32>, vector<16x96xf32> -> vector<16x96xf32>
    %c0_110 = arith.constant 0 : index
    %c0_111 = arith.constant 0 : index
    %551 = vector.load %arg19[%c0_110, %c0_111] : memref<1x96xf32, #tpu.memory_space<vmem>>, vector<1x96xf32>
    %552 = vector.broadcast %551 : vector<1x96xf32> to vector<16x96xf32>
    %553 = arith.addf %550, %552 : vector<16x96xf32>
    %554 = vector.extract_strided_slice %553 {offsets = [0, 0], sizes = [16, 16], strides = [1, 1]} : vector<16x96xf32> to vector<16x16xf32>
    %555 = vector.extract_strided_slice %553 {offsets = [0, 32], sizes = [16, 16], strides = [1, 1]} : vector<16x96xf32> to vector<16x16xf32>
    %556 = vector.extract_strided_slice %553 {offsets = [0, 64], sizes = [16, 16], strides = [1, 1]} : vector<16x96xf32> to vector<16x16xf32>
    %cst_112 = arith.constant dense<0.000000e+00> : vector<16x16xf32>
    %557 = tpu.matmul %554, %555, %cst_112 {dimension_numbers = #tpu.dot_dimension_numbers<[1], [1], [0], [0], [0, 0, 1, 0], [], []>} : vector<16x16xf32>, vector<16x16xf32>, vector<16x16xf32> -> vector<16x16xf32>
    %cst_113 = arith.constant 2.500000e-01 : f32
    %558 = vector.broadcast %cst_113 : f32 to vector<16x16xf32>
    %559 = arith.mulf %557, %558 : vector<16x16xf32>
    %560 = arith.addf %559, %548 : vector<16x16xf32>
    %cst_114 = arith.constant dense<0xFF800000> : vector<16xf32>
    %561 = vector.multi_reduction <maximumf>, %560, %cst_114 [1] : vector<16x16xf32> to vector<16xf32>
    %562 = vector.shape_cast %561 : vector<16xf32> to vector<16x1xf32>
    %563 = vector.broadcast %562 : vector<16x1xf32> to vector<16x16xf32>
    %564 = arith.subf %560, %563 : vector<16x16xf32>
    %565 = math.exp %564 : vector<16x16xf32>
    %cst_115 = arith.constant dense<0.000000e+00> : vector<16xf32>
    %566 = vector.multi_reduction <add>, %565, %cst_115 [1] : vector<16x16xf32> to vector<16xf32>
    %567 = vector.shape_cast %566 : vector<16xf32> to vector<16x1xf32>
    %568 = vector.broadcast %567 : vector<16x1xf32> to vector<16x16xf32>
    %569 = arith.divf %565, %568 : vector<16x16xf32>
    %cst_116 = arith.constant dense<0.000000e+00> : vector<16x16xf32>
    %570 = tpu.matmul %569, %556, %cst_116 {dimension_numbers = #tpu.dot_dimension_numbers<[1], [0], [0], [1], [0, 0, 1, 1], [], []>} : vector<16x16xf32>, vector<16x16xf32>, vector<16x16xf32> -> vector<16x16xf32>
    %571 = vector.extract_strided_slice %553 {offsets = [0, 16], sizes = [16, 16], strides = [1, 1]} : vector<16x96xf32> to vector<16x16xf32>
    %572 = vector.extract_strided_slice %553 {offsets = [0, 48], sizes = [16, 16], strides = [1, 1]} : vector<16x96xf32> to vector<16x16xf32>
    %573 = vector.extract_strided_slice %553 {offsets = [0, 80], sizes = [16, 16], strides = [1, 1]} : vector<16x96xf32> to vector<16x16xf32>
    %cst_117 = arith.constant dense<0.000000e+00> : vector<16x16xf32>
    %574 = tpu.matmul %571, %572, %cst_117 {dimension_numbers = #tpu.dot_dimension_numbers<[1], [1], [0], [0], [0, 0, 1, 0], [], []>} : vector<16x16xf32>, vector<16x16xf32>, vector<16x16xf32> -> vector<16x16xf32>
    %cst_118 = arith.constant 2.500000e-01 : f32
    %575 = vector.broadcast %cst_118 : f32 to vector<16x16xf32>
    %576 = arith.mulf %574, %575 : vector<16x16xf32>
    %577 = arith.addf %576, %548 : vector<16x16xf32>
    %cst_119 = arith.constant dense<0xFF800000> : vector<16xf32>
    %578 = vector.multi_reduction <maximumf>, %577, %cst_119 [1] : vector<16x16xf32> to vector<16xf32>
    %579 = vector.shape_cast %578 : vector<16xf32> to vector<16x1xf32>
    %580 = vector.broadcast %579 : vector<16x1xf32> to vector<16x16xf32>
    %581 = arith.subf %577, %580 : vector<16x16xf32>
    %582 = math.exp %581 : vector<16x16xf32>
    %cst_120 = arith.constant dense<0.000000e+00> : vector<16xf32>
    %583 = vector.multi_reduction <add>, %582, %cst_120 [1] : vector<16x16xf32> to vector<16xf32>
    %584 = vector.shape_cast %583 : vector<16xf32> to vector<16x1xf32>
    %585 = vector.broadcast %584 : vector<16x1xf32> to vector<16x16xf32>
    %586 = arith.divf %582, %585 : vector<16x16xf32>
    %cst_121 = arith.constant dense<0.000000e+00> : vector<16x16xf32>
    %587 = tpu.matmul %586, %573, %cst_121 {dimension_numbers = #tpu.dot_dimension_numbers<[1], [0], [0], [1], [0, 0, 1, 1], [], []>} : vector<16x16xf32>, vector<16x16xf32>, vector<16x16xf32> -> vector<16x16xf32>
    %588 = tpu.concatenate %570, %587 in 1 : vector<16x16xf32>, vector<16x16xf32> -> vector<16x32xf32>
    %c0_122 = arith.constant 0 : index
    %c0_123 = arith.constant 0 : index
    %589 = vector.load %arg20[%c0_122, %c0_123] : memref<32x32xf32, #tpu.memory_space<vmem>>, vector<32x32xf32>
    %cst_124 = arith.constant dense<0.000000e+00> : vector<16x32xf32>
    %590 = tpu.matmul %588, %589, %cst_124 {dimension_numbers = #tpu.dot_dimension_numbers<[1], [0], [0], [1], [0, 0, 1, 1], [], []>} : vector<16x32xf32>, vector<32x32xf32>, vector<16x32xf32> -> vector<16x32xf32>
    %c0_125 = arith.constant 0 : index
    %c0_126 = arith.constant 0 : index
    %591 = vector.load %arg21[%c0_125, %c0_126] : memref<1x32xf32, #tpu.memory_space<vmem>>, vector<1x32xf32>
    %592 = vector.broadcast %591 : vector<1x32xf32> to vector<16x32xf32>
    %593 = arith.addf %590, %592 : vector<16x32xf32>
    %594 = arith.addf %547, %593 : vector<16x32xf32>
    %c0_127 = arith.constant 0 : index
    %c0_128 = arith.constant 0 : index
    %595 = vector.load %arg26[%c0_127, %c0_128] : memref<1x32xf32, #tpu.memory_space<vmem>>, vector<1x32xf32>
    %c0_129 = arith.constant 0 : index
    %c0_130 = arith.constant 0 : index
    %596 = vector.load %arg27[%c0_129, %c0_130] : memref<1x32xf32, #tpu.memory_space<vmem>>, vector<1x32xf32>
    %cst_131 = arith.constant dense<0.000000e+00> : vector<16xf32>
    %597 = vector.multi_reduction <add>, %594, %cst_131 [1] : vector<16x32xf32> to vector<16xf32>
    %598 = vector.shape_cast %597 : vector<16xf32> to vector<16x1xf32>
    %cst_132 = arith.constant 3.200000e+01 : f32
    %599 = vector.broadcast %cst_132 : f32 to vector<16x1xf32>
    %600 = arith.divf %598, %599 : vector<16x1xf32>
    %601 = vector.broadcast %600 : vector<16x1xf32> to vector<16x32xf32>
    %602 = arith.subf %594, %601 : vector<16x32xf32>
    %603 = arith.mulf %602, %602 : vector<16x32xf32>
    %cst_133 = arith.constant dense<0.000000e+00> : vector<16xf32>
    %604 = vector.multi_reduction <add>, %603, %cst_133 [1] : vector<16x32xf32> to vector<16xf32>
    %605 = vector.shape_cast %604 : vector<16xf32> to vector<16x1xf32>
    %cst_134 = arith.constant 3.200000e+01 : f32
    %606 = vector.broadcast %cst_134 : f32 to vector<16x1xf32>
    %607 = arith.divf %605, %606 : vector<16x1xf32>
    %cst_135 = arith.constant 9.99999974E-6 : f32
    %608 = vector.broadcast %cst_135 : f32 to vector<16x1xf32>
    %609 = arith.addf %607, %608 : vector<16x1xf32>
    %610 = math.rsqrt %609 : vector<16x1xf32>
    %611 = vector.broadcast %610 : vector<16x1xf32> to vector<16x32xf32>
    %612 = arith.mulf %602, %611 : vector<16x32xf32>
    %613 = vector.broadcast %595 : vector<1x32xf32> to vector<16x32xf32>
    %614 = arith.mulf %612, %613 : vector<16x32xf32>
    %615 = vector.broadcast %596 : vector<1x32xf32> to vector<16x32xf32>
    %616 = arith.addf %614, %615 : vector<16x32xf32>
    %617 = arith.truncf %616 : vector<16x32xf32> to vector<16x32xbf16>
    %c0_136 = arith.constant 0 : index
    %c0_137 = arith.constant 0 : index
    %618 = vector.load %arg22[%c0_136, %c0_137] : memref<32x2048xbf16, #tpu.memory_space<vmem>>, vector<32x2048xbf16>
    %cst_138 = arith.constant dense<0.000000e+00> : vector<16x2048xf32>
    %619 = tpu.matmul %617, %618, %cst_138 {dimension_numbers = #tpu.dot_dimension_numbers<[1], [0], [0], [1], [0, 0, 1, 1], [], []>} : vector<16x32xbf16>, vector<32x2048xbf16>, vector<16x2048xf32> -> vector<16x2048xf32>
    %c0_139 = arith.constant 0 : index
    %c0_140 = arith.constant 0 : index
    %620 = vector.load %arg23[%c0_139, %c0_140] : memref<1x2048xf32, #tpu.memory_space<vmem>>, vector<1x2048xf32>
    %621 = vector.broadcast %620 : vector<1x2048xf32> to vector<16x2048xf32>
    %622 = arith.addf %619, %621 : vector<16x2048xf32>
    %cst_141 = arith.constant 0.000000e+00 : f32
    %623 = vector.broadcast %cst_141 : f32 to vector<16x2048xf32>
    %624 = arith.maximumf %622, %623 : vector<16x2048xf32>
    %625 = arith.truncf %624 : vector<16x2048xf32> to vector<16x2048xbf16>
    %c0_142 = arith.constant 0 : index
    %c0_143 = arith.constant 0 : index
    %626 = vector.load %arg24[%c0_142, %c0_143] : memref<2048x32xbf16, #tpu.memory_space<vmem>>, vector<2048x32xbf16>
    %cst_144 = arith.constant dense<0.000000e+00> : vector<16x32xf32>
    %627 = tpu.matmul %625, %626, %cst_144 {dimension_numbers = #tpu.dot_dimension_numbers<[1], [0], [0], [1], [0, 0, 1, 1], [], []>} : vector<16x2048xbf16>, vector<2048x32xbf16>, vector<16x32xf32> -> vector<16x32xf32>
    %c0_145 = arith.constant 0 : index
    %c0_146 = arith.constant 0 : index
    %628 = vector.load %arg25[%c0_145, %c0_146] : memref<1x32xf32, #tpu.memory_space<vmem>>, vector<1x32xf32>
    %629 = vector.broadcast %628 : vector<1x32xf32> to vector<16x32xf32>
    %630 = arith.addf %627, %629 : vector<16x32xf32>
    %631 = arith.addf %616, %630 : vector<16x32xf32>
    %c0_147 = arith.constant 0 : index
    %c0_148 = arith.constant 0 : index
    %632 = vector.load %arg28[%c0_147, %c0_148] : memref<1x32xf32, #tpu.memory_space<vmem>>, vector<1x32xf32>
    %c0_149 = arith.constant 0 : index
    %c0_150 = arith.constant 0 : index
    %633 = vector.load %arg29[%c0_149, %c0_150] : memref<1x32xf32, #tpu.memory_space<vmem>>, vector<1x32xf32>
    %cst_151 = arith.constant dense<0.000000e+00> : vector<16xf32>
    %634 = vector.multi_reduction <add>, %631, %cst_151 [1] : vector<16x32xf32> to vector<16xf32>
    %635 = vector.shape_cast %634 : vector<16xf32> to vector<16x1xf32>
    %cst_152 = arith.constant 3.200000e+01 : f32
    %636 = vector.broadcast %cst_152 : f32 to vector<16x1xf32>
    %637 = arith.divf %635, %636 : vector<16x1xf32>
    %638 = vector.broadcast %637 : vector<16x1xf32> to vector<16x32xf32>
    %639 = arith.subf %631, %638 : vector<16x32xf32>
    %640 = arith.mulf %639, %639 : vector<16x32xf32>
    %cst_153 = arith.constant dense<0.000000e+00> : vector<16xf32>
    %641 = vector.multi_reduction <add>, %640, %cst_153 [1] : vector<16x32xf32> to vector<16xf32>
    %642 = vector.shape_cast %641 : vector<16xf32> to vector<16x1xf32>
    %cst_154 = arith.constant 3.200000e+01 : f32
    %643 = vector.broadcast %cst_154 : f32 to vector<16x1xf32>
    %644 = arith.divf %642, %643 : vector<16x1xf32>
    %cst_155 = arith.constant 9.99999974E-6 : f32
    %645 = vector.broadcast %cst_155 : f32 to vector<16x1xf32>
    %646 = arith.addf %644, %645 : vector<16x1xf32>
    %647 = math.rsqrt %646 : vector<16x1xf32>
    %648 = vector.broadcast %647 : vector<16x1xf32> to vector<16x32xf32>
    %649 = arith.mulf %639, %648 : vector<16x32xf32>
    %650 = vector.broadcast %632 : vector<1x32xf32> to vector<16x32xf32>
    %651 = arith.mulf %649, %650 : vector<16x32xf32>
    %652 = vector.broadcast %633 : vector<1x32xf32> to vector<16x32xf32>
    %653 = arith.addf %651, %652 : vector<16x32xf32>
    %654 = vector.extract_strided_slice %653 {offsets = [0, 0], sizes = [1, 32], strides = [1, 1]} : vector<16x32xf32> to vector<1x32xf32>
    %655 = vector.extract_strided_slice %653 {offsets = [8, 0], sizes = [1, 32], strides = [1, 1]} : vector<16x32xf32> to vector<1x32xf32>
    %656 = tpu.concatenate %654, %655 in 0 : vector<1x32xf32>, vector<1x32xf32> -> vector<2x32xf32>
    %657 = vector.extract_strided_slice %653 {offsets = [1, 0], sizes = [1, 32], strides = [1, 1]} : vector<16x32xf32> to vector<1x32xf32>
    %658 = vector.extract_strided_slice %653 {offsets = [9, 0], sizes = [1, 32], strides = [1, 1]} : vector<16x32xf32> to vector<1x32xf32>
    %659 = tpu.concatenate %657, %658 in 0 : vector<1x32xf32>, vector<1x32xf32> -> vector<2x32xf32>
    %660 = vector.extract_strided_slice %653 {offsets = [2, 0], sizes = [1, 32], strides = [1, 1]} : vector<16x32xf32> to vector<1x32xf32>
    %661 = vector.extract_strided_slice %653 {offsets = [10, 0], sizes = [1, 32], strides = [1, 1]} : vector<16x32xf32> to vector<1x32xf32>
    %662 = tpu.concatenate %660, %661 in 0 : vector<1x32xf32>, vector<1x32xf32> -> vector<2x32xf32>
    %663 = vector.extract_strided_slice %653 {offsets = [3, 0], sizes = [1, 32], strides = [1, 1]} : vector<16x32xf32> to vector<1x32xf32>
    %664 = vector.extract_strided_slice %653 {offsets = [11, 0], sizes = [1, 32], strides = [1, 1]} : vector<16x32xf32> to vector<1x32xf32>
    %665 = tpu.concatenate %663, %664 in 0 : vector<1x32xf32>, vector<1x32xf32> -> vector<2x32xf32>
    %666 = vector.extract_strided_slice %653 {offsets = [4, 0], sizes = [1, 32], strides = [1, 1]} : vector<16x32xf32> to vector<1x32xf32>
    %667 = vector.extract_strided_slice %653 {offsets = [12, 0], sizes = [1, 32], strides = [1, 1]} : vector<16x32xf32> to vector<1x32xf32>
    %668 = tpu.concatenate %666, %667 in 0 : vector<1x32xf32>, vector<1x32xf32> -> vector<2x32xf32>
    %669 = vector.extract_strided_slice %653 {offsets = [5, 0], sizes = [1, 32], strides = [1, 1]} : vector<16x32xf32> to vector<1x32xf32>
    %670 = vector.extract_strided_slice %653 {offsets = [13, 0], sizes = [1, 32], strides = [1, 1]} : vector<16x32xf32> to vector<1x32xf32>
    %671 = tpu.concatenate %669, %670 in 0 : vector<1x32xf32>, vector<1x32xf32> -> vector<2x32xf32>
    %672 = vector.extract_strided_slice %653 {offsets = [6, 0], sizes = [1, 32], strides = [1, 1]} : vector<16x32xf32> to vector<1x32xf32>
    %673 = vector.extract_strided_slice %653 {offsets = [14, 0], sizes = [1, 32], strides = [1, 1]} : vector<16x32xf32> to vector<1x32xf32>
    %674 = tpu.concatenate %672, %673 in 0 : vector<1x32xf32>, vector<1x32xf32> -> vector<2x32xf32>
    %675 = vector.extract_strided_slice %653 {offsets = [7, 0], sizes = [1, 32], strides = [1, 1]} : vector<16x32xf32> to vector<1x32xf32>
    %676 = vector.extract_strided_slice %653 {offsets = [15, 0], sizes = [1, 32], strides = [1, 1]} : vector<16x32xf32> to vector<1x32xf32>
    %677 = tpu.concatenate %675, %676 in 0 : vector<1x32xf32>, vector<1x32xf32> -> vector<2x32xf32>
    %678 = tpu.concatenate %656, %659, %662, %665, %668, %671, %674, %677 in 1 : vector<2x32xf32>, vector<2x32xf32>, vector<2x32xf32>, vector<2x32xf32>, vector<2x32xf32>, vector<2x32xf32>, vector<2x32xf32>, vector<2x32xf32> -> vector<2x256xf32>
    %c0_156 = arith.constant 0 : index
    %c0_157 = arith.constant 0 : index
    %679 = vector.load %arg2[%c0_156, %c0_157] : memref<2x1024xf32, #tpu.memory_space<vmem>>, vector<2x1024xf32>
    %680 = arith.truncf %678 : vector<2x256xf32> to vector<2x256xbf16>
    %c0_158 = arith.constant 0 : index
    %c0_159 = arith.constant 0 : index
    %681 = vector.load %arg30[%c0_158, %c0_159] : memref<256x512xbf16, #tpu.memory_space<vmem>>, vector<256x512xbf16>
    %cst_160 = arith.constant dense<0.000000e+00> : vector<2x512xf32>
    %682 = tpu.matmul %680, %681, %cst_160 {dimension_numbers = #tpu.dot_dimension_numbers<[1], [0], [0], [1], [0, 0, 1, 1], [], []>} : vector<2x256xbf16>, vector<256x512xbf16>, vector<2x512xf32> -> vector<2x512xf32>
    %683 = arith.truncf %679 : vector<2x1024xf32> to vector<2x1024xbf16>
    %c0_161 = arith.constant 0 : index
    %c0_162 = arith.constant 0 : index
    %684 = vector.load %arg31[%c0_161, %c0_162] : memref<1024x512xbf16, #tpu.memory_space<vmem>>, vector<1024x512xbf16>
    %cst_163 = arith.constant dense<0.000000e+00> : vector<2x512xf32>
    %685 = tpu.matmul %683, %684, %cst_163 {dimension_numbers = #tpu.dot_dimension_numbers<[1], [0], [0], [1], [0, 0, 1, 1], [], []>} : vector<2x1024xbf16>, vector<1024x512xbf16>, vector<2x512xf32> -> vector<2x512xf32>
    %686 = arith.addf %682, %685 : vector<2x512xf32>
    %c0_164 = arith.constant 0 : index
    %c0_165 = arith.constant 0 : index
    %687 = vector.load %arg32[%c0_164, %c0_165] : memref<1x512xf32, #tpu.memory_space<vmem>>, vector<1x512xf32>
    %688 = vector.broadcast %687 : vector<1x512xf32> to vector<2x512xf32>
    %689 = arith.addf %686, %688 : vector<2x512xf32>
    %cst_166 = arith.constant 0.000000e+00 : f32
    %690 = vector.broadcast %cst_166 : f32 to vector<2x512xf32>
    %691 = arith.maximumf %689, %690 : vector<2x512xf32>
    %692 = vector.extract_strided_slice %691 {offsets = [0, 0], sizes = [2, 256], strides = [1, 1]} : vector<2x512xf32> to vector<2x256xf32>
    %693 = arith.truncf %692 : vector<2x256xf32> to vector<2x256xbf16>
    %c0_167 = arith.constant 0 : index
    %c0_168 = arith.constant 0 : index
    %694 = vector.load %arg33[%c0_167, %c0_168] : memref<256x1280xbf16, #tpu.memory_space<vmem>>, vector<256x1280xbf16>
    %cst_169 = arith.constant dense<0.000000e+00> : vector<2x1280xf32>
    %695 = tpu.matmul %693, %694, %cst_169 {dimension_numbers = #tpu.dot_dimension_numbers<[1], [0], [0], [1], [0, 0, 1, 1], [], []>} : vector<2x256xbf16>, vector<256x1280xbf16>, vector<2x1280xf32> -> vector<2x1280xf32>
    %c0_170 = arith.constant 0 : index
    %c0_171 = arith.constant 0 : index
    %696 = vector.load %arg34[%c0_170, %c0_171] : memref<1x1280xf32, #tpu.memory_space<vmem>>, vector<1x1280xf32>
    %697 = vector.broadcast %696 : vector<1x1280xf32> to vector<2x1280xf32>
    %698 = arith.addf %695, %697 : vector<2x1280xf32>
    %c0_172 = arith.constant 0 : index
    %c0_173 = arith.constant 0 : index
    %699 = vector.load %arg43[%c0_172, %c0_173] : memref<2x1280xf32, #tpu.memory_space<vmem>>, vector<2x1280xf32>
    tpu.vector_store %arg43[%c0_172, %c0_173], %698 {strides = array<i32>} : memref<2x1280xf32, #tpu.memory_space<vmem>>, vector<2x1280xf32>,
    %700 = vector.extract_strided_slice %698 {offsets = [0, 0], sizes = [2, 256], strides = [1, 1]} : vector<2x1280xf32> to vector<2x256xf32>
    %701 = arith.subf %700, %678 : vector<2x256xf32>
    %702 = vector.extract_strided_slice %698 {offsets = [0, 256], sizes = [2, 1024], strides = [1, 1]} : vector<2x1280xf32> to vector<2x1024xf32>
    %703 = arith.subf %702, %679 : vector<2x1024xf32>
    %704 = arith.mulf %701, %701 : vector<2x256xf32>
    %cst_174 = arith.constant dense<0.000000e+00> : vector<2xf32>
    %705 = vector.multi_reduction <add>, %704, %cst_174 [1] : vector<2x256xf32> to vector<2xf32>
    %706 = vector.shape_cast %705 : vector<2xf32> to vector<2x1xf32>
    %707 = arith.mulf %703, %703 : vector<2x1024xf32>
    %cst_175 = arith.constant dense<0.000000e+00> : vector<2xf32>
    %708 = vector.multi_reduction <add>, %707, %cst_175 [1] : vector<2x1024xf32> to vector<2xf32>
    %709 = vector.shape_cast %708 : vector<2xf32> to vector<2x1xf32>
    %710 = arith.addf %706, %709 : vector<2x1xf32>
    %cst_176 = arith.constant dense<0.000000e+00> : vector<1xf32>
    %711 = vector.multi_reduction <add>, %710, %cst_176 [0] : vector<2x1xf32> to vector<1xf32>
    %712 = vector.shape_cast %711 : vector<1xf32> to vector<1x1xf32>
    %cst_177 = arith.constant 2.560000e+03 : f32
    %713 = vector.broadcast %cst_177 : f32 to vector<1x1xf32>
    %714 = arith.divf %712, %713 : vector<1x1xf32>
    %715 = math.absf %692 : vector<2x256xf32>
    %cst_178 = arith.constant dense<0.000000e+00> : vector<2xf32>
    %716 = vector.multi_reduction <add>, %715, %cst_178 [1] : vector<2x256xf32> to vector<2xf32>
    %717 = vector.shape_cast %716 : vector<2xf32> to vector<2x1xf32>
    %cst_179 = arith.constant dense<0.000000e+00> : vector<1xf32>
    %718 = vector.multi_reduction <add>, %717, %cst_179 [0] : vector<2x1xf32> to vector<1xf32>
    %719 = vector.shape_cast %718 : vector<1xf32> to vector<1x1xf32>
    %cst_180 = arith.constant 5.120000e+02 : f32
    %720 = vector.broadcast %cst_180 : f32 to vector<1x1xf32>
    %721 = arith.divf %719, %720 : vector<1x1xf32>
    %cst_181 = arith.constant 1.000000e-03 : f32
    %722 = vector.broadcast %cst_181 : f32 to vector<1x1xf32>
    %723 = arith.mulf %722, %721 : vector<1x1xf32>
    %724 = arith.addf %714, %723 : vector<1x1xf32>
    %725 = vector.extract_strided_slice %691 {offsets = [0, 256], sizes = [2, 128], strides = [1, 1]} : vector<2x512xf32> to vector<2x128xf32>
    %726 = vector.extract_strided_slice %691 {offsets = [0, 384], sizes = [2, 128], strides = [1, 1]} : vector<2x512xf32> to vector<2x128xf32>
    %c0_182 = arith.constant 0 : index
    %c0_183 = arith.constant 0 : index
    %727 = vector.load %arg35[%c0_182, %c0_183] : memref<128x16xf32, #tpu.memory_space<vmem>>, vector<128x16xf32>
    %cst_184 = arith.constant dense<0.000000e+00> : vector<2x16xf32>
    %728 = tpu.matmul %725, %727, %cst_184 {dimension_numbers = #tpu.dot_dimension_numbers<[1], [0], [0], [1], [0, 0, 1, 1], [], []>} : vector<2x128xf32>, vector<128x16xf32>, vector<2x16xf32> -> vector<2x16xf32>
    %c0_185 = arith.constant 0 : index
    %c0_186 = arith.constant 0 : index
    %729 = vector.load %arg36[%c0_185, %c0_186] : memref<1x16xf32, #tpu.memory_space<vmem>>, vector<1x16xf32>
    %730 = vector.broadcast %729 : vector<1x16xf32> to vector<2x16xf32>
    %731 = arith.addf %728, %730 : vector<2x16xf32>
    %cst_187 = arith.constant 0.000000e+00 : f32
    %732 = vector.broadcast %cst_187 : f32 to vector<2x16xf32>
    %733 = arith.maximumf %731, %732 : vector<2x16xf32>
    %c0_188 = arith.constant 0 : index
    %c0_189 = arith.constant 0 : index
    %734 = vector.load %arg37[%c0_188, %c0_189] : memref<16x4xf32, #tpu.memory_space<vmem>>, vector<16x4xf32>
    %cst_190 = arith.constant dense<0.000000e+00> : vector<2x4xf32>
    %735 = tpu.matmul %733, %734, %cst_190 {dimension_numbers = #tpu.dot_dimension_numbers<[1], [0], [0], [1], [0, 0, 1, 1], [], []>} : vector<2x16xf32>, vector<16x4xf32>, vector<2x4xf32> -> vector<2x4xf32>
    %c0_191 = arith.constant 0 : index
    %c0_192 = arith.constant 0 : index
    %736 = vector.load %arg38[%c0_191, %c0_192] : memref<1x4xf32, #tpu.memory_space<vmem>>, vector<1x4xf32>
    %737 = vector.broadcast %736 : vector<1x4xf32> to vector<2x4xf32>
    %738 = arith.addf %735, %737 : vector<2x4xf32>
    %c0_193 = arith.constant 0 : index
    %c0_194 = arith.constant 0 : index
    %739 = vector.load %arg39[%c0_193, %c0_194] : memref<128x16xf32, #tpu.memory_space<vmem>>, vector<128x16xf32>
    %cst_195 = arith.constant dense<0.000000e+00> : vector<2x16xf32>
    %740 = tpu.matmul %726, %739, %cst_195 {dimension_numbers = #tpu.dot_dimension_numbers<[1], [0], [0], [1], [0, 0, 1, 1], [], []>} : vector<2x128xf32>, vector<128x16xf32>, vector<2x16xf32> -> vector<2x16xf32>
    %c0_196 = arith.constant 0 : index
    %c0_197 = arith.constant 0 : index
    %741 = vector.load %arg40[%c0_196, %c0_197] : memref<1x16xf32, #tpu.memory_space<vmem>>, vector<1x16xf32>
    %742 = vector.broadcast %741 : vector<1x16xf32> to vector<2x16xf32>
    %743 = arith.addf %740, %742 : vector<2x16xf32>
    %cst_198 = arith.constant 0.000000e+00 : f32
    %744 = vector.broadcast %cst_198 : f32 to vector<2x16xf32>
    %745 = arith.maximumf %743, %744 : vector<2x16xf32>
    %c0_199 = arith.constant 0 : index
    %c0_200 = arith.constant 0 : index
    %746 = vector.load %arg41[%c0_199, %c0_200] : memref<16x4xf32, #tpu.memory_space<vmem>>, vector<16x4xf32>
    %cst_201 = arith.constant dense<0.000000e+00> : vector<2x4xf32>
    %747 = tpu.matmul %745, %746, %cst_201 {dimension_numbers = #tpu.dot_dimension_numbers<[1], [0], [0], [1], [0, 0, 1, 1], [], []>} : vector<2x16xf32>, vector<16x4xf32>, vector<2x4xf32> -> vector<2x4xf32>
    %c0_202 = arith.constant 0 : index
    %c0_203 = arith.constant 0 : index
    %748 = vector.load %arg42[%c0_202, %c0_203] : memref<1x4xf32, #tpu.memory_space<vmem>>, vector<1x4xf32>
    %749 = vector.broadcast %748 : vector<1x4xf32> to vector<2x4xf32>
    %750 = arith.addf %747, %749 : vector<2x4xf32>
    %cst_204 = arith.constant dense<0xFF800000> : vector<2xf32>
    %751 = vector.multi_reduction <maximumf>, %750, %cst_204 [1] : vector<2x4xf32> to vector<2xf32>
    %752 = vector.shape_cast %751 : vector<2xf32> to vector<2x1xf32>
    %753 = vector.broadcast %752 : vector<2x1xf32> to vector<2x4xf32>
    %754 = arith.subf %750, %753 : vector<2x4xf32>
    %755 = math.exp %754 : vector<2x4xf32>
    %cst_205 = arith.constant dense<0.000000e+00> : vector<2xf32>
    %756 = vector.multi_reduction <add>, %755, %cst_205 [1] : vector<2x4xf32> to vector<2xf32>
    %757 = vector.shape_cast %756 : vector<2xf32> to vector<2x1xf32>
    %758 = vector.broadcast %757 : vector<2x1xf32> to vector<2x4xf32>
    %759 = arith.divf %755, %758 : vector<2x4xf32>
    %cst_206 = arith.constant 0.000000e+00 : f32
    %760 = vector.broadcast %cst_206 : f32 to vector<64x16xf32>
    %c0_207 = arith.constant 0 : index
    %c0_208 = arith.constant 0 : index
    %761 = vector.load %arg44[%c0_207, %c0_208] : memref<64x16xf32, #tpu.memory_space<vmem>>, vector<64x16xf32>
    tpu.vector_store %arg44[%c0_207, %c0_208], %760 {strides = array<i32>} : memref<64x16xf32, #tpu.memory_space<vmem>>, vector<64x16xf32>,
    %c0_209 = arith.constant 0 : index
    %c0_210 = arith.constant 0 : index
    %762 = vector.load %arg44[%c0_209, %c0_210] : memref<64x16xf32, #tpu.memory_space<vmem>>, vector<64x2xf32>
    tpu.vector_store %arg44[%c0_209, %c0_210], %52 {strides = array<i32>} : memref<64x16xf32, #tpu.memory_space<vmem>>, vector<64x2xf32>,
    %c0_211 = arith.constant 0 : index
    %c2 = arith.constant 2 : index
    %763 = vector.load %arg44[%c0_211, %c2] : memref<64x16xf32, #tpu.memory_space<vmem>>, vector<2x4xf32>
    tpu.vector_store %arg44[%c0_211, %c2], %750 {strides = array<i32>} : memref<64x16xf32, #tpu.memory_space<vmem>>, vector<2x4xf32>,
    %c0_212 = arith.constant 0 : index
    %c6 = arith.constant 6 : index
    %764 = vector.load %arg44[%c0_212, %c6] : memref<64x16xf32, #tpu.memory_space<vmem>>, vector<2x4xf32>
    tpu.vector_store %arg44[%c0_212, %c6], %738 {strides = array<i32>} : memref<64x16xf32, #tpu.memory_space<vmem>>, vector<2x4xf32>,
    %c0_213 = arith.constant 0 : index
    %c10 = arith.constant 10 : index
    %765 = vector.load %arg44[%c0_213, %c10] : memref<64x16xf32, #tpu.memory_space<vmem>>, vector<2x4xf32>
    tpu.vector_store %arg44[%c0_213, %c10], %759 {strides = array<i32>} : memref<64x16xf32, #tpu.memory_space<vmem>>, vector<2x4xf32>,
    %c0_214 = arith.constant 0 : index
    %c14 = arith.constant 14 : index
    %766 = vector.load %arg44[%c0_214, %c14] : memref<64x16xf32, #tpu.memory_space<vmem>>, vector<1x1xf32>
    tpu.vector_store %arg44[%c0_214, %c14], %724 {strides = array<i32>} : memref<64x16xf32, #tpu.memory_space<vmem>>, vector<1x1xf32>,
    return
  }
}

</mosaic_0001>

<llo_original>
// kernel: our_model_forward.1
$region0: #{our_model_forward.1}
  #allocation0 [shape = 'u32[]', space=smem, size = 0x4, offset = 0x4, fixed_abs, tag = 'smem constant byte address 0x4 - core index']
  #allocation1 [shape = 'u32[144,128]{1,0:T(1,128)}', space=vmem, size = 0x12000, scoped, tag = 'internal scratch']
  #allocation2 [shape = 'f32[1,1]{1,0:T(1,128)S(1)}', space=vmem, size = 0x200, scoped, tag = 'scoped memory for our_model_forward.1']
  #allocation3 [shape = 'f32[1,1]{1,0:T(1,128)S(1)}', space=vmem, size = 0x200, scoped, tag = 'scoped memory for our_model_forward.1']
  %s0 = inlined_call_operand.smem [shape: u32[45], index: -1, kind: input, shape index: {}]
  %s1 = sld [smem:[%s0]]
  %s2 = scalar_lea.smem %s0, 1
  %s3 = sld [smem:[%s2]]
  %s4 = scalar_lea.smem %s0, 2
  %s5 = sld [smem:[%s4]]
  %s6 = scalar_lea.smem %s0, 3
  %s7 = sld [smem:[%s6]]
  %s8 = scalar_lea.smem %s0, 4
  %s9 = sld [smem:[%s8]]
  %s10 = scalar_lea.smem %s0, 5
  %s11 = sld [smem:[%s10]]
  %s12 = scalar_lea.smem %s0, 6
  %s13 = sld [smem:[%s12]]
  %s14 = scalar_lea.smem %s0, 7
  %s15 = sld [smem:[%s14]]
  %s16 = scalar_lea.smem %s0, 8
  %s17 = sld [smem:[%s16]]
  %s18 = scalar_lea.smem %s0, 9
  %s19 = sld [smem:[%s18]]
  %s20 = scalar_lea.smem %s0, 10
  %s21 = sld [smem:[%s20]]
  %s22 = scalar_lea.smem %s0, 11
  %s23 = sld [smem:[%s22]]
  %s24 = scalar_lea.smem %s0, 12
  %s25 = sld [smem:[%s24]]
  %s26 = scalar_lea.smem %s0, 13
  %s27 = sld [smem:[%s26]]
  %s28 = scalar_lea.smem %s0, 14
  %s29 = sld [smem:[%s28]]
  %s30 = scalar_lea.smem %s0, 15
  %s31 = sld [smem:[%s30]]
  %s32 = scalar_lea.smem %s0, 16
  %s33 = sld [smem:[%s32]]
  %s34 = scalar_lea.smem %s0, 17
  %s35 = sld [smem:[%s34]]
  %s36 = scalar_lea.smem %s0, 18
  %s37 = sld [smem:[%s36]]
  %s38 = scalar_lea.smem %s0, 19
  %s39 = sld [smem:[%s38]]
  %s40 = scalar_lea.smem %s0, 20
  %s41 = sld [smem:[%s40]]
  %s42 = scalar_lea.smem %s0, 21
  %s43 = sld [smem:[%s42]]
  %s44 = scalar_lea.smem %s0, 22
  %s45 = sld [smem:[%s44]]
  %s46 = scalar_lea.smem %s0, 23
  %s47 = sld [smem:[%s46]]
  %s48 = scalar_lea.smem %s0, 24
  %s49 = sld [smem:[%s48]]
  %s50 = scalar_lea.smem %s0, 25
  %s51 = sld [smem:[%s50]]
  %s52 = scalar_lea.smem %s0, 26
  %s53 = sld [smem:[%s52]]
  %s54 = scalar_lea.smem %s0, 27
  %s55 = sld [smem:[%s54]]
  %s56 = scalar_lea.smem %s0, 28
  %s57 = sld [smem:[%s56]]
  %s58 = scalar_lea.smem %s0, 29
  %s59 = sld [smem:[%s58]]
  %s60 = scalar_lea.smem %s0, 30
  %s61 = sld [smem:[%s60]]
  %s62 = scalar_lea.smem %s0, 31
  %s63 = sld [smem:[%s62]]
  %s64 = scalar_lea.smem %s0, 32
  %s65 = sld [smem:[%s64]]
  %s66 = scalar_lea.smem %s0, 33
  %s67 = sld [smem:[%s66]]
  %s68 = scalar_lea.smem %s0, 34
  %s69 = sld [smem:[%s68]]
  %s70 = scalar_lea.smem %s0, 35
  %s71 = sld [smem:[%s70]]
  %s72 = scalar_lea.smem %s0, 36
  %s73 = sld [smem:[%s72]]
  %s74 = scalar_lea.smem %s0, 37
  %s75 = sld [smem:[%s74]]
  %s76 = scalar_lea.smem %s0, 38
  %s77 = sld [smem:[%s76]]
  %s78 = scalar_lea.smem %s0, 39
  %s79 = sld [smem:[%s78]]
  %s80 = scalar_lea.smem %s0, 40
  %s81 = sld [smem:[%s80]]
  %s82 = scalar_lea.smem %s0, 41
  %s83 = sld [smem:[%s82]]
  %s84 = scalar_lea.smem %s0, 42
  %s85 = sld [smem:[%s84]]
  %s86 = scalar_lea.smem %s0, 43
  %s87 = sld [smem:[%s86]]
  %s88 = scalar_lea.smem %s0, 44
  %s89 = sld [smem:[%s88]]
  %90 = xla_tuple %s87, %s89
  %s91 = sld [smem:[#allocation0]]
  $region298: #{our_model_forward.1} parent=0
    _
  %s93 = ssub.s32 1, %s91
  %s94 = scalar_select 0, %s93, %s91
  %v95 = vstv %s15
  %96 = vst [vmem:[#allocation2] sm:$0x1] %v95
  %v97 = vstv %s23
  %98 = vst [vmem:[#allocation3] sm:$0x1] %v97
  $region1: #{our_model_forward.1} parent=0
    #allocation4 [shape = 'u8[8192]{0}', space=vmem, size = 0x2000, scoped, tag = 'input window, operand 3, single buffered']
    #allocation5 [shape = 's32[1]{0}', space=sflag, size = 0x4, scoped, tag = 'scoped memory for our_model_forward.1']
    #allocation6 [shape = 's32[1]{0}', space=sflag, size = 0x4, scoped, tag = 'scoped memory for our_model_forward.1']
    #allocation7 [shape = 'u8[8192]{0}', space=vmem, size = 0x2000, scoped, tag = 'input window, operand 4, single buffered']
    #allocation8 [shape = 's32[1]{0}', space=sflag, size = 0x4, scoped, tag = 'scoped memory for our_model_forward.1']
    #allocation9 [shape = 'u8[512]{0}', space=vmem, size = 0x400, scoped, tag = 'input window, operand 6, single buffered']
    #allocation10 [shape = 'u8[8192]{0}', space=vmem, size = 0x2000, scoped, tag = 'input window, operand 8, single buffered']
    #allocation11 [shape = 's32[1]{0}', space=sflag, size = 0x4, scoped, tag = 'scoped memory for our_model_forward.1']
    #allocation12 [shape = 'u8[512]{0}', space=vmem, size = 0x400, scoped, tag = 'input window, operand 9, single buffered']
    #allocation13 [shape = 'u8[512]{0}', space=vmem, size = 0x400, scoped, tag = 'input window, operand 10, single buffered']
    #allocation14 [shape = 's32[1]{0}', space=sflag, size = 0x4, scoped, tag = 'scoped memory for our_model_forward.1']
    #allocation15 [shape = 'u8[512]{0}', space=vmem, size = 0x400, scoped, tag = 'input window, operand 13, single buffered']
    #allocation16 [shape = 'u8[8192]{0}', space=vmem, size = 0x2000, scoped, tag = 'input window, operand 14, single buffered']
    #allocation17 [shape = 's32[1]{0}', space=sflag, size = 0x4, scoped, tag = 'scoped memory for our_model_forward.1']
    #allocation18 [shape = 'u8[8192]{0}', space=vmem, size = 0x2000, scoped, tag = 'input window, operand 15, single buffered']
    #allocation19 [shape = 'u8[512]{0}', space=vmem, size = 0x400, scoped, tag = 'input window, operand 16, single buffered']
    #allocation20 [shape = 's32[1]{0}', space=sflag, size = 0x4, scoped, tag = 'scoped memory for our_model_forward.1']
    #allocation21 [shape = 'u8[8192]{0}', space=vmem, size = 0x2000, scoped, tag = 'input window, operand 17, single buffered']
    #allocation22 [shape = 'u8[512]{0}', space=vmem, size = 0x400, scoped, tag = 'input window, operand 19, single buffered']
    #allocation23 [shape = 's32[1]{0}', space=sflag, size = 0x4, scoped, tag = 'scoped memory for our_model_forward.1']
    #allocation24 [shape = 'u8[512]{0}', space=vmem, size = 0x400, scoped, tag = 'input window, operand 21, single buffered']
    #allocation25 [shape = 'u8[131072]{0}', space=vmem, size = 0x20000, scoped, tag = 'input window, operand 22, single buffered']
    #allocation26 [shape = 's32[1]{0}', space=sflag, size = 0x4, scoped, tag = 'scoped memory for our_model_forward.1']
    #allocation27 [shape = 'u8[8192]{0}', space=vmem, size = 0x2000, scoped, tag = 'input window, operand 23, single buffered']
    #allocation28 [shape = 'u8[512]{0}', space=vmem, size = 0x400, scoped, tag = 'input window, operand 25, single buffered']
    #allocation29 [shape = 's32[1]{0}', space=sflag, size = 0x4, scoped, tag = 'scoped memory for our_model_forward.1']
    #allocation30 [shape = 'u8[512]{0}', space=vmem, size = 0x400, scoped, tag = 'input window, operand 26, single buffered']
    #allocation31 [shape = 'u8[512]{0}', space=vmem, size = 0x400, scoped, tag = 'input window, operand 27, single buffered']
    #allocation32 [shape = 's32[1]{0}', space=sflag, size = 0x4, scoped, tag = 'scoped memory for our_model_forward.1']
    #allocation33 [shape = 'u8[512]{0}', space=vmem, size = 0x400, scoped, tag = 'input window, operand 28, single buffered']
    #allocation34 [shape = 'u8[512]{0}', space=vmem, size = 0x400, scoped, tag = 'input window, operand 29, single buffered']
    #allocation35 [shape = 's32[1]{0}', space=sflag, size = 0x4, scoped, tag = 'scoped memory for our_model_forward.1']
    #allocation36 [shape = 'u8[1048576]{0}', space=vmem, size = 0x100000, scoped, tag = 'input window, operand 31, single buffered']
    #allocation37 [shape = 'u8[2048]{0}', space=vmem, size = 0x800, scoped, tag = 'input window, operand 32, single buffered']
    #allocation38 [shape = 's32[1]{0}', space=sflag, size = 0x4, scoped, tag = 'scoped memory for our_model_forward.1']
    #allocation39 [shape = 'u8[5120]{0}', space=vmem, size = 0x1400, scoped, tag = 'input window, operand 34, single buffered']
    #allocation40 [shape = 'u8[512]{0}', space=vmem, size = 0x400, scoped, tag = 'input window, operand 36, single buffered']
    #allocation41 [shape = 's32[1]{0}', space=sflag, size = 0x4, scoped, tag = 'scoped memory for our_model_forward.1']
    #allocation42 [shape = 'u8[512]{0}', space=vmem, size = 0x400, scoped, tag = 'input window, operand 38, single buffered']
    #allocation43 [shape = 'u8[512]{0}', space=vmem, size = 0x400, scoped, tag = 'input window, operand 40, single buffered']
    #allocation44 [shape = 's32[1]{0}', space=sflag, size = 0x4, scoped, tag = 'scoped memory for our_model_forward.1']
    #allocation45 [shape = 'u8[512]{0}', space=vmem, size = 0x400, scoped, tag = 'input window, operand 42, single buffered']
    #allocation46 [shape = 'u8[10240]{0}', space=vmem, size = 0x2800, scoped, tag = 'output window, operand 0, single buffered']
    %99 = vsyncpa [#allocation5], 0
    %100 = vsyncpa [#allocation8], 0
    %101 = vsyncpa [#allocation11], 0
    %102 = vsyncpa [#allocation14], 0
    %103 = vsyncpa [#allocation17], 0
    %104 = vsyncpa [#allocation20], 0
    %105 = vsyncpa [#allocation23], 0
    %106 = vsyncpa [#allocation26], 0
    %107 = vsyncpa [#allocation29], 0
    %108 = vsyncpa [#allocation32], 0
    %109 = vsyncpa [#allocation35], 0
    %110 = vsyncpa [#allocation38], 0
    %111 = vsyncpa [#allocation41], 0
    %112 = vsyncpa [#allocation44], 0
    %113 = vsyncpa [#allocation6], 0
    // Predicated region
    $region2: #{our_model_forward.1} parent=1 // pred_check
      _
    $region3: #{our_model_forward.1} parent=1 // pred_check_branch
      %115 = sbr.rel (0) target = $region5
    $region4: #{our_model_forward.1} parent=1 // pred_region
      _
    $region5: #{our_model_forward.1} parent=1 // pred_fallthru
      _
    // Predicated region
    $region6: #{our_model_forward.1} parent=1 // pred_check
      _
    $region7: #{our_model_forward.1} parent=1 // pred_check_branch
      %117 = sbr.rel (0) target = $region9
    $region8: #{our_model_forward.1} parent=1 // pred_region
      _
    $region9: #{our_model_forward.1} parent=1 // pred_fallthru
      _
    // Predicated region
    $region10: #{our_model_forward.1} parent=1 // pred_check
      _
    $region11: #{our_model_forward.1} parent=1 // pred_check_branch
      %119 = sbr.rel (0) target = $region13
    $region12: #{our_model_forward.1} parent=1 // pred_region
      _
    $region13: #{our_model_forward.1} parent=1 // pred_fallthru
      _
    // Predicated region
    $region14: #{our_model_forward.1} parent=1 // pred_check
      _
    $region15: #{our_model_forward.1} parent=1 // pred_check_branch
      %121 = sbr.rel (0) target = $region17
    $region16: #{our_model_forward.1} parent=1 // pred_region
      %s123 = ssub.s32 256, 256
      %124 = vsyncadd [#allocation5], %s123
      %s125 = sshll.u32 [#allocation4], 4
      %s126 = int_to_ptr.vmem [resolvable:$true] %s125
      %131 = dma.hbm_to_vmem [thread:$0]  %s7, 256, %s126, [#allocation5], 128, 128, 8
    $region17: #{our_model_forward.1} parent=1 // pred_fallthru
      _
    // Predicated region
    $region18: #{our_model_forward.1} parent=1 // pred_check
      _
    $region19: #{our_model_forward.1} parent=1 // pred_check_branch
      %133 = sbr.rel (0) target = $region21
    $region20: #{our_model_forward.1} parent=1 // pred_region
      %s135 = ssub.s32 256, 256
      %136 = vsyncadd [#allocation8], %s135
      %s137 = sshll.u32 [#allocation7], 4
      %s138 = int_to_ptr.vmem [resolvable:$true] %s137
      %143 = dma.hbm_to_vmem [thread:$0]  %s9, 256, %s138, [#allocation8], 128, 128, 8
    $region21: #{our_model_forward.1} parent=1 // pred_fallthru
      _
    // Predicated region
    $region22: #{our_model_forward.1} parent=1 // pred_check
      _
    $region23: #{our_model_forward.1} parent=1 // pred_check_branch
      %145 = sbr.rel (0) target = $region25
    $region24: #{our_model_forward.1} parent=1 // pred_region
      _
    $region25: #{our_model_forward.1} parent=1 // pred_fallthru
      _
    // Predicated region
    $region26: #{our_model_forward.1} parent=1 // pred_check
      _
    $region27: #{our_model_forward.1} parent=1 // pred_check_branch
      %147 = sbr.rel (0) target = $region29
    $region28: #{our_model_forward.1} parent=1 // pred_region
      %s149 = ssub.s32 16, 16
      %150 = vsyncadd [#allocation8], %s149
      %s152 = sshll.u32 [#allocation9], 4
      %s153 = int_to_ptr.vmem [resolvable:$true] %s152
      %155 = dma.hbm_to_vmem [thread:$0]  %s13, 16, %s153, [#allocation8]
    $region29: #{our_model_forward.1} parent=1 // pred_fallthru
      _
    // Predicated region
    $region30: #{our_model_forward.1} parent=1 // pred_check
      _
    $region31: #{our_model_forward.1} parent=1 // pred_check_branch
      %157 = sbr.rel (0) target = $region33
    $region32: #{our_model_forward.1} parent=1 // pred_region
      _
    $region33: #{our_model_forward.1} parent=1 // pred_fallthru
      _
    // Predicated region
    $region34: #{our_model_forward.1} parent=1 // pred_check
      _
    $region35: #{our_model_forward.1} parent=1 // pred_check_branch
      %159 = sbr.rel (0) target = $region37
    $region36: #{our_model_forward.1} parent=1 // pred_region
      %s161 = ssub.s32 256, 256
      %162 = vsyncadd [#allocation11], %s161
      %s163 = sshll.u32 [#allocation10], 4
      %s164 = int_to_ptr.vmem [resolvable:$true] %s163
      %169 = dma.hbm_to_vmem [thread:$0]  %s17, 256, %s164, [#allocation11], 128, 128, 8
    $region37: #{our_model_forward.1} parent=1 // pred_fallthru
      _
    // Predicated region
    $region38: #{our_model_forward.1} parent=1 // pred_check
      _
    $region39: #{our_model_forward.1} parent=1 // pred_check_branch
      %171 = sbr.rel (0) target = $region41
    $region40: #{our_model_forward.1} parent=1 // pred_region
      %s173 = ssub.s32 16, 16
      %174 = vsyncadd [#allocation11], %s173
      %s176 = sshll.u32 [#allocation12], 4
      %s177 = int_to_ptr.vmem [resolvable:$true] %s176
      %179 = dma.hbm_to_vmem [thread:$0]  %s19, 16, %s177, [#allocation11]
    $region41: #{our_model_forward.1} parent=1 // pred_fallthru
      _
    // Predicated region
    $region42: #{our_model_forward.1} parent=1 // pred_check
      _
    $region43: #{our_model_forward.1} parent=1 // pred_check_branch
      %181 = sbr.rel (0) target = $region45
    $region44: #{our_model_forward.1} parent=1 // pred_region
      %s183 = ssub.s32 16, 16
      %184 = vsyncadd [#allocation14], %s183
      %s186 = sshll.u32 [#allocation13], 4
      %s187 = int_to_ptr.vmem [resolvable:$true] %s186
      %189 = dma.hbm_to_vmem [thread:$0]  %s21, 16, %s187, [#allocation14]
    $region45: #{our_model_forward.1} parent=1 // pred_fallthru
      _
    // Predicated region
    $region46: #{our_model_forward.1} parent=1 // pred_check
      _
    $region47: #{our_model_forward.1} parent=1 // pred_check_branch
      %191 = sbr.rel (0) target = $region49
    $region48: #{our_model_forward.1} parent=1 // pred_region
      _
    $region49: #{our_model_forward.1} parent=1 // pred_fallthru
      _
    // Predicated region
    $region50: #{our_model_forward.1} parent=1 // pred_check
      _
    $region51: #{our_model_forward.1} parent=1 // pred_check_branch
      %193 = sbr.rel (0) target = $region53
    $region52: #{our_model_forward.1} parent=1 // pred_region
      _
    $region53: #{our_model_forward.1} parent=1 // pred_fallthru
      _
    // Predicated region
    $region54: #{our_model_forward.1} parent=1 // pred_check
      _
    $region55: #{our_model_forward.1} parent=1 // pred_check_branch
      %195 = sbr.rel (0) target = $region57
    $region56: #{our_model_forward.1} parent=1 // pred_region
      %s197 = ssub.s32 16, 16
      %198 = vsyncadd [#allocation14], %s197
      %s200 = sshll.u32 [#allocation15], 4
      %s201 = int_to_ptr.vmem [resolvable:$true] %s200
      %203 = dma.hbm_to_vmem [thread:$0]  %s27, 16, %s201, [#allocation14]
    $region57: #{our_model_forward.1} parent=1 // pred_fallthru
      _
    // Predicated region
    $region58: #{our_model_forward.1} parent=1 // pred_check
      _
    $region59: #{our_model_forward.1} parent=1 // pred_check_branch
      %205 = sbr.rel (0) target = $region61
    $region60: #{our_model_forward.1} parent=1 // pred_region
      %s207 = ssub.s32 256, 256
      %208 = vsyncadd [#allocation17], %s207
      %s209 = sshll.u32 [#allocation16], 4
      %s210 = int_to_ptr.vmem [resolvable:$true] %s209
      %215 = dma.hbm_to_vmem [thread:$0]  %s29, 256, %s210, [#allocation17], 128, 128, 8
    $region61: #{our_model_forward.1} parent=1 // pred_fallthru
      _
    // Predicated region
    $region62: #{our_model_forward.1} parent=1 // pred_check
      _
    $region63: #{our_model_forward.1} parent=1 // pred_check_branch
      %217 = sbr.rel (0) target = $region65
    $region64: #{our_model_forward.1} parent=1 // pred_region
      %s219 = ssub.s32 256, 256
      %220 = vsyncadd [#allocation17], %s219
      %s221 = sshll.u32 [#allocation18], 4
      %s222 = int_to_ptr.vmem [resolvable:$true] %s221
      %227 = dma.hbm_to_vmem [thread:$0]  %s31, 256, %s222, [#allocation17], 128, 128, 8
    $region65: #{our_model_forward.1} parent=1 // pred_fallthru
      _
    // Predicated region
    $region66: #{our_model_forward.1} parent=1 // pred_check
      _
    $region67: #{our_model_forward.1} parent=1 // pred_check_branch
      %229 = sbr.rel (0) target = $region69
    $region68: #{our_model_forward.1} parent=1 // pred_region
      %s231 = ssub.s32 16, 16
      %232 = vsyncadd [#allocation20], %s231
      %s234 = sshll.u32 [#allocation19], 4
      %s235 = int_to_ptr.vmem [resolvable:$true] %s234
      %237 = dma.hbm_to_vmem [thread:$0]  %s33, 16, %s235, [#allocation20]
    $region69: #{our_model_forward.1} parent=1 // pred_fallthru
      _
    // Predicated region
    $region70: #{our_model_forward.1} parent=1 // pred_check
      _
    $region71: #{our_model_forward.1} parent=1 // pred_check_branch
      %239 = sbr.rel (0) target = $region73
    $region72: #{our_model_forward.1} parent=1 // pred_region
      %s241 = ssub.s32 256, 256
      %242 = vsyncadd [#allocation20], %s241
      %s243 = sshll.u32 [#allocation21], 4
      %s244 = int_to_ptr.vmem [resolvable:$true] %s243
      %249 = dma.hbm_to_vmem [thread:$0]  %s35, 256, %s244, [#allocation20], 128, 128, 8
    $region73: #{our_model_forward.1} parent=1 // pred_fallthru
      _
    // Predicated region
    $region74: #{our_model_forward.1} parent=1 // pred_check
      _
    $region75: #{our_model_forward.1} parent=1 // pred_check_branch
      %251 = sbr.rel (0) target = $region77
    $region76: #{our_model_forward.1} parent=1 // pred_region
      _
    $region77: #{our_model_forward.1} parent=1 // pred_fallthru
      _
    // Predicated region
    $region78: #{our_model_forward.1} parent=1 // pred_check
      _
    $region79: #{our_model_forward.1} parent=1 // pred_check_branch
      %253 = sbr.rel (0) target = $region81
    $region80: #{our_model_forward.1} parent=1 // pred_region
      %s255 = ssub.s32 16, 16
      %256 = vsyncadd [#allocation23], %s255
      %s258 = sshll.u32 [#allocation22], 4
      %s259 = int_to_ptr.vmem [resolvable:$true] %s258
      %261 = dma.hbm_to_vmem [thread:$0]  %s39, 16, %s259, [#allocation23]
    $region81: #{our_model_forward.1} parent=1 // pred_fallthru
      _
    // Predicated region
    $region82: #{our_model_forward.1} parent=1 // pred_check
      _
    $region83: #{our_model_forward.1} parent=1 // pred_check_branch
      %263 = sbr.rel (0) target = $region85
    $region84: #{our_model_forward.1} parent=1 // pred_region
      _
    $region85: #{our_model_forward.1} parent=1 // pred_fallthru
      _
    // Predicated region
    $region86: #{our_model_forward.1} parent=1 // pred_check
      _
    $region87: #{our_model_forward.1} parent=1 // pred_check_branch
      %265 = sbr.rel (0) target = $region89
    $region88: #{our_model_forward.1} parent=1 // pred_region
      %s267 = ssub.s32 16, 16
      %268 = vsyncadd [#allocation23], %s267
      %s270 = sshll.u32 [#allocation24], 4
      %s271 = int_to_ptr.vmem [resolvable:$true] %s270
      %273 = dma.hbm_to_vmem [thread:$0]  %s43, 16, %s271, [#allocation23]
    $region89: #{our_model_forward.1} parent=1 // pred_fallthru
      _
    // Predicated region
    $region90: #{our_model_forward.1} parent=1 // pred_check
      _
    $region91: #{our_model_forward.1} parent=1 // pred_check_branch
      %275 = sbr.rel (0) target = $region93
    $region92: #{our_model_forward.1} parent=1 // pred_region
      %s277 = ssub.s32 4096, 4096
      %278 = vsyncadd [#allocation26], %s277
      %s279 = sshll.u32 [#allocation25], 4
      %s280 = int_to_ptr.vmem [resolvable:$true] %s279
      %285 = dma.hbm_to_vmem [thread:$0]  %s45, 4096, %s280, [#allocation26], 1024, 1024, 64
    $region93: #{our_model_forward.1} parent=1 // pred_fallthru
      _
    // Predicated region
    $region94: #{our_model_forward.1} parent=1 // pred_check
      _
    $region95: #{our_model_forward.1} parent=1 // pred_check_branch
      %287 = sbr.rel (0) target = $region97
    $region96: #{our_model_forward.1} parent=1 // pred_region
      %s289 = ssub.s32 256, 256
      %290 = vsyncadd [#allocation26], %s289
      %s292 = sshll.u32 [#allocation27], 4
      %s293 = int_to_ptr.vmem [resolvable:$true] %s292
      %295 = dma.hbm_to_vmem [thread:$0]  %s47, 256, %s293, [#allocation26]
    $region97: #{our_model_forward.1} parent=1 // pred_fallthru
      _
    // Predicated region
    $region98: #{our_model_forward.1} parent=1 // pred_check
      _
    $region99: #{our_model_forward.1} parent=1 // pred_check_branch
      %297 = sbr.rel (0) target = $region101
    $region100: #{our_model_forward.1} parent=1 // pred_region
      _
    $region101: #{our_model_forward.1} parent=1 // pred_fallthru
      _
    // Predicated region
    $region102: #{our_model_forward.1} parent=1 // pred_check
      _
    $region103: #{our_model_forward.1} parent=1 // pred_check_branch
      %299 = sbr.rel (0) target = $region105
    $region104: #{our_model_forward.1} parent=1 // pred_region
      %s301 = ssub.s32 16, 16
      %302 = vsyncadd [#allocation29], %s301
      %s304 = sshll.u32 [#allocation28], 4
      %s305 = int_to_ptr.vmem [resolvable:$true] %s304
      %307 = dma.hbm_to_vmem [thread:$0]  %s51, 16, %s305, [#allocation29]
    $region105: #{our_model_forward.1} parent=1 // pred_fallthru
      _
    // Predicated region
    $region106: #{our_model_forward.1} parent=1 // pred_check
      _
    $region107: #{our_model_forward.1} parent=1 // pred_check_branch
      %309 = sbr.rel (0) target = $region109
    $region108: #{our_model_forward.1} parent=1 // pred_region
      %s311 = ssub.s32 16, 16
      %312 = vsyncadd [#allocation29], %s311
      %s314 = sshll.u32 [#allocation30], 4
      %s315 = int_to_ptr.vmem [resolvable:$true] %s314
      %317 = dma.hbm_to_vmem [thread:$0]  %s53, 16, %s315, [#allocation29]
    $region109: #{our_model_forward.1} parent=1 // pred_fallthru
      _
    // Predicated region
    $region110: #{our_model_forward.1} parent=1 // pred_check
      _
    $region111: #{our_model_forward.1} parent=1 // pred_check_branch
      %319 = sbr.rel (0) target = $region113
    $region112: #{our_model_forward.1} parent=1 // pred_region
      %s321 = ssub.s32 16, 16
      %322 = vsyncadd [#allocation32], %s321
      %s324 = sshll.u32 [#allocation31], 4
      %s325 = int_to_ptr.vmem [resolvable:$true] %s324
      %327 = dma.hbm_to_vmem [thread:$0]  %s55, 16, %s325, [#allocation32]
    $region113: #{our_model_forward.1} parent=1 // pred_fallthru
      _
    // Predicated region
    $region114: #{our_model_forward.1} parent=1 // pred_check
      _
    $region115: #{our_model_forward.1} parent=1 // pred_check_branch
      %329 = sbr.rel (0) target = $region117
    $region116: #{our_model_forward.1} parent=1 // pred_region
      %s331 = ssub.s32 16, 16
      %332 = vsyncadd [#allocation32], %s331
      %s334 = sshll.u32 [#allocation33], 4
      %s335 = int_to_ptr.vmem [resolvable:$true] %s334
      %337 = dma.hbm_to_vmem [thread:$0]  %s57, 16, %s335, [#allocation32]
    $region117: #{our_model_forward.1} parent=1 // pred_fallthru
      _
    // Predicated region
    $region118: #{our_model_forward.1} parent=1 // pred_check
      _
    $region119: #{our_model_forward.1} parent=1 // pred_check_branch
      %339 = sbr.rel (0) target = $region121
    $region120: #{our_model_forward.1} parent=1 // pred_region
      %s341 = ssub.s32 16, 16
      %342 = vsyncadd [#allocation35], %s341
      %s344 = sshll.u32 [#allocation34], 4
      %s345 = int_to_ptr.vmem [resolvable:$true] %s344
      %347 = dma.hbm_to_vmem [thread:$0]  %s59, 16, %s345, [#allocation35]
    $region121: #{our_model_forward.1} parent=1 // pred_fallthru
      _
    // Predicated region
    $region122: #{our_model_forward.1} parent=1 // pred_check
      _
    $region123: #{our_model_forward.1} parent=1 // pred_check_branch
      %349 = sbr.rel (0) target = $region125
    $region124: #{our_model_forward.1} parent=1 // pred_region
      _
    $region125: #{our_model_forward.1} parent=1 // pred_fallthru
      _
    // Predicated region
    $region126: #{our_model_forward.1} parent=1 // pred_check
      _
    $region127: #{our_model_forward.1} parent=1 // pred_check_branch
      %351 = sbr.rel (0) target = $region129
    $region128: #{our_model_forward.1} parent=1 // pred_region
      %s353 = ssub.s32 32768, 32768
      %354 = vsyncadd [#allocation35], %s353
      %s355 = sshll.u32 [#allocation36], 4
      %s356 = int_to_ptr.vmem [resolvable:$true] %s355
      %361 = dma.hbm_to_vmem [thread:$0]  %s63, 32768, %s356, [#allocation35], 256, 256, 16
    $region129: #{our_model_forward.1} parent=1 // pred_fallthru
      _
    // Predicated region
    $region130: #{our_model_forward.1} parent=1 // pred_check
      _
    $region131: #{our_model_forward.1} parent=1 // pred_check_branch
      %363 = sbr.rel (0) target = $region133
    $region132: #{our_model_forward.1} parent=1 // pred_region
      %s365 = ssub.s32 64, 64
      %366 = vsyncadd [#allocation38], %s365
      %s368 = sshll.u32 [#allocation37], 4
      %s369 = int_to_ptr.vmem [resolvable:$true] %s368
      %371 = dma.hbm_to_vmem [thread:$0]  %s65, 64, %s369, [#allocation38]
    $region133: #{our_model_forward.1} parent=1 // pred_fallthru
      _
    // Predicated region
    $region134: #{our_model_forward.1} parent=1 // pred_check
      _
    $region135: #{our_model_forward.1} parent=1 // pred_check_branch
      %373 = sbr.rel (0) target = $region137
    $region136: #{our_model_forward.1} parent=1 // pred_region
      _
    $region137: #{our_model_forward.1} parent=1 // pred_fallthru
      _
    // Predicated region
    $region138: #{our_model_forward.1} parent=1 // pred_check
      _
    $region139: #{our_model_forward.1} parent=1 // pred_check_branch
      %375 = sbr.rel (0) target = $region141
    $region140: #{our_model_forward.1} parent=1 // pred_region
      %s377 = ssub.s32 160, 160
      %378 = vsyncadd [#allocation38], %s377
      %s380 = sshll.u32 [#allocation39], 4
      %s381 = int_to_ptr.vmem [resolvable:$true] %s380
      %383 = dma.hbm_to_vmem [thread:$0]  %s69, 160, %s381, [#allocation38]
    $region141: #{our_model_forward.1} parent=1 // pred_fallthru
      _
    // Predicated region
    $region142: #{our_model_forward.1} parent=1 // pred_check
      _
    $region143: #{our_model_forward.1} parent=1 // pred_check_branch
      %385 = sbr.rel (0) target = $region145
    $region144: #{our_model_forward.1} parent=1 // pred_region
      _
    $region145: #{our_model_forward.1} parent=1 // pred_fallthru
      _
    // Predicated region
    $region146: #{our_model_forward.1} parent=1 // pred_check
      _
    $region147: #{our_model_forward.1} parent=1 // pred_check_branch
      %387 = sbr.rel (0) target = $region149
    $region148: #{our_model_forward.1} parent=1 // pred_region
      %s389 = ssub.s32 16, 16
      %390 = vsyncadd [#allocation41], %s389
      %s392 = sshll.u32 [#allocation40], 4
      %s393 = int_to_ptr.vmem [resolvable:$true] %s392
      %395 = dma.hbm_to_vmem [thread:$0]  %s73, 16, %s393, [#allocation41]
    $region149: #{our_model_forward.1} parent=1 // pred_fallthru
      _
    // Predicated region
    $region150: #{our_model_forward.1} parent=1 // pred_check
      _
    $region151: #{our_model_forward.1} parent=1 // pred_check_branch
      %397 = sbr.rel (0) target = $region153
    $region152: #{our_model_forward.1} parent=1 // pred_region
      _
    $region153: #{our_model_forward.1} parent=1 // pred_fallthru
      _
    // Predicated region
    $region154: #{our_model_forward.1} parent=1 // pred_check
      _
    $region155: #{our_model_forward.1} parent=1 // pred_check_branch
      %399 = sbr.rel (0) target = $region157
    $region156: #{our_model_forward.1} parent=1 // pred_region
      %s401 = ssub.s32 16, 16
      %402 = vsyncadd [#allocation41], %s401
      %s404 = sshll.u32 [#allocation42], 4
      %s405 = int_to_ptr.vmem [resolvable:$true] %s404
      %407 = dma.hbm_to_vmem [thread:$0]  %s77, 16, %s405, [#allocation41]
    $region157: #{our_model_forward.1} parent=1 // pred_fallthru
      _
    // Predicated region
    $region158: #{our_model_forward.1} parent=1 // pred_check
      _
    $region159: #{our_model_forward.1} parent=1 // pred_check_branch
      %409 = sbr.rel (0) target = $region161
    $region160: #{our_model_forward.1} parent=1 // pred_region
      _
    $region161: #{our_model_forward.1} parent=1 // pred_fallthru
      _
    // Predicated region
    $region162: #{our_model_forward.1} parent=1 // pred_check
      _
    $region163: #{our_model_forward.1} parent=1 // pred_check_branch
      %411 = sbr.rel (0) target = $region165
    $region164: #{our_model_forward.1} parent=1 // pred_region
      %s413 = ssub.s32 16, 16
      %414 = vsyncadd [#allocation44], %s413
      %s416 = sshll.u32 [#allocation43], 4
      %s417 = int_to_ptr.vmem [resolvable:$true] %s416
      %419 = dma.hbm_to_vmem [thread:$0]  %s81, 16, %s417, [#allocation44]
    $region165: #{our_model_forward.1} parent=1 // pred_fallthru
      _
    // Predicated region
    $region166: #{our_model_forward.1} parent=1 // pred_check
      _
    $region167: #{our_model_forward.1} parent=1 // pred_check_branch
      %421 = sbr.rel (0) target = $region169
    $region168: #{our_model_forward.1} parent=1 // pred_region
      _
    $region169: #{our_model_forward.1} parent=1 // pred_fallthru
      _
    // Predicated region
    $region170: #{our_model_forward.1} parent=1 // pred_check
      _
    $region171: #{our_model_forward.1} parent=1 // pred_check_branch
      %423 = sbr.rel (0) target = $region173
    $region172: #{our_model_forward.1} parent=1 // pred_region
      %s425 = ssub.s32 16, 16
      %426 = vsyncadd [#allocation44], %s425
      %s428 = sshll.u32 [#allocation45], 4
      %s429 = int_to_ptr.vmem [resolvable:$true] %s428
      %431 = dma.hbm_to_vmem [thread:$0]  %s85, 16, %s429, [#allocation44]
    $region173: #{our_model_forward.1} parent=1 // pred_fallthru
      _
    // Predicated region
    $region174: #{our_model_forward.1} parent=1 // pred_check
      _
    $region175: #{our_model_forward.1} parent=1 // pred_check_branch
      %433 = sbr.rel (0) target = $region177
    $region176: #{our_model_forward.1} parent=1 // pred_region
      %434 = dma.done [#allocation5], 256
    $region177: #{our_model_forward.1} parent=1 // pred_fallthru
      _
    // Predicated region
    $region178: #{our_model_forward.1} parent=1 // pred_check
      _
    $region179: #{our_model_forward.1} parent=1 // pred_check_branch
      %436 = sbr.rel (0) target = $region181
    $region180: #{our_model_forward.1} parent=1 // pred_region
      %437 = dma.done [#allocation8], 256
    $region181: #{our_model_forward.1} parent=1 // pred_fallthru
      _
    // Predicated region
    $region182: #{our_model_forward.1} parent=1 // pred_check
      _
    $region183: #{our_model_forward.1} parent=1 // pred_check_branch
      %439 = sbr.rel (0) target = $region185
    $region184: #{our_model_forward.1} parent=1 // pred_region
      %440 = dma.done [#allocation8], 16
    $region185: #{our_model_forward.1} parent=1 // pred_fallthru
      _
    // Predicated region
    $region186: #{our_model_forward.1} parent=1 // pred_check
      _
    $region187: #{our_model_forward.1} parent=1 // pred_check_branch
      %442 = sbr.rel (0) target = $region189
    $region188: #{our_model_forward.1} parent=1 // pred_region
      %443 = dma.done [#allocation11], 256
    $region189: #{our_model_forward.1} parent=1 // pred_fallthru
      _
    // Predicated region
    $region190: #{our_model_forward.1} parent=1 // pred_check
      _
    $region191: #{our_model_forward.1} parent=1 // pred_check_branch
      %445 = sbr.rel (0) target = $region193
    $region192: #{our_model_forward.1} parent=1 // pred_region
      %446 = dma.done [#allocation11], 16
    $region193: #{our_model_forward.1} parent=1 // pred_fallthru
      _
    // Predicated region
    $region194: #{our_model_forward.1} parent=1 // pred_check
      _
    $region195: #{our_model_forward.1} parent=1 // pred_check_branch
      %448 = sbr.rel (0) target = $region197
    $region196: #{our_model_forward.1} parent=1 // pred_region
      %449 = dma.done [#allocation14], 16
    $region197: #{our_model_forward.1} parent=1 // pred_fallthru
      _
    // Predicated region
    $region198: #{our_model_forward.1} parent=1 // pred_check
      _
    $region199: #{our_model_forward.1} parent=1 // pred_check_branch
      %451 = sbr.rel (0) target = $region201
    $region200: #{our_model_forward.1} parent=1 // pred_region
      %452 = dma.done [#allocation14], 16
    $region201: #{our_model_forward.1} parent=1 // pred_fallthru
      _
    // Predicated region
    $region202: #{our_model_forward.1} parent=1 // pred_check
      _
    $region203: #{our_model_forward.1} parent=1 // pred_check_branch
      %454 = sbr.rel (0) target = $region205
    $region204: #{our_model_forward.1} parent=1 // pred_region
      %455 = dma.done [#allocation17], 256
    $region205: #{our_model_forward.1} parent=1 // pred_fallthru
      _
    // Predicated region
    $region206: #{our_model_forward.1} parent=1 // pred_check
      _
    $region207: #{our_model_forward.1} parent=1 // pred_check_branch
      %457 = sbr.rel (0) target = $region209
    $region208: #{our_model_forward.1} parent=1 // pred_region
      %458 = dma.done [#allocation17], 256
    $region209: #{our_model_forward.1} parent=1 // pred_fallthru
      _
    // Predicated region
    $region210: #{our_model_forward.1} parent=1 // pred_check
      _
    $region211: #{our_model_forward.1} parent=1 // pred_check_branch
      %460 = sbr.rel (0) target = $region213
    $region212: #{our_model_forward.1} parent=1 // pred_region
      %461 = dma.done [#allocation20], 16
    $region213: #{our_model_forward.1} parent=1 // pred_fallthru
      _
    // Predicated region
    $region214: #{our_model_forward.1} parent=1 // pred_check
      _
    $region215: #{our_model_forward.1} parent=1 // pred_check_branch
      %463 = sbr.rel (0) target = $region217
    $region216: #{our_model_forward.1} parent=1 // pred_region
      %464 = dma.done [#allocation20], 256
    $region217: #{our_model_forward.1} parent=1 // pred_fallthru
      _
    // Predicated region
    $region218: #{our_model_forward.1} parent=1 // pred_check
      _
    $region219: #{our_model_forward.1} parent=1 // pred_check_branch
      %466 = sbr.rel (0) target = $region221
    $region220: #{our_model_forward.1} parent=1 // pred_region
      %467 = dma.done [#allocation23], 16
    $region221: #{our_model_forward.1} parent=1 // pred_fallthru
      _
    // Predicated region
    $region222: #{our_model_forward.1} parent=1 // pred_check
      _
    $region223: #{our_model_forward.1} parent=1 // pred_check_branch
      %469 = sbr.rel (0) target = $region225
    $region224: #{our_model_forward.1} parent=1 // pred_region
      %470 = dma.done [#allocation23], 16
    $region225: #{our_model_forward.1} parent=1 // pred_fallthru
      _
    // Predicated region
    $region226: #{our_model_forward.1} parent=1 // pred_check
      _
    $region227: #{our_model_forward.1} parent=1 // pred_check_branch
      %472 = sbr.rel (0) target = $region229
    $region228: #{our_model_forward.1} parent=1 // pred_region
      %473 = dma.done [#allocation26], 4096
    $region229: #{our_model_forward.1} parent=1 // pred_fallthru
      _
    // Predicated region
    $region230: #{our_model_forward.1} parent=1 // pred_check
      _
    $region231: #{our_model_forward.1} parent=1 // pred_check_branch
      %475 = sbr.rel (0) target = $region233
    $region232: #{our_model_forward.1} parent=1 // pred_region
      %476 = dma.done [#allocation26], 256
    $region233: #{our_model_forward.1} parent=1 // pred_fallthru
      _
    // Predicated region
    $region234: #{our_model_forward.1} parent=1 // pred_check
      _
    $region235: #{our_model_forward.1} parent=1 // pred_check_branch
      %478 = sbr.rel (0) target = $region237
    $region236: #{our_model_forward.1} parent=1 // pred_region
      %479 = dma.done [#allocation29], 16
    $region237: #{our_model_forward.1} parent=1 // pred_fallthru
      _
    // Predicated region
    $region238: #{our_model_forward.1} parent=1 // pred_check
      _
    $region239: #{our_model_forward.1} parent=1 // pred_check_branch
      %481 = sbr.rel (0) target = $region241
    $region240: #{our_model_forward.1} parent=1 // pred_region
      %482 = dma.done [#allocation29], 16
    $region241: #{our_model_forward.1} parent=1 // pred_fallthru
      _
    // Predicated region
    $region242: #{our_model_forward.1} parent=1 // pred_check
      _
    $region243: #{our_model_forward.1} parent=1 // pred_check_branch
      %484 = sbr.rel (0) target = $region245
    $region244: #{our_model_forward.1} parent=1 // pred_region
      %485 = dma.done [#allocation32], 16
    $region245: #{our_model_forward.1} parent=1 // pred_fallthru
      _
    // Predicated region
    $region246: #{our_model_forward.1} parent=1 // pred_check
      _
    $region247: #{our_model_forward.1} parent=1 // pred_check_branch
      %487 = sbr.rel (0) target = $region249
    $region248: #{our_model_forward.1} parent=1 // pred_region
      %488 = dma.done [#allocation32], 16
    $region249: #{our_model_forward.1} parent=1 // pred_fallthru
      _
    // Predicated region
    $region250: #{our_model_forward.1} parent=1 // pred_check
      _
    $region251: #{our_model_forward.1} parent=1 // pred_check_branch
      %490 = sbr.rel (0) target = $region253
    $region252: #{our_model_forward.1} parent=1 // pred_region
      %491 = dma.done [#allocation35], 16
    $region253: #{our_model_forward.1} parent=1 // pred_fallthru
      _
    // Predicated region
    $region254: #{our_model_forward.1} parent=1 // pred_check
      _
    $region255: #{our_model_forward.1} parent=1 // pred_check_branch
      %493 = sbr.rel (0) target = $region257
    $region256: #{our_model_forward.1} parent=1 // pred_region
      %494 = dma.done [#allocation35], 32768
    $region257: #{our_model_forward.1} parent=1 // pred_fallthru
      _
    // Predicated region
    $region258: #{our_model_forward.1} parent=1 // pred_check
      _
    $region259: #{our_model_forward.1} parent=1 // pred_check_branch
      %496 = sbr.rel (0) target = $region261
    $region260: #{our_model_forward.1} parent=1 // pred_region
      %497 = dma.done [#allocation38], 64
    $region261: #{our_model_forward.1} parent=1 // pred_fallthru
      _
    // Predicated region
    $region262: #{our_model_forward.1} parent=1 // pred_check
      _
    $region263: #{our_model_forward.1} parent=1 // pred_check_branch
      %499 = sbr.rel (0) target = $region265
    $region264: #{our_model_forward.1} parent=1 // pred_region
      %500 = dma.done [#allocation38], 160
    $region265: #{our_model_forward.1} parent=1 // pred_fallthru
      _
    // Predicated region
    $region266: #{our_model_forward.1} parent=1 // pred_check
      _
    $region267: #{our_model_forward.1} parent=1 // pred_check_branch
      %502 = sbr.rel (0) target = $region269
    $region268: #{our_model_forward.1} parent=1 // pred_region
      %503 = dma.done [#allocation41], 16
    $region269: #{our_model_forward.1} parent=1 // pred_fallthru
      _
    // Predicated region
    $region270: #{our_model_forward.1} parent=1 // pred_check
      _
    $region271: #{our_model_forward.1} parent=1 // pred_check_branch
      %505 = sbr.rel (0) target = $region273
    $region272: #{our_model_forward.1} parent=1 // pred_region
      %506 = dma.done [#allocation41], 16
    $region273: #{our_model_forward.1} parent=1 // pred_fallthru
      _
    // Predicated region
    $region274: #{our_model_forward.1} parent=1 // pred_check
      _
    $region275: #{our_model_forward.1} parent=1 // pred_check_branch
      %508 = sbr.rel (0) target = $region277
    $region276: #{our_model_forward.1} parent=1 // pred_region
      %509 = dma.done [#allocation44], 16
    $region277: #{our_model_forward.1} parent=1 // pred_fallthru
      _
    // Predicated region
    $region278: #{our_model_forward.1} parent=1 // pred_check
      _
    $region279: #{our_model_forward.1} parent=1 // pred_check_branch
      %511 = sbr.rel (0) target = $region281
    $region280: #{our_model_forward.1} parent=1 // pred_region
      %512 = dma.done [#allocation44], 16
    $region281: #{our_model_forward.1} parent=1 // pred_fallthru
      _
    %v514 = vld [vmem:[%s1] sm:$0xff]
    %v515 = vld [vmem:[%s1 + $0x8] sm:$0xff]
    %v516 = vld [vmem:[%s1 + $0x10] sm:$0xff]
    %v517 = vld [vmem:[%s1 + $0x18] sm:$0xff]
    %v518 = vld [vmem:[%s1 + $0x20] sm:$0xff]
    %v519 = vld [vmem:[%s1 + $0x28] sm:$0xff]
    %v520 = vld [vmem:[%s1 + $0x30] sm:$0xff]
    %v521 = vld [vmem:[%s1 + $0x38] sm:$0xff]
    %v522 = vld [vmem:[%s3] sm:$0xff]
    %v523 = vld [vmem:[%s3 + $0x8] sm:$0xff]
    %v524 = vld [vmem:[%s3 + $0x10] sm:$0xff]
    %v525 = vld [vmem:[%s3 + $0x18] sm:$0xff]
    %v526 = vld [vmem:[%s3 + $0x20] sm:$0xff]
    %v527 = vld [vmem:[%s3 + $0x28] sm:$0xff]
    %v528 = vld [vmem:[%s3 + $0x30] sm:$0xff]
    %v529 = vld [vmem:[%s3 + $0x38] sm:$0xff]
    %v530 = vld [vmem:[#allocation7] sm:$0xff]
    %v531 = vld [vmem:[#allocation7 + $0x8] sm:$0xff]
    %v532 = vld [vmem:[%s11] sm:$0x1]
    %v534 = vlaneseq
    %v535 = vshrl.u32 %v534, 7
    %v536 = vsub.s32 0, %v535
    %v537 = vrot.slane %v532, %v536
    %vm539 = vcmask 130048
    %v541 = vsel %vm539, %v514, 0
    %v544 = vsel %vm539, %v515, 0
    %v547 = vsel %vm539, %v516, 0
    %v550 = vsel %vm539, %v517, 0
    %v553 = vsel %vm539, %v518, 0
    %v556 = vsel %vm539, %v519, 0
    %v559 = vsel %vm539, %v520, 0
    %v562 = vsel %vm539, %v521, 0
    %564 = vmatprep.subr.mxu0 0.0
    %565 = vmatpush1.msra.mxu0 0.0
    %566 = vmatprep.subr.mxu0 0.0
    %567 = vmatpush1.msra.mxu0 0.0
    %568 = vmatprep.subr.mxu0 0.0
    %569 = vmatpush1.msra.mxu0 0.0
    %570 = vmatprep.subr.mxu0 0.0
    %571 = vmatpush1.msra.mxu0 0.0
    %572 = vmatprep.subr.mxu0 0.0
    %573 = vmatpush1.msra.mxu0 0.0
    %574 = vmatprep.subr.mxu0 0.0
    %575 = vmatpush1.msra.mxu0 0.0
    %576 = vmatprep.subr.mxu0 0.0
    %577 = vmatpush1.msra.mxu0 0.0
    %578 = vmatprep.subr.mxu0 0.0
    %579 = vmatpush1.msra.mxu0 0.0
    %580 = vmatprep.subr.mxu0 0.0
    %581 = vmatpush1.msra.mxu0 0.0
    %582 = vmatprep.subr.mxu0 0.0
    %583 = vmatpush1.msra.mxu0 0.0
    %584 = vmatprep.subr.mxu0 0.0
    %585 = vmatpush1.msra.mxu0 0.0
    %586 = vmatprep.subr.mxu0 0.0
    %587 = vmatpush1.msra.mxu0 0.0
    %588 = vmatprep.subr.mxu0 0.0
    %589 = vmatpush1.msra.mxu0 0.0
    %590 = vmatprep.subr.mxu0 0.0
    %591 = vmatpush1.msra.mxu0 0.0
    %592 = vmatprep.subr.mxu0 0.0
    %593 = vmatpush1.msra.mxu0 %v531
    %594 = vmatprep.subr.mxu0 0.0
    %595 = vmatpush1.msra.mxu0 %v530
    %596 = vmatprep.subr.mxu0 0.0
    %597 = vmatpush2.msra.mxu0 0.0
    %598 = vmatprep.subr.mxu0 0.0
    %599 = vmatpush2.msra.mxu0 0.0
    %600 = vmatprep.subr.mxu0 0.0
    %601 = vmatpush2.msra.mxu0 0.0
    %602 = vmatprep.subr.mxu0 0.0
    %603 = vmatpush2.msra.mxu0 0.0
    %604 = vmatprep.subr.mxu0 0.0
    %605 = vmatpush2.msra.mxu0 0.0
    %606 = vmatprep.subr.mxu0 0.0
    %607 = vmatpush2.msra.mxu0 0.0
    %608 = vmatprep.subr.mxu0 0.0
    %609 = vmatpush2.msra.mxu0 0.0
    %610 = vmatprep.subr.mxu0 0.0
    %611 = vmatpush2.msra.mxu0 0.0
    %612 = vmatprep.subr.mxu0 0.0
    %613 = vmatpush2.msra.mxu0 0.0
    %614 = vmatprep.subr.mxu0 0.0
    %615 = vmatpush2.msra.mxu0 0.0
    %616 = vmatprep.subr.mxu0 0.0
    %617 = vmatpush2.msra.mxu0 0.0
    %618 = vmatprep.subr.mxu0 0.0
    %619 = vmatpush2.msra.mxu0 0.0
    %620 = vmatprep.subr.mxu0 0.0
    %621 = vmatpush2.msra.mxu0 0.0
    %622 = vmatprep.subr.mxu0 0.0
    %623 = vmatpush2.msra.mxu0 0.0
    %624 = vmatprep.subr.mxu0 0.0
    %625 = vmatpush2.msra.mxu0 0.0
    %626 = vmatprep.subr.mxu0 0.0
    %627 = vmatpush2.msra.mxu0 0.0
    %628 = vmatprep.mubr.f32.mxu0 0.0
    %629 = vmatmul.mubr.f32.gmra.mxu0 %v541
    %v630 = vpop.f32.mrf.mxu0
    %v631 = vadd.f32 %v537, %v630
    %v632 = vpop.f32.mrf.mxu0
    %633 = vmatprep.mubr.f32.mxu0 0.0
    %634 = vmatmul.mubr.f32.gmra.mxu0 %v544
    %v635 = vpop.f32.mrf.mxu0
    %v636 = vadd.f32 %v537, %v635
    %v637 = vpop.f32.mrf.mxu0
    %638 = vmatprep.mubr.f32.mxu0 0.0
    %639 = vmatmul.mubr.f32.gmra.mxu0 %v547
    %v640 = vpop.f32.mrf.mxu0
    %v641 = vadd.f32 %v537, %v640
    %v642 = vpop.f32.mrf.mxu0
    %643 = vmatprep.mubr.f32.mxu0 0.0
    %644 = vmatmul.mubr.f32.gmra.mxu0 %v550
    %v645 = vpop.f32.mrf.mxu0
    %v646 = vadd.f32 %v537, %v645
    %v647 = vpop.f32.mrf.mxu0
    %648 = vmatprep.mubr.f32.mxu0 0.0
    %649 = vmatmul.mubr.f32.gmra.mxu0 %v553
    %v650 = vpop.f32.mrf.mxu0
    %v651 = vadd.f32 %v537, %v650
    %v652 = vpop.f32.mrf.mxu0
    %653 = vmatprep.mubr.f32.mxu0 0.0
    %654 = vmatmul.mubr.f32.gmra.mxu0 %v556
    %v655 = vpop.f32.mrf.mxu0
    %v656 = vadd.f32 %v537, %v655
    %v657 = vpop.f32.mrf.mxu0
    %658 = vmatprep.mubr.f32.mxu0 0.0
    %659 = vmatmul.mubr.f32.gmra.mxu0 %v559
    %v660 = vpop.f32.mrf.mxu0
    %v661 = vadd.f32 %v537, %v660
    %v662 = vpop.f32.mrf.mxu0
    %663 = vmatprep.mubr.f32.mxu0 0.0
    %664 = vmatmul.mubr.f32.gmra.mxu0 %v562
    %v665 = vpop.f32.mrf.mxu0
    %v666 = vadd.f32 %v537, %v665
    %v667 = vpop.f32.mrf.mxu0
    %668 = vdwg.mxu0
    %v669 = vtanh.pop %v631
    %v670 = vtanh.pop %v636
    %v671 = vtanh.pop %v641
    %v672 = vtanh.pop %v646
    %v673 = vtanh.pop %v651
    %v674 = vtanh.pop %v656
    %v675 = vtanh.pop %v661
    %v676 = vtanh.pop %v666
    %v677 = vld [vmem:[#allocation10] sm:$0xff]
    %v678 = vld [vmem:[#allocation10 + $0x8] sm:$0xff]
    %v679 = vld [vmem:[#allocation12] sm:$0x1]
    %v681 = vlaneseq
    %v682 = vshrl.u32 %v681, 7
    %v683 = vsub.s32 0, %v682
    %v684 = vrot.slane %v679, %v683
    %v687 = vsel %vm539, %v522, 0
    %v690 = vsel %vm539, %v523, 0
    %v693 = vsel %vm539, %v524, 0
    %v696 = vsel %vm539, %v525, 0
    %v699 = vsel %vm539, %v526, 0
    %v702 = vsel %vm539, %v527, 0
    %v705 = vsel %vm539, %v528, 0
    %v708 = vsel %vm539, %v529, 0
    %710 = vmatprep.subr.mxu0 0.0
    %711 = vmatpush1.msra.mxu0 0.0
    %712 = vmatprep.subr.mxu0 0.0
    %713 = vmatpush1.msra.mxu0 0.0
    %714 = vmatprep.subr.mxu0 0.0
    %715 = vmatpush1.msra.mxu0 0.0
    %716 = vmatprep.subr.mxu0 0.0
    %717 = vmatpush1.msra.mxu0 0.0
    %718 = vmatprep.subr.mxu0 0.0
    %719 = vmatpush1.msra.mxu0 0.0
    %720 = vmatprep.subr.mxu0 0.0
    %721 = vmatpush1.msra.mxu0 0.0
    %722 = vmatprep.subr.mxu0 0.0
    %723 = vmatpush1.msra.mxu0 0.0
    %724 = vmatprep.subr.mxu0 0.0
    %725 = vmatpush1.msra.mxu0 0.0
    %726 = vmatprep.subr.mxu0 0.0
    %727 = vmatpush1.msra.mxu0 0.0
    %728 = vmatprep.subr.mxu0 0.0
    %729 = vmatpush1.msra.mxu0 0.0
    %730 = vmatprep.subr.mxu0 0.0
    %731 = vmatpush1.msra.mxu0 0.0
    %732 = vmatprep.subr.mxu0 0.0
    %733 = vmatpush1.msra.mxu0 0.0
    %734 = vmatprep.subr.mxu0 0.0
    %735 = vmatpush1.msra.mxu0 0.0
    %736 = vmatprep.subr.mxu0 0.0
    %737 = vmatpush1.msra.mxu0 0.0
    %738 = vmatprep.subr.mxu0 0.0
    %739 = vmatpush1.msra.mxu0 %v678
    %740 = vmatprep.subr.mxu0 0.0
    %741 = vmatpush1.msra.mxu0 %v677
    %742 = vmatprep.subr.mxu0 0.0
    %743 = vmatpush2.msra.mxu0 0.0
    %744 = vmatprep.subr.mxu0 0.0
    %745 = vmatpush2.msra.mxu0 0.0
    %746 = vmatprep.subr.mxu0 0.0
    %747 = vmatpush2.msra.mxu0 0.0
    %748 = vmatprep.subr.mxu0 0.0
    %749 = vmatpush2.msra.mxu0 0.0
    %750 = vmatprep.subr.mxu0 0.0
    %751 = vmatpush2.msra.mxu0 0.0
    %752 = vmatprep.subr.mxu0 0.0
    %753 = vmatpush2.msra.mxu0 0.0
    %754 = vmatprep.subr.mxu0 0.0
    %755 = vmatpush2.msra.mxu0 0.0
    %756 = vmatprep.subr.mxu0 0.0
    %757 = vmatpush2.msra.mxu0 0.0
    %758 = vmatprep.subr.mxu0 0.0
    %759 = vmatpush2.msra.mxu0 0.0
    %760 = vmatprep.subr.mxu0 0.0
    %761 = vmatpush2.msra.mxu0 0.0
    %762 = vmatprep.subr.mxu0 0.0
    %763 = vmatpush2.msra.mxu0 0.0
    %764 = vmatprep.subr.mxu0 0.0
    %765 = vmatpush2.msra.mxu0 0.0
    %766 = vmatprep.subr.mxu0 0.0
    %767 = vmatpush2.msra.mxu0 0.0
    %768 = vmatprep.subr.mxu0 0.0
    %769 = vmatpush2.msra.mxu0 0.0
    %770 = vmatprep.subr.mxu0 0.0
    %771 = vmatpush2.msra.mxu0 0.0
    %772 = vmatprep.subr.mxu0 0.0
    %773 = vmatpush2.msra.mxu0 0.0
    %774 = vmatprep.mubr.f32.mxu0 0.0
    %775 = vmatmul.mubr.f32.gmra.mxu0 %v687
    %v776 = vpop.f32.mrf.mxu0
    %v777 = vadd.f32 %v684, %v776
    %v778 = vpop.f32.mrf.mxu0
    %779 = vmatprep.mubr.f32.mxu0 0.0
    %780 = vmatmul.mubr.f32.gmra.mxu0 %v690
    %v781 = vpop.f32.mrf.mxu0
    %v782 = vadd.f32 %v684, %v781
    %v783 = vpop.f32.mrf.mxu0
    %784 = vmatprep.mubr.f32.mxu0 0.0
    %785 = vmatmul.mubr.f32.gmra.mxu0 %v693
    %v786 = vpop.f32.mrf.mxu0
    %v787 = vadd.f32 %v684, %v786
    %v788 = vpop.f32.mrf.mxu0
    %789 = vmatprep.mubr.f32.mxu0 0.0
    %790 = vmatmul.mubr.f32.gmra.mxu0 %v696
    %v791 = vpop.f32.mrf.mxu0
    %v792 = vadd.f32 %v684, %v791
    %v793 = vpop.f32.mrf.mxu0
    %794 = vmatprep.mubr.f32.mxu0 0.0
    %795 = vmatmul.mubr.f32.gmra.mxu0 %v699
    %v796 = vpop.f32.mrf.mxu0
    %v797 = vadd.f32 %v684, %v796
    %v798 = vpop.f32.mrf.mxu0
    %799 = vmatprep.mubr.f32.mxu0 0.0
    %800 = vmatmul.mubr.f32.gmra.mxu0 %v702
    %v801 = vpop.f32.mrf.mxu0
    %v802 = vadd.f32 %v684, %v801
    %v803 = vpop.f32.mrf.mxu0
    %804 = vmatprep.mubr.f32.mxu0 0.0
    %805 = vmatmul.mubr.f32.gmra.mxu0 %v705
    %v806 = vpop.f32.mrf.mxu0
    %v807 = vadd.f32 %v684, %v806
    %v808 = vpop.f32.mrf.mxu0
    %809 = vmatprep.mubr.f32.mxu0 0.0
    %810 = vmatmul.mubr.f32.gmra.mxu0 %v708
    %v811 = vpop.f32.mrf.mxu0
    %v812 = vadd.f32 %v684, %v811
    %v813 = vpop.f32.mrf.mxu0
    %814 = vdwg.mxu0
    %v815 = vtanh.pop %v777
    %v816 = vtanh.pop %v782
    %v817 = vtanh.pop %v787
    %v818 = vtanh.pop %v792
    %v819 = vtanh.pop %v797
    %v820 = vtanh.pop %v802
    %v821 = vtanh.pop %v807
    %v822 = vtanh.pop %v812
    %v823 = vld [vmem:[#allocation9] sm:$0x1]
    %v825 = vlaneseq
    %v826 = vshrl.u32 %v825, 7
    %v827 = vsub.s32 0, %v826
    %v828 = vrot.slane %v823, %v827
    %v830 = vmul.f32 %v669, %v828
    %v831 = vmul.f32 %v670, %v828
    %v832 = vmul.f32 %v671, %v828
    %v833 = vmul.f32 %v672, %v828
    %v834 = vmul.f32 %v673, %v828
    %v835 = vmul.f32 %v674, %v828
    %v836 = vmul.f32 %v675, %v828
    %v837 = vmul.f32 %v676, %v828
    %v838 = vsel %vm539, %v830, 0.0
    %839 = vadd.xlane.f32.xlu0 %v838
    %v840 = vpop.xlane.xlu0 %839
    %v841 = vsel %vm539, %v831, 0.0
    %842 = vadd.xlane.f32.xlu0 %v841
    %v843 = vpop.xlane.xlu0 %842
    %v844 = vsel %vm539, %v832, 0.0
    %845 = vadd.xlane.f32.xlu0 %v844
    %v846 = vpop.xlane.xlu0 %845
    %v847 = vsel %vm539, %v833, 0.0
    %848 = vadd.xlane.f32.xlu0 %v847
    %v849 = vpop.xlane.xlu0 %848
    %v850 = vsel %vm539, %v834, 0.0
    %851 = vadd.xlane.f32.xlu0 %v850
    %v852 = vpop.xlane.xlu0 %851
    %v853 = vsel %vm539, %v835, 0.0
    %854 = vadd.xlane.f32.xlu0 %v853
    %v855 = vpop.xlane.xlu0 %854
    %v856 = vsel %vm539, %v836, 0.0
    %857 = vadd.xlane.f32.xlu0 %v856
    %v858 = vpop.xlane.xlu0 %857
    %v859 = vsel %vm539, %v837, 0.0
    %860 = vadd.xlane.f32.xlu0 %v859
    %v861 = vpop.xlane.xlu0 %860
    %v862 = vld [vmem:[#allocation2] sm:$0x1]
    %v864 = vlaneseq
    %v865 = vshrl.u32 %v864, 7
    %v866 = vsub.s32 0, %v865
    %v867 = vrot.slane %v862, %v866
    %v869 = vadd.f32 %v840, %v867
    %v870 = vadd.f32 %v843, %v867
    %v871 = vadd.f32 %v846, %v867
    %v872 = vadd.f32 %v849, %v867
    %v873 = vadd.f32 %v852, %v867
    %v874 = vadd.f32 %v855, %v867
    %v875 = vadd.f32 %v858, %v867
    %v876 = vadd.f32 %v861, %v867
    %v877 = vld [vmem:[#allocation13] sm:$0x1]
    %v879 = vlaneseq
    %v880 = vshrl.u32 %v879, 7
    %v881 = vsub.s32 0, %v880
    %v882 = vrot.slane %v877, %v881
    %v884 = vmul.f32 %v815, %v882
    %v885 = vmul.f32 %v816, %v882
    %v886 = vmul.f32 %v817, %v882
    %v887 = vmul.f32 %v818, %v882
    %v888 = vmul.f32 %v819, %v882
    %v889 = vmul.f32 %v820, %v882
    %v890 = vmul.f32 %v821, %v882
    %v891 = vmul.f32 %v822, %v882
    %v892 = vsel %vm539, %v884, 0.0
    %893 = vadd.xlane.f32.xlu0 %v892
    %v894 = vpop.xlane.xlu0 %893
    %v895 = vsel %vm539, %v885, 0.0
    %896 = vadd.xlane.f32.xlu0 %v895
    %v897 = vpop.xlane.xlu0 %896
    %v898 = vsel %vm539, %v886, 0.0
    %899 = vadd.xlane.f32.xlu0 %v898
    %v900 = vpop.xlane.xlu0 %899
    %v901 = vsel %vm539, %v887, 0.0
    %902 = vadd.xlane.f32.xlu0 %v901
    %v903 = vpop.xlane.xlu0 %902
    %v904 = vsel %vm539, %v888, 0.0
    %905 = vadd.xlane.f32.xlu0 %v904
    %v906 = vpop.xlane.xlu0 %905
    %v907 = vsel %vm539, %v889, 0.0
    %908 = vadd.xlane.f32.xlu0 %v907
    %v909 = vpop.xlane.xlu0 %908
    %v910 = vsel %vm539, %v890, 0.0
    %911 = vadd.xlane.f32.xlu0 %v910
    %v912 = vpop.xlane.xlu0 %911
    %v913 = vsel %vm539, %v891, 0.0
    %914 = vadd.xlane.f32.xlu0 %v913
    %v915 = vpop.xlane.xlu0 %914
    %v916 = vld [vmem:[#allocation3] sm:$0x1]
    %v918 = vlaneseq
    %v919 = vshrl.u32 %v918, 7
    %v920 = vsub.s32 0, %v919
    %v921 = vrot.slane %v916, %v920
    %v923 = vadd.f32 %v894, %v921
    %v924 = vadd.f32 %v897, %v921
    %v925 = vadd.f32 %v900, %v921
    %v926 = vadd.f32 %v903, %v921
    %v927 = vadd.f32 %v906, %v921
    %v928 = vadd.f32 %v909, %v921
    %v929 = vadd.f32 %v912, %v921
    %v930 = vadd.f32 %v915, %v921
    %939 = vrot.lane.b32.xlu0 %v923, 1
    %v940 = vpop.permute.xlu0 %939
    %941 = vrot.lane.b32.xlu0 %v924, 1
    %v942 = vpop.permute.xlu0 %941
    %943 = vrot.lane.b32.xlu0 %v925, 1
    %v944 = vpop.permute.xlu0 %943
    %945 = vrot.lane.b32.xlu0 %v926, 1
    %v946 = vpop.permute.xlu0 %945
    %947 = vrot.lane.b32.xlu0 %v927, 1
    %v948 = vpop.permute.xlu0 %947
    %949 = vrot.lane.b32.xlu0 %v928, 1
    %v950 = vpop.permute.xlu0 %949
    %951 = vrot.lane.b32.xlu0 %v929, 1
    %v952 = vpop.permute.xlu0 %951
    %953 = vrot.lane.b32.xlu0 %v930, 1
    %v954 = vpop.permute.xlu0 %953
    %vm963 = vcmask 7168
    %v964 = vsel %vm963, %v869, %v940
    %v965 = vsel %vm963, %v870, %v942
    %v966 = vsel %vm963, %v871, %v944
    %v967 = vsel %vm963, %v872, %v946
    %v968 = vsel %vm963, %v873, %v948
    %v969 = vsel %vm963, %v874, %v950
    %v970 = vsel %vm963, %v875, %v952
    %v971 = vsel %vm963, %v876, %v954
    %vm972 = vcmask 15360
    %v973 = vsel %vm972, %v964, -inf
    %v974 = vsel %vm972, %v965, -inf
    %v975 = vsel %vm972, %v966, -inf
    %v976 = vsel %vm972, %v967, -inf
    %v977 = vsel %vm972, %v968, -inf
    %v978 = vmax.f32 %v973, %v977
    %v979 = vsel %vm972, %v969, -inf
    %v980 = vmax.f32 %v974, %v979
    %v981 = vsel %vm972, %v970, -inf
    %v982 = vmax.f32 %v975, %v981
    %v983 = vsel %vm972, %v971, -inf
    %v984 = vmax.f32 %v976, %v983
    %v985 = vmax.f32 %v978, %v980
    %v986 = vmax.f32 %v982, %v984
    %v987 = vmax.f32 %v985, %v986
    %v988 = vrot.slane %v987, 4
    %v989 = vmax.f32 %v987, %v988
    %v990 = vrot.slane %v989, 2
    %v991 = vmax.f32 %v989, %v990
    %v992 = vrot.slane %v991, 1
    %v993 = vmax.f32 %v991, %v992
    %v994 = vsub.f32 %v964, %v993
    %v995 = vsub.f32 %v965, %v993
    %v996 = vsub.f32 %v966, %v993
    %v997 = vsub.f32 %v967, %v993
    %v998 = vsub.f32 %v968, %v993
    %v999 = vsub.f32 %v969, %v993
    %v1000 = vsub.f32 %v970, %v993
    %v1001 = vsub.f32 %v971, %v993
    %v1002 = vmul.f32 %v994, 1.442695
    %v1003 = vpow.pop %v1002
    %v1004 = vmul.f32 %v995, 1.442695
    %v1005 = vpow.pop %v1004
    %v1006 = vmul.f32 %v996, 1.442695
    %v1007 = vpow.pop %v1006
    %v1008 = vmul.f32 %v997, 1.442695
    %v1009 = vpow.pop %v1008
    %v1010 = vmul.f32 %v998, 1.442695
    %v1011 = vpow.pop %v1010
    %v1012 = vmul.f32 %v999, 1.442695
    %v1013 = vpow.pop %v1012
    %v1014 = vmul.f32 %v1000, 1.442695
    %v1015 = vpow.pop %v1014
    %v1016 = vmul.f32 %v1001, 1.442695
    %v1017 = vpow.pop %v1016
    %v1018 = vadd.f32 %v1003, %v1005
    %v1019 = vadd.f32 %v1018, %v1007
    %v1020 = vadd.f32 %v1019, %v1009
    %v1021 = vadd.f32 %v1020, %v1011
    %v1022 = vadd.f32 %v1021, %v1013
    %v1023 = vadd.f32 %v1022, %v1015
    %v1024 = vadd.f32 %v1023, %v1017
    %v1025 = vrcp.pop %v1024
    %v1026 = vmul.f32 %v1003, %v1025
    %v1027 = vmul.f32 %v1005, %v1025
    %v1028 = vmul.f32 %v1007, %v1025
    %v1029 = vmul.f32 %v1009, %v1025
    %v1030 = vmul.f32 %v1011, %v1025
    %v1031 = vmul.f32 %v1013, %v1025
    %v1032 = vmul.f32 %v1015, %v1025
    %v1033 = vmul.f32 %v1017, %v1025
    %1035 = vset.pattern.permute.xlu0 0
    %1036 = vperm.xlu0 %1035, %v1026
    %v1037 = vpop.permute.xlu0 %1036
    %1040 = vset.pattern.permute.xlu0 0
    %1041 = vperm.xlu0 %1040, %v1027
    %v1042 = vpop.permute.xlu0 %1041
    %1045 = vset.pattern.permute.xlu0 0
    %1046 = vperm.xlu0 %1045, %v1028
    %v1047 = vpop.permute.xlu0 %1046
    %1050 = vset.pattern.permute.xlu0 0
    %1051 = vperm.xlu0 %1050, %v1029
    %v1052 = vpop.permute.xlu0 %1051
    %1055 = vset.pattern.permute.xlu0 0
    %1056 = vperm.xlu0 %1055, %v1030
    %v1057 = vpop.permute.xlu0 %1056
    %1060 = vset.pattern.permute.xlu0 0
    %1061 = vperm.xlu0 %1060, %v1031
    %v1062 = vpop.permute.xlu0 %1061
    %1065 = vset.pattern.permute.xlu0 0
    %1066 = vperm.xlu0 %1065, %v1032
    %v1067 = vpop.permute.xlu0 %1066
    %1070 = vset.pattern.permute.xlu0 0
    %1071 = vperm.xlu0 %1070, %v1033
    %v1072 = vpop.permute.xlu0 %1071
    %v1074 = vmul.f32 %v514, %v1037
    %v1075 = vmul.f32 %v515, %v1042
    %v1076 = vmul.f32 %v516, %v1047
    %v1077 = vmul.f32 %v517, %v1052
    %v1078 = vmul.f32 %v518, %v1057
    %v1079 = vmul.f32 %v519, %v1062
    %v1080 = vmul.f32 %v520, %v1067
    %v1081 = vmul.f32 %v521, %v1072
    %1082 = vset.pattern.permute.xlu0 1
    %1083 = vperm.xlu0 %1082, %v1026
    %v1084 = vpop.permute.xlu0 %1083
    %1086 = vset.pattern.permute.xlu0 1
    %1087 = vperm.xlu0 %1086, %v1027
    %v1088 = vpop.permute.xlu0 %1087
    %1090 = vset.pattern.permute.xlu0 1
    %1091 = vperm.xlu0 %1090, %v1028
    %v1092 = vpop.permute.xlu0 %1091
    %1094 = vset.pattern.permute.xlu0 1
    %1095 = vperm.xlu0 %1094, %v1029
    %v1096 = vpop.permute.xlu0 %1095
    %1098 = vset.pattern.permute.xlu0 1
    %1099 = vperm.xlu0 %1098, %v1030
    %v1100 = vpop.permute.xlu0 %1099
    %1102 = vset.pattern.permute.xlu0 1
    %1103 = vperm.xlu0 %1102, %v1031
    %v1104 = vpop.permute.xlu0 %1103
    %1106 = vset.pattern.permute.xlu0 1
    %1107 = vperm.xlu0 %1106, %v1032
    %v1108 = vpop.permute.xlu0 %1107
    %1110 = vset.pattern.permute.xlu0 1
    %1111 = vperm.xlu0 %1110, %v1033
    %v1112 = vpop.permute.xlu0 %1111
    %v1114 = vmul.f32 %v522, %v1084
    %v1115 = vmul.f32 %v523, %v1088
    %v1116 = vmul.f32 %v524, %v1092
    %v1117 = vmul.f32 %v525, %v1096
    %v1118 = vmul.f32 %v526, %v1100
    %v1119 = vmul.f32 %v527, %v1104
    %v1120 = vmul.f32 %v528, %v1108
    %v1121 = vmul.f32 %v529, %v1112
    %v1122 = vld [vmem:[%s25] sm:$0xff]
    %v1123 = vld [vmem:[%s25 + $0x8] sm:$0xff]
    %v1124 = vld [vmem:[#allocation15] sm:$0x1]
    %v1126 = vlaneseq
    %v1127 = vshrl.u32 %v1126, 7
    %v1128 = vsub.s32 0, %v1127
    %v1129 = vrot.slane %v1124, %v1128
    %v1132 = vsel %vm539, %v1074, 0
    %v1135 = vsel %vm539, %v1075, 0
    %v1138 = vsel %vm539, %v1076, 0
    %v1141 = vsel %vm539, %v1077, 0
    %v1144 = vsel %vm539, %v1078, 0
    %v1147 = vsel %vm539, %v1079, 0
    %v1150 = vsel %vm539, %v1080, 0
    %v1153 = vsel %vm539, %v1081, 0
    %1155 = vmatprep.subr.mxu0 0.0
    %1156 = vmatpush1.msra.mxu0 0.0
    %1157 = vmatprep.subr.mxu0 0.0
    %1158 = vmatpush1.msra.mxu0 0.0
    %1159 = vmatprep.subr.mxu0 0.0
    %1160 = vmatpush1.msra.mxu0 0.0
    %1161 = vmatprep.subr.mxu0 0.0
    %1162 = vmatpush1.msra.mxu0 0.0
    %1163 = vmatprep.subr.mxu0 0.0
    %1164 = vmatpush1.msra.mxu0 0.0
    %1165 = vmatprep.subr.mxu0 0.0
    %1166 = vmatpush1.msra.mxu0 0.0
    %1167 = vmatprep.subr.mxu0 0.0
    %1168 = vmatpush1.msra.mxu0 0.0
    %1169 = vmatprep.subr.mxu0 0.0
    %1170 = vmatpush1.msra.mxu0 0.0
    %1171 = vmatprep.subr.mxu0 0.0
    %1172 = vmatpush1.msra.mxu0 0.0
    %1173 = vmatprep.subr.mxu0 0.0
    %1174 = vmatpush1.msra.mxu0 0.0
    %1175 = vmatprep.subr.mxu0 0.0
    %1176 = vmatpush1.msra.mxu0 0.0
    %1177 = vmatprep.subr.mxu0 0.0
    %1178 = vmatpush1.msra.mxu0 0.0
    %1179 = vmatprep.subr.mxu0 0.0
    %1180 = vmatpush1.msra.mxu0 0.0
    %1181 = vmatprep.subr.mxu0 0.0
    %1182 = vmatpush1.msra.mxu0 0.0
    %1183 = vmatprep.subr.mxu0 0.0
    %1184 = vmatpush1.msra.mxu0 %v1123
    %1185 = vmatprep.subr.mxu0 0.0
    %1186 = vmatpush1.msra.mxu0 %v1122
    %1187 = vmatprep.subr.mxu0 0.0
    %1188 = vmatpush2.msra.mxu0 0.0
    %1189 = vmatprep.subr.mxu0 0.0
    %1190 = vmatpush2.msra.mxu0 0.0
    %1191 = vmatprep.subr.mxu0 0.0
    %1192 = vmatpush2.msra.mxu0 0.0
    %1193 = vmatprep.subr.mxu0 0.0
    %1194 = vmatpush2.msra.mxu0 0.0
    %1195 = vmatprep.subr.mxu0 0.0
    %1196 = vmatpush2.msra.mxu0 0.0
    %1197 = vmatprep.subr.mxu0 0.0
    %1198 = vmatpush2.msra.mxu0 0.0
    %1199 = vmatprep.subr.mxu0 0.0
    %1200 = vmatpush2.msra.mxu0 0.0
    %1201 = vmatprep.subr.mxu0 0.0
    %1202 = vmatpush2.msra.mxu0 0.0
    %1203 = vmatprep.subr.mxu0 0.0
    %1204 = vmatpush2.msra.mxu0 0.0
    %1205 = vmatprep.subr.mxu0 0.0
    %1206 = vmatpush2.msra.mxu0 0.0
    %1207 = vmatprep.subr.mxu0 0.0
    %1208 = vmatpush2.msra.mxu0 0.0
    %1209 = vmatprep.subr.mxu0 0.0
    %1210 = vmatpush2.msra.mxu0 0.0
    %1211 = vmatprep.subr.mxu0 0.0
    %1212 = vmatpush2.msra.mxu0 0.0
    %1213 = vmatprep.subr.mxu0 0.0
    %1214 = vmatpush2.msra.mxu0 0.0
    %1215 = vmatprep.subr.mxu0 0.0
    %1216 = vmatpush2.msra.mxu0 0.0
    %1217 = vmatprep.subr.mxu0 0.0
    %1218 = vmatpush2.msra.mxu0 0.0
    %1219 = vmatprep.mubr.f32.mxu0 0.0
    %1220 = vmatmul.mubr.f32.gmra.mxu0 %v1132
    %v1221 = vpop.f32.mrf.mxu0
    %v1222 = vadd.f32 %v1129, %v1221
    %v1223 = vpop.f32.mrf.mxu0
    %1224 = vmatprep.mubr.f32.mxu0 0.0
    %1225 = vmatmul.mubr.f32.gmra.mxu0 %v1135
    %v1226 = vpop.f32.mrf.mxu0
    %v1227 = vadd.f32 %v1129, %v1226
    %v1228 = vpop.f32.mrf.mxu0
    %1229 = vmatprep.mubr.f32.mxu0 0.0
    %1230 = vmatmul.mubr.f32.gmra.mxu0 %v1138
    %v1231 = vpop.f32.mrf.mxu0
    %v1232 = vadd.f32 %v1129, %v1231
    %v1233 = vpop.f32.mrf.mxu0
    %1234 = vmatprep.mubr.f32.mxu0 0.0
    %1235 = vmatmul.mubr.f32.gmra.mxu0 %v1141
    %v1236 = vpop.f32.mrf.mxu0
    %v1237 = vadd.f32 %v1129, %v1236
    %v1238 = vpop.f32.mrf.mxu0
    %1239 = vmatprep.mubr.f32.mxu0 0.0
    %1240 = vmatmul.mubr.f32.gmra.mxu0 %v1144
    %v1241 = vpop.f32.mrf.mxu0
    %v1242 = vadd.f32 %v1129, %v1241
    %v1243 = vpop.f32.mrf.mxu0
    %1244 = vmatprep.mubr.f32.mxu0 0.0
    %1245 = vmatmul.mubr.f32.gmra.mxu0 %v1147
    %v1246 = vpop.f32.mrf.mxu0
    %v1247 = vadd.f32 %v1129, %v1246
    %v1248 = vpop.f32.mrf.mxu0
    %1249 = vmatprep.mubr.f32.mxu0 0.0
    %1250 = vmatmul.mubr.f32.gmra.mxu0 %v1150
    %v1251 = vpop.f32.mrf.mxu0
    %v1252 = vadd.f32 %v1129, %v1251
    %v1253 = vpop.f32.mrf.mxu0
    %1254 = vmatprep.mubr.f32.mxu0 0.0
    %1255 = vmatmul.mubr.f32.gmra.mxu0 %v1153
    %v1256 = vpop.f32.mrf.mxu0
    %v1257 = vadd.f32 %v1129, %v1256
    %v1258 = vpop.f32.mrf.mxu0
    %1259 = vdwg.mxu0
    %v1260 = vld [vmem:[#allocation18] sm:$0xff]
    %v1261 = vld [vmem:[#allocation18 + $0x8] sm:$0xff]
    %v1262 = vld [vmem:[#allocation19] sm:$0x1]
    %v1264 = vlaneseq
    %v1265 = vshrl.u32 %v1264, 7
    %v1266 = vsub.s32 0, %v1265
    %v1267 = vrot.slane %v1262, %v1266
    %v1270 = vsel %vm539, %v1114, 0
    %v1273 = vsel %vm539, %v1115, 0
    %v1276 = vsel %vm539, %v1116, 0
    %v1279 = vsel %vm539, %v1117, 0
    %v1282 = vsel %vm539, %v1118, 0
    %v1285 = vsel %vm539, %v1119, 0
    %v1288 = vsel %vm539, %v1120, 0
    %v1291 = vsel %vm539, %v1121, 0
    %1293 = vmatprep.subr.mxu0 0.0
    %1294 = vmatpush1.msra.mxu0 0.0
    %1295 = vmatprep.subr.mxu0 0.0
    %1296 = vmatpush1.msra.mxu0 0.0
    %1297 = vmatprep.subr.mxu0 0.0
    %1298 = vmatpush1.msra.mxu0 0.0
    %1299 = vmatprep.subr.mxu0 0.0
    %1300 = vmatpush1.msra.mxu0 0.0
    %1301 = vmatprep.subr.mxu0 0.0
    %1302 = vmatpush1.msra.mxu0 0.0
    %1303 = vmatprep.subr.mxu0 0.0
    %1304 = vmatpush1.msra.mxu0 0.0
    %1305 = vmatprep.subr.mxu0 0.0
    %1306 = vmatpush1.msra.mxu0 0.0
    %1307 = vmatprep.subr.mxu0 0.0
    %1308 = vmatpush1.msra.mxu0 0.0
    %1309 = vmatprep.subr.mxu0 0.0
    %1310 = vmatpush1.msra.mxu0 0.0
    %1311 = vmatprep.subr.mxu0 0.0
    %1312 = vmatpush1.msra.mxu0 0.0
    %1313 = vmatprep.subr.mxu0 0.0
    %1314 = vmatpush1.msra.mxu0 0.0
    %1315 = vmatprep.subr.mxu0 0.0
    %1316 = vmatpush1.msra.mxu0 0.0
    %1317 = vmatprep.subr.mxu0 0.0
    %1318 = vmatpush1.msra.mxu0 0.0
    %1319 = vmatprep.subr.mxu0 0.0
    %1320 = vmatpush1.msra.mxu0 0.0
    %1321 = vmatprep.subr.mxu0 0.0
    %1322 = vmatpush1.msra.mxu0 %v1261
    %1323 = vmatprep.subr.mxu0 0.0
    %1324 = vmatpush1.msra.mxu0 %v1260
    %1325 = vmatprep.subr.mxu0 0.0
    %1326 = vmatpush2.msra.mxu0 0.0
    %1327 = vmatprep.subr.mxu0 0.0
    %1328 = vmatpush2.msra.mxu0 0.0
    %1329 = vmatprep.subr.mxu0 0.0
    %1330 = vmatpush2.msra.mxu0 0.0
    %1331 = vmatprep.subr.mxu0 0.0
    %1332 = vmatpush2.msra.mxu0 0.0
    %1333 = vmatprep.subr.mxu0 0.0
    %1334 = vmatpush2.msra.mxu0 0.0
    %1335 = vmatprep.subr.mxu0 0.0
    %1336 = vmatpush2.msra.mxu0 0.0
    %1337 = vmatprep.subr.mxu0 0.0
    %1338 = vmatpush2.msra.mxu0 0.0
    %1339 = vmatprep.subr.mxu0 0.0
    %1340 = vmatpush2.msra.mxu0 0.0
    %1341 = vmatprep.subr.mxu0 0.0
    %1342 = vmatpush2.msra.mxu0 0.0
    %1343 = vmatprep.subr.mxu0 0.0
    %1344 = vmatpush2.msra.mxu0 0.0
    %1345 = vmatprep.subr.mxu0 0.0
    %1346 = vmatpush2.msra.mxu0 0.0
    %1347 = vmatprep.subr.mxu0 0.0
    %1348 = vmatpush2.msra.mxu0 0.0
    %1349 = vmatprep.subr.mxu0 0.0
    %1350 = vmatpush2.msra.mxu0 0.0
    %1351 = vmatprep.subr.mxu0 0.0
    %1352 = vmatpush2.msra.mxu0 0.0
    %1353 = vmatprep.subr.mxu0 0.0
    %1354 = vmatpush2.msra.mxu0 0.0
    %1355 = vmatprep.subr.mxu0 0.0
    %1356 = vmatpush2.msra.mxu0 0.0
    %1357 = vmatprep.mubr.f32.mxu0 0.0
    %1358 = vmatmul.mubr.f32.gmra.mxu0 %v1270
    %v1359 = vpop.f32.mrf.mxu0
    %v1360 = vadd.f32 %v1267, %v1359
    %v1361 = vpop.f32.mrf.mxu0
    %1362 = vmatprep.mubr.f32.mxu0 0.0
    %1363 = vmatmul.mubr.f32.gmra.mxu0 %v1273
    %v1364 = vpop.f32.mrf.mxu0
    %v1365 = vadd.f32 %v1267, %v1364
    %v1366 = vpop.f32.mrf.mxu0
    %1367 = vmatprep.mubr.f32.mxu0 0.0
    %1368 = vmatmul.mubr.f32.gmra.mxu0 %v1276
    %v1369 = vpop.f32.mrf.mxu0
    %v1370 = vadd.f32 %v1267, %v1369
    %v1371 = vpop.f32.mrf.mxu0
    %1372 = vmatprep.mubr.f32.mxu0 0.0
    %1373 = vmatmul.mubr.f32.gmra.mxu0 %v1279
    %v1374 = vpop.f32.mrf.mxu0
    %v1375 = vadd.f32 %v1267, %v1374
    %v1376 = vpop.f32.mrf.mxu0
    %1377 = vmatprep.mubr.f32.mxu0 0.0
    %1378 = vmatmul.mubr.f32.gmra.mxu0 %v1282
    %v1379 = vpop.f32.mrf.mxu0
    %v1380 = vadd.f32 %v1267, %v1379
    %v1381 = vpop.f32.mrf.mxu0
    %1382 = vmatprep.mubr.f32.mxu0 0.0
    %1383 = vmatmul.mubr.f32.gmra.mxu0 %v1285
    %v1384 = vpop.f32.mrf.mxu0
    %v1385 = vadd.f32 %v1267, %v1384
    %v1386 = vpop.f32.mrf.mxu0
    %1387 = vmatprep.mubr.f32.mxu0 0.0
    %1388 = vmatmul.mubr.f32.gmra.mxu0 %v1288
    %v1389 = vpop.f32.mrf.mxu0
    %v1390 = vadd.f32 %v1267, %v1389
    %v1391 = vpop.f32.mrf.mxu0
    %1392 = vmatprep.mubr.f32.mxu0 0.0
    %1393 = vmatmul.mubr.f32.gmra.mxu0 %v1291
    %v1394 = vpop.f32.mrf.mxu0
    %v1395 = vadd.f32 %v1267, %v1394
    %v1396 = vpop.f32.mrf.mxu0
    %1397 = vdwg.mxu0
    %v1398 = vld [vmem:[#allocation16] sm:$0xff]
    %v1399 = vld [vmem:[#allocation16 + $0x8] sm:$0xff]
    %v1400 = vld [vmem:[#allocation21] sm:$0xff]
    %v1401 = vld [vmem:[#allocation21 + $0x8] sm:$0xff]
    %v1403 = vsel %vm539, 0.0, 0
    %1405 = vmatprep.subr.mxu0 0.0
    %1406 = vmatpush1.msra.mxu0 0.0
    %1407 = vmatprep.subr.mxu0 0.0
    %1408 = vmatpush1.msra.mxu0 0.0
    %1409 = vmatprep.subr.mxu0 0.0
    %1410 = vmatpush1.msra.mxu0 0.0
    %1411 = vmatprep.subr.mxu0 0.0
    %1412 = vmatpush1.msra.mxu0 0.0
    %1413 = vmatprep.subr.mxu0 0.0
    %1414 = vmatpush1.msra.mxu0 0.0
    %1415 = vmatprep.subr.mxu0 0.0
    %1416 = vmatpush1.msra.mxu0 0.0
    %1417 = vmatprep.subr.mxu0 0.0
    %1418 = vmatpush1.msra.mxu0 0.0
    %1419 = vmatprep.subr.mxu0 0.0
    %1420 = vmatpush1.msra.mxu0 0.0
    %1421 = vmatprep.subr.mxu0 0.0
    %1422 = vmatpush1.msra.mxu0 0.0
    %1423 = vmatprep.subr.mxu0 0.0
    %1424 = vmatpush1.msra.mxu0 0.0
    %1425 = vmatprep.subr.mxu0 0.0
    %1426 = vmatpush1.msra.mxu0 0.0
    %1427 = vmatprep.subr.mxu0 0.0
    %1428 = vmatpush1.msra.mxu0 0.0
    %1429 = vmatprep.subr.mxu0 0.0
    %1430 = vmatpush1.msra.mxu0 0.0
    %1431 = vmatprep.subr.mxu0 0.0
    %1432 = vmatpush1.msra.mxu0 0.0
    %1433 = vmatprep.subr.mxu0 0.0
    %1434 = vmatpush1.msra.mxu0 %v1399
    %1435 = vmatprep.subr.mxu0 0.0
    %1436 = vmatpush1.msra.mxu0 %v1398
    %1437 = vmatprep.subr.mxu0 0.0
    %1438 = vmatpush2.msra.mxu0 0.0
    %1439 = vmatprep.subr.mxu0 0.0
    %1440 = vmatpush2.msra.mxu0 0.0
    %1441 = vmatprep.subr.mxu0 0.0
    %1442 = vmatpush2.msra.mxu0 0.0
    %1443 = vmatprep.subr.mxu0 0.0
    %1444 = vmatpush2.msra.mxu0 0.0
    %1445 = vmatprep.subr.mxu0 0.0
    %1446 = vmatpush2.msra.mxu0 0.0
    %1447 = vmatprep.subr.mxu0 0.0
    %1448 = vmatpush2.msra.mxu0 0.0
    %1449 = vmatprep.subr.mxu0 0.0
    %1450 = vmatpush2.msra.mxu0 0.0
    %1451 = vmatprep.subr.mxu0 0.0
    %1452 = vmatpush2.msra.mxu0 0.0
    %1453 = vmatprep.subr.mxu0 0.0
    %1454 = vmatpush2.msra.mxu0 0.0
    %1455 = vmatprep.subr.mxu0 0.0
    %1456 = vmatpush2.msra.mxu0 0.0
    %1457 = vmatprep.subr.mxu0 0.0
    %1458 = vmatpush2.msra.mxu0 0.0
    %1459 = vmatprep.subr.mxu0 0.0
    %1460 = vmatpush2.msra.mxu0 0.0
    %1461 = vmatprep.subr.mxu0 0.0
    %1462 = vmatpush2.msra.mxu0 0.0
    %1463 = vmatprep.subr.mxu0 0.0
    %1464 = vmatpush2.msra.mxu0 0.0
    %1465 = vmatprep.subr.mxu0 0.0
    %1466 = vmatpush2.msra.mxu0 0.0
    %1467 = vmatprep.subr.mxu0 0.0
    %1468 = vmatpush2.msra.mxu0 0.0
    %1469 = vmatprep.mubr.f32.mxu0 0.0
    %1470 = vmatmul.mubr.f32.gmra.mxu0 %v1403
    %v1471 = vpop.f32.mrf.mxu0
    %v1472 = vadd.f32 0.0, %v1471
    %v1473 = vpop.f32.mrf.mxu0
    %1474 = vdwg.mxu0
    %v1475 = vadd.f32 %v1222, %v1472
    %1476 = vmatprep.subr.mxu0 0.0
    %1477 = vmatpush1.msra.mxu0 0.0
    %1478 = vmatprep.subr.mxu0 0.0
    %1479 = vmatpush1.msra.mxu0 0.0
    %1480 = vmatprep.subr.mxu0 0.0
    %1481 = vmatpush1.msra.mxu0 0.0
    %1482 = vmatprep.subr.mxu0 0.0
    %1483 = vmatpush1.msra.mxu0 0.0
    %1484 = vmatprep.subr.mxu0 0.0
    %1485 = vmatpush1.msra.mxu0 0.0
    %1486 = vmatprep.subr.mxu0 0.0
    %1487 = vmatpush1.msra.mxu0 0.0
    %1488 = vmatprep.subr.mxu0 0.0
    %1489 = vmatpush1.msra.mxu0 0.0
    %1490 = vmatprep.subr.mxu0 0.0
    %1491 = vmatpush1.msra.mxu0 0.0
    %1492 = vmatprep.subr.mxu0 0.0
    %1493 = vmatpush1.msra.mxu0 0.0
    %1494 = vmatprep.subr.mxu0 0.0
    %1495 = vmatpush1.msra.mxu0 0.0
    %1496 = vmatprep.subr.mxu0 0.0
    %1497 = vmatpush1.msra.mxu0 0.0
    %1498 = vmatprep.subr.mxu0 0.0
    %1499 = vmatpush1.msra.mxu0 0.0
    %1500 = vmatprep.subr.mxu0 0.0
    %1501 = vmatpush1.msra.mxu0 0.0
    %1502 = vmatprep.subr.mxu0 0.0
    %1503 = vmatpush1.msra.mxu0 0.0
    %1504 = vmatprep.subr.mxu0 0.0
    %1505 = vmatpush1.msra.mxu0 %v1401
    %1506 = vmatprep.subr.mxu0 0.0
    %1507 = vmatpush1.msra.mxu0 %v1400
    %1508 = vmatprep.subr.mxu0 0.0
    %1509 = vmatpush2.msra.mxu0 0.0
    %1510 = vmatprep.subr.mxu0 0.0
    %1511 = vmatpush2.msra.mxu0 0.0
    %1512 = vmatprep.subr.mxu0 0.0
    %1513 = vmatpush2.msra.mxu0 0.0
    %1514 = vmatprep.subr.mxu0 0.0
    %1515 = vmatpush2.msra.mxu0 0.0
    %1516 = vmatprep.subr.mxu0 0.0
    %1517 = vmatpush2.msra.mxu0 0.0
    %1518 = vmatprep.subr.mxu0 0.0
    %1519 = vmatpush2.msra.mxu0 0.0
    %1520 = vmatprep.subr.mxu0 0.0
    %1521 = vmatpush2.msra.mxu0 0.0
    %1522 = vmatprep.subr.mxu0 0.0
    %1523 = vmatpush2.msra.mxu0 0.0
    %1524 = vmatprep.subr.mxu0 0.0
    %1525 = vmatpush2.msra.mxu0 0.0
    %1526 = vmatprep.subr.mxu0 0.0
    %1527 = vmatpush2.msra.mxu0 0.0
    %1528 = vmatprep.subr.mxu0 0.0
    %1529 = vmatpush2.msra.mxu0 0.0
    %1530 = vmatprep.subr.mxu0 0.0
    %1531 = vmatpush2.msra.mxu0 0.0
    %1532 = vmatprep.subr.mxu0 0.0
    %1533 = vmatpush2.msra.mxu0 0.0
    %1534 = vmatprep.subr.mxu0 0.0
    %1535 = vmatpush2.msra.mxu0 0.0
    %1536 = vmatprep.subr.mxu0 0.0
    %1537 = vmatpush2.msra.mxu0 0.0
    %1538 = vmatprep.subr.mxu0 0.0
    %1539 = vmatpush2.msra.mxu0 0.0
    %1540 = vmatprep.mubr.f32.mxu0 0.0
    %1541 = vmatmul.mubr.f32.gmra.mxu0 %v1403
    %v1542 = vpop.f32.mrf.mxu0
    %v1543 = vadd.f32 0.0, %v1542
    %v1544 = vpop.f32.mrf.mxu0
    %1545 = vdwg.mxu0
    %v1546 = vadd.f32 %v1360, %v1543
    %v1547 = vxor.u32 %v1475, 2147483648
    %v1548 = vmul.f32 %v1547, 1.442695
    %v1549 = vpow.pop %v1548
    %v1550 = vadd.f32 %v1549, 1.0
    %v1551 = vrcp.pop %v1550
    %v1552 = vmul.f32 1.0, %v1551
    %v1553 = vtanh.pop %v1475
    %v1554 = vmul.f32 %v1552, 0.0
    %1556 = vrot.lane.b32.xlu0 %v1553, 96
    %v1557 = vpop.permute.xlu0 %1556
    %v1559 = vmul.f32 %v1552, %v1557
    %1561 = vrot.lane.b32.xlu0 %v1559, 16
    %v1562 = vpop.permute.xlu0 %1561
    %v1564 = vadd.f32 %v1554, %v1562
    %v1565 = vtanh.pop %v1564
    %1567 = vrot.lane.b32.xlu0 %v1565, 32
    %v1568 = vpop.permute.xlu0 %1567
    %v1570 = vmul.f32 %v1552, %v1568
    %v1571 = vxor.u32 %v1546, 2147483648
    %v1572 = vmul.f32 %v1571, 1.442695
    %v1573 = vpow.pop %v1572
    %v1574 = vadd.f32 %v1573, 1.0
    %v1575 = vrcp.pop %v1574
    %v1576 = vmul.f32 1.0, %v1575
    %v1577 = vtanh.pop %v1546
    %v1578 = vmul.f32 %v1576, 0.0
    %1580 = vrot.lane.b32.xlu0 %v1577, 96
    %v1581 = vpop.permute.xlu0 %1580
    %v1583 = vmul.f32 %v1576, %v1581
    %1585 = vrot.lane.b32.xlu0 %v1583, 16
    %v1586 = vpop.permute.xlu0 %1585
    %v1588 = vadd.f32 %v1578, %v1586
    %v1589 = vtanh.pop %v1588
    %1591 = vrot.lane.b32.xlu0 %v1589, 32
    %v1592 = vpop.permute.xlu0 %1591
    %v1594 = vmul.f32 %v1576, %v1592
    %1596 = vrot.lane.b32.xlu0 %v1594, 80
    %v1597 = vpop.permute.xlu0 %1596
    %1600 = vrot.lane.b32.xlu0 %v1570, 96
    %v1601 = vpop.permute.xlu0 %1600
    %v1603 = vsel %vm539, %v1597, %v1601
    %1604 = vrot.lane.b32.xlu0 %v1570, 80
    %v1605 = vpop.permute.xlu0 %1604
    %v1606 = vsel %vm539, %v1605, 0
    %1608 = vmatprep.subr.mxu0 0.0
    %1609 = vmatpush1.msra.mxu0 0.0
    %1610 = vmatprep.subr.mxu0 0.0
    %1611 = vmatpush1.msra.mxu0 0.0
    %1612 = vmatprep.subr.mxu0 0.0
    %1613 = vmatpush1.msra.mxu0 0.0
    %1614 = vmatprep.subr.mxu0 0.0
    %1615 = vmatpush1.msra.mxu0 0.0
    %1616 = vmatprep.subr.mxu0 0.0
    %1617 = vmatpush1.msra.mxu0 0.0
    %1618 = vmatprep.subr.mxu0 0.0
    %1619 = vmatpush1.msra.mxu0 0.0
    %1620 = vmatprep.subr.mxu0 0.0
    %1621 = vmatpush1.msra.mxu0 0.0
    %1622 = vmatprep.subr.mxu0 0.0
    %1623 = vmatpush1.msra.mxu0 0.0
    %1624 = vmatprep.subr.mxu0 0.0
    %1625 = vmatpush1.msra.mxu0 0.0
    %1626 = vmatprep.subr.mxu0 0.0
    %1627 = vmatpush1.msra.mxu0 0.0
    %1628 = vmatprep.subr.mxu0 0.0
    %1629 = vmatpush1.msra.mxu0 0.0
    %1630 = vmatprep.subr.mxu0 0.0
    %1631 = vmatpush1.msra.mxu0 0.0
    %1632 = vmatprep.subr.mxu0 0.0
    %1633 = vmatpush1.msra.mxu0 0.0
    %1634 = vmatprep.subr.mxu0 0.0
    %1635 = vmatpush1.msra.mxu0 0.0
    %1636 = vmatprep.subr.mxu0 0.0
    %1637 = vmatpush1.msra.mxu0 %v1399
    %1638 = vmatprep.subr.mxu0 0.0
    %1639 = vmatpush1.msra.mxu0 %v1398
    %1640 = vmatprep.subr.mxu0 0.0
    %1641 = vmatpush2.msra.mxu0 0.0
    %1642 = vmatprep.subr.mxu0 0.0
    %1643 = vmatpush2.msra.mxu0 0.0
    %1644 = vmatprep.subr.mxu0 0.0
    %1645 = vmatpush2.msra.mxu0 0.0
    %1646 = vmatprep.subr.mxu0 0.0
    %1647 = vmatpush2.msra.mxu0 0.0
    %1648 = vmatprep.subr.mxu0 0.0
    %1649 = vmatpush2.msra.mxu0 0.0
    %1650 = vmatprep.subr.mxu0 0.0
    %1651 = vmatpush2.msra.mxu0 0.0
    %1652 = vmatprep.subr.mxu0 0.0
    %1653 = vmatpush2.msra.mxu0 0.0
    %1654 = vmatprep.subr.mxu0 0.0
    %1655 = vmatpush2.msra.mxu0 0.0
    %1656 = vmatprep.subr.mxu0 0.0
    %1657 = vmatpush2.msra.mxu0 0.0
    %1658 = vmatprep.subr.mxu0 0.0
    %1659 = vmatpush2.msra.mxu0 0.0
    %1660 = vmatprep.subr.mxu0 0.0
    %1661 = vmatpush2.msra.mxu0 0.0
    %1662 = vmatprep.subr.mxu0 0.0
    %1663 = vmatpush2.msra.mxu0 0.0
    %1664 = vmatprep.subr.mxu0 0.0
    %1665 = vmatpush2.msra.mxu0 0.0
    %1666 = vmatprep.subr.mxu0 0.0
    %1667 = vmatpush2.msra.mxu0 0.0
    %1668 = vmatprep.subr.mxu0 0.0
    %1669 = vmatpush2.msra.mxu0 0.0
    %1670 = vmatprep.subr.mxu0 0.0
    %1671 = vmatpush2.msra.mxu0 0.0
    %1672 = vmatprep.mubr.f32.mxu0 0.0
    %1673 = vmatmul.mubr.f32.gmra.mxu0 %v1606
    %v1674 = vpop.f32.mrf.mxu0
    %v1675 = vadd.f32 0.0, %v1674
    %v1676 = vpop.f32.mrf.mxu0
    %1677 = vdwg.mxu0
    %v1678 = vadd.f32 %v1227, %v1675
    %v1679 = vsel %vm539, %v1597, 0
    %1681 = vmatprep.subr.mxu0 0.0
    %1682 = vmatpush1.msra.mxu0 0.0
    %1683 = vmatprep.subr.mxu0 0.0
    %1684 = vmatpush1.msra.mxu0 0.0
    %1685 = vmatprep.subr.mxu0 0.0
    %1686 = vmatpush1.msra.mxu0 0.0
    %1687 = vmatprep.subr.mxu0 0.0
    %1688 = vmatpush1.msra.mxu0 0.0
    %1689 = vmatprep.subr.mxu0 0.0
    %1690 = vmatpush1.msra.mxu0 0.0
    %1691 = vmatprep.subr.mxu0 0.0
    %1692 = vmatpush1.msra.mxu0 0.0
    %1693 = vmatprep.subr.mxu0 0.0
    %1694 = vmatpush1.msra.mxu0 0.0
    %1695 = vmatprep.subr.mxu0 0.0
    %1696 = vmatpush1.msra.mxu0 0.0
    %1697 = vmatprep.subr.mxu0 0.0
    %1698 = vmatpush1.msra.mxu0 0.0
    %1699 = vmatprep.subr.mxu0 0.0
    %1700 = vmatpush1.msra.mxu0 0.0
    %1701 = vmatprep.subr.mxu0 0.0
    %1702 = vmatpush1.msra.mxu0 0.0
    %1703 = vmatprep.subr.mxu0 0.0
    %1704 = vmatpush1.msra.mxu0 0.0
    %1705 = vmatprep.subr.mxu0 0.0
    %1706 = vmatpush1.msra.mxu0 0.0
    %1707 = vmatprep.subr.mxu0 0.0
    %1708 = vmatpush1.msra.mxu0 0.0
    %1709 = vmatprep.subr.mxu0 0.0
    %1710 = vmatpush1.msra.mxu0 %v1401
    %1711 = vmatprep.subr.mxu0 0.0
    %1712 = vmatpush1.msra.mxu0 %v1400
    %1713 = vmatprep.subr.mxu0 0.0
    %1714 = vmatpush2.msra.mxu0 0.0
    %1715 = vmatprep.subr.mxu0 0.0
    %1716 = vmatpush2.msra.mxu0 0.0
    %1717 = vmatprep.subr.mxu0 0.0
    %1718 = vmatpush2.msra.mxu0 0.0
    %1719 = vmatprep.subr.mxu0 0.0
    %1720 = vmatpush2.msra.mxu0 0.0
    %1721 = vmatprep.subr.mxu0 0.0
    %1722 = vmatpush2.msra.mxu0 0.0
    %1723 = vmatprep.subr.mxu0 0.0
    %1724 = vmatpush2.msra.mxu0 0.0
    %1725 = vmatprep.subr.mxu0 0.0
    %1726 = vmatpush2.msra.mxu0 0.0
    %1727 = vmatprep.subr.mxu0 0.0
    %1728 = vmatpush2.msra.mxu0 0.0
    %1729 = vmatprep.subr.mxu0 0.0
    %1730 = vmatpush2.msra.mxu0 0.0
    %1731 = vmatprep.subr.mxu0 0.0
    %1732 = vmatpush2.msra.mxu0 0.0
    %1733 = vmatprep.subr.mxu0 0.0
    %1734 = vmatpush2.msra.mxu0 0.0
    %1735 = vmatprep.subr.mxu0 0.0
    %1736 = vmatpush2.msra.mxu0 0.0
    %1737 = vmatprep.subr.mxu0 0.0
    %1738 = vmatpush2.msra.mxu0 0.0
    %1739 = vmatprep.subr.mxu0 0.0
    %1740 = vmatpush2.msra.mxu0 0.0
    %1741 = vmatprep.subr.mxu0 0.0
    %1742 = vmatpush2.msra.mxu0 0.0
    %1743 = vmatprep.subr.mxu0 0.0
    %1744 = vmatpush2.msra.mxu0 0.0
    %1745 = vmatprep.mubr.f32.mxu0 0.0
    %1746 = vmatmul.mubr.f32.gmra.mxu0 %v1679
    %v1747 = vpop.f32.mrf.mxu0
    %v1748 = vadd.f32 0.0, %v1747
    %v1749 = vpop.f32.mrf.mxu0
    %1750 = vdwg.mxu0
    %v1751 = vadd.f32 %v1365, %v1748
    %v1752 = vxor.u32 %v1678, 2147483648
    %v1753 = vmul.f32 %v1752, 1.442695
    %v1754 = vpow.pop %v1753
    %v1755 = vadd.f32 %v1754, 1.0
    %v1756 = vrcp.pop %v1755
    %v1757 = vmul.f32 1.0, %v1756
    %v1758 = vtanh.pop %v1678
    %v1759 = vmul.f32 %v1757, %v1564
    %1761 = vrot.lane.b32.xlu0 %v1758, 96
    %v1762 = vpop.permute.xlu0 %1761
    %v1764 = vmul.f32 %v1757, %v1762
    %1766 = vrot.lane.b32.xlu0 %v1764, 16
    %v1767 = vpop.permute.xlu0 %1766
    %v1769 = vadd.f32 %v1759, %v1767
    %v1770 = vtanh.pop %v1769
    %1772 = vrot.lane.b32.xlu0 %v1770, 32
    %v1773 = vpop.permute.xlu0 %1772
    %v1775 = vmul.f32 %v1757, %v1773
    %v1776 = vxor.u32 %v1751, 2147483648
    %v1777 = vmul.f32 %v1776, 1.442695
    %v1778 = vpow.pop %v1777
    %v1779 = vadd.f32 %v1778, 1.0
    %v1780 = vrcp.pop %v1779
    %v1781 = vmul.f32 1.0, %v1780
    %v1782 = vtanh.pop %v1751
    %v1783 = vmul.f32 %v1781, %v1588
    %1785 = vrot.lane.b32.xlu0 %v1782, 96
    %v1786 = vpop.permute.xlu0 %1785
    %v1788 = vmul.f32 %v1781, %v1786
    %1790 = vrot.lane.b32.xlu0 %v1788, 16
    %v1791 = vpop.permute.xlu0 %1790
    %v1793 = vadd.f32 %v1783, %v1791
    %v1794 = vtanh.pop %v1793
    %1796 = vrot.lane.b32.xlu0 %v1794, 32
    %v1797 = vpop.permute.xlu0 %1796
    %v1799 = vmul.f32 %v1781, %v1797
    %1801 = vrot.lane.b32.xlu0 %v1799, 80
    %v1802 = vpop.permute.xlu0 %1801
    %1805 = vrot.lane.b32.xlu0 %v1775, 96
    %v1806 = vpop.permute.xlu0 %1805
    %v1808 = vsel %vm539, %v1802, %v1806
    %1809 = vrot.lane.b32.xlu0 %v1775, 80
    %v1810 = vpop.permute.xlu0 %1809
    %v1811 = vsel %vm539, %v1810, 0
    %1813 = vmatprep.subr.mxu0 0.0
    %1814 = vmatpush1.msra.mxu0 0.0
    %1815 = vmatprep.subr.mxu0 0.0
    %1816 = vmatpush1.msra.mxu0 0.0
    %1817 = vmatprep.subr.mxu0 0.0
    %1818 = vmatpush1.msra.mxu0 0.0
    %1819 = vmatprep.subr.mxu0 0.0
    %1820 = vmatpush1.msra.mxu0 0.0
    %1821 = vmatprep.subr.mxu0 0.0
    %1822 = vmatpush1.msra.mxu0 0.0
    %1823 = vmatprep.subr.mxu0 0.0
    %1824 = vmatpush1.msra.mxu0 0.0
    %1825 = vmatprep.subr.mxu0 0.0
    %1826 = vmatpush1.msra.mxu0 0.0
    %1827 = vmatprep.subr.mxu0 0.0
    %1828 = vmatpush1.msra.mxu0 0.0
    %1829 = vmatprep.subr.mxu0 0.0
    %1830 = vmatpush1.msra.mxu0 0.0
    %1831 = vmatprep.subr.mxu0 0.0
    %1832 = vmatpush1.msra.mxu0 0.0
    %1833 = vmatprep.subr.mxu0 0.0
    %1834 = vmatpush1.msra.mxu0 0.0
    %1835 = vmatprep.subr.mxu0 0.0
    %1836 = vmatpush1.msra.mxu0 0.0
    %1837 = vmatprep.subr.mxu0 0.0
    %1838 = vmatpush1.msra.mxu0 0.0
    %1839 = vmatprep.subr.mxu0 0.0
    %1840 = vmatpush1.msra.mxu0 0.0
    %1841 = vmatprep.subr.mxu0 0.0
    %1842 = vmatpush1.msra.mxu0 %v1399
    %1843 = vmatprep.subr.mxu0 0.0
    %1844 = vmatpush1.msra.mxu0 %v1398
    %1845 = vmatprep.subr.mxu0 0.0
    %1846 = vmatpush2.msra.mxu0 0.0
    %1847 = vmatprep.subr.mxu0 0.0
    %1848 = vmatpush2.msra.mxu0 0.0
    %1849 = vmatprep.subr.mxu0 0.0
    %1850 = vmatpush2.msra.mxu0 0.0
    %1851 = vmatprep.subr.mxu0 0.0
    %1852 = vmatpush2.msra.mxu0 0.0
    %1853 = vmatprep.subr.mxu0 0.0
    %1854 = vmatpush2.msra.mxu0 0.0
    %1855 = vmatprep.subr.mxu0 0.0
    %1856 = vmatpush2.msra.mxu0 0.0
    %1857 = vmatprep.subr.mxu0 0.0
    %1858 = vmatpush2.msra.mxu0 0.0
    %1859 = vmatprep.subr.mxu0 0.0
    %1860 = vmatpush2.msra.mxu0 0.0
    %1861 = vmatprep.subr.mxu0 0.0
    %1862 = vmatpush2.msra.mxu0 0.0
    %1863 = vmatprep.subr.mxu0 0.0
    %1864 = vmatpush2.msra.mxu0 0.0
    %1865 = vmatprep.subr.mxu0 0.0
    %1866 = vmatpush2.msra.mxu0 0.0
    %1867 = vmatprep.subr.mxu0 0.0
    %1868 = vmatpush2.msra.mxu0 0.0
    %1869 = vmatprep.subr.mxu0 0.0
    %1870 = vmatpush2.msra.mxu0 0.0
    %1871 = vmatprep.subr.mxu0 0.0
    %1872 = vmatpush2.msra.mxu0 0.0
    %1873 = vmatprep.subr.mxu0 0.0
    %1874 = vmatpush2.msra.mxu0 0.0
    %1875 = vmatprep.subr.mxu0 0.0
    %1876 = vmatpush2.msra.mxu0 0.0
    %1877 = vmatprep.mubr.f32.mxu0 0.0
    %1878 = vmatmul.mubr.f32.gmra.mxu0 %v1811
    %v1879 = vpop.f32.mrf.mxu0
    %v1880 = vadd.f32 0.0, %v1879
    %v1881 = vpop.f32.mrf.mxu0
    %1882 = vdwg.mxu0
    %v1883 = vadd.f32 %v1232, %v1880
    %v1884 = vsel %vm539, %v1802, 0
    %1886 = vmatprep.subr.mxu0 0.0
    %1887 = vmatpush1.msra.mxu0 0.0
    %1888 = vmatprep.subr.mxu0 0.0
    %1889 = vmatpush1.msra.mxu0 0.0
    %1890 = vmatprep.subr.mxu0 0.0
    %1891 = vmatpush1.msra.mxu0 0.0
    %1892 = vmatprep.subr.mxu0 0.0
    %1893 = vmatpush1.msra.mxu0 0.0
    %1894 = vmatprep.subr.mxu0 0.0
    %1895 = vmatpush1.msra.mxu0 0.0
    %1896 = vmatprep.subr.mxu0 0.0
    %1897 = vmatpush1.msra.mxu0 0.0
    %1898 = vmatprep.subr.mxu0 0.0
    %1899 = vmatpush1.msra.mxu0 0.0
    %1900 = vmatprep.subr.mxu0 0.0
    %1901 = vmatpush1.msra.mxu0 0.0
    %1902 = vmatprep.subr.mxu0 0.0
    %1903 = vmatpush1.msra.mxu0 0.0
    %1904 = vmatprep.subr.mxu0 0.0
    %1905 = vmatpush1.msra.mxu0 0.0
    %1906 = vmatprep.subr.mxu0 0.0
    %1907 = vmatpush1.msra.mxu0 0.0
    %1908 = vmatprep.subr.mxu0 0.0
    %1909 = vmatpush1.msra.mxu0 0.0
    %1910 = vmatprep.subr.mxu0 0.0
    %1911 = vmatpush1.msra.mxu0 0.0
    %1912 = vmatprep.subr.mxu0 0.0
    %1913 = vmatpush1.msra.mxu0 0.0
    %1914 = vmatprep.subr.mxu0 0.0
    %1915 = vmatpush1.msra.mxu0 %v1401
    %1916 = vmatprep.subr.mxu0 0.0
    %1917 = vmatpush1.msra.mxu0 %v1400
    %1918 = vmatprep.subr.mxu0 0.0
    %1919 = vmatpush2.msra.mxu0 0.0
    %1920 = vmatprep.subr.mxu0 0.0
    %1921 = vmatpush2.msra.mxu0 0.0
    %1922 = vmatprep.subr.mxu0 0.0
    %1923 = vmatpush2.msra.mxu0 0.0
    %1924 = vmatprep.subr.mxu0 0.0
    %1925 = vmatpush2.msra.mxu0 0.0
    %1926 = vmatprep.subr.mxu0 0.0
    %1927 = vmatpush2.msra.mxu0 0.0
    %1928 = vmatprep.subr.mxu0 0.0
    %1929 = vmatpush2.msra.mxu0 0.0
    %1930 = vmatprep.subr.mxu0 0.0
    %1931 = vmatpush2.msra.mxu0 0.0
    %1932 = vmatprep.subr.mxu0 0.0
    %1933 = vmatpush2.msra.mxu0 0.0
    %1934 = vmatprep.subr.mxu0 0.0
    %1935 = vmatpush2.msra.mxu0 0.0
    %1936 = vmatprep.subr.mxu0 0.0
    %1937 = vmatpush2.msra.mxu0 0.0
    %1938 = vmatprep.subr.mxu0 0.0
    %1939 = vmatpush2.msra.mxu0 0.0
    %1940 = vmatprep.subr.mxu0 0.0
    %1941 = vmatpush2.msra.mxu0 0.0
    %1942 = vmatprep.subr.mxu0 0.0
    %1943 = vmatpush2.msra.mxu0 0.0
    %1944 = vmatprep.subr.mxu0 0.0
    %1945 = vmatpush2.msra.mxu0 0.0
    %1946 = vmatprep.subr.mxu0 0.0
    %1947 = vmatpush2.msra.mxu0 0.0
    %1948 = vmatprep.subr.mxu0 0.0
    %1949 = vmatpush2.msra.mxu0 0.0
    %1950 = vmatprep.mubr.f32.mxu0 0.0
    %1951 = vmatmul.mubr.f32.gmra.mxu0 %v1884
    %v1952 = vpop.f32.mrf.mxu0
    %v1953 = vadd.f32 0.0, %v1952
    %v1954 = vpop.f32.mrf.mxu0
    %1955 = vdwg.mxu0
    %v1956 = vadd.f32 %v1370, %v1953
    %v1957 = vxor.u32 %v1883, 2147483648
    %v1958 = vmul.f32 %v1957, 1.442695
    %v1959 = vpow.pop %v1958
    %v1960 = vadd.f32 %v1959, 1.0
    %v1961 = vrcp.pop %v1960
    %v1962 = vmul.f32 1.0, %v1961
    %v1963 = vtanh.pop %v1883
    %v1964 = vmul.f32 %v1962, %v1769
    %1966 = vrot.lane.b32.xlu0 %v1963, 96
    %v1967 = vpop.permute.xlu0 %1966
    %v1969 = vmul.f32 %v1962, %v1967
    %1971 = vrot.lane.b32.xlu0 %v1969, 16
    %v1972 = vpop.permute.xlu0 %1971
    %v1974 = vadd.f32 %v1964, %v1972
    %v1975 = vtanh.pop %v1974
    %1977 = vrot.lane.b32.xlu0 %v1975, 32
    %v1978 = vpop.permute.xlu0 %1977
    %v1980 = vmul.f32 %v1962, %v1978
    %v1981 = vxor.u32 %v1956, 2147483648
    %v1982 = vmul.f32 %v1981, 1.442695
    %v1983 = vpow.pop %v1982
    %v1984 = vadd.f32 %v1983, 1.0
    %v1985 = vrcp.pop %v1984
    %v1986 = vmul.f32 1.0, %v1985
    %v1987 = vtanh.pop %v1956
    %v1988 = vmul.f32 %v1986, %v1793
    %1990 = vrot.lane.b32.xlu0 %v1987, 96
    %v1991 = vpop.permute.xlu0 %1990
    %v1993 = vmul.f32 %v1986, %v1991
    %1995 = vrot.lane.b32.xlu0 %v1993, 16
    %v1996 = vpop.permute.xlu0 %1995
    %v1998 = vadd.f32 %v1988, %v1996
    %v1999 = vtanh.pop %v1998
    %2001 = vrot.lane.b32.xlu0 %v1999, 32
    %v2002 = vpop.permute.xlu0 %2001
    %v2004 = vmul.f32 %v1986, %v2002
    %2006 = vrot.lane.b32.xlu0 %v2004, 80
    %v2007 = vpop.permute.xlu0 %2006
    %2010 = vrot.lane.b32.xlu0 %v1980, 96
    %v2011 = vpop.permute.xlu0 %2010
    %v2013 = vsel %vm539, %v2007, %v2011
    %2014 = vrot.lane.b32.xlu0 %v1980, 80
    %v2015 = vpop.permute.xlu0 %2014
    %v2016 = vsel %vm539, %v2015, 0
    %2018 = vmatprep.subr.mxu0 0.0
    %2019 = vmatpush1.msra.mxu0 0.0
    %2020 = vmatprep.subr.mxu0 0.0
    %2021 = vmatpush1.msra.mxu0 0.0
    %2022 = vmatprep.subr.mxu0 0.0
    %2023 = vmatpush1.msra.mxu0 0.0
    %2024 = vmatprep.subr.mxu0 0.0
    %2025 = vmatpush1.msra.mxu0 0.0
    %2026 = vmatprep.subr.mxu0 0.0
    %2027 = vmatpush1.msra.mxu0 0.0
    %2028 = vmatprep.subr.mxu0 0.0
    %2029 = vmatpush1.msra.mxu0 0.0
    %2030 = vmatprep.subr.mxu0 0.0
    %2031 = vmatpush1.msra.mxu0 0.0
    %2032 = vmatprep.subr.mxu0 0.0
    %2033 = vmatpush1.msra.mxu0 0.0
    %2034 = vmatprep.subr.mxu0 0.0
    %2035 = vmatpush1.msra.mxu0 0.0
    %2036 = vmatprep.subr.mxu0 0.0
    %2037 = vmatpush1.msra.mxu0 0.0
    %2038 = vmatprep.subr.mxu0 0.0
    %2039 = vmatpush1.msra.mxu0 0.0
    %2040 = vmatprep.subr.mxu0 0.0
    %2041 = vmatpush1.msra.mxu0 0.0
    %2042 = vmatprep.subr.mxu0 0.0
    %2043 = vmatpush1.msra.mxu0 0.0
    %2044 = vmatprep.subr.mxu0 0.0
    %2045 = vmatpush1.msra.mxu0 0.0
    %2046 = vmatprep.subr.mxu0 0.0
    %2047 = vmatpush1.msra.mxu0 %v1399
    %2048 = vmatprep.subr.mxu0 0.0
    %2049 = vmatpush1.msra.mxu0 %v1398
    %2050 = vmatprep.subr.mxu0 0.0
    %2051 = vmatpush2.msra.mxu0 0.0
    %2052 = vmatprep.subr.mxu0 0.0
    %2053 = vmatpush2.msra.mxu0 0.0
    %2054 = vmatprep.subr.mxu0 0.0
    %2055 = vmatpush2.msra.mxu0 0.0
    %2056 = vmatprep.subr.mxu0 0.0
    %2057 = vmatpush2.msra.mxu0 0.0
    %2058 = vmatprep.subr.mxu0 0.0
    %2059 = vmatpush2.msra.mxu0 0.0
    %2060 = vmatprep.subr.mxu0 0.0
    %2061 = vmatpush2.msra.mxu0 0.0
    %2062 = vmatprep.subr.mxu0 0.0
    %2063 = vmatpush2.msra.mxu0 0.0
    %2064 = vmatprep.subr.mxu0 0.0
    %2065 = vmatpush2.msra.mxu0 0.0
    %2066 = vmatprep.subr.mxu0 0.0
    %2067 = vmatpush2.msra.mxu0 0.0
    %2068 = vmatprep.subr.mxu0 0.0
    %2069 = vmatpush2.msra.mxu0 0.0
    %2070 = vmatprep.subr.mxu0 0.0
    %2071 = vmatpush2.msra.mxu0 0.0
    %2072 = vmatprep.subr.mxu0 0.0
    %2073 = vmatpush2.msra.mxu0 0.0
    %2074 = vmatprep.subr.mxu0 0.0
    %2075 = vmatpush2.msra.mxu0 0.0
    %2076 = vmatprep.subr.mxu0 0.0
    %2077 = vmatpush2.msra.mxu0 0.0
    %2078 = vmatprep.subr.mxu0 0.0
    %2079 = vmatpush2.msra.mxu0 0.0
    %2080 = vmatprep.subr.mxu0 0.0
    %2081 = vmatpush2.msra.mxu0 0.0
    %2082 = vmatprep.mubr.f32.mxu0 0.0
    %2083 = vmatmul.mubr.f32.gmra.mxu0 %v2016
    %v2084 = vpop.f32.mrf.mxu0
    %v2085 = vadd.f32 0.0, %v2084
    %v2086 = vpop.f32.mrf.mxu0
    %2087 = vdwg.mxu0
    %v2088 = vadd.f32 %v1237, %v2085
    %v2089 = vsel %vm539, %v2007, 0
    %2091 = vmatprep.subr.mxu0 0.0
    %2092 = vmatpush1.msra.mxu0 0.0
    %2093 = vmatprep.subr.mxu0 0.0
    %2094 = vmatpush1.msra.mxu0 0.0
    %2095 = vmatprep.subr.mxu0 0.0
    %2096 = vmatpush1.msra.mxu0 0.0
    %2097 = vmatprep.subr.mxu0 0.0
    %2098 = vmatpush1.msra.mxu0 0.0
    %2099 = vmatprep.subr.mxu0 0.0
    %2100 = vmatpush1.msra.mxu0 0.0
    %2101 = vmatprep.subr.mxu0 0.0
    %2102 = vmatpush1.msra.mxu0 0.0
    %2103 = vmatprep.subr.mxu0 0.0
    %2104 = vmatpush1.msra.mxu0 0.0
    %2105 = vmatprep.subr.mxu0 0.0
    %2106 = vmatpush1.msra.mxu0 0.0
    %2107 = vmatprep.subr.mxu0 0.0
    %2108 = vmatpush1.msra.mxu0 0.0
    %2109 = vmatprep.subr.mxu0 0.0
    %2110 = vmatpush1.msra.mxu0 0.0
    %2111 = vmatprep.subr.mxu0 0.0
    %2112 = vmatpush1.msra.mxu0 0.0
    %2113 = vmatprep.subr.mxu0 0.0
    %2114 = vmatpush1.msra.mxu0 0.0
    %2115 = vmatprep.subr.mxu0 0.0
    %2116 = vmatpush1.msra.mxu0 0.0
    %2117 = vmatprep.subr.mxu0 0.0
    %2118 = vmatpush1.msra.mxu0 0.0
    %2119 = vmatprep.subr.mxu0 0.0
    %2120 = vmatpush1.msra.mxu0 %v1401
    %2121 = vmatprep.subr.mxu0 0.0
    %2122 = vmatpush1.msra.mxu0 %v1400
    %2123 = vmatprep.subr.mxu0 0.0
    %2124 = vmatpush2.msra.mxu0 0.0
    %2125 = vmatprep.subr.mxu0 0.0
    %2126 = vmatpush2.msra.mxu0 0.0
    %2127 = vmatprep.subr.mxu0 0.0
    %2128 = vmatpush2.msra.mxu0 0.0
    %2129 = vmatprep.subr.mxu0 0.0
    %2130 = vmatpush2.msra.mxu0 0.0
    %2131 = vmatprep.subr.mxu0 0.0
    %2132 = vmatpush2.msra.mxu0 0.0
    %2133 = vmatprep.subr.mxu0 0.0
    %2134 = vmatpush2.msra.mxu0 0.0
    %2135 = vmatprep.subr.mxu0 0.0
    %2136 = vmatpush2.msra.mxu0 0.0
    %2137 = vmatprep.subr.mxu0 0.0
    %2138 = vmatpush2.msra.mxu0 0.0
    %2139 = vmatprep.subr.mxu0 0.0
    %2140 = vmatpush2.msra.mxu0 0.0
    %2141 = vmatprep.subr.mxu0 0.0
    %2142 = vmatpush2.msra.mxu0 0.0
    %2143 = vmatprep.subr.mxu0 0.0
    %2144 = vmatpush2.msra.mxu0 0.0
    %2145 = vmatprep.subr.mxu0 0.0
    %2146 = vmatpush2.msra.mxu0 0.0
    %2147 = vmatprep.subr.mxu0 0.0
    %2148 = vmatpush2.msra.mxu0 0.0
    %2149 = vmatprep.subr.mxu0 0.0
    %2150 = vmatpush2.msra.mxu0 0.0
    %2151 = vmatprep.subr.mxu0 0.0
    %2152 = vmatpush2.msra.mxu0 0.0
    %2153 = vmatprep.subr.mxu0 0.0
    %2154 = vmatpush2.msra.mxu0 0.0
    %2155 = vmatprep.mubr.f32.mxu0 0.0
    %2156 = vmatmul.mubr.f32.gmra.mxu0 %v2089
    %v2157 = vpop.f32.mrf.mxu0
    %v2158 = vadd.f32 0.0, %v2157
    %v2159 = vpop.f32.mrf.mxu0
    %2160 = vdwg.mxu0
    %v2161 = vadd.f32 %v1375, %v2158
    %v2162 = vxor.u32 %v2088, 2147483648
    %v2163 = vmul.f32 %v2162, 1.442695
    %v2164 = vpow.pop %v2163
    %v2165 = vadd.f32 %v2164, 1.0
    %v2166 = vrcp.pop %v2165
    %v2167 = vmul.f32 1.0, %v2166
    %v2168 = vtanh.pop %v2088
    %v2169 = vmul.f32 %v2167, %v1974
    %2171 = vrot.lane.b32.xlu0 %v2168, 96
    %v2172 = vpop.permute.xlu0 %2171
    %v2174 = vmul.f32 %v2167, %v2172
    %2176 = vrot.lane.b32.xlu0 %v2174, 16
    %v2177 = vpop.permute.xlu0 %2176
    %v2179 = vadd.f32 %v2169, %v2177
    %v2180 = vtanh.pop %v2179
    %2182 = vrot.lane.b32.xlu0 %v2180, 32
    %v2183 = vpop.permute.xlu0 %2182
    %v2185 = vmul.f32 %v2167, %v2183
    %v2186 = vxor.u32 %v2161, 2147483648
    %v2187 = vmul.f32 %v2186, 1.442695
    %v2188 = vpow.pop %v2187
    %v2189 = vadd.f32 %v2188, 1.0
    %v2190 = vrcp.pop %v2189
    %v2191 = vmul.f32 1.0, %v2190
    %v2192 = vtanh.pop %v2161
    %v2193 = vmul.f32 %v2191, %v1998
    %2195 = vrot.lane.b32.xlu0 %v2192, 96
    %v2196 = vpop.permute.xlu0 %2195
    %v2198 = vmul.f32 %v2191, %v2196
    %2200 = vrot.lane.b32.xlu0 %v2198, 16
    %v2201 = vpop.permute.xlu0 %2200
    %v2203 = vadd.f32 %v2193, %v2201
    %v2204 = vtanh.pop %v2203
    %2206 = vrot.lane.b32.xlu0 %v2204, 32
    %v2207 = vpop.permute.xlu0 %2206
    %v2209 = vmul.f32 %v2191, %v2207
    %2211 = vrot.lane.b32.xlu0 %v2209, 80
    %v2212 = vpop.permute.xlu0 %2211
    %2215 = vrot.lane.b32.xlu0 %v2185, 96
    %v2216 = vpop.permute.xlu0 %2215
    %v2218 = vsel %vm539, %v2212, %v2216
    %2219 = vrot.lane.b32.xlu0 %v2185, 80
    %v2220 = vpop.permute.xlu0 %2219
    %v2221 = vsel %vm539, %v2220, 0
    %2223 = vmatprep.subr.mxu0 0.0
    %2224 = vmatpush1.msra.mxu0 0.0
    %2225 = vmatprep.subr.mxu0 0.0
    %2226 = vmatpush1.msra.mxu0 0.0
    %2227 = vmatprep.subr.mxu0 0.0
    %2228 = vmatpush1.msra.mxu0 0.0
    %2229 = vmatprep.subr.mxu0 0.0
    %2230 = vmatpush1.msra.mxu0 0.0
    %2231 = vmatprep.subr.mxu0 0.0
    %2232 = vmatpush1.msra.mxu0 0.0
    %2233 = vmatprep.subr.mxu0 0.0
    %2234 = vmatpush1.msra.mxu0 0.0
    %2235 = vmatprep.subr.mxu0 0.0
    %2236 = vmatpush1.msra.mxu0 0.0
    %2237 = vmatprep.subr.mxu0 0.0
    %2238 = vmatpush1.msra.mxu0 0.0
    %2239 = vmatprep.subr.mxu0 0.0
    %2240 = vmatpush1.msra.mxu0 0.0
    %2241 = vmatprep.subr.mxu0 0.0
    %2242 = vmatpush1.msra.mxu0 0.0
    %2243 = vmatprep.subr.mxu0 0.0
    %2244 = vmatpush1.msra.mxu0 0.0
    %2245 = vmatprep.subr.mxu0 0.0
    %2246 = vmatpush1.msra.mxu0 0.0
    %2247 = vmatprep.subr.mxu0 0.0
    %2248 = vmatpush1.msra.mxu0 0.0
    %2249 = vmatprep.subr.mxu0 0.0
    %2250 = vmatpush1.msra.mxu0 0.0
    %2251 = vmatprep.subr.mxu0 0.0
    %2252 = vmatpush1.msra.mxu0 %v1399
    %2253 = vmatprep.subr.mxu0 0.0
    %2254 = vmatpush1.msra.mxu0 %v1398
    %2255 = vmatprep.subr.mxu0 0.0
    %2256 = vmatpush2.msra.mxu0 0.0
    %2257 = vmatprep.subr.mxu0 0.0
    %2258 = vmatpush2.msra.mxu0 0.0
    %2259 = vmatprep.subr.mxu0 0.0
    %2260 = vmatpush2.msra.mxu0 0.0
    %2261 = vmatprep.subr.mxu0 0.0
    %2262 = vmatpush2.msra.mxu0 0.0
    %2263 = vmatprep.subr.mxu0 0.0
    %2264 = vmatpush2.msra.mxu0 0.0
    %2265 = vmatprep.subr.mxu0 0.0
    %2266 = vmatpush2.msra.mxu0 0.0
    %2267 = vmatprep.subr.mxu0 0.0
    %2268 = vmatpush2.msra.mxu0 0.0
    %2269 = vmatprep.subr.mxu0 0.0
    %2270 = vmatpush2.msra.mxu0 0.0
    %2271 = vmatprep.subr.mxu0 0.0
    %2272 = vmatpush2.msra.mxu0 0.0
    %2273 = vmatprep.subr.mxu0 0.0
    %2274 = vmatpush2.msra.mxu0 0.0
    %2275 = vmatprep.subr.mxu0 0.0
    %2276 = vmatpush2.msra.mxu0 0.0
    %2277 = vmatprep.subr.mxu0 0.0
    %2278 = vmatpush2.msra.mxu0 0.0
    %2279 = vmatprep.subr.mxu0 0.0
    %2280 = vmatpush2.msra.mxu0 0.0
    %2281 = vmatprep.subr.mxu0 0.0
    %2282 = vmatpush2.msra.mxu0 0.0
    %2283 = vmatprep.subr.mxu0 0.0
    %2284 = vmatpush2.msra.mxu0 0.0
    %2285 = vmatprep.subr.mxu0 0.0
    %2286 = vmatpush2.msra.mxu0 0.0
    %2287 = vmatprep.mubr.f32.mxu0 0.0
    %2288 = vmatmul.mubr.f32.gmra.mxu0 %v2221
    %v2289 = vpop.f32.mrf.mxu0
    %v2290 = vadd.f32 0.0, %v2289
    %v2291 = vpop.f32.mrf.mxu0
    %2292 = vdwg.mxu0
    %v2293 = vadd.f32 %v1242, %v2290
    %v2294 = vsel %vm539, %v2212, 0
    %2296 = vmatprep.subr.mxu0 0.0
    %2297 = vmatpush1.msra.mxu0 0.0
    %2298 = vmatprep.subr.mxu0 0.0
    %2299 = vmatpush1.msra.mxu0 0.0
    %2300 = vmatprep.subr.mxu0 0.0
    %2301 = vmatpush1.msra.mxu0 0.0
    %2302 = vmatprep.subr.mxu0 0.0
    %2303 = vmatpush1.msra.mxu0 0.0
    %2304 = vmatprep.subr.mxu0 0.0
    %2305 = vmatpush1.msra.mxu0 0.0
    %2306 = vmatprep.subr.mxu0 0.0
    %2307 = vmatpush1.msra.mxu0 0.0
    %2308 = vmatprep.subr.mxu0 0.0
    %2309 = vmatpush1.msra.mxu0 0.0
    %2310 = vmatprep.subr.mxu0 0.0
    %2311 = vmatpush1.msra.mxu0 0.0
    %2312 = vmatprep.subr.mxu0 0.0
    %2313 = vmatpush1.msra.mxu0 0.0
    %2314 = vmatprep.subr.mxu0 0.0
    %2315 = vmatpush1.msra.mxu0 0.0
    %2316 = vmatprep.subr.mxu0 0.0
    %2317 = vmatpush1.msra.mxu0 0.0
    %2318 = vmatprep.subr.mxu0 0.0
    %2319 = vmatpush1.msra.mxu0 0.0
    %2320 = vmatprep.subr.mxu0 0.0
    %2321 = vmatpush1.msra.mxu0 0.0
    %2322 = vmatprep.subr.mxu0 0.0
    %2323 = vmatpush1.msra.mxu0 0.0
    %2324 = vmatprep.subr.mxu0 0.0
    %2325 = vmatpush1.msra.mxu0 %v1401
    %2326 = vmatprep.subr.mxu0 0.0
    %2327 = vmatpush1.msra.mxu0 %v1400
    %2328 = vmatprep.subr.mxu0 0.0
    %2329 = vmatpush2.msra.mxu0 0.0
    %2330 = vmatprep.subr.mxu0 0.0
    %2331 = vmatpush2.msra.mxu0 0.0
    %2332 = vmatprep.subr.mxu0 0.0
    %2333 = vmatpush2.msra.mxu0 0.0
    %2334 = vmatprep.subr.mxu0 0.0
    %2335 = vmatpush2.msra.mxu0 0.0
    %2336 = vmatprep.subr.mxu0 0.0
    %2337 = vmatpush2.msra.mxu0 0.0
    %2338 = vmatprep.subr.mxu0 0.0
    %2339 = vmatpush2.msra.mxu0 0.0
    %2340 = vmatprep.subr.mxu0 0.0
    %2341 = vmatpush2.msra.mxu0 0.0
    %2342 = vmatprep.subr.mxu0 0.0
    %2343 = vmatpush2.msra.mxu0 0.0
    %2344 = vmatprep.subr.mxu0 0.0
    %2345 = vmatpush2.msra.mxu0 0.0
    %2346 = vmatprep.subr.mxu0 0.0
    %2347 = vmatpush2.msra.mxu0 0.0
    %2348 = vmatprep.subr.mxu0 0.0
    %2349 = vmatpush2.msra.mxu0 0.0
    %2350 = vmatprep.subr.mxu0 0.0
    %2351 = vmatpush2.msra.mxu0 0.0
    %2352 = vmatprep.subr.mxu0 0.0
    %2353 = vmatpush2.msra.mxu0 0.0
    %2354 = vmatprep.subr.mxu0 0.0
    %2355 = vmatpush2.msra.mxu0 0.0
    %2356 = vmatprep.subr.mxu0 0.0
    %2357 = vmatpush2.msra.mxu0 0.0
    %2358 = vmatprep.subr.mxu0 0.0
    %2359 = vmatpush2.msra.mxu0 0.0
    %2360 = vmatprep.mubr.f32.mxu0 0.0
    %2361 = vmatmul.mubr.f32.gmra.mxu0 %v2294
    %v2362 = vpop.f32.mrf.mxu0
    %v2363 = vadd.f32 0.0, %v2362
    %v2364 = vpop.f32.mrf.mxu0
    %2365 = vdwg.mxu0
    %v2366 = vadd.f32 %v1380, %v2363
    %v2367 = vxor.u32 %v2293, 2147483648
    %v2368 = vmul.f32 %v2367, 1.442695
    %v2369 = vpow.pop %v2368
    %v2370 = vadd.f32 %v2369, 1.0
    %v2371 = vrcp.pop %v2370
    %v2372 = vmul.f32 1.0, %v2371
    %v2373 = vtanh.pop %v2293
    %v2374 = vmul.f32 %v2372, %v2179
    %2376 = vrot.lane.b32.xlu0 %v2373, 96
    %v2377 = vpop.permute.xlu0 %2376
    %v2379 = vmul.f32 %v2372, %v2377
    %2381 = vrot.lane.b32.xlu0 %v2379, 16
    %v2382 = vpop.permute.xlu0 %2381
    %v2384 = vadd.f32 %v2374, %v2382
    %v2385 = vtanh.pop %v2384
    %2387 = vrot.lane.b32.xlu0 %v2385, 32
    %v2388 = vpop.permute.xlu0 %2387
    %v2390 = vmul.f32 %v2372, %v2388
    %v2391 = vxor.u32 %v2366, 2147483648
    %v2392 = vmul.f32 %v2391, 1.442695
    %v2393 = vpow.pop %v2392
    %v2394 = vadd.f32 %v2393, 1.0
    %v2395 = vrcp.pop %v2394
    %v2396 = vmul.f32 1.0, %v2395
    %v2397 = vtanh.pop %v2366
    %v2398 = vmul.f32 %v2396, %v2203
    %2400 = vrot.lane.b32.xlu0 %v2397, 96
    %v2401 = vpop.permute.xlu0 %2400
    %v2403 = vmul.f32 %v2396, %v2401
    %2405 = vrot.lane.b32.xlu0 %v2403, 16
    %v2406 = vpop.permute.xlu0 %2405
    %v2408 = vadd.f32 %v2398, %v2406
    %v2409 = vtanh.pop %v2408
    %2411 = vrot.lane.b32.xlu0 %v2409, 32
    %v2412 = vpop.permute.xlu0 %2411
    %v2414 = vmul.f32 %v2396, %v2412
    %2416 = vrot.lane.b32.xlu0 %v2414, 80
    %v2417 = vpop.permute.xlu0 %2416
    %2420 = vrot.lane.b32.xlu0 %v2390, 96
    %v2421 = vpop.permute.xlu0 %2420
    %v2423 = vsel %vm539, %v2417, %v2421
    %2424 = vrot.lane.b32.xlu0 %v2390, 80
    %v2425 = vpop.permute.xlu0 %2424
    %v2426 = vsel %vm539, %v2425, 0
    %2428 = vmatprep.subr.mxu0 0.0
    %2429 = vmatpush1.msra.mxu0 0.0
    %2430 = vmatprep.subr.mxu0 0.0
    %2431 = vmatpush1.msra.mxu0 0.0
    %2432 = vmatprep.subr.mxu0 0.0
    %2433 = vmatpush1.msra.mxu0 0.0
    %2434 = vmatprep.subr.mxu0 0.0
    %2435 = vmatpush1.msra.mxu0 0.0
    %2436 = vmatprep.subr.mxu0 0.0
    %2437 = vmatpush1.msra.mxu0 0.0
    %2438 = vmatprep.subr.mxu0 0.0
    %2439 = vmatpush1.msra.mxu0 0.0
    %2440 = vmatprep.subr.mxu0 0.0
    %2441 = vmatpush1.msra.mxu0 0.0
    %2442 = vmatprep.subr.mxu0 0.0
    %2443 = vmatpush1.msra.mxu0 0.0
    %2444 = vmatprep.subr.mxu0 0.0
    %2445 = vmatpush1.msra.mxu0 0.0
    %2446 = vmatprep.subr.mxu0 0.0
    %2447 = vmatpush1.msra.mxu0 0.0
    %2448 = vmatprep.subr.mxu0 0.0
    %2449 = vmatpush1.msra.mxu0 0.0
    %2450 = vmatprep.subr.mxu0 0.0
    %2451 = vmatpush1.msra.mxu0 0.0
    %2452 = vmatprep.subr.mxu0 0.0
    %2453 = vmatpush1.msra.mxu0 0.0
    %2454 = vmatprep.subr.mxu0 0.0
    %2455 = vmatpush1.msra.mxu0 0.0
    %2456 = vmatprep.subr.mxu0 0.0
    %2457 = vmatpush1.msra.mxu0 %v1399
    %2458 = vmatprep.subr.mxu0 0.0
    %2459 = vmatpush1.msra.mxu0 %v1398
    %2460 = vmatprep.subr.mxu0 0.0
    %2461 = vmatpush2.msra.mxu0 0.0
    %2462 = vmatprep.subr.mxu0 0.0
    %2463 = vmatpush2.msra.mxu0 0.0
    %2464 = vmatprep.subr.mxu0 0.0
    %2465 = vmatpush2.msra.mxu0 0.0
    %2466 = vmatprep.subr.mxu0 0.0
    %2467 = vmatpush2.msra.mxu0 0.0
    %2468 = vmatprep.subr.mxu0 0.0
    %2469 = vmatpush2.msra.mxu0 0.0
    %2470 = vmatprep.subr.mxu0 0.0
    %2471 = vmatpush2.msra.mxu0 0.0
    %2472 = vmatprep.subr.mxu0 0.0
    %2473 = vmatpush2.msra.mxu0 0.0
    %2474 = vmatprep.subr.mxu0 0.0
    %2475 = vmatpush2.msra.mxu0 0.0
    %2476 = vmatprep.subr.mxu0 0.0
    %2477 = vmatpush2.msra.mxu0 0.0
    %2478 = vmatprep.subr.mxu0 0.0
    %2479 = vmatpush2.msra.mxu0 0.0
    %2480 = vmatprep.subr.mxu0 0.0
    %2481 = vmatpush2.msra.mxu0 0.0
    %2482 = vmatprep.subr.mxu0 0.0
    %2483 = vmatpush2.msra.mxu0 0.0
    %2484 = vmatprep.subr.mxu0 0.0
    %2485 = vmatpush2.msra.mxu0 0.0
    %2486 = vmatprep.subr.mxu0 0.0
    %2487 = vmatpush2.msra.mxu0 0.0
    %2488 = vmatprep.subr.mxu0 0.0
    %2489 = vmatpush2.msra.mxu0 0.0
    %2490 = vmatprep.subr.mxu0 0.0
    %2491 = vmatpush2.msra.mxu0 0.0
    %2492 = vmatprep.mubr.f32.mxu0 0.0
    %2493 = vmatmul.mubr.f32.gmra.mxu0 %v2426
    %v2494 = vpop.f32.mrf.mxu0
    %v2495 = vadd.f32 0.0, %v2494
    %v2496 = vpop.f32.mrf.mxu0
    %2497 = vdwg.mxu0
    %v2498 = vadd.f32 %v1247, %v2495
    %v2499 = vsel %vm539, %v2417, 0
    %2501 = vmatprep.subr.mxu0 0.0
    %2502 = vmatpush1.msra.mxu0 0.0
    %2503 = vmatprep.subr.mxu0 0.0
    %2504 = vmatpush1.msra.mxu0 0.0
    %2505 = vmatprep.subr.mxu0 0.0
    %2506 = vmatpush1.msra.mxu0 0.0
    %2507 = vmatprep.subr.mxu0 0.0
    %2508 = vmatpush1.msra.mxu0 0.0
    %2509 = vmatprep.subr.mxu0 0.0
    %2510 = vmatpush1.msra.mxu0 0.0
    %2511 = vmatprep.subr.mxu0 0.0
    %2512 = vmatpush1.msra.mxu0 0.0
    %2513 = vmatprep.subr.mxu0 0.0
    %2514 = vmatpush1.msra.mxu0 0.0
    %2515 = vmatprep.subr.mxu0 0.0
    %2516 = vmatpush1.msra.mxu0 0.0
    %2517 = vmatprep.subr.mxu0 0.0
    %2518 = vmatpush1.msra.mxu0 0.0
    %2519 = vmatprep.subr.mxu0 0.0
    %2520 = vmatpush1.msra.mxu0 0.0
    %2521 = vmatprep.subr.mxu0 0.0
    %2522 = vmatpush1.msra.mxu0 0.0
    %2523 = vmatprep.subr.mxu0 0.0
    %2524 = vmatpush1.msra.mxu0 0.0
    %2525 = vmatprep.subr.mxu0 0.0
    %2526 = vmatpush1.msra.mxu0 0.0
    %2527 = vmatprep.subr.mxu0 0.0
    %2528 = vmatpush1.msra.mxu0 0.0
    %2529 = vmatprep.subr.mxu0 0.0
    %2530 = vmatpush1.msra.mxu0 %v1401
    %2531 = vmatprep.subr.mxu0 0.0
    %2532 = vmatpush1.msra.mxu0 %v1400
    %2533 = vmatprep.subr.mxu0 0.0
    %2534 = vmatpush2.msra.mxu0 0.0
    %2535 = vmatprep.subr.mxu0 0.0
    %2536 = vmatpush2.msra.mxu0 0.0
    %2537 = vmatprep.subr.mxu0 0.0
    %2538 = vmatpush2.msra.mxu0 0.0
    %2539 = vmatprep.subr.mxu0 0.0
    %2540 = vmatpush2.msra.mxu0 0.0
    %2541 = vmatprep.subr.mxu0 0.0
    %2542 = vmatpush2.msra.mxu0 0.0
    %2543 = vmatprep.subr.mxu0 0.0
    %2544 = vmatpush2.msra.mxu0 0.0
    %2545 = vmatprep.subr.mxu0 0.0
    %2546 = vmatpush2.msra.mxu0 0.0
    %2547 = vmatprep.subr.mxu0 0.0
    %2548 = vmatpush2.msra.mxu0 0.0
    %2549 = vmatprep.subr.mxu0 0.0
    %2550 = vmatpush2.msra.mxu0 0.0
    %2551 = vmatprep.subr.mxu0 0.0
    %2552 = vmatpush2.msra.mxu0 0.0
    %2553 = vmatprep.subr.mxu0 0.0
    %2554 = vmatpush2.msra.mxu0 0.0
    %2555 = vmatprep.subr.mxu0 0.0
    %2556 = vmatpush2.msra.mxu0 0.0
    %2557 = vmatprep.subr.mxu0 0.0
    %2558 = vmatpush2.msra.mxu0 0.0
    %2559 = vmatprep.subr.mxu0 0.0
    %2560 = vmatpush2.msra.mxu0 0.0
    %2561 = vmatprep.subr.mxu0 0.0
    %2562 = vmatpush2.msra.mxu0 0.0
    %2563 = vmatprep.subr.mxu0 0.0
    %2564 = vmatpush2.msra.mxu0 0.0
    %2565 = vmatprep.mubr.f32.mxu0 0.0
    %2566 = vmatmul.mubr.f32.gmra.mxu0 %v2499
    %v2567 = vpop.f32.mrf.mxu0
    %v2568 = vadd.f32 0.0, %v2567
    %v2569 = vpop.f32.mrf.mxu0
    %2570 = vdwg.mxu0
    %v2571 = vadd.f32 %v1385, %v2568
    %v2572 = vxor.u32 %v2498, 2147483648
    %v2573 = vmul.f32 %v2572, 1.442695
    %v2574 = vpow.pop %v2573
    %v2575 = vadd.f32 %v2574, 1.0
    %v2576 = vrcp.pop %v2575
    %v2577 = vmul.f32 1.0, %v2576
    %v2578 = vtanh.pop %v2498
    %v2579 = vmul.f32 %v2577, %v2384
    %2581 = vrot.lane.b32.xlu0 %v2578, 96
    %v2582 = vpop.permute.xlu0 %2581
    %v2584 = vmul.f32 %v2577, %v2582
    %2586 = vrot.lane.b32.xlu0 %v2584, 16
    %v2587 = vpop.permute.xlu0 %2586
    %v2589 = vadd.f32 %v2579, %v2587
    %v2590 = vtanh.pop %v2589
    %2592 = vrot.lane.b32.xlu0 %v2590, 32
    %v2593 = vpop.permute.xlu0 %2592
    %v2595 = vmul.f32 %v2577, %v2593
    %v2596 = vxor.u32 %v2571, 2147483648
    %v2597 = vmul.f32 %v2596, 1.442695
    %v2598 = vpow.pop %v2597
    %v2599 = vadd.f32 %v2598, 1.0
    %v2600 = vrcp.pop %v2599
    %v2601 = vmul.f32 1.0, %v2600
    %v2602 = vtanh.pop %v2571
    %v2603 = vmul.f32 %v2601, %v2408
    %2605 = vrot.lane.b32.xlu0 %v2602, 96
    %v2606 = vpop.permute.xlu0 %2605
    %v2608 = vmul.f32 %v2601, %v2606
    %2610 = vrot.lane.b32.xlu0 %v2608, 16
    %v2611 = vpop.permute.xlu0 %2610
    %v2613 = vadd.f32 %v2603, %v2611
    %v2614 = vtanh.pop %v2613
    %2616 = vrot.lane.b32.xlu0 %v2614, 32
    %v2617 = vpop.permute.xlu0 %2616
    %v2619 = vmul.f32 %v2601, %v2617
    %2621 = vrot.lane.b32.xlu0 %v2619, 80
    %v2622 = vpop.permute.xlu0 %2621
    %2625 = vrot.lane.b32.xlu0 %v2595, 96
    %v2626 = vpop.permute.xlu0 %2625
    %v2628 = vsel %vm539, %v2622, %v2626
    %2629 = vrot.lane.b32.xlu0 %v2595, 80
    %v2630 = vpop.permute.xlu0 %2629
    %v2631 = vsel %vm539, %v2630, 0
    %2633 = vmatprep.subr.mxu0 0.0
    %2634 = vmatpush1.msra.mxu0 0.0
    %2635 = vmatprep.subr.mxu0 0.0
    %2636 = vmatpush1.msra.mxu0 0.0
    %2637 = vmatprep.subr.mxu0 0.0
    %2638 = vmatpush1.msra.mxu0 0.0
    %2639 = vmatprep.subr.mxu0 0.0
    %2640 = vmatpush1.msra.mxu0 0.0
    %2641 = vmatprep.subr.mxu0 0.0
    %2642 = vmatpush1.msra.mxu0 0.0
    %2643 = vmatprep.subr.mxu0 0.0
    %2644 = vmatpush1.msra.mxu0 0.0
    %2645 = vmatprep.subr.mxu0 0.0
    %2646 = vmatpush1.msra.mxu0 0.0
    %2647 = vmatprep.subr.mxu0 0.0
    %2648 = vmatpush1.msra.mxu0 0.0
    %2649 = vmatprep.subr.mxu0 0.0
    %2650 = vmatpush1.msra.mxu0 0.0
    %2651 = vmatprep.subr.mxu0 0.0
    %2652 = vmatpush1.msra.mxu0 0.0
    %2653 = vmatprep.subr.mxu0 0.0
    %2654 = vmatpush1.msra.mxu0 0.0
    %2655 = vmatprep.subr.mxu0 0.0
    %2656 = vmatpush1.msra.mxu0 0.0
    %2657 = vmatprep.subr.mxu0 0.0
    %2658 = vmatpush1.msra.mxu0 0.0
    %2659 = vmatprep.subr.mxu0 0.0
    %2660 = vmatpush1.msra.mxu0 0.0
    %2661 = vmatprep.subr.mxu0 0.0
    %2662 = vmatpush1.msra.mxu0 %v1399
    %2663 = vmatprep.subr.mxu0 0.0
    %2664 = vmatpush1.msra.mxu0 %v1398
    %2665 = vmatprep.subr.mxu0 0.0
    %2666 = vmatpush2.msra.mxu0 0.0
    %2667 = vmatprep.subr.mxu0 0.0
    %2668 = vmatpush2.msra.mxu0 0.0
    %2669 = vmatprep.subr.mxu0 0.0
    %2670 = vmatpush2.msra.mxu0 0.0
    %2671 = vmatprep.subr.mxu0 0.0
    %2672 = vmatpush2.msra.mxu0 0.0
    %2673 = vmatprep.subr.mxu0 0.0
    %2674 = vmatpush2.msra.mxu0 0.0
    %2675 = vmatprep.subr.mxu0 0.0
    %2676 = vmatpush2.msra.mxu0 0.0
    %2677 = vmatprep.subr.mxu0 0.0
    %2678 = vmatpush2.msra.mxu0 0.0
    %2679 = vmatprep.subr.mxu0 0.0
    %2680 = vmatpush2.msra.mxu0 0.0
    %2681 = vmatprep.subr.mxu0 0.0
    %2682 = vmatpush2.msra.mxu0 0.0
    %2683 = vmatprep.subr.mxu0 0.0
    %2684 = vmatpush2.msra.mxu0 0.0
    %2685 = vmatprep.subr.mxu0 0.0
    %2686 = vmatpush2.msra.mxu0 0.0
    %2687 = vmatprep.subr.mxu0 0.0
    %2688 = vmatpush2.msra.mxu0 0.0
    %2689 = vmatprep.subr.mxu0 0.0
    %2690 = vmatpush2.msra.mxu0 0.0
    %2691 = vmatprep.subr.mxu0 0.0
    %2692 = vmatpush2.msra.mxu0 0.0
    %2693 = vmatprep.subr.mxu0 0.0
    %2694 = vmatpush2.msra.mxu0 0.0
    %2695 = vmatprep.subr.mxu0 0.0
    %2696 = vmatpush2.msra.mxu0 0.0
    %2697 = vmatprep.mubr.f32.mxu0 0.0
    %2698 = vmatmul.mubr.f32.gmra.mxu0 %v2631
    %v2699 = vpop.f32.mrf.mxu0
    %v2700 = vadd.f32 0.0, %v2699
    %v2701 = vpop.f32.mrf.mxu0
    %2702 = vdwg.mxu0
    %v2703 = vadd.f32 %v1252, %v2700
    %v2704 = vsel %vm539, %v2622, 0
    %2706 = vmatprep.subr.mxu0 0.0
    %2707 = vmatpush1.msra.mxu0 0.0
    %2708 = vmatprep.subr.mxu0 0.0
    %2709 = vmatpush1.msra.mxu0 0.0
    %2710 = vmatprep.subr.mxu0 0.0
    %2711 = vmatpush1.msra.mxu0 0.0
    %2712 = vmatprep.subr.mxu0 0.0
    %2713 = vmatpush1.msra.mxu0 0.0
    %2714 = vmatprep.subr.mxu0 0.0
    %2715 = vmatpush1.msra.mxu0 0.0
    %2716 = vmatprep.subr.mxu0 0.0
    %2717 = vmatpush1.msra.mxu0 0.0
    %2718 = vmatprep.subr.mxu0 0.0
    %2719 = vmatpush1.msra.mxu0 0.0
    %2720 = vmatprep.subr.mxu0 0.0
    %2721 = vmatpush1.msra.mxu0 0.0
    %2722 = vmatprep.subr.mxu0 0.0
    %2723 = vmatpush1.msra.mxu0 0.0
    %2724 = vmatprep.subr.mxu0 0.0
    %2725 = vmatpush1.msra.mxu0 0.0
    %2726 = vmatprep.subr.mxu0 0.0
    %2727 = vmatpush1.msra.mxu0 0.0
    %2728 = vmatprep.subr.mxu0 0.0
    %2729 = vmatpush1.msra.mxu0 0.0
    %2730 = vmatprep.subr.mxu0 0.0
    %2731 = vmatpush1.msra.mxu0 0.0
    %2732 = vmatprep.subr.mxu0 0.0
    %2733 = vmatpush1.msra.mxu0 0.0
    %2734 = vmatprep.subr.mxu0 0.0
    %2735 = vmatpush1.msra.mxu0 %v1401
    %2736 = vmatprep.subr.mxu0 0.0
    %2737 = vmatpush1.msra.mxu0 %v1400
    %2738 = vmatprep.subr.mxu0 0.0
    %2739 = vmatpush2.msra.mxu0 0.0
    %2740 = vmatprep.subr.mxu0 0.0
    %2741 = vmatpush2.msra.mxu0 0.0
    %2742 = vmatprep.subr.mxu0 0.0
    %2743 = vmatpush2.msra.mxu0 0.0
    %2744 = vmatprep.subr.mxu0 0.0
    %2745 = vmatpush2.msra.mxu0 0.0
    %2746 = vmatprep.subr.mxu0 0.0
    %2747 = vmatpush2.msra.mxu0 0.0
    %2748 = vmatprep.subr.mxu0 0.0
    %2749 = vmatpush2.msra.mxu0 0.0
    %2750 = vmatprep.subr.mxu0 0.0
    %2751 = vmatpush2.msra.mxu0 0.0
    %2752 = vmatprep.subr.mxu0 0.0
    %2753 = vmatpush2.msra.mxu0 0.0
    %2754 = vmatprep.subr.mxu0 0.0
    %2755 = vmatpush2.msra.mxu0 0.0
    %2756 = vmatprep.subr.mxu0 0.0
    %2757 = vmatpush2.msra.mxu0 0.0
    %2758 = vmatprep.subr.mxu0 0.0
    %2759 = vmatpush2.msra.mxu0 0.0
    %2760 = vmatprep.subr.mxu0 0.0
    %2761 = vmatpush2.msra.mxu0 0.0
    %2762 = vmatprep.subr.mxu0 0.0
    %2763 = vmatpush2.msra.mxu0 0.0
    %2764 = vmatprep.subr.mxu0 0.0
    %2765 = vmatpush2.msra.mxu0 0.0
    %2766 = vmatprep.subr.mxu0 0.0
    %2767 = vmatpush2.msra.mxu0 0.0
    %2768 = vmatprep.subr.mxu0 0.0
    %2769 = vmatpush2.msra.mxu0 0.0
    %2770 = vmatprep.mubr.f32.mxu0 0.0
    %2771 = vmatmul.mubr.f32.gmra.mxu0 %v2704
    %v2772 = vpop.f32.mrf.mxu0
    %v2773 = vadd.f32 0.0, %v2772
    %v2774 = vpop.f32.mrf.mxu0
    %2775 = vdwg.mxu0
    %v2776 = vadd.f32 %v1390, %v2773
    %v2777 = vxor.u32 %v2703, 2147483648
    %v2778 = vmul.f32 %v2777, 1.442695
    %v2779 = vpow.pop %v2778
    %v2780 = vadd.f32 %v2779, 1.0
    %v2781 = vrcp.pop %v2780
    %v2782 = vmul.f32 1.0, %v2781
    %v2783 = vtanh.pop %v2703
    %v2784 = vmul.f32 %v2782, %v2589
    %2786 = vrot.lane.b32.xlu0 %v2783, 96
    %v2787 = vpop.permute.xlu0 %2786
    %v2789 = vmul.f32 %v2782, %v2787
    %2791 = vrot.lane.b32.xlu0 %v2789, 16
    %v2792 = vpop.permute.xlu0 %2791
    %v2794 = vadd.f32 %v2784, %v2792
    %v2795 = vtanh.pop %v2794
    %2797 = vrot.lane.b32.xlu0 %v2795, 32
    %v2798 = vpop.permute.xlu0 %2797
    %v2800 = vmul.f32 %v2782, %v2798
    %v2801 = vxor.u32 %v2776, 2147483648
    %v2802 = vmul.f32 %v2801, 1.442695
    %v2803 = vpow.pop %v2802
    %v2804 = vadd.f32 %v2803, 1.0
    %v2805 = vrcp.pop %v2804
    %v2806 = vmul.f32 1.0, %v2805
    %v2807 = vtanh.pop %v2776
    %v2808 = vmul.f32 %v2806, %v2613
    %2810 = vrot.lane.b32.xlu0 %v2807, 96
    %v2811 = vpop.permute.xlu0 %2810
    %v2813 = vmul.f32 %v2806, %v2811
    %2815 = vrot.lane.b32.xlu0 %v2813, 16
    %v2816 = vpop.permute.xlu0 %2815
    %v2818 = vadd.f32 %v2808, %v2816
    %v2819 = vtanh.pop %v2818
    %2821 = vrot.lane.b32.xlu0 %v2819, 32
    %v2822 = vpop.permute.xlu0 %2821
    %v2824 = vmul.f32 %v2806, %v2822
    %2826 = vrot.lane.b32.xlu0 %v2824, 80
    %v2827 = vpop.permute.xlu0 %2826
    %2830 = vrot.lane.b32.xlu0 %v2800, 96
    %v2831 = vpop.permute.xlu0 %2830
    %v2833 = vsel %vm539, %v2827, %v2831
    %2834 = vrot.lane.b32.xlu0 %v2800, 80
    %v2835 = vpop.permute.xlu0 %2834
    %v2836 = vsel %vm539, %v2835, 0
    %2838 = vmatprep.subr.mxu0 0.0
    %2839 = vmatpush1.msra.mxu0 0.0
    %2840 = vmatprep.subr.mxu0 0.0
    %2841 = vmatpush1.msra.mxu0 0.0
    %2842 = vmatprep.subr.mxu0 0.0
    %2843 = vmatpush1.msra.mxu0 0.0
    %2844 = vmatprep.subr.mxu0 0.0
    %2845 = vmatpush1.msra.mxu0 0.0
    %2846 = vmatprep.subr.mxu0 0.0
    %2847 = vmatpush1.msra.mxu0 0.0
    %2848 = vmatprep.subr.mxu0 0.0
    %2849 = vmatpush1.msra.mxu0 0.0
    %2850 = vmatprep.subr.mxu0 0.0
    %2851 = vmatpush1.msra.mxu0 0.0
    %2852 = vmatprep.subr.mxu0 0.0
    %2853 = vmatpush1.msra.mxu0 0.0
    %2854 = vmatprep.subr.mxu0 0.0
    %2855 = vmatpush1.msra.mxu0 0.0
    %2856 = vmatprep.subr.mxu0 0.0
    %2857 = vmatpush1.msra.mxu0 0.0
    %2858 = vmatprep.subr.mxu0 0.0
    %2859 = vmatpush1.msra.mxu0 0.0
    %2860 = vmatprep.subr.mxu0 0.0
    %2861 = vmatpush1.msra.mxu0 0.0
    %2862 = vmatprep.subr.mxu0 0.0
    %2863 = vmatpush1.msra.mxu0 0.0
    %2864 = vmatprep.subr.mxu0 0.0
    %2865 = vmatpush1.msra.mxu0 0.0
    %2866 = vmatprep.subr.mxu0 0.0
    %2867 = vmatpush1.msra.mxu0 %v1399
    %2868 = vmatprep.subr.mxu0 0.0
    %2869 = vmatpush1.msra.mxu0 %v1398
    %2870 = vmatprep.subr.mxu0 0.0
    %2871 = vmatpush2.msra.mxu0 0.0
    %2872 = vmatprep.subr.mxu0 0.0
    %2873 = vmatpush2.msra.mxu0 0.0
    %2874 = vmatprep.subr.mxu0 0.0
    %2875 = vmatpush2.msra.mxu0 0.0
    %2876 = vmatprep.subr.mxu0 0.0
    %2877 = vmatpush2.msra.mxu0 0.0
    %2878 = vmatprep.subr.mxu0 0.0
    %2879 = vmatpush2.msra.mxu0 0.0
    %2880 = vmatprep.subr.mxu0 0.0
    %2881 = vmatpush2.msra.mxu0 0.0
    %2882 = vmatprep.subr.mxu0 0.0
    %2883 = vmatpush2.msra.mxu0 0.0
    %2884 = vmatprep.subr.mxu0 0.0
    %2885 = vmatpush2.msra.mxu0 0.0
    %2886 = vmatprep.subr.mxu0 0.0
    %2887 = vmatpush2.msra.mxu0 0.0
    %2888 = vmatprep.subr.mxu0 0.0
    %2889 = vmatpush2.msra.mxu0 0.0
    %2890 = vmatprep.subr.mxu0 0.0
    %2891 = vmatpush2.msra.mxu0 0.0
    %2892 = vmatprep.subr.mxu0 0.0
    %2893 = vmatpush2.msra.mxu0 0.0
    %2894 = vmatprep.subr.mxu0 0.0
    %2895 = vmatpush2.msra.mxu0 0.0
    %2896 = vmatprep.subr.mxu0 0.0
    %2897 = vmatpush2.msra.mxu0 0.0
    %2898 = vmatprep.subr.mxu0 0.0
    %2899 = vmatpush2.msra.mxu0 0.0
    %2900 = vmatprep.subr.mxu0 0.0
    %2901 = vmatpush2.msra.mxu0 0.0
    %2902 = vmatprep.mubr.f32.mxu0 0.0
    %2903 = vmatmul.mubr.f32.gmra.mxu0 %v2836
    %v2904 = vpop.f32.mrf.mxu0
    %v2905 = vadd.f32 0.0, %v2904
    %v2906 = vpop.f32.mrf.mxu0
    %2907 = vdwg.mxu0
    %v2908 = vadd.f32 %v1257, %v2905
    %v2909 = vsel %vm539, %v2827, 0
    %2911 = vmatprep.subr.mxu0 0.0
    %2912 = vmatpush1.msra.mxu0 0.0
    %2913 = vmatprep.subr.mxu0 0.0
    %2914 = vmatpush1.msra.mxu0 0.0
    %2915 = vmatprep.subr.mxu0 0.0
    %2916 = vmatpush1.msra.mxu0 0.0
    %2917 = vmatprep.subr.mxu0 0.0
    %2918 = vmatpush1.msra.mxu0 0.0
    %2919 = vmatprep.subr.mxu0 0.0
    %2920 = vmatpush1.msra.mxu0 0.0
    %2921 = vmatprep.subr.mxu0 0.0
    %2922 = vmatpush1.msra.mxu0 0.0
    %2923 = vmatprep.subr.mxu0 0.0
    %2924 = vmatpush1.msra.mxu0 0.0
    %2925 = vmatprep.subr.mxu0 0.0
    %2926 = vmatpush1.msra.mxu0 0.0
    %2927 = vmatprep.subr.mxu0 0.0
    %2928 = vmatpush1.msra.mxu0 0.0
    %2929 = vmatprep.subr.mxu0 0.0
    %2930 = vmatpush1.msra.mxu0 0.0
    %2931 = vmatprep.subr.mxu0 0.0
    %2932 = vmatpush1.msra.mxu0 0.0
    %2933 = vmatprep.subr.mxu0 0.0
    %2934 = vmatpush1.msra.mxu0 0.0
    %2935 = vmatprep.subr.mxu0 0.0
    %2936 = vmatpush1.msra.mxu0 0.0
    %2937 = vmatprep.subr.mxu0 0.0
    %2938 = vmatpush1.msra.mxu0 0.0
    %2939 = vmatprep.subr.mxu0 0.0
    %2940 = vmatpush1.msra.mxu0 %v1401
    %2941 = vmatprep.subr.mxu0 0.0
    %2942 = vmatpush1.msra.mxu0 %v1400
    %2943 = vmatprep.subr.mxu0 0.0
    %2944 = vmatpush2.msra.mxu0 0.0
    %2945 = vmatprep.subr.mxu0 0.0
    %2946 = vmatpush2.msra.mxu0 0.0
    %2947 = vmatprep.subr.mxu0 0.0
    %2948 = vmatpush2.msra.mxu0 0.0
    %2949 = vmatprep.subr.mxu0 0.0
    %2950 = vmatpush2.msra.mxu0 0.0
    %2951 = vmatprep.subr.mxu0 0.0
    %2952 = vmatpush2.msra.mxu0 0.0
    %2953 = vmatprep.subr.mxu0 0.0
    %2954 = vmatpush2.msra.mxu0 0.0
    %2955 = vmatprep.subr.mxu0 0.0
    %2956 = vmatpush2.msra.mxu0 0.0
    %2957 = vmatprep.subr.mxu0 0.0
    %2958 = vmatpush2.msra.mxu0 0.0
    %2959 = vmatprep.subr.mxu0 0.0
    %2960 = vmatpush2.msra.mxu0 0.0
    %2961 = vmatprep.subr.mxu0 0.0
    %2962 = vmatpush2.msra.mxu0 0.0
    %2963 = vmatprep.subr.mxu0 0.0
    %2964 = vmatpush2.msra.mxu0 0.0
    %2965 = vmatprep.subr.mxu0 0.0
    %2966 = vmatpush2.msra.mxu0 0.0
    %2967 = vmatprep.subr.mxu0 0.0
    %2968 = vmatpush2.msra.mxu0 0.0
    %2969 = vmatprep.subr.mxu0 0.0
    %2970 = vmatpush2.msra.mxu0 0.0
    %2971 = vmatprep.subr.mxu0 0.0
    %2972 = vmatpush2.msra.mxu0 0.0
    %2973 = vmatprep.subr.mxu0 0.0
    %2974 = vmatpush2.msra.mxu0 0.0
    %2975 = vmatprep.mubr.f32.mxu0 0.0
    %2976 = vmatmul.mubr.f32.gmra.mxu0 %v2909
    %v2977 = vpop.f32.mrf.mxu0
    %v2978 = vadd.f32 0.0, %v2977
    %v2979 = vpop.f32.mrf.mxu0
    %2980 = vdwg.mxu0
    %v2981 = vadd.f32 %v1395, %v2978
    %v2982 = vxor.u32 %v2908, 2147483648
    %v2983 = vmul.f32 %v2982, 1.442695
    %v2984 = vpow.pop %v2983
    %v2985 = vadd.f32 %v2984, 1.0
    %v2986 = vrcp.pop %v2985
    %v2987 = vmul.f32 1.0, %v2986
    %v2988 = vtanh.pop %v2908
    %v2989 = vmul.f32 %v2987, %v2794
    %2991 = vrot.lane.b32.xlu0 %v2988, 96
    %v2992 = vpop.permute.xlu0 %2991
    %v2994 = vmul.f32 %v2987, %v2992
    %2996 = vrot.lane.b32.xlu0 %v2994, 16
    %v2997 = vpop.permute.xlu0 %2996
    %v2999 = vadd.f32 %v2989, %v2997
    %v3000 = vtanh.pop %v2999
    %3002 = vrot.lane.b32.xlu0 %v3000, 32
    %v3003 = vpop.permute.xlu0 %3002
    %v3005 = vmul.f32 %v2987, %v3003
    %v3006 = vxor.u32 %v2981, 2147483648
    %v3007 = vmul.f32 %v3006, 1.442695
    %v3008 = vpow.pop %v3007
    %v3009 = vadd.f32 %v3008, 1.0
    %v3010 = vrcp.pop %v3009
    %v3011 = vmul.f32 1.0, %v3010
    %v3012 = vtanh.pop %v2981
    %v3013 = vmul.f32 %v3011, %v2818
    %3015 = vrot.lane.b32.xlu0 %v3012, 96
    %v3016 = vpop.permute.xlu0 %3015
    %v3018 = vmul.f32 %v3011, %v3016
    %3020 = vrot.lane.b32.xlu0 %v3018, 16
    %v3021 = vpop.permute.xlu0 %3020
    %v3023 = vadd.f32 %v3013, %v3021
    %v3024 = vtanh.pop %v3023
    %3026 = vrot.lane.b32.xlu0 %v3024, 32
    %v3027 = vpop.permute.xlu0 %3026
    %v3029 = vmul.f32 %v3011, %v3027
    %3031 = vrot.lane.b32.xlu0 %v3029, 80
    %v3032 = vpop.permute.xlu0 %3031
    %3035 = vrot.lane.b32.xlu0 %v3005, 96
    %v3036 = vpop.permute.xlu0 %3035
    %v3038 = vsel %vm539, %v3032, %v3036
    %v3040 = vrot.slane %v1808, 6
    %v3043 = vrot.slane %v2013, 4
    %v3046 = vrot.slane %v2218, 2
    %v3049 = vrot.slane %v2628, 6
    %v3052 = vrot.slane %v2833, 4
    %v3055 = vrot.slane %v3038, 2
    %vm3057 = vcmask 1041408
    %v3058 = vsel %vm3057, %v1603, %v3040
    %vm3059 = vcmask 1043456
    %v3060 = vsel %vm3059, %v3058, %v3043
    %vm3061 = vcmask 1045504
    %v3062 = vsel %vm3061, %v3060, %v3046
    %v3063 = vsel %vm3057, %v2423, %v3049
    %v3064 = vsel %vm3059, %v3063, %v3052
    %v3065 = vsel %vm3061, %v3064, %v3055
    %v3066 = vld [vmem:[#allocation4] sm:$0xff]
    %v3067 = vld [vmem:[#allocation4 + $0x8] sm:$0xff]
    %v3068 = vld [vmem:[%s37] sm:$0xff]
    %v3069 = vld [vmem:[%s37 + $0x8] sm:$0xff]
    %v3070 = vld [vmem:[%s37 + $0x10] sm:$0xff]
    %v3071 = vld [vmem:[%s37 + $0x18] sm:$0xff]
    %v3072 = vld [vmem:[#allocation22] sm:$0x1]
    %v3074 = vlaneseq
    %v3075 = vshrl.u32 %v3074, 7
    %v3076 = vsub.s32 0, %v3075
    %v3077 = vrot.slane %v3072, %v3076
    %vm3079 = vcmask 261120
    %v3081 = vsel %vm3079, %v3062, 0
    %v3084 = vsel %vm3079, %v3065, 0
    %3086 = vmatprep.subr.mxu0 0.0
    %3087 = vmatpush1.msra.mxu0 0.0
    %3088 = vmatprep.subr.mxu0 0.0
    %3089 = vmatpush1.msra.mxu0 0.0
    %3090 = vmatprep.subr.mxu0 0.0
    %3091 = vmatpush1.msra.mxu0 0.0
    %3092 = vmatprep.subr.mxu0 0.0
    %3093 = vmatpush1.msra.mxu0 0.0
    %3094 = vmatprep.subr.mxu0 0.0
    %3095 = vmatpush1.msra.mxu0 0.0
    %3096 = vmatprep.subr.mxu0 0.0
    %3097 = vmatpush1.msra.mxu0 0.0
    %3098 = vmatprep.subr.mxu0 0.0
    %3099 = vmatpush1.msra.mxu0 0.0
    %3100 = vmatprep.subr.mxu0 0.0
    %3101 = vmatpush1.msra.mxu0 0.0
    %3102 = vmatprep.subr.mxu0 0.0
    %3103 = vmatpush1.msra.mxu0 0.0
    %3104 = vmatprep.subr.mxu0 0.0
    %3105 = vmatpush1.msra.mxu0 0.0
    %3106 = vmatprep.subr.mxu0 0.0
    %3107 = vmatpush1.msra.mxu0 0.0
    %3108 = vmatprep.subr.mxu0 0.0
    %3109 = vmatpush1.msra.mxu0 0.0
    %3110 = vmatprep.subr.mxu0 0.0
    %3111 = vmatpush1.msra.mxu0 %v3071
    %3112 = vmatprep.subr.mxu0 0.0
    %3113 = vmatpush1.msra.mxu0 %v3070
    %3114 = vmatprep.subr.mxu0 0.0
    %3115 = vmatpush1.msra.mxu0 %v3069
    %3116 = vmatprep.subr.mxu0 0.0
    %3117 = vmatpush1.msra.mxu0 %v3068
    %3118 = vmatprep.subr.mxu0 0.0
    %3119 = vmatpush2.msra.mxu0 0.0
    %3120 = vmatprep.subr.mxu0 0.0
    %3121 = vmatpush2.msra.mxu0 0.0
    %3122 = vmatprep.subr.mxu0 0.0
    %3123 = vmatpush2.msra.mxu0 0.0
    %3124 = vmatprep.subr.mxu0 0.0
    %3125 = vmatpush2.msra.mxu0 0.0
    %3126 = vmatprep.subr.mxu0 0.0
    %3127 = vmatpush2.msra.mxu0 0.0
    %3128 = vmatprep.subr.mxu0 0.0
    %3129 = vmatpush2.msra.mxu0 0.0
    %3130 = vmatprep.subr.mxu0 0.0
    %3131 = vmatpush2.msra.mxu0 0.0
    %3132 = vmatprep.subr.mxu0 0.0
    %3133 = vmatpush2.msra.mxu0 0.0
    %3134 = vmatprep.subr.mxu0 0.0
    %3135 = vmatpush2.msra.mxu0 0.0
    %3136 = vmatprep.subr.mxu0 0.0
    %3137 = vmatpush2.msra.mxu0 0.0
    %3138 = vmatprep.subr.mxu0 0.0
    %3139 = vmatpush2.msra.mxu0 0.0
    %3140 = vmatprep.subr.mxu0 0.0
    %3141 = vmatpush2.msra.mxu0 0.0
    %3142 = vmatprep.subr.mxu0 0.0
    %3143 = vmatpush2.msra.mxu0 0.0
    %3144 = vmatprep.subr.mxu0 0.0
    %3145 = vmatpush2.msra.mxu0 0.0
    %3146 = vmatprep.subr.mxu0 0.0
    %3147 = vmatpush2.msra.mxu0 0.0
    %3148 = vmatprep.subr.mxu0 0.0
    %3149 = vmatpush2.msra.mxu0 0.0
    %3150 = vmatprep.mubr.f32.mxu0 0.0
    %3151 = vmatmul.mubr.f32.gmra.mxu0 %v3081
    %v3152 = vpop.f32.mrf.mxu0
    %v3153 = vadd.f32 %v3077, %v3152
    %v3154 = vpop.f32.mrf.mxu0
    %3155 = vmatprep.mubr.f32.mxu0 0.0
    %3156 = vmatmul.mubr.f32.gmra.mxu0 %v3084
    %v3157 = vpop.f32.mrf.mxu0
    %v3158 = vadd.f32 %v3077, %v3157
    %v3159 = vpop.f32.mrf.mxu0
    %3160 = vdwg.mxu0
    %3163 = vrot.lane.b32.xlu0 %v3153, 96
    %v3164 = vpop.permute.xlu0 %3163
    %3165 = vrot.lane.b32.xlu0 %v3158, 96
    %v3166 = vpop.permute.xlu0 %3165
    %v3167 = vsel %vm539, %v3153, 0
    %v3169 = vsel %vm539, %v3158, 0
    %v3171 = vsel %vm539, %v3164, 0
    %v3173 = vsel %vm539, %v3166, 0
    %3175 = vmatprep.subr.mxu0 0.0
    %3176 = vmatpush1.xpose.msra.mxu0 0.0
    %3177 = vmatprep.subr.mxu0 0.0
    %3178 = vmatpush1.xpose.msra.mxu0 0.0
    %3179 = vmatprep.subr.mxu0 0.0
    %3180 = vmatpush1.xpose.msra.mxu0 0.0
    %3181 = vmatprep.subr.mxu0 0.0
    %3182 = vmatpush1.xpose.msra.mxu0 0.0
    %3183 = vmatprep.subr.mxu0 0.0
    %3184 = vmatpush1.xpose.msra.mxu0 0.0
    %3185 = vmatprep.subr.mxu0 0.0
    %3186 = vmatpush1.xpose.msra.mxu0 0.0
    %3187 = vmatprep.subr.mxu0 0.0
    %3188 = vmatpush1.xpose.msra.mxu0 0.0
    %3189 = vmatprep.subr.mxu0 0.0
    %3190 = vmatpush1.xpose.msra.mxu0 0.0
    %3191 = vmatprep.subr.mxu0 0.0
    %3192 = vmatpush1.xpose.msra.mxu0 0.0
    %3193 = vmatprep.subr.mxu0 0.0
    %3194 = vmatpush1.xpose.msra.mxu0 0.0
    %3195 = vmatprep.subr.mxu0 0.0
    %3196 = vmatpush1.xpose.msra.mxu0 0.0
    %3197 = vmatprep.subr.mxu0 0.0
    %3198 = vmatpush1.xpose.msra.mxu0 0.0
    %3199 = vmatprep.subr.mxu0 0.0
    %3200 = vmatpush1.xpose.msra.mxu0 0.0
    %3201 = vmatprep.subr.mxu0 0.0
    %3202 = vmatpush1.xpose.msra.mxu0 0.0
    %3203 = vmatprep.subr.mxu0 0.0
    %3204 = vmatpush1.xpose.msra.mxu0 %v3173
    %3205 = vmatprep.subr.mxu0 0.0
    %3206 = vmatpush1.xpose.msra.mxu0 %v3171
    %3207 = vmatprep.subr.mxu0 0.0
    %3208 = vmatpush2.xpose.msra.mxu0 0.0
    %3209 = vmatprep.subr.mxu0 0.0
    %3210 = vmatpush2.xpose.msra.mxu0 0.0
    %3211 = vmatprep.subr.mxu0 0.0
    %3212 = vmatpush2.xpose.msra.mxu0 0.0
    %3213 = vmatprep.subr.mxu0 0.0
    %3214 = vmatpush2.xpose.msra.mxu0 0.0
    %3215 = vmatprep.subr.mxu0 0.0
    %3216 = vmatpush2.xpose.msra.mxu0 0.0
    %3217 = vmatprep.subr.mxu0 0.0
    %3218 = vmatpush2.xpose.msra.mxu0 0.0
    %3219 = vmatprep.subr.mxu0 0.0
    %3220 = vmatpush2.xpose.msra.mxu0 0.0
    %3221 = vmatprep.subr.mxu0 0.0
    %3222 = vmatpush2.xpose.msra.mxu0 0.0
    %3223 = vmatprep.subr.mxu0 0.0
    %3224 = vmatpush2.xpose.msra.mxu0 0.0
    %3225 = vmatprep.subr.mxu0 0.0
    %3226 = vmatpush2.xpose.msra.mxu0 0.0
    %3227 = vmatprep.subr.mxu0 0.0
    %3228 = vmatpush2.xpose.msra.mxu0 0.0
    %3229 = vmatprep.subr.mxu0 0.0
    %3230 = vmatpush2.xpose.msra.mxu0 0.0
    %3231 = vmatprep.subr.mxu0 0.0
    %3232 = vmatpush2.xpose.msra.mxu0 0.0
    %3233 = vmatprep.subr.mxu0 0.0
    %3234 = vmatpush2.xpose.msra.mxu0 0.0
    %3235 = vmatprep.subr.mxu0 0.0
    %3236 = vmatpush2.xpose.msra.mxu0 0.0
    %3237 = vmatprep.subr.mxu0 0.0
    %3238 = vmatpush2.xpose.msra.mxu0 0.0
    %3239 = vmatprep.mubr.f32.mxu0 0.0
    %3240 = vmatmul.mubr.f32.gmra.mxu0 %v3167
    %v3241 = vpop.f32.mrf.mxu0
    %v3242 = vadd.f32 0.0, %v3241
    %v3243 = vpop.f32.mrf.mxu0
    %3244 = vmatprep.mubr.f32.mxu0 0.0
    %3245 = vmatmul.mubr.f32.gmra.mxu0 %v3169
    %v3246 = vpop.f32.mrf.mxu0
    %v3247 = vadd.f32 0.0, %v3246
    %v3248 = vpop.f32.mrf.mxu0
    %3249 = vdwg.mxu0
    %v3250 = vmul.f32 %v3242, 0.25
    %v3251 = vmul.f32 %v3247, 0.25
    %v3252 = vadd.f32 %v3250, %v3066
    %v3253 = vadd.f32 %v3251, %v3067
    %v3254 = vsel %vm539, %v3252, -inf
    %3255 = vmax.xlane.f32.xlu0 %v3254
    %v3256 = vpop.xlane.xlu0 %3255
    %v3257 = vsel %vm539, %v3253, -inf
    %3258 = vmax.xlane.f32.xlu0 %v3257
    %v3259 = vpop.xlane.xlu0 %3258
    %v3260 = vsub.f32 %v3252, %v3256
    %v3261 = vsub.f32 %v3253, %v3259
    %v3262 = vmul.f32 %v3260, 1.442695
    %v3263 = vpow.pop %v3262
    %v3264 = vmul.f32 %v3261, 1.442695
    %v3265 = vpow.pop %v3264
    %v3266 = vsel %vm539, %v3263, 0.0
    %3267 = vadd.xlane.f32.xlu0 %v3266
    %v3268 = vpop.xlane.xlu0 %3267
    %v3269 = vsel %vm539, %v3265, 0.0
    %3270 = vadd.xlane.f32.xlu0 %v3269
    %v3271 = vpop.xlane.xlu0 %3270
    %v3272 = vrcp.pop %v3268
    %v3273 = vmul.f32 %v3263, %v3272
    %v3274 = vrcp.pop %v3271
    %v3275 = vmul.f32 %v3265, %v3274
    %3276 = vrot.lane.b32.xlu0 %v3153, 64
    %v3277 = vpop.permute.xlu0 %3276
    %3278 = vrot.lane.b32.xlu0 %v3158, 64
    %v3279 = vpop.permute.xlu0 %3278
    %v3283 = vsel %vm539, %v3273, 0
    %v3286 = vsel %vm539, %v3275, 0
    %3288 = vmatprep.subr.mxu0 0.0
    %3289 = vmatpush1.msra.mxu0 0.0
    %3290 = vmatprep.subr.mxu0 0.0
    %3291 = vmatpush1.msra.mxu0 0.0
    %3292 = vmatprep.subr.mxu0 0.0
    %3293 = vmatpush1.msra.mxu0 0.0
    %3294 = vmatprep.subr.mxu0 0.0
    %3295 = vmatpush1.msra.mxu0 0.0
    %3296 = vmatprep.subr.mxu0 0.0
    %3297 = vmatpush1.msra.mxu0 0.0
    %3298 = vmatprep.subr.mxu0 0.0
    %3299 = vmatpush1.msra.mxu0 0.0
    %3300 = vmatprep.subr.mxu0 0.0
    %3301 = vmatpush1.msra.mxu0 0.0
    %3302 = vmatprep.subr.mxu0 0.0
    %3303 = vmatpush1.msra.mxu0 0.0
    %3304 = vmatprep.subr.mxu0 0.0
    %3305 = vmatpush1.msra.mxu0 0.0
    %3306 = vmatprep.subr.mxu0 0.0
    %3307 = vmatpush1.msra.mxu0 0.0
    %3308 = vmatprep.subr.mxu0 0.0
    %3309 = vmatpush1.msra.mxu0 0.0
    %3310 = vmatprep.subr.mxu0 0.0
    %3311 = vmatpush1.msra.mxu0 0.0
    %3312 = vmatprep.subr.mxu0 0.0
    %3313 = vmatpush1.msra.mxu0 0.0
    %3314 = vmatprep.subr.mxu0 0.0
    %3315 = vmatpush1.msra.mxu0 0.0
    %3316 = vmatprep.subr.mxu0 0.0
    %3317 = vmatpush1.msra.mxu0 %v3279
    %3318 = vmatprep.subr.mxu0 0.0
    %3319 = vmatpush1.msra.mxu0 %v3277
    %3320 = vmatprep.subr.mxu0 0.0
    %3321 = vmatpush2.msra.mxu0 0.0
    %3322 = vmatprep.subr.mxu0 0.0
    %3323 = vmatpush2.msra.mxu0 0.0
    %3324 = vmatprep.subr.mxu0 0.0
    %3325 = vmatpush2.msra.mxu0 0.0
    %3326 = vmatprep.subr.mxu0 0.0
    %3327 = vmatpush2.msra.mxu0 0.0
    %3328 = vmatprep.subr.mxu0 0.0
    %3329 = vmatpush2.msra.mxu0 0.0
    %3330 = vmatprep.subr.mxu0 0.0
    %3331 = vmatpush2.msra.mxu0 0.0
    %3332 = vmatprep.subr.mxu0 0.0
    %3333 = vmatpush2.msra.mxu0 0.0
    %3334 = vmatprep.subr.mxu0 0.0
    %3335 = vmatpush2.msra.mxu0 0.0
    %3336 = vmatprep.subr.mxu0 0.0
    %3337 = vmatpush2.msra.mxu0 0.0
    %3338 = vmatprep.subr.mxu0 0.0
    %3339 = vmatpush2.msra.mxu0 0.0
    %3340 = vmatprep.subr.mxu0 0.0
    %3341 = vmatpush2.msra.mxu0 0.0
    %3342 = vmatprep.subr.mxu0 0.0
    %3343 = vmatpush2.msra.mxu0 0.0
    %3344 = vmatprep.subr.mxu0 0.0
    %3345 = vmatpush2.msra.mxu0 0.0
    %3346 = vmatprep.subr.mxu0 0.0
    %3347 = vmatpush2.msra.mxu0 0.0
    %3348 = vmatprep.subr.mxu0 0.0
    %3349 = vmatpush2.msra.mxu0 0.0
    %3350 = vmatprep.subr.mxu0 0.0
    %3351 = vmatpush2.msra.mxu0 0.0
    %3352 = vmatprep.mubr.f32.mxu0 0.0
    %3353 = vmatmul.mubr.f32.gmra.mxu0 %v3283
    %v3354 = vpop.f32.mrf.mxu0
    %v3355 = vadd.f32 0.0, %v3354
    %v3356 = vpop.f32.mrf.mxu0
    %3357 = vmatprep.mubr.f32.mxu0 0.0
    %3358 = vmatmul.mubr.f32.gmra.mxu0 %v3286
    %v3359 = vpop.f32.mrf.mxu0
    %v3360 = vadd.f32 0.0, %v3359
    %v3361 = vpop.f32.mrf.mxu0
    %3362 = vdwg.mxu0
    %3363 = vrot.lane.b32.xlu0 %v3153, 112
    %v3364 = vpop.permute.xlu0 %3363
    %3365 = vrot.lane.b32.xlu0 %v3158, 112
    %v3366 = vpop.permute.xlu0 %3365
    %3367 = vrot.lane.b32.xlu0 %v3153, 80
    %v3368 = vpop.permute.xlu0 %3367
    %3369 = vrot.lane.b32.xlu0 %v3158, 80
    %v3370 = vpop.permute.xlu0 %3369
    %v3371 = vsel %vm539, %v3364, 0
    %v3373 = vsel %vm539, %v3366, 0
    %v3375 = vsel %vm539, %v3368, 0
    %v3377 = vsel %vm539, %v3370, 0
    %3379 = vmatprep.subr.mxu0 0.0
    %3380 = vmatpush1.xpose.msra.mxu0 0.0
    %3381 = vmatprep.subr.mxu0 0.0
    %3382 = vmatpush1.xpose.msra.mxu0 0.0
    %3383 = vmatprep.subr.mxu0 0.0
    %3384 = vmatpush1.xpose.msra.mxu0 0.0
    %3385 = vmatprep.subr.mxu0 0.0
    %3386 = vmatpush1.xpose.msra.mxu0 0.0
    %3387 = vmatprep.subr.mxu0 0.0
    %3388 = vmatpush1.xpose.msra.mxu0 0.0
    %3389 = vmatprep.subr.mxu0 0.0
    %3390 = vmatpush1.xpose.msra.mxu0 0.0
    %3391 = vmatprep.subr.mxu0 0.0
    %3392 = vmatpush1.xpose.msra.mxu0 0.0
    %3393 = vmatprep.subr.mxu0 0.0
    %3394 = vmatpush1.xpose.msra.mxu0 0.0
    %3395 = vmatprep.subr.mxu0 0.0
    %3396 = vmatpush1.xpose.msra.mxu0 0.0
    %3397 = vmatprep.subr.mxu0 0.0
    %3398 = vmatpush1.xpose.msra.mxu0 0.0
    %3399 = vmatprep.subr.mxu0 0.0
    %3400 = vmatpush1.xpose.msra.mxu0 0.0
    %3401 = vmatprep.subr.mxu0 0.0
    %3402 = vmatpush1.xpose.msra.mxu0 0.0
    %3403 = vmatprep.subr.mxu0 0.0
    %3404 = vmatpush1.xpose.msra.mxu0 0.0
    %3405 = vmatprep.subr.mxu0 0.0
    %3406 = vmatpush1.xpose.msra.mxu0 0.0
    %3407 = vmatprep.subr.mxu0 0.0
    %3408 = vmatpush1.xpose.msra.mxu0 %v3377
    %3409 = vmatprep.subr.mxu0 0.0
    %3410 = vmatpush1.xpose.msra.mxu0 %v3375
    %3411 = vmatprep.subr.mxu0 0.0
    %3412 = vmatpush2.xpose.msra.mxu0 0.0
    %3413 = vmatprep.subr.mxu0 0.0
    %3414 = vmatpush2.xpose.msra.mxu0 0.0
    %3415 = vmatprep.subr.mxu0 0.0
    %3416 = vmatpush2.xpose.msra.mxu0 0.0
    %3417 = vmatprep.subr.mxu0 0.0
    %3418 = vmatpush2.xpose.msra.mxu0 0.0
    %3419 = vmatprep.subr.mxu0 0.0
    %3420 = vmatpush2.xpose.msra.mxu0 0.0
    %3421 = vmatprep.subr.mxu0 0.0
    %3422 = vmatpush2.xpose.msra.mxu0 0.0
    %3423 = vmatprep.subr.mxu0 0.0
    %3424 = vmatpush2.xpose.msra.mxu0 0.0
    %3425 = vmatprep.subr.mxu0 0.0
    %3426 = vmatpush2.xpose.msra.mxu0 0.0
    %3427 = vmatprep.subr.mxu0 0.0
    %3428 = vmatpush2.xpose.msra.mxu0 0.0
    %3429 = vmatprep.subr.mxu0 0.0
    %3430 = vmatpush2.xpose.msra.mxu0 0.0
    %3431 = vmatprep.subr.mxu0 0.0
    %3432 = vmatpush2.xpose.msra.mxu0 0.0
    %3433 = vmatprep.subr.mxu0 0.0
    %3434 = vmatpush2.xpose.msra.mxu0 0.0
    %3435 = vmatprep.subr.mxu0 0.0
    %3436 = vmatpush2.xpose.msra.mxu0 0.0
    %3437 = vmatprep.subr.mxu0 0.0
    %3438 = vmatpush2.xpose.msra.mxu0 0.0
    %3439 = vmatprep.subr.mxu0 0.0
    %3440 = vmatpush2.xpose.msra.mxu0 0.0
    %3441 = vmatprep.subr.mxu0 0.0
    %3442 = vmatpush2.xpose.msra.mxu0 0.0
    %3443 = vmatprep.mubr.f32.mxu0 0.0
    %3444 = vmatmul.mubr.f32.gmra.mxu0 %v3371
    %v3445 = vpop.f32.mrf.mxu0
    %v3446 = vadd.f32 0.0, %v3445
    %v3447 = vpop.f32.mrf.mxu0
    %3448 = vmatprep.mubr.f32.mxu0 0.0
    %3449 = vmatmul.mubr.f32.gmra.mxu0 %v3373
    %v3450 = vpop.f32.mrf.mxu0
    %v3451 = vadd.f32 0.0, %v3450
    %v3452 = vpop.f32.mrf.mxu0
    %3453 = vdwg.mxu0
    %v3454 = vmul.f32 %v3446, 0.25
    %v3455 = vmul.f32 %v3451, 0.25
    %v3456 = vadd.f32 %v3454, %v3066
    %v3457 = vadd.f32 %v3455, %v3067
    %v3458 = vsel %vm539, %v3456, -inf
    %3459 = vmax.xlane.f32.xlu0 %v3458
    %v3460 = vpop.xlane.xlu0 %3459
    %v3461 = vsel %vm539, %v3457, -inf
    %3462 = vmax.xlane.f32.xlu0 %v3461
    %v3463 = vpop.xlane.xlu0 %3462
    %v3464 = vsub.f32 %v3456, %v3460
    %v3465 = vsub.f32 %v3457, %v3463
    %v3466 = vmul.f32 %v3464, 1.442695
    %v3467 = vpow.pop %v3466
    %v3468 = vmul.f32 %v3465, 1.442695
    %v3469 = vpow.pop %v3468
    %v3470 = vsel %vm539, %v3467, 0.0
    %3471 = vadd.xlane.f32.xlu0 %v3470
    %v3472 = vpop.xlane.xlu0 %3471
    %v3473 = vsel %vm539, %v3469, 0.0
    %3474 = vadd.xlane.f32.xlu0 %v3473
    %v3475 = vpop.xlane.xlu0 %3474
    %v3476 = vrcp.pop %v3472
    %v3477 = vmul.f32 %v3467, %v3476
    %v3478 = vrcp.pop %v3475
    %v3479 = vmul.f32 %v3469, %v3478
    %3480 = vrot.lane.b32.xlu0 %v3153, 48
    %v3481 = vpop.permute.xlu0 %3480
    %3482 = vrot.lane.b32.xlu0 %v3158, 48
    %v3483 = vpop.permute.xlu0 %3482
    %v3487 = vsel %vm539, %v3477, 0
    %v3490 = vsel %vm539, %v3479, 0
    %3492 = vmatprep.subr.mxu0 0.0
    %3493 = vmatpush1.msra.mxu0 0.0
    %3494 = vmatprep.subr.mxu0 0.0
    %3495 = vmatpush1.msra.mxu0 0.0
    %3496 = vmatprep.subr.mxu0 0.0
    %3497 = vmatpush1.msra.mxu0 0.0
    %3498 = vmatprep.subr.mxu0 0.0
    %3499 = vmatpush1.msra.mxu0 0.0
    %3500 = vmatprep.subr.mxu0 0.0
    %3501 = vmatpush1.msra.mxu0 0.0
    %3502 = vmatprep.subr.mxu0 0.0
    %3503 = vmatpush1.msra.mxu0 0.0
    %3504 = vmatprep.subr.mxu0 0.0
    %3505 = vmatpush1.msra.mxu0 0.0
    %3506 = vmatprep.subr.mxu0 0.0
    %3507 = vmatpush1.msra.mxu0 0.0
    %3508 = vmatprep.subr.mxu0 0.0
    %3509 = vmatpush1.msra.mxu0 0.0
    %3510 = vmatprep.subr.mxu0 0.0
    %3511 = vmatpush1.msra.mxu0 0.0
    %3512 = vmatprep.subr.mxu0 0.0
    %3513 = vmatpush1.msra.mxu0 0.0
    %3514 = vmatprep.subr.mxu0 0.0
    %3515 = vmatpush1.msra.mxu0 0.0
    %3516 = vmatprep.subr.mxu0 0.0
    %3517 = vmatpush1.msra.mxu0 0.0
    %3518 = vmatprep.subr.mxu0 0.0
    %3519 = vmatpush1.msra.mxu0 0.0
    %3520 = vmatprep.subr.mxu0 0.0
    %3521 = vmatpush1.msra.mxu0 %v3483
    %3522 = vmatprep.subr.mxu0 0.0
    %3523 = vmatpush1.msra.mxu0 %v3481
    %3524 = vmatprep.subr.mxu0 0.0
    %3525 = vmatpush2.msra.mxu0 0.0
    %3526 = vmatprep.subr.mxu0 0.0
    %3527 = vmatpush2.msra.mxu0 0.0
    %3528 = vmatprep.subr.mxu0 0.0
    %3529 = vmatpush2.msra.mxu0 0.0
    %3530 = vmatprep.subr.mxu0 0.0
    %3531 = vmatpush2.msra.mxu0 0.0
    %3532 = vmatprep.subr.mxu0 0.0
    %3533 = vmatpush2.msra.mxu0 0.0
    %3534 = vmatprep.subr.mxu0 0.0
    %3535 = vmatpush2.msra.mxu0 0.0
    %3536 = vmatprep.subr.mxu0 0.0
    %3537 = vmatpush2.msra.mxu0 0.0
    %3538 = vmatprep.subr.mxu0 0.0
    %3539 = vmatpush2.msra.mxu0 0.0
    %3540 = vmatprep.subr.mxu0 0.0
    %3541 = vmatpush2.msra.mxu0 0.0
    %3542 = vmatprep.subr.mxu0 0.0
    %3543 = vmatpush2.msra.mxu0 0.0
    %3544 = vmatprep.subr.mxu0 0.0
    %3545 = vmatpush2.msra.mxu0 0.0
    %3546 = vmatprep.subr.mxu0 0.0
    %3547 = vmatpush2.msra.mxu0 0.0
    %3548 = vmatprep.subr.mxu0 0.0
    %3549 = vmatpush2.msra.mxu0 0.0
    %3550 = vmatprep.subr.mxu0 0.0
    %3551 = vmatpush2.msra.mxu0 0.0
    %3552 = vmatprep.subr.mxu0 0.0
    %3553 = vmatpush2.msra.mxu0 0.0
    %3554 = vmatprep.subr.mxu0 0.0
    %3555 = vmatpush2.msra.mxu0 0.0
    %3556 = vmatprep.mubr.f32.mxu0 0.0
    %3557 = vmatmul.mubr.f32.gmra.mxu0 %v3487
    %v3558 = vpop.f32.mrf.mxu0
    %v3559 = vadd.f32 0.0, %v3558
    %v3560 = vpop.f32.mrf.mxu0
    %3561 = vmatprep.mubr.f32.mxu0 0.0
    %3562 = vmatmul.mubr.f32.gmra.mxu0 %v3490
    %v3563 = vpop.f32.mrf.mxu0
    %v3564 = vadd.f32 0.0, %v3563
    %v3565 = vpop.f32.mrf.mxu0
    %3566 = vdwg.mxu0
    %3569 = vrot.lane.b32.xlu0 %v3559, 16
    %v3570 = vpop.permute.xlu0 %3569
    %3571 = vrot.lane.b32.xlu0 %v3564, 16
    %v3572 = vpop.permute.xlu0 %3571
    %v3575 = vsel %vm539, %v3355, %v3570
    %v3576 = vsel %vm539, %v3360, %v3572
    %v3577 = vld [vmem:[%s41] sm:$0xff]
    %v3578 = vld [vmem:[%s41 + $0x8] sm:$0xff]
    %v3579 = vld [vmem:[%s41 + $0x10] sm:$0xff]
    %v3580 = vld [vmem:[%s41 + $0x18] sm:$0xff]
    %v3581 = vld [vmem:[#allocation24] sm:$0x1]
    %v3583 = vlaneseq
    %v3584 = vshrl.u32 %v3583, 7
    %v3585 = vsub.s32 0, %v3584
    %v3586 = vrot.slane %v3581, %v3585
    %v3589 = vsel %vm3079, %v3575, 0
    %v3592 = vsel %vm3079, %v3576, 0
    %3594 = vmatprep.subr.mxu0 0.0
    %3595 = vmatpush1.msra.mxu0 0.0
    %3596 = vmatprep.subr.mxu0 0.0
    %3597 = vmatpush1.msra.mxu0 0.0
    %3598 = vmatprep.subr.mxu0 0.0
    %3599 = vmatpush1.msra.mxu0 0.0
    %3600 = vmatprep.subr.mxu0 0.0
    %3601 = vmatpush1.msra.mxu0 0.0
    %3602 = vmatprep.subr.mxu0 0.0
    %3603 = vmatpush1.msra.mxu0 0.0
    %3604 = vmatprep.subr.mxu0 0.0
    %3605 = vmatpush1.msra.mxu0 0.0
    %3606 = vmatprep.subr.mxu0 0.0
    %3607 = vmatpush1.msra.mxu0 0.0
    %3608 = vmatprep.subr.mxu0 0.0
    %3609 = vmatpush1.msra.mxu0 0.0
    %3610 = vmatprep.subr.mxu0 0.0
    %3611 = vmatpush1.msra.mxu0 0.0
    %3612 = vmatprep.subr.mxu0 0.0
    %3613 = vmatpush1.msra.mxu0 0.0
    %3614 = vmatprep.subr.mxu0 0.0
    %3615 = vmatpush1.msra.mxu0 0.0
    %3616 = vmatprep.subr.mxu0 0.0
    %3617 = vmatpush1.msra.mxu0 0.0
    %3618 = vmatprep.subr.mxu0 0.0
    %3619 = vmatpush1.msra.mxu0 %v3580
    %3620 = vmatprep.subr.mxu0 0.0
    %3621 = vmatpush1.msra.mxu0 %v3579
    %3622 = vmatprep.subr.mxu0 0.0
    %3623 = vmatpush1.msra.mxu0 %v3578
    %3624 = vmatprep.subr.mxu0 0.0
    %3625 = vmatpush1.msra.mxu0 %v3577
    %3626 = vmatprep.subr.mxu0 0.0
    %3627 = vmatpush2.msra.mxu0 0.0
    %3628 = vmatprep.subr.mxu0 0.0
    %3629 = vmatpush2.msra.mxu0 0.0
    %3630 = vmatprep.subr.mxu0 0.0
    %3631 = vmatpush2.msra.mxu0 0.0
    %3632 = vmatprep.subr.mxu0 0.0
    %3633 = vmatpush2.msra.mxu0 0.0
    %3634 = vmatprep.subr.mxu0 0.0
    %3635 = vmatpush2.msra.mxu0 0.0
    %3636 = vmatprep.subr.mxu0 0.0
    %3637 = vmatpush2.msra.mxu0 0.0
    %3638 = vmatprep.subr.mxu0 0.0
    %3639 = vmatpush2.msra.mxu0 0.0
    %3640 = vmatprep.subr.mxu0 0.0
    %3641 = vmatpush2.msra.mxu0 0.0
    %3642 = vmatprep.subr.mxu0 0.0
    %3643 = vmatpush2.msra.mxu0 0.0
    %3644 = vmatprep.subr.mxu0 0.0
    %3645 = vmatpush2.msra.mxu0 0.0
    %3646 = vmatprep.subr.mxu0 0.0
    %3647 = vmatpush2.msra.mxu0 0.0
    %3648 = vmatprep.subr.mxu0 0.0
    %3649 = vmatpush2.msra.mxu0 0.0
    %3650 = vmatprep.subr.mxu0 0.0
    %3651 = vmatpush2.msra.mxu0 0.0
    %3652 = vmatprep.subr.mxu0 0.0
    %3653 = vmatpush2.msra.mxu0 0.0
    %3654 = vmatprep.subr.mxu0 0.0
    %3655 = vmatpush2.msra.mxu0 0.0
    %3656 = vmatprep.subr.mxu0 0.0
    %3657 = vmatpush2.msra.mxu0 0.0
    %3658 = vmatprep.mubr.f32.mxu0 0.0
    %3659 = vmatmul.mubr.f32.gmra.mxu0 %v3589
    %v3660 = vpop.f32.mrf.mxu0
    %v3661 = vadd.f32 %v3586, %v3660
    %v3662 = vpop.f32.mrf.mxu0
    %3663 = vmatprep.mubr.f32.mxu0 0.0
    %3664 = vmatmul.mubr.f32.gmra.mxu0 %v3592
    %v3665 = vpop.f32.mrf.mxu0
    %v3666 = vadd.f32 %v3586, %v3665
    %v3667 = vpop.f32.mrf.mxu0
    %3668 = vdwg.mxu0
    %v3669 = vadd.f32 %v3062, %v3661
    %v3670 = vadd.f32 %v3065, %v3666
    %v3671 = vld [vmem:[#allocation30] sm:$0x1]
    %v3672 = vld [vmem:[#allocation31] sm:$0x1]
    %v3673 = vsel %vm3079, %v3669, 0.0
    %3674 = vadd.xlane.f32.xlu0 %v3673
    %v3675 = vpop.xlane.xlu0 %3674
    %v3676 = vsel %vm3079, %v3670, 0.0
    %3677 = vadd.xlane.f32.xlu0 %v3676
    %v3678 = vpop.xlane.xlu0 %3677
    %v3679 = vrcp.pop 32.0
    %v3680 = vmul.f32 %v3675, %v3679
    %v3681 = vmul.f32 %v3678, %v3679
    %v3682 = vsub.f32 %v3669, %v3680
    %v3683 = vsub.f32 %v3670, %v3681
    %v3684 = vmul.f32 %v3682, %v3682
    %v3685 = vmul.f32 %v3683, %v3683
    %v3686 = vsel %vm3079, %v3684, 0.0
    %3687 = vadd.xlane.f32.xlu0 %v3686
    %v3688 = vpop.xlane.xlu0 %3687
    %v3689 = vsel %vm3079, %v3685, 0.0
    %3690 = vadd.xlane.f32.xlu0 %v3689
    %v3691 = vpop.xlane.xlu0 %3690
    %v3692 = vmul.f32 %v3688, %v3679
    %v3693 = vmul.f32 %v3691, %v3679
    %v3694 = vadd.f32 %v3692, 1e-05
    %v3695 = vadd.f32 %v3693, 1e-05
    %v3696 = vrsqrt.pop %v3694
    %v3697 = vrsqrt.pop %v3695
    %v3698 = vmul.f32 %v3682, %v3696
    %v3699 = vmul.f32 %v3683, %v3697
    %v3701 = vlaneseq
    %v3702 = vshrl.u32 %v3701, 7
    %v3703 = vsub.s32 0, %v3702
    %v3704 = vrot.slane %v3671, %v3703
    %v3706 = vmul.f32 %v3698, %v3704
    %v3707 = vmul.f32 %v3699, %v3704
    %v3709 = vlaneseq
    %v3710 = vshrl.u32 %v3709, 7
    %v3711 = vsub.s32 0, %v3710
    %v3712 = vrot.slane %v3672, %v3711
    %v3714 = vadd.f32 %v3706, %v3712
    %v3715 = vadd.f32 %v3707, %v3712
    %v3716 = vpack.c.bf16 %v3715, %v3714
    %v3717 = vld [vmem:[#allocation25] sm:$0xff]
    %v3718 = vld [vmem:[#allocation25 + $0x8] sm:$0xff]
    %v3719 = vld [vmem:[#allocation25 + $0x10] sm:$0xff]
    %v3720 = vld [vmem:[#allocation25 + $0x18] sm:$0xff]
    %v3721 = vld [vmem:[#allocation25 + $0x20] sm:$0xff]
    %v3722 = vld [vmem:[#allocation25 + $0x28] sm:$0xff]
    %v3723 = vld [vmem:[#allocation25 + $0x30] sm:$0xff]
    %v3724 = vld [vmem:[#allocation25 + $0x38] sm:$0xff]
    %v3725 = vld [vmem:[#allocation25 + $0x40] sm:$0xff]
    %v3726 = vld [vmem:[#allocation25 + $0x48] sm:$0xff]
    %v3727 = vld [vmem:[#allocation25 + $0x50] sm:$0xff]
    %v3728 = vld [vmem:[#allocation25 + $0x58] sm:$0xff]
    %v3729 = vld [vmem:[#allocation25 + $0x60] sm:$0xff]
    %v3730 = vld [vmem:[#allocation25 + $0x68] sm:$0xff]
    %v3731 = vld [vmem:[#allocation25 + $0x70] sm:$0xff]
    %v3732 = vld [vmem:[#allocation25 + $0x78] sm:$0xff]
    %v3733 = vld [vmem:[#allocation25 + $0x80] sm:$0xff]
    %v3734 = vld [vmem:[#allocation25 + $0x88] sm:$0xff]
    %v3735 = vld [vmem:[#allocation25 + $0x90] sm:$0xff]
    %v3736 = vld [vmem:[#allocation25 + $0x98] sm:$0xff]
    %v3737 = vld [vmem:[#allocation25 + $0xa0] sm:$0xff]
    %v3738 = vld [vmem:[#allocation25 + $0xa8] sm:$0xff]
    %v3739 = vld [vmem:[#allocation25 + $0xb0] sm:$0xff]
    %v3740 = vld [vmem:[#allocation25 + $0xb8] sm:$0xff]
    %v3741 = vld [vmem:[#allocation25 + $0xc0] sm:$0xff]
    %v3742 = vld [vmem:[#allocation25 + $0xc8] sm:$0xff]
    %v3743 = vld [vmem:[#allocation25 + $0xd0] sm:$0xff]
    %v3744 = vld [vmem:[#allocation25 + $0xd8] sm:$0xff]
    %v3745 = vld [vmem:[#allocation25 + $0xe0] sm:$0xff]
    %v3746 = vld [vmem:[#allocation25 + $0xe8] sm:$0xff]
    %v3747 = vld [vmem:[#allocation25 + $0xf0] sm:$0xff]
    %v3748 = vld [vmem:[#allocation25 + $0xf8] sm:$0xff]
    %v3749 = vld [vmem:[#allocation27] sm:$0xff]
    %v3750 = vld [vmem:[#allocation27 + $0x8] sm:$0xff]
    %v3753 = vlaneseq
    %v3754 = vshrl.u32 %v3753, 7
    %v3755 = vsub.s32 0, %v3754
    %v3756 = vrot.slane %v3749, %v3755
    %v3757 = vlaneseq
    %v3758 = vshrl.u32 %v3757, 7
    %v3759 = vsub.s32 1, %v3758
    %v3760 = vrot.slane %v3749, %v3759
    %v3761 = vlaneseq
    %v3762 = vshrl.u32 %v3761, 7
    %v3763 = vsub.s32 2, %v3762
    %v3764 = vrot.slane %v3749, %v3763
    %v3765 = vlaneseq
    %v3766 = vshrl.u32 %v3765, 7
    %v3767 = vsub.s32 3, %v3766
    %v3768 = vrot.slane %v3749, %v3767
    %v3769 = vlaneseq
    %v3770 = vshrl.u32 %v3769, 7
    %v3771 = vsub.s32 4, %v3770
    %v3772 = vrot.slane %v3749, %v3771
    %v3773 = vlaneseq
    %v3774 = vshrl.u32 %v3773, 7
    %v3775 = vsub.s32 5, %v3774
    %v3776 = vrot.slane %v3749, %v3775
    %v3777 = vlaneseq
    %v3778 = vshrl.u32 %v3777, 7
    %v3779 = vsub.s32 6, %v3778
    %v3780 = vrot.slane %v3749, %v3779
    %v3781 = vlaneseq
    %v3782 = vshrl.u32 %v3781, 7
    %v3783 = vsub.s32 7, %v3782
    %v3784 = vrot.slane %v3749, %v3783
    %v3785 = vlaneseq
    %v3786 = vshrl.u32 %v3785, 7
    %v3787 = vsub.s32 0, %v3786
    %v3788 = vrot.slane %v3750, %v3787
    %v3789 = vlaneseq
    %v3790 = vshrl.u32 %v3789, 7
    %v3791 = vsub.s32 1, %v3790
    %v3792 = vrot.slane %v3750, %v3791
    %v3793 = vlaneseq
    %v3794 = vshrl.u32 %v3793, 7
    %v3795 = vsub.s32 2, %v3794
    %v3796 = vrot.slane %v3750, %v3795
    %v3797 = vlaneseq
    %v3798 = vshrl.u32 %v3797, 7
    %v3799 = vsub.s32 3, %v3798
    %v3800 = vrot.slane %v3750, %v3799
    %v3801 = vlaneseq
    %v3802 = vshrl.u32 %v3801, 7
    %v3803 = vsub.s32 4, %v3802
    %v3804 = vrot.slane %v3750, %v3803
    %v3805 = vlaneseq
    %v3806 = vshrl.u32 %v3805, 7
    %v3807 = vsub.s32 5, %v3806
    %v3808 = vrot.slane %v3750, %v3807
    %v3809 = vlaneseq
    %v3810 = vshrl.u32 %v3809, 7
    %v3811 = vsub.s32 6, %v3810
    %v3812 = vrot.slane %v3750, %v3811
    %v3813 = vlaneseq
    %v3814 = vshrl.u32 %v3813, 7
    %v3815 = vsub.s32 7, %v3814
    %v3816 = vrot.slane %v3750, %v3815
    %v3865 = vunpack.c.l.b16 %v3717
    %v3866 = vunpack.c.h.b16 %v3717
    %v3867 = vunpack.c.l.b16 %v3718
    %v3868 = vunpack.c.h.b16 %v3718
    %v3869 = vunpack.c.l.b16 %v3719
    %v3870 = vunpack.c.h.b16 %v3719
    %v3871 = vunpack.c.l.b16 %v3720
    %v3872 = vunpack.c.h.b16 %v3720
    %v3873 = vunpack.c.l.b16 %v3721
    %v3874 = vunpack.c.h.b16 %v3721
    %v3875 = vunpack.c.l.b16 %v3722
    %v3876 = vunpack.c.h.b16 %v3722
    %v3877 = vunpack.c.l.b16 %v3723
    %v3878 = vunpack.c.h.b16 %v3723
    %v3879 = vunpack.c.l.b16 %v3724
    %v3880 = vunpack.c.h.b16 %v3724
    %v3881 = vunpack.c.l.b16 %v3725
    %v3882 = vunpack.c.h.b16 %v3725
    %v3883 = vunpack.c.l.b16 %v3726
    %v3884 = vunpack.c.h.b16 %v3726
    %v3885 = vunpack.c.l.b16 %v3727
    %v3886 = vunpack.c.h.b16 %v3727
    %v3887 = vunpack.c.l.b16 %v3728
    %v3888 = vunpack.c.h.b16 %v3728
    %v3889 = vunpack.c.l.b16 %v3729
    %v3890 = vunpack.c.h.b16 %v3729
    %v3891 = vunpack.c.l.b16 %v3730
    %v3892 = vunpack.c.h.b16 %v3730
    %v3893 = vunpack.c.l.b16 %v3731
    %v3894 = vunpack.c.h.b16 %v3731
    %v3895 = vunpack.c.l.b16 %v3732
    %v3896 = vunpack.c.h.b16 %v3732
    %v3897 = vunpack.c.l.b16 %v3733
    %v3898 = vunpack.c.h.b16 %v3733
    %v3899 = vunpack.c.l.b16 %v3734
    %v3900 = vunpack.c.h.b16 %v3734
    %v3901 = vunpack.c.l.b16 %v3735
    %v3902 = vunpack.c.h.b16 %v3735
    %v3903 = vunpack.c.l.b16 %v3736
    %v3904 = vunpack.c.h.b16 %v3736
    %v3905 = vunpack.c.l.b16 %v3737
    %v3906 = vunpack.c.h.b16 %v3737
    %v3907 = vunpack.c.l.b16 %v3738
    %v3908 = vunpack.c.h.b16 %v3738
    %v3909 = vunpack.c.l.b16 %v3739
    %v3910 = vunpack.c.h.b16 %v3739
    %v3911 = vunpack.c.l.b16 %v3740
    %v3912 = vunpack.c.h.b16 %v3740
    %v3913 = vunpack.c.l.b16 %v3741
    %v3914 = vunpack.c.h.b16 %v3741
    %v3915 = vunpack.c.l.b16 %v3742
    %v3916 = vunpack.c.h.b16 %v3742
    %v3917 = vunpack.c.l.b16 %v3743
    %v3918 = vunpack.c.h.b16 %v3743
    %v3919 = vunpack.c.l.b16 %v3744
    %v3920 = vunpack.c.h.b16 %v3744
    %v3921 = vunpack.c.l.b16 %v3745
    %v3922 = vunpack.c.h.b16 %v3745
    %v3923 = vunpack.c.l.b16 %v3746
    %v3924 = vunpack.c.h.b16 %v3746
    %v3925 = vunpack.c.l.b16 %v3747
    %v3926 = vunpack.c.h.b16 %v3747
    %v3927 = vunpack.c.l.b16 %v3748
    %v3928 = vunpack.c.h.b16 %v3748
    %v3929 = vpack.c.b16 %v3881, %v3865
    %v3930 = vpack.c.b16 %v3882, %v3866
    %v3931 = vpack.c.b16 %v3883, %v3867
    %v3932 = vpack.c.b16 %v3884, %v3868
    %v3933 = vpack.c.b16 %v3885, %v3869
    %v3934 = vpack.c.b16 %v3886, %v3870
    %v3935 = vpack.c.b16 %v3887, %v3871
    %v3936 = vpack.c.b16 %v3888, %v3872
    %v3937 = vpack.c.b16 %v3889, %v3873
    %v3938 = vpack.c.b16 %v3890, %v3874
    %v3939 = vpack.c.b16 %v3891, %v3875
    %v3940 = vpack.c.b16 %v3892, %v3876
    %v3941 = vpack.c.b16 %v3893, %v3877
    %v3942 = vpack.c.b16 %v3894, %v3878
    %v3943 = vpack.c.b16 %v3895, %v3879
    %v3944 = vpack.c.b16 %v3896, %v3880
    %v3945 = vpack.c.b16 %v3913, %v3897
    %v3946 = vpack.c.b16 %v3914, %v3898
    %v3947 = vpack.c.b16 %v3915, %v3899
    %v3948 = vpack.c.b16 %v3916, %v3900
    %v3949 = vpack.c.b16 %v3917, %v3901
    %v3950 = vpack.c.b16 %v3918, %v3902
    %v3951 = vpack.c.b16 %v3919, %v3903
    %v3952 = vpack.c.b16 %v3920, %v3904
    %v3953 = vpack.c.b16 %v3921, %v3905
    %v3954 = vpack.c.b16 %v3922, %v3906
    %v3955 = vpack.c.b16 %v3923, %v3907
    %v3956 = vpack.c.b16 %v3924, %v3908
    %v3957 = vpack.c.b16 %v3925, %v3909
    %v3958 = vpack.c.b16 %v3926, %v3910
    %v3959 = vpack.c.b16 %v3927, %v3911
    %v3960 = vpack.c.b16 %v3928, %v3912
    %v3994 = vsel %vm3079, %v3716, 0
    %3996 = vmatprep.subr.bf16.mxu0 0
    %3997 = vmatpush1.bf16.msra.mxu0 0
    %3998 = vmatprep.subr.bf16.mxu0 0
    %3999 = vmatpush1.bf16.msra.mxu0 0
    %4000 = vmatprep.subr.bf16.mxu0 0
    %4001 = vmatpush1.bf16.msra.mxu0 0
    %4002 = vmatprep.subr.bf16.mxu0 0
    %4003 = vmatpush1.bf16.msra.mxu0 0
    %4004 = vmatprep.subr.bf16.mxu0 0
    %4005 = vmatpush1.bf16.msra.mxu0 0
    %4006 = vmatprep.subr.bf16.mxu0 0
    %4007 = vmatpush1.bf16.msra.mxu0 0
    %4008 = vmatprep.subr.bf16.mxu0 %v3946
    %4009 = vmatpush1.bf16.msra.mxu0 %v3945
    %4010 = vmatprep.subr.bf16.mxu0 %v3930
    %4011 = vmatpush1.bf16.msra.mxu0 %v3929
    %4012 = vmatprep.subr.bf16.mxu0 0
    %4013 = vmatpush2.bf16.msra.mxu0 0
    %4014 = vmatprep.subr.bf16.mxu0 0
    %4015 = vmatpush2.bf16.msra.mxu0 0
    %4016 = vmatprep.subr.bf16.mxu0 0
    %4017 = vmatpush2.bf16.msra.mxu0 0
    %4018 = vmatprep.subr.bf16.mxu0 0
    %4019 = vmatpush2.bf16.msra.mxu0 0
    %4020 = vmatprep.subr.bf16.mxu0 0
    %4021 = vmatpush2.bf16.msra.mxu0 0
    %4022 = vmatprep.subr.bf16.mxu0 0
    %4023 = vmatpush2.bf16.msra.mxu0 0
    %4024 = vmatprep.subr.bf16.mxu0 0
    %4025 = vmatpush2.bf16.msra.mxu0 0
    %4026 = vmatprep.subr.bf16.mxu0 0
    %4027 = vmatpush2.bf16.msra.mxu0 0
    %4028 = vmatprep.mubr.bf16.mxu0 0
    %4029 = vmatmul.mubr.bf16.gmra.mxu0 %v3994
    %v4030 = vpop.f32.mrf.mxu0
    %v4031 = vadd.f32 %v3756, %v4030
    %v4032 = vpop.f32.mrf.mxu0
    %v4033 = vadd.f32 %v3760, %v4032
    %v4034 = vpop.f32.mrf.mxu0
    %v4035 = vadd.f32 %v3756, %v4034
    %v4036 = vpop.f32.mrf.mxu0
    %v4037 = vadd.f32 %v3760, %v4036
    %4038 = vdwg.mxu0
    %4039 = vmatprep.subr.bf16.mxu0 0
    %4040 = vmatpush1.bf16.msra.mxu0 0
    %4041 = vmatprep.subr.bf16.mxu0 0
    %4042 = vmatpush1.bf16.msra.mxu0 0
    %4043 = vmatprep.subr.bf16.mxu0 0
    %4044 = vmatpush1.bf16.msra.mxu0 0
    %4045 = vmatprep.subr.bf16.mxu0 0
    %4046 = vmatpush1.bf16.msra.mxu0 0
    %4047 = vmatprep.subr.bf16.mxu0 0
    %4048 = vmatpush1.bf16.msra.mxu0 0
    %4049 = vmatprep.subr.bf16.mxu0 0
    %4050 = vmatpush1.bf16.msra.mxu0 0
    %4051 = vmatprep.subr.bf16.mxu0 %v3948
    %4052 = vmatpush1.bf16.msra.mxu0 %v3947
    %4053 = vmatprep.subr.bf16.mxu0 %v3932
    %4054 = vmatpush1.bf16.msra.mxu0 %v3931
    %4055 = vmatprep.subr.bf16.mxu0 0
    %4056 = vmatpush2.bf16.msra.mxu0 0
    %4057 = vmatprep.subr.bf16.mxu0 0
    %4058 = vmatpush2.bf16.msra.mxu0 0
    %4059 = vmatprep.subr.bf16.mxu0 0
    %4060 = vmatpush2.bf16.msra.mxu0 0
    %4061 = vmatprep.subr.bf16.mxu0 0
    %4062 = vmatpush2.bf16.msra.mxu0 0
    %4063 = vmatprep.subr.bf16.mxu0 0
    %4064 = vmatpush2.bf16.msra.mxu0 0
    %4065 = vmatprep.subr.bf16.mxu0 0
    %4066 = vmatpush2.bf16.msra.mxu0 0
    %4067 = vmatprep.subr.bf16.mxu0 0
    %4068 = vmatpush2.bf16.msra.mxu0 0
    %4069 = vmatprep.subr.bf16.mxu0 0
    %4070 = vmatpush2.bf16.msra.mxu0 0
    %4071 = vmatprep.mubr.bf16.mxu0 0
    %4072 = vmatmul.mubr.bf16.gmra.mxu0 %v3994
    %v4073 = vpop.f32.mrf.mxu0
    %v4074 = vadd.f32 %v3764, %v4073
    %v4075 = vpop.f32.mrf.mxu0
    %v4076 = vadd.f32 %v3768, %v4075
    %v4077 = vpop.f32.mrf.mxu0
    %v4078 = vadd.f32 %v3764, %v4077
    %v4079 = vpop.f32.mrf.mxu0
    %v4080 = vadd.f32 %v3768, %v4079
    %4081 = vdwg.mxu0
    %4082 = vmatprep.subr.bf16.mxu0 0
    %4083 = vmatpush1.bf16.msra.mxu0 0
    %4084 = vmatprep.subr.bf16.mxu0 0
    %4085 = vmatpush1.bf16.msra.mxu0 0
    %4086 = vmatprep.subr.bf16.mxu0 0
    %4087 = vmatpush1.bf16.msra.mxu0 0
    %4088 = vmatprep.subr.bf16.mxu0 0
    %4089 = vmatpush1.bf16.msra.mxu0 0
    %4090 = vmatprep.subr.bf16.mxu0 0
    %4091 = vmatpush1.bf16.msra.mxu0 0
    %4092 = vmatprep.subr.bf16.mxu0 0
    %4093 = vmatpush1.bf16.msra.mxu0 0
    %4094 = vmatprep.subr.bf16.mxu0 %v3950
    %4095 = vmatpush1.bf16.msra.mxu0 %v3949
    %4096 = vmatprep.subr.bf16.mxu0 %v3934
    %4097 = vmatpush1.bf16.msra.mxu0 %v3933
    %4098 = vmatprep.subr.bf16.mxu0 0
    %4099 = vmatpush2.bf16.msra.mxu0 0
    %4100 = vmatprep.subr.bf16.mxu0 0
    %4101 = vmatpush2.bf16.msra.mxu0 0
    %4102 = vmatprep.subr.bf16.mxu0 0
    %4103 = vmatpush2.bf16.msra.mxu0 0
    %4104 = vmatprep.subr.bf16.mxu0 0
    %4105 = vmatpush2.bf16.msra.mxu0 0
    %4106 = vmatprep.subr.bf16.mxu0 0
    %4107 = vmatpush2.bf16.msra.mxu0 0
    %4108 = vmatprep.subr.bf16.mxu0 0
    %4109 = vmatpush2.bf16.msra.mxu0 0
    %4110 = vmatprep.subr.bf16.mxu0 0
    %4111 = vmatpush2.bf16.msra.mxu0 0
    %4112 = vmatprep.subr.bf16.mxu0 0
    %4113 = vmatpush2.bf16.msra.mxu0 0
    %4114 = vmatprep.mubr.bf16.mxu0 0
    %4115 = vmatmul.mubr.bf16.gmra.mxu0 %v3994
    %v4116 = vpop.f32.mrf.mxu0
    %v4117 = vadd.f32 %v3772, %v4116
    %v4118 = vpop.f32.mrf.mxu0
    %v4119 = vadd.f32 %v3776, %v4118
    %v4120 = vpop.f32.mrf.mxu0
    %v4121 = vadd.f32 %v3772, %v4120
    %v4122 = vpop.f32.mrf.mxu0
    %v4123 = vadd.f32 %v3776, %v4122
    %4124 = vdwg.mxu0
    %4125 = vmatprep.subr.bf16.mxu0 0
    %4126 = vmatpush1.bf16.msra.mxu0 0
    %4127 = vmatprep.subr.bf16.mxu0 0
    %4128 = vmatpush1.bf16.msra.mxu0 0
    %4129 = vmatprep.subr.bf16.mxu0 0
    %4130 = vmatpush1.bf16.msra.mxu0 0
    %4131 = vmatprep.subr.bf16.mxu0 0
    %4132 = vmatpush1.bf16.msra.mxu0 0
    %4133 = vmatprep.subr.bf16.mxu0 0
    %4134 = vmatpush1.bf16.msra.mxu0 0
    %4135 = vmatprep.subr.bf16.mxu0 0
    %4136 = vmatpush1.bf16.msra.mxu0 0
    %4137 = vmatprep.subr.bf16.mxu0 %v3952
    %4138 = vmatpush1.bf16.msra.mxu0 %v3951
    %4139 = vmatprep.subr.bf16.mxu0 %v3936
    %4140 = vmatpush1.bf16.msra.mxu0 %v3935
    %4141 = vmatprep.subr.bf16.mxu0 0
    %4142 = vmatpush2.bf16.msra.mxu0 0
    %4143 = vmatprep.subr.bf16.mxu0 0
    %4144 = vmatpush2.bf16.msra.mxu0 0
    %4145 = vmatprep.subr.bf16.mxu0 0
    %4146 = vmatpush2.bf16.msra.mxu0 0
    %4147 = vmatprep.subr.bf16.mxu0 0
    %4148 = vmatpush2.bf16.msra.mxu0 0
    %4149 = vmatprep.subr.bf16.mxu0 0
    %4150 = vmatpush2.bf16.msra.mxu0 0
    %4151 = vmatprep.subr.bf16.mxu0 0
    %4152 = vmatpush2.bf16.msra.mxu0 0
    %4153 = vmatprep.subr.bf16.mxu0 0
    %4154 = vmatpush2.bf16.msra.mxu0 0
    %4155 = vmatprep.subr.bf16.mxu0 0
    %4156 = vmatpush2.bf16.msra.mxu0 0
    %4157 = vmatprep.mubr.bf16.mxu0 0
    %4158 = vmatmul.mubr.bf16.gmra.mxu0 %v3994
    %v4159 = vpop.f32.mrf.mxu0
    %v4160 = vadd.f32 %v3780, %v4159
    %v4161 = vpop.f32.mrf.mxu0
    %v4162 = vadd.f32 %v3784, %v4161
    %v4163 = vpop.f32.mrf.mxu0
    %v4164 = vadd.f32 %v3780, %v4163
    %v4165 = vpop.f32.mrf.mxu0
    %v4166 = vadd.f32 %v3784, %v4165
    %4167 = vdwg.mxu0
    %4168 = vmatprep.subr.bf16.mxu0 0
    %4169 = vmatpush1.bf16.msra.mxu0 0
    %4170 = vmatprep.subr.bf16.mxu0 0
    %4171 = vmatpush1.bf16.msra.mxu0 0
    %4172 = vmatprep.subr.bf16.mxu0 0
    %4173 = vmatpush1.bf16.msra.mxu0 0
    %4174 = vmatprep.subr.bf16.mxu0 0
    %4175 = vmatpush1.bf16.msra.mxu0 0
    %4176 = vmatprep.subr.bf16.mxu0 0
    %4177 = vmatpush1.bf16.msra.mxu0 0
    %4178 = vmatprep.subr.bf16.mxu0 0
    %4179 = vmatpush1.bf16.msra.mxu0 0
    %4180 = vmatprep.subr.bf16.mxu0 %v3954
    %4181 = vmatpush1.bf16.msra.mxu0 %v3953
    %4182 = vmatprep.subr.bf16.mxu0 %v3938
    %4183 = vmatpush1.bf16.msra.mxu0 %v3937
    %4184 = vmatprep.subr.bf16.mxu0 0
    %4185 = vmatpush2.bf16.msra.mxu0 0
    %4186 = vmatprep.subr.bf16.mxu0 0
    %4187 = vmatpush2.bf16.msra.mxu0 0
    %4188 = vmatprep.subr.bf16.mxu0 0
    %4189 = vmatpush2.bf16.msra.mxu0 0
    %4190 = vmatprep.subr.bf16.mxu0 0
    %4191 = vmatpush2.bf16.msra.mxu0 0
    %4192 = vmatprep.subr.bf16.mxu0 0
    %4193 = vmatpush2.bf16.msra.mxu0 0
    %4194 = vmatprep.subr.bf16.mxu0 0
    %4195 = vmatpush2.bf16.msra.mxu0 0
    %4196 = vmatprep.subr.bf16.mxu0 0
    %4197 = vmatpush2.bf16.msra.mxu0 0
    %4198 = vmatprep.subr.bf16.mxu0 0
    %4199 = vmatpush2.bf16.msra.mxu0 0
    %4200 = vmatprep.mubr.bf16.mxu0 0
    %4201 = vmatmul.mubr.bf16.gmra.mxu0 %v3994
    %v4202 = vpop.f32.mrf.mxu0
    %v4203 = vadd.f32 %v3788, %v4202
    %v4204 = vpop.f32.mrf.mxu0
    %v4205 = vadd.f32 %v3792, %v4204
    %v4206 = vpop.f32.mrf.mxu0
    %v4207 = vadd.f32 %v3788, %v4206
    %v4208 = vpop.f32.mrf.mxu0
    %v4209 = vadd.f32 %v3792, %v4208
    %4210 = vdwg.mxu0
    %4211 = vmatprep.subr.bf16.mxu0 0
    %4212 = vmatpush1.bf16.msra.mxu0 0
    %4213 = vmatprep.subr.bf16.mxu0 0
    %4214 = vmatpush1.bf16.msra.mxu0 0
    %4215 = vmatprep.subr.bf16.mxu0 0
    %4216 = vmatpush1.bf16.msra.mxu0 0
    %4217 = vmatprep.subr.bf16.mxu0 0
    %4218 = vmatpush1.bf16.msra.mxu0 0
    %4219 = vmatprep.subr.bf16.mxu0 0
    %4220 = vmatpush1.bf16.msra.mxu0 0
    %4221 = vmatprep.subr.bf16.mxu0 0
    %4222 = vmatpush1.bf16.msra.mxu0 0
    %4223 = vmatprep.subr.bf16.mxu0 %v3956
    %4224 = vmatpush1.bf16.msra.mxu0 %v3955
    %4225 = vmatprep.subr.bf16.mxu0 %v3940
    %4226 = vmatpush1.bf16.msra.mxu0 %v3939
    %4227 = vmatprep.subr.bf16.mxu0 0
    %4228 = vmatpush2.bf16.msra.mxu0 0
    %4229 = vmatprep.subr.bf16.mxu0 0
    %4230 = vmatpush2.bf16.msra.mxu0 0
    %4231 = vmatprep.subr.bf16.mxu0 0
    %4232 = vmatpush2.bf16.msra.mxu0 0
    %4233 = vmatprep.subr.bf16.mxu0 0
    %4234 = vmatpush2.bf16.msra.mxu0 0
    %4235 = vmatprep.subr.bf16.mxu0 0
    %4236 = vmatpush2.bf16.msra.mxu0 0
    %4237 = vmatprep.subr.bf16.mxu0 0
    %4238 = vmatpush2.bf16.msra.mxu0 0
    %4239 = vmatprep.subr.bf16.mxu0 0
    %4240 = vmatpush2.bf16.msra.mxu0 0
    %4241 = vmatprep.subr.bf16.mxu0 0
    %4242 = vmatpush2.bf16.msra.mxu0 0
    %4243 = vmatprep.mubr.bf16.mxu0 0
    %4244 = vmatmul.mubr.bf16.gmra.mxu0 %v3994
    %v4245 = vpop.f32.mrf.mxu0
    %v4246 = vadd.f32 %v3796, %v4245
    %v4247 = vpop.f32.mrf.mxu0
    %v4248 = vadd.f32 %v3800, %v4247
    %v4249 = vpop.f32.mrf.mxu0
    %v4250 = vadd.f32 %v3796, %v4249
    %v4251 = vpop.f32.mrf.mxu0
    %v4252 = vadd.f32 %v3800, %v4251
    %4253 = vdwg.mxu0
    %4254 = vmatprep.subr.bf16.mxu0 0
    %4255 = vmatpush1.bf16.msra.mxu0 0
    %4256 = vmatprep.subr.bf16.mxu0 0
    %4257 = vmatpush1.bf16.msra.mxu0 0
    %4258 = vmatprep.subr.bf16.mxu0 0
    %4259 = vmatpush1.bf16.msra.mxu0 0
    %4260 = vmatprep.subr.bf16.mxu0 0
    %4261 = vmatpush1.bf16.msra.mxu0 0
    %4262 = vmatprep.subr.bf16.mxu0 0
    %4263 = vmatpush1.bf16.msra.mxu0 0
    %4264 = vmatprep.subr.bf16.mxu0 0
    %4265 = vmatpush1.bf16.msra.mxu0 0
    %4266 = vmatprep.subr.bf16.mxu0 %v3958
    %4267 = vmatpush1.bf16.msra.mxu0 %v3957
    %4268 = vmatprep.subr.bf16.mxu0 %v3942
    %4269 = vmatpush1.bf16.msra.mxu0 %v3941
    %4270 = vmatprep.subr.bf16.mxu0 0
    %4271 = vmatpush2.bf16.msra.mxu0 0
    %4272 = vmatprep.subr.bf16.mxu0 0
    %4273 = vmatpush2.bf16.msra.mxu0 0
    %4274 = vmatprep.subr.bf16.mxu0 0
    %4275 = vmatpush2.bf16.msra.mxu0 0
    %4276 = vmatprep.subr.bf16.mxu0 0
    %4277 = vmatpush2.bf16.msra.mxu0 0
    %4278 = vmatprep.subr.bf16.mxu0 0
    %4279 = vmatpush2.bf16.msra.mxu0 0
    %4280 = vmatprep.subr.bf16.mxu0 0
    %4281 = vmatpush2.bf16.msra.mxu0 0
    %4282 = vmatprep.subr.bf16.mxu0 0
    %4283 = vmatpush2.bf16.msra.mxu0 0
    %4284 = vmatprep.subr.bf16.mxu0 0
    %4285 = vmatpush2.bf16.msra.mxu0 0
    %4286 = vmatprep.mubr.bf16.mxu0 0
    %4287 = vmatmul.mubr.bf16.gmra.mxu0 %v3994
    %v4288 = vpop.f32.mrf.mxu0
    %v4289 = vadd.f32 %v3804, %v4288
    %v4290 = vpop.f32.mrf.mxu0
    %v4291 = vadd.f32 %v3808, %v4290
    %v4292 = vpop.f32.mrf.mxu0
    %v4293 = vadd.f32 %v3804, %v4292
    %v4294 = vpop.f32.mrf.mxu0
    %v4295 = vadd.f32 %v3808, %v4294
    %4296 = vdwg.mxu0
    %4297 = vmatprep.subr.bf16.mxu0 0
    %4298 = vmatpush1.bf16.msra.mxu0 0
    %4299 = vmatprep.subr.bf16.mxu0 0
    %4300 = vmatpush1.bf16.msra.mxu0 0
    %4301 = vmatprep.subr.bf16.mxu0 0
    %4302 = vmatpush1.bf16.msra.mxu0 0
    %4303 = vmatprep.subr.bf16.mxu0 0
    %4304 = vmatpush1.bf16.msra.mxu0 0
    %4305 = vmatprep.subr.bf16.mxu0 0
    %4306 = vmatpush1.bf16.msra.mxu0 0
    %4307 = vmatprep.subr.bf16.mxu0 0
    %4308 = vmatpush1.bf16.msra.mxu0 0
    %4309 = vmatprep.subr.bf16.mxu0 %v3960
    %4310 = vmatpush1.bf16.msra.mxu0 %v3959
    %4311 = vmatprep.subr.bf16.mxu0 %v3944
    %4312 = vmatpush1.bf16.msra.mxu0 %v3943
    %4313 = vmatprep.subr.bf16.mxu0 0
    %4314 = vmatpush2.bf16.msra.mxu0 0
    %4315 = vmatprep.subr.bf16.mxu0 0
    %4316 = vmatpush2.bf16.msra.mxu0 0
    %4317 = vmatprep.subr.bf16.mxu0 0
    %4318 = vmatpush2.bf16.msra.mxu0 0
    %4319 = vmatprep.subr.bf16.mxu0 0
    %4320 = vmatpush2.bf16.msra.mxu0 0
    %4321 = vmatprep.subr.bf16.mxu0 0
    %4322 = vmatpush2.bf16.msra.mxu0 0
    %4323 = vmatprep.subr.bf16.mxu0 0
    %4324 = vmatpush2.bf16.msra.mxu0 0
    %4325 = vmatprep.subr.bf16.mxu0 0
    %4326 = vmatpush2.bf16.msra.mxu0 0
    %4327 = vmatprep.subr.bf16.mxu0 0
    %4328 = vmatpush2.bf16.msra.mxu0 0
    %4329 = vmatprep.mubr.bf16.mxu0 0
    %4330 = vmatmul.mubr.bf16.gmra.mxu0 %v3994
    %v4331 = vpop.f32.mrf.mxu0
    %v4332 = vadd.f32 %v3812, %v4331
    %v4333 = vpop.f32.mrf.mxu0
    %v4334 = vadd.f32 %v3816, %v4333
    %v4335 = vpop.f32.mrf.mxu0
    %v4336 = vadd.f32 %v3812, %v4335
    %v4337 = vpop.f32.mrf.mxu0
    %v4338 = vadd.f32 %v3816, %v4337
    %4339 = vdwg.mxu0
    %v4340 = vmax.f32 %v4031, 0.0
    %v4341 = vmax.f32 %v4033, 0.0
    %v4342 = vmax.f32 %v4074, 0.0
    %v4343 = vmax.f32 %v4076, 0.0
    %v4344 = vmax.f32 %v4117, 0.0
    %v4345 = vmax.f32 %v4119, 0.0
    %v4346 = vmax.f32 %v4160, 0.0
    %v4347 = vmax.f32 %v4162, 0.0
    %v4348 = vmax.f32 %v4203, 0.0
    %v4349 = vmax.f32 %v4205, 0.0
    %v4350 = vmax.f32 %v4246, 0.0
    %v4351 = vmax.f32 %v4248, 0.0
    %v4352 = vmax.f32 %v4289, 0.0
    %v4353 = vmax.f32 %v4291, 0.0
    %v4354 = vmax.f32 %v4332, 0.0
    %v4355 = vmax.f32 %v4334, 0.0
    %v4356 = vmax.f32 %v4035, 0.0
    %v4357 = vmax.f32 %v4037, 0.0
    %v4358 = vmax.f32 %v4078, 0.0
    %v4359 = vmax.f32 %v4080, 0.0
    %v4360 = vmax.f32 %v4121, 0.0
    %v4361 = vmax.f32 %v4123, 0.0
    %v4362 = vmax.f32 %v4164, 0.0
    %v4363 = vmax.f32 %v4166, 0.0
    %v4364 = vmax.f32 %v4207, 0.0
    %v4365 = vmax.f32 %v4209, 0.0
    %v4366 = vmax.f32 %v4250, 0.0
    %v4367 = vmax.f32 %v4252, 0.0
    %v4368 = vmax.f32 %v4293, 0.0
    %v4369 = vmax.f32 %v4295, 0.0
    %v4370 = vmax.f32 %v4336, 0.0
    %v4371 = vmax.f32 %v4338, 0.0
    %v4372 = vpack.c.bf16 %v4356, %v4340
    %v4373 = vpack.c.bf16 %v4357, %v4341
    %v4374 = vpack.c.bf16 %v4358, %v4342
    %v4375 = vpack.c.bf16 %v4359, %v4343
    %v4376 = vpack.c.bf16 %v4360, %v4344
    %v4377 = vpack.c.bf16 %v4361, %v4345
    %v4378 = vpack.c.bf16 %v4362, %v4346
    %v4379 = vpack.c.bf16 %v4363, %v4347
    %v4380 = vpack.c.bf16 %v4364, %v4348
    %v4381 = vpack.c.bf16 %v4365, %v4349
    %v4382 = vpack.c.bf16 %v4366, %v4350
    %v4383 = vpack.c.bf16 %v4367, %v4351
    %v4384 = vpack.c.bf16 %v4368, %v4352
    %v4385 = vpack.c.bf16 %v4369, %v4353
    %v4386 = vpack.c.bf16 %v4370, %v4354
    %v4387 = vpack.c.bf16 %v4371, %v4355
    %v4388 = vld [vmem:[%s49] sm:$0xf]
    %v4389 = vld [vmem:[%s49 + $0x4] sm:$0xf]
    %v4390 = vld [vmem:[%s49 + $0x8] sm:$0xf]
    %v4391 = vld [vmem:[%s49 + $0xc] sm:$0xf]
    %v4392 = vld [vmem:[%s49 + $0x10] sm:$0xf]
    %v4393 = vld [vmem:[%s49 + $0x14] sm:$0xf]
    %v4394 = vld [vmem:[%s49 + $0x18] sm:$0xf]
    %v4395 = vld [vmem:[%s49 + $0x1c] sm:$0xf]
    %v4396 = vld [vmem:[%s49 + $0x20] sm:$0xf]
    %v4397 = vld [vmem:[%s49 + $0x24] sm:$0xf]
    %v4398 = vld [vmem:[%s49 + $0x28] sm:$0xf]
    %v4399 = vld [vmem:[%s49 + $0x2c] sm:$0xf]
    %v4400 = vld [vmem:[%s49 + $0x30] sm:$0xf]
    %v4401 = vld [vmem:[%s49 + $0x34] sm:$0xf]
    %v4402 = vld [vmem:[%s49 + $0x38] sm:$0xf]
    %v4403 = vld [vmem:[%s49 + $0x3c] sm:$0xf]
    %v4404 = vld [vmem:[%s49 + $0x40] sm:$0xf]
    %v4405 = vld [vmem:[%s49 + $0x44] sm:$0xf]
    %v4406 = vld [vmem:[%s49 + $0x48] sm:$0xf]
    %v4407 = vld [vmem:[%s49 + $0x4c] sm:$0xf]
    %v4408 = vld [vmem:[%s49 + $0x50] sm:$0xf]
    %v4409 = vld [vmem:[%s49 + $0x54] sm:$0xf]
    %v4410 = vld [vmem:[%s49 + $0x58] sm:$0xf]
    %v4411 = vld [vmem:[%s49 + $0x5c] sm:$0xf]
    %v4412 = vld [vmem:[%s49 + $0x60] sm:$0xf]
    %v4413 = vld [vmem:[%s49 + $0x64] sm:$0xf]
    %v4414 = vld [vmem:[%s49 + $0x68] sm:$0xf]
    %v4415 = vld [vmem:[%s49 + $0x6c] sm:$0xf]
    %v4416 = vld [vmem:[%s49 + $0x70] sm:$0xf]
    %v4417 = vld [vmem:[%s49 + $0x74] sm:$0xf]
    %v4418 = vld [vmem:[%s49 + $0x78] sm:$0xf]
    %v4419 = vld [vmem:[%s49 + $0x7c] sm:$0xf]
    %v4420 = vld [vmem:[%s49 + $0x80] sm:$0xf]
    %v4421 = vld [vmem:[%s49 + $0x84] sm:$0xf]
    %v4422 = vld [vmem:[%s49 + $0x88] sm:$0xf]
    %v4423 = vld [vmem:[%s49 + $0x8c] sm:$0xf]
    %v4424 = vld [vmem:[%s49 + $0x90] sm:$0xf]
    %v4425 = vld [vmem:[%s49 + $0x94] sm:$0xf]
    %v4426 = vld [vmem:[%s49 + $0x98] sm:$0xf]
    %v4427 = vld [vmem:[%s49 + $0x9c] sm:$0xf]
    %v4428 = vld [vmem:[%s49 + $0xa0] sm:$0xf]
    %v4429 = vld [vmem:[%s49 + $0xa4] sm:$0xf]
    %v4430 = vld [vmem:[%s49 + $0xa8] sm:$0xf]
    %v4431 = vld [vmem:[%s49 + $0xac] sm:$0xf]
    %v4432 = vld [vmem:[%s49 + $0xb0] sm:$0xf]
    %v4433 = vld [vmem:[%s49 + $0xb4] sm:$0xf]
    %v4434 = vld [vmem:[%s49 + $0xb8] sm:$0xf]
    %v4435 = vld [vmem:[%s49 + $0xbc] sm:$0xf]
    %v4436 = vld [vmem:[%s49 + $0xc0] sm:$0xf]
    %v4437 = vld [vmem:[%s49 + $0xc4] sm:$0xf]
    %v4438 = vld [vmem:[%s49 + $0xc8] sm:$0xf]
    %v4439 = vld [vmem:[%s49 + $0xcc] sm:$0xf]
    %v4440 = vld [vmem:[%s49 + $0xd0] sm:$0xf]
    %v4441 = vld [vmem:[%s49 + $0xd4] sm:$0xf]
    %v4442 = vld [vmem:[%s49 + $0xd8] sm:$0xf]
    %v4443 = vld [vmem:[%s49 + $0xdc] sm:$0xf]
    %v4444 = vld [vmem:[%s49 + $0xe0] sm:$0xf]
    %v4445 = vld [vmem:[%s49 + $0xe4] sm:$0xf]
    %v4446 = vld [vmem:[%s49 + $0xe8] sm:$0xf]
    %v4447 = vld [vmem:[%s49 + $0xec] sm:$0xf]
    %v4448 = vld [vmem:[%s49 + $0xf0] sm:$0xf]
    %v4449 = vld [vmem:[%s49 + $0xf4] sm:$0xf]
    %v4450 = vld [vmem:[%s49 + $0xf8] sm:$0xf]
    %v4451 = vld [vmem:[%s49 + $0xfc] sm:$0xf]
    %v4452 = vld [vmem:[%s49 + $0x100] sm:$0xf]
    %v4453 = vld [vmem:[%s49 + $0x104] sm:$0xf]
    %v4454 = vld [vmem:[%s49 + $0x108] sm:$0xf]
    %v4455 = vld [vmem:[%s49 + $0x10c] sm:$0xf]
    %v4456 = vld [vmem:[%s49 + $0x110] sm:$0xf]
    %v4457 = vld [vmem:[%s49 + $0x114] sm:$0xf]
    %v4458 = vld [vmem:[%s49 + $0x118] sm:$0xf]
    %v4459 = vld [vmem:[%s49 + $0x11c] sm:$0xf]
    %v4460 = vld [vmem:[%s49 + $0x120] sm:$0xf]
    %v4461 = vld [vmem:[%s49 + $0x124] sm:$0xf]
    %v4462 = vld [vmem:[%s49 + $0x128] sm:$0xf]
    %v4463 = vld [vmem:[%s49 + $0x12c] sm:$0xf]
    %v4464 = vld [vmem:[%s49 + $0x130] sm:$0xf]
    %v4465 = vld [vmem:[%s49 + $0x134] sm:$0xf]
    %v4466 = vld [vmem:[%s49 + $0x138] sm:$0xf]
    %v4467 = vld [vmem:[%s49 + $0x13c] sm:$0xf]
    %v4468 = vld [vmem:[%s49 + $0x140] sm:$0xf]
    %v4469 = vld [vmem:[%s49 + $0x144] sm:$0xf]
    %v4470 = vld [vmem:[%s49 + $0x148] sm:$0xf]
    %v4471 = vld [vmem:[%s49 + $0x14c] sm:$0xf]
    %v4472 = vld [vmem:[%s49 + $0x150] sm:$0xf]
    %v4473 = vld [vmem:[%s49 + $0x154] sm:$0xf]
    %v4474 = vld [vmem:[%s49 + $0x158] sm:$0xf]
    %v4475 = vld [vmem:[%s49 + $0x15c] sm:$0xf]
    %v4476 = vld [vmem:[%s49 + $0x160] sm:$0xf]
    %v4477 = vld [vmem:[%s49 + $0x164] sm:$0xf]
    %v4478 = vld [vmem:[%s49 + $0x168] sm:$0xf]
    %v4479 = vld [vmem:[%s49 + $0x16c] sm:$0xf]
    %v4480 = vld [vmem:[%s49 + $0x170] sm:$0xf]
    %v4481 = vld [vmem:[%s49 + $0x174] sm:$0xf]
    %v4482 = vld [vmem:[%s49 + $0x178] sm:$0xf]
    %v4483 = vld [vmem:[%s49 + $0x17c] sm:$0xf]
    %v4484 = vld [vmem:[%s49 + $0x180] sm:$0xf]
    %v4485 = vld [vmem:[%s49 + $0x184] sm:$0xf]
    %v4486 = vld [vmem:[%s49 + $0x188] sm:$0xf]
    %v4487 = vld [vmem:[%s49 + $0x18c] sm:$0xf]
    %v4488 = vld [vmem:[%s49 + $0x190] sm:$0xf]
    %v4489 = vld [vmem:[%s49 + $0x194] sm:$0xf]
    %v4490 = vld [vmem:[%s49 + $0x198] sm:$0xf]
    %v4491 = vld [vmem:[%s49 + $0x19c] sm:$0xf]
    %v4492 = vld [vmem:[%s49 + $0x1a0] sm:$0xf]
    %v4493 = vld [vmem:[%s49 + $0x1a4] sm:$0xf]
    %v4494 = vld [vmem:[%s49 + $0x1a8] sm:$0xf]
    %v4495 = vld [vmem:[%s49 + $0x1ac] sm:$0xf]
    %v4496 = vld [vmem:[%s49 + $0x1b0] sm:$0xf]
    %v4497 = vld [vmem:[%s49 + $0x1b4] sm:$0xf]
    %v4498 = vld [vmem:[%s49 + $0x1b8] sm:$0xf]
    %v4499 = vld [vmem:[%s49 + $0x1bc] sm:$0xf]
    %v4500 = vld [vmem:[%s49 + $0x1c0] sm:$0xf]
    %v4501 = vld [vmem:[%s49 + $0x1c4] sm:$0xf]
    %v4502 = vld [vmem:[%s49 + $0x1c8] sm:$0xf]
    %v4503 = vld [vmem:[%s49 + $0x1cc] sm:$0xf]
    %v4504 = vld [vmem:[%s49 + $0x1d0] sm:$0xf]
    %v4505 = vld [vmem:[%s49 + $0x1d4] sm:$0xf]
    %v4506 = vld [vmem:[%s49 + $0x1d8] sm:$0xf]
    %v4507 = vld [vmem:[%s49 + $0x1dc] sm:$0xf]
    %v4508 = vld [vmem:[%s49 + $0x1e0] sm:$0xf]
    %v4509 = vld [vmem:[%s49 + $0x1e4] sm:$0xf]
    %v4510 = vld [vmem:[%s49 + $0x1e8] sm:$0xf]
    %v4511 = vld [vmem:[%s49 + $0x1ec] sm:$0xf]
    %v4512 = vld [vmem:[%s49 + $0x1f0] sm:$0xf]
    %v4513 = vld [vmem:[%s49 + $0x1f4] sm:$0xf]
    %v4514 = vld [vmem:[%s49 + $0x1f8] sm:$0xf]
    %v4515 = vld [vmem:[%s49 + $0x1fc] sm:$0xf]
    %v4516 = vld [vmem:[%s49 + $0x200] sm:$0xf]
    %v4517 = vld [vmem:[%s49 + $0x204] sm:$0xf]
    %v4518 = vld [vmem:[%s49 + $0x208] sm:$0xf]
    %v4519 = vld [vmem:[%s49 + $0x20c] sm:$0xf]
    %v4520 = vld [vmem:[%s49 + $0x210] sm:$0xf]
    %v4521 = vld [vmem:[%s49 + $0x214] sm:$0xf]
    %v4522 = vld [vmem:[%s49 + $0x218] sm:$0xf]
    %v4523 = vld [vmem:[%s49 + $0x21c] sm:$0xf]
    %v4524 = vld [vmem:[%s49 + $0x220] sm:$0xf]
    %v4525 = vld [vmem:[%s49 + $0x224] sm:$0xf]
    %v4526 = vld [vmem:[%s49 + $0x228] sm:$0xf]
    %v4527 = vld [vmem:[%s49 + $0x22c] sm:$0xf]
    %v4528 = vld [vmem:[%s49 + $0x230] sm:$0xf]
    %v4529 = vld [vmem:[%s49 + $0x234] sm:$0xf]
    %v4530 = vld [vmem:[%s49 + $0x238] sm:$0xf]
    %v4531 = vld [vmem:[%s49 + $0x23c] sm:$0xf]
    %v4532 = vld [vmem:[%s49 + $0x240] sm:$0xf]
    %v4533 = vld [vmem:[%s49 + $0x244] sm:$0xf]
    %v4534 = vld [vmem:[%s49 + $0x248] sm:$0xf]
    %v4535 = vld [vmem:[%s49 + $0x24c] sm:$0xf]
    %v4536 = vld [vmem:[%s49 + $0x250] sm:$0xf]
    %v4537 = vld [vmem:[%s49 + $0x254] sm:$0xf]
    %v4538 = vld [vmem:[%s49 + $0x258] sm:$0xf]
    %v4539 = vld [vmem:[%s49 + $0x25c] sm:$0xf]
    %v4540 = vld [vmem:[%s49 + $0x260] sm:$0xf]
    %v4541 = vld [vmem:[%s49 + $0x264] sm:$0xf]
    %v4542 = vld [vmem:[%s49 + $0x268] sm:$0xf]
    %v4543 = vld [vmem:[%s49 + $0x26c] sm:$0xf]
    %v4544 = vld [vmem:[%s49 + $0x270] sm:$0xf]
    %v4545 = vld [vmem:[%s49 + $0x274] sm:$0xf]
    %v4546 = vld [vmem:[%s49 + $0x278] sm:$0xf]
    %v4547 = vld [vmem:[%s49 + $0x27c] sm:$0xf]
    %v4548 = vld [vmem:[%s49 + $0x280] sm:$0xf]
    %v4549 = vld [vmem:[%s49 + $0x284] sm:$0xf]
    %v4550 = vld [vmem:[%s49 + $0x288] sm:$0xf]
    %v4551 = vld [vmem:[%s49 + $0x28c] sm:$0xf]
    %v4552 = vld [vmem:[%s49 + $0x290] sm:$0xf]
    %v4553 = vld [vmem:[%s49 + $0x294] sm:$0xf]
    %v4554 = vld [vmem:[%s49 + $0x298] sm:$0xf]
    %v4555 = vld [vmem:[%s49 + $0x29c] sm:$0xf]
    %v4556 = vld [vmem:[%s49 + $0x2a0] sm:$0xf]
    %v4557 = vld [vmem:[%s49 + $0x2a4] sm:$0xf]
    %v4558 = vld [vmem:[%s49 + $0x2a8] sm:$0xf]
    %v4559 = vld [vmem:[%s49 + $0x2ac] sm:$0xf]
    %v4560 = vld [vmem:[%s49 + $0x2b0] sm:$0xf]
    %v4561 = vld [vmem:[%s49 + $0x2b4] sm:$0xf]
    %v4562 = vld [vmem:[%s49 + $0x2b8] sm:$0xf]
    %v4563 = vld [vmem:[%s49 + $0x2bc] sm:$0xf]
    %v4564 = vld [vmem:[%s49 + $0x2c0] sm:$0xf]
    %v4565 = vld [vmem:[%s49 + $0x2c4] sm:$0xf]
    %v4566 = vld [vmem:[%s49 + $0x2c8] sm:$0xf]
    %v4567 = vld [vmem:[%s49 + $0x2cc] sm:$0xf]
    %v4568 = vld [vmem:[%s49 + $0x2d0] sm:$0xf]
    %v4569 = vld [vmem:[%s49 + $0x2d4] sm:$0xf]
    %v4570 = vld [vmem:[%s49 + $0x2d8] sm:$0xf]
    %v4571 = vld [vmem:[%s49 + $0x2dc] sm:$0xf]
    %v4572 = vld [vmem:[%s49 + $0x2e0] sm:$0xf]
    %v4573 = vld [vmem:[%s49 + $0x2e4] sm:$0xf]
    %v4574 = vld [vmem:[%s49 + $0x2e8] sm:$0xf]
    %v4575 = vld [vmem:[%s49 + $0x2ec] sm:$0xf]
    %v4576 = vld [vmem:[%s49 + $0x2f0] sm:$0xf]
    %v4577 = vld [vmem:[%s49 + $0x2f4] sm:$0xf]
    %v4578 = vld [vmem:[%s49 + $0x2f8] sm:$0xf]
    %v4579 = vld [vmem:[%s49 + $0x2fc] sm:$0xf]
    %v4580 = vld [vmem:[%s49 + $0x300] sm:$0xf]
    %v4581 = vld [vmem:[%s49 + $0x304] sm:$0xf]
    %v4582 = vld [vmem:[%s49 + $0x308] sm:$0xf]
    %v4583 = vld [vmem:[%s49 + $0x30c] sm:$0xf]
    %v4584 = vld [vmem:[%s49 + $0x310] sm:$0xf]
    %v4585 = vld [vmem:[%s49 + $0x314] sm:$0xf]
    %v4586 = vld [vmem:[%s49 + $0x318] sm:$0xf]
    %v4587 = vld [vmem:[%s49 + $0x31c] sm:$0xf]
    %v4588 = vld [vmem:[%s49 + $0x320] sm:$0xf]
    %v4589 = vld [vmem:[%s49 + $0x324] sm:$0xf]
    %v4590 = vld [vmem:[%s49 + $0x328] sm:$0xf]
    %v4591 = vld [vmem:[%s49 + $0x32c] sm:$0xf]
    %v4592 = vld [vmem:[%s49 + $0x330] sm:$0xf]
    %v4593 = vld [vmem:[%s49 + $0x334] sm:$0xf]
    %v4594 = vld [vmem:[%s49 + $0x338] sm:$0xf]
    %v4595 = vld [vmem:[%s49 + $0x33c] sm:$0xf]
    %v4596 = vld [vmem:[%s49 + $0x340] sm:$0xf]
    %v4597 = vld [vmem:[%s49 + $0x344] sm:$0xf]
    %v4598 = vld [vmem:[%s49 + $0x348] sm:$0xf]
    %v4599 = vld [vmem:[%s49 + $0x34c] sm:$0xf]
    %v4600 = vld [vmem:[%s49 + $0x350] sm:$0xf]
    %v4601 = vld [vmem:[%s49 + $0x354] sm:$0xf]
    %v4602 = vld [vmem:[%s49 + $0x358] sm:$0xf]
    %v4603 = vld [vmem:[%s49 + $0x35c] sm:$0xf]
    %v4604 = vld [vmem:[%s49 + $0x360] sm:$0xf]
    %v4605 = vld [vmem:[%s49 + $0x364] sm:$0xf]
    %v4606 = vld [vmem:[%s49 + $0x368] sm:$0xf]
    %v4607 = vld [vmem:[%s49 + $0x36c] sm:$0xf]
    %v4608 = vld [vmem:[%s49 + $0x370] sm:$0xf]
    %v4609 = vld [vmem:[%s49 + $0x374] sm:$0xf]
    %v4610 = vld [vmem:[%s49 + $0x378] sm:$0xf]
    %v4611 = vld [vmem:[%s49 + $0x37c] sm:$0xf]
    %v4612 = vld [vmem:[%s49 + $0x380] sm:$0xf]
    %v4613 = vld [vmem:[%s49 + $0x384] sm:$0xf]
    %v4614 = vld [vmem:[%s49 + $0x388] sm:$0xf]
    %v4615 = vld [vmem:[%s49 + $0x38c] sm:$0xf]
    %v4616 = vld [vmem:[%s49 + $0x390] sm:$0xf]
    %v4617 = vld [vmem:[%s49 + $0x394] sm:$0xf]
    %v4618 = vld [vmem:[%s49 + $0x398] sm:$0xf]
    %v4619 = vld [vmem:[%s49 + $0x39c] sm:$0xf]
    %v4620 = vld [vmem:[%s49 + $0x3a0] sm:$0xf]
    %v4621 = vld [vmem:[%s49 + $0x3a4] sm:$0xf]
    %v4622 = vld [vmem:[%s49 + $0x3a8] sm:$0xf]
    %v4623 = vld [vmem:[%s49 + $0x3ac] sm:$0xf]
    %v4624 = vld [vmem:[%s49 + $0x3b0] sm:$0xf]
    %v4625 = vld [vmem:[%s49 + $0x3b4] sm:$0xf]
    %v4626 = vld [vmem:[%s49 + $0x3b8] sm:$0xf]
    %v4627 = vld [vmem:[%s49 + $0x3bc] sm:$0xf]
    %v4628 = vld [vmem:[%s49 + $0x3c0] sm:$0xf]
    %v4629 = vld [vmem:[%s49 + $0x3c4] sm:$0xf]
    %v4630 = vld [vmem:[%s49 + $0x3c8] sm:$0xf]
    %v4631 = vld [vmem:[%s49 + $0x3cc] sm:$0xf]
    %v4632 = vld [vmem:[%s49 + $0x3d0] sm:$0xf]
    %v4633 = vld [vmem:[%s49 + $0x3d4] sm:$0xf]
    %v4634 = vld [vmem:[%s49 + $0x3d8] sm:$0xf]
    %v4635 = vld [vmem:[%s49 + $0x3dc] sm:$0xf]
    %v4636 = vld [vmem:[%s49 + $0x3e0] sm:$0xf]
    %v4637 = vld [vmem:[%s49 + $0x3e4] sm:$0xf]
    %v4638 = vld [vmem:[%s49 + $0x3e8] sm:$0xf]
    %v4639 = vld [vmem:[%s49 + $0x3ec] sm:$0xf]
    %v4640 = vld [vmem:[%s49 + $0x3f0] sm:$0xf]
    %v4641 = vld [vmem:[%s49 + $0x3f4] sm:$0xf]
    %v4642 = vld [vmem:[%s49 + $0x3f8] sm:$0xf]
    %v4643 = vld [vmem:[%s49 + $0x3fc] sm:$0xf]
    %v4644 = vld [vmem:[#allocation28] sm:$0x1]
    %v4646 = vlaneseq
    %v4647 = vshrl.u32 %v4646, 7
    %v4648 = vsub.s32 0, %v4647
    %v4649 = vrot.slane %v4644, %v4648
    %v4907 = vunpack.c.l.b16 %v4388
    %v4908 = vunpack.c.l.b16 %v4389
    %v4909 = vunpack.c.l.b16 %v4390
    %v4910 = vunpack.c.l.b16 %v4391
    %v4911 = vunpack.c.l.b16 %v4392
    %v4912 = vunpack.c.l.b16 %v4393
    %v4913 = vunpack.c.l.b16 %v4394
    %v4914 = vunpack.c.l.b16 %v4395
    %v4915 = vunpack.c.l.b16 %v4396
    %v4916 = vunpack.c.l.b16 %v4397
    %v4917 = vunpack.c.l.b16 %v4398
    %v4918 = vunpack.c.l.b16 %v4399
    %v4919 = vunpack.c.l.b16 %v4400
    %v4920 = vunpack.c.l.b16 %v4401
    %v4921 = vunpack.c.l.b16 %v4402
    %v4922 = vunpack.c.l.b16 %v4403
    %v4923 = vunpack.c.l.b16 %v4404
    %v4924 = vunpack.c.l.b16 %v4405
    %v4925 = vunpack.c.l.b16 %v4406
    %v4926 = vunpack.c.l.b16 %v4407
    %v4927 = vunpack.c.l.b16 %v4408
    %v4928 = vunpack.c.l.b16 %v4409
    %v4929 = vunpack.c.l.b16 %v4410
    %v4930 = vunpack.c.l.b16 %v4411
    %v4931 = vunpack.c.l.b16 %v4412
    %v4932 = vunpack.c.l.b16 %v4413
    %v4933 = vunpack.c.l.b16 %v4414
    %v4934 = vunpack.c.l.b16 %v4415
    %v4935 = vunpack.c.l.b16 %v4416
    %v4936 = vunpack.c.l.b16 %v4417
    %v4937 = vunpack.c.l.b16 %v4418
    %v4938 = vunpack.c.l.b16 %v4419
    %v4939 = vunpack.c.l.b16 %v4420
    %v4940 = vunpack.c.l.b16 %v4421
    %v4941 = vunpack.c.l.b16 %v4422
    %v4942 = vunpack.c.l.b16 %v4423
    %v4943 = vunpack.c.l.b16 %v4424
    %v4944 = vunpack.c.l.b16 %v4425
    %v4945 = vunpack.c.l.b16 %v4426
    %v4946 = vunpack.c.l.b16 %v4427
    %v4947 = vunpack.c.l.b16 %v4428
    %v4948 = vunpack.c.l.b16 %v4429
    %v4949 = vunpack.c.l.b16 %v4430
    %v4950 = vunpack.c.l.b16 %v4431
    %v4951 = vunpack.c.l.b16 %v4432
    %v4952 = vunpack.c.l.b16 %v4433
    %v4953 = vunpack.c.l.b16 %v4434
    %v4954 = vunpack.c.l.b16 %v4435
    %v4955 = vunpack.c.l.b16 %v4436
    %v4956 = vunpack.c.l.b16 %v4437
    %v4957 = vunpack.c.l.b16 %v4438
    %v4958 = vunpack.c.l.b16 %v4439
    %v4959 = vunpack.c.l.b16 %v4440
    %v4960 = vunpack.c.l.b16 %v4441
    %v4961 = vunpack.c.l.b16 %v4442
    %v4962 = vunpack.c.l.b16 %v4443
    %v4963 = vunpack.c.l.b16 %v4444
    %v4964 = vunpack.c.l.b16 %v4445
    %v4965 = vunpack.c.l.b16 %v4446
    %v4966 = vunpack.c.l.b16 %v4447
    %v4967 = vunpack.c.l.b16 %v4448
    %v4968 = vunpack.c.l.b16 %v4449
    %v4969 = vunpack.c.l.b16 %v4450
    %v4970 = vunpack.c.l.b16 %v4451
    %v4971 = vunpack.c.l.b16 %v4452
    %v4972 = vunpack.c.l.b16 %v4453
    %v4973 = vunpack.c.l.b16 %v4454
    %v4974 = vunpack.c.l.b16 %v4455
    %v4975 = vunpack.c.l.b16 %v4456
    %v4976 = vunpack.c.l.b16 %v4457
    %v4977 = vunpack.c.l.b16 %v4458
    %v4978 = vunpack.c.l.b16 %v4459
    %v4979 = vunpack.c.l.b16 %v4460
    %v4980 = vunpack.c.l.b16 %v4461
    %v4981 = vunpack.c.l.b16 %v4462
    %v4982 = vunpack.c.l.b16 %v4463
    %v4983 = vunpack.c.l.b16 %v4464
    %v4984 = vunpack.c.l.b16 %v4465
    %v4985 = vunpack.c.l.b16 %v4466
    %v4986 = vunpack.c.l.b16 %v4467
    %v4987 = vunpack.c.l.b16 %v4468
    %v4988 = vunpack.c.l.b16 %v4469
    %v4989 = vunpack.c.l.b16 %v4470
    %v4990 = vunpack.c.l.b16 %v4471
    %v4991 = vunpack.c.l.b16 %v4472
    %v4992 = vunpack.c.l.b16 %v4473
    %v4993 = vunpack.c.l.b16 %v4474
    %v4994 = vunpack.c.l.b16 %v4475
    %v4995 = vunpack.c.l.b16 %v4476
    %v4996 = vunpack.c.l.b16 %v4477
    %v4997 = vunpack.c.l.b16 %v4478
    %v4998 = vunpack.c.l.b16 %v4479
    %v4999 = vunpack.c.l.b16 %v4480
    %v5000 = vunpack.c.l.b16 %v4481
    %v5001 = vunpack.c.l.b16 %v4482
    %v5002 = vunpack.c.l.b16 %v4483
    %v5003 = vunpack.c.l.b16 %v4484
    %v5004 = vunpack.c.l.b16 %v4485
    %v5005 = vunpack.c.l.b16 %v4486
    %v5006 = vunpack.c.l.b16 %v4487
    %v5007 = vunpack.c.l.b16 %v4488
    %v5008 = vunpack.c.l.b16 %v4489
    %v5009 = vunpack.c.l.b16 %v4490
    %v5010 = vunpack.c.l.b16 %v4491
    %v5011 = vunpack.c.l.b16 %v4492
    %v5012 = vunpack.c.l.b16 %v4493
    %v5013 = vunpack.c.l.b16 %v4494
    %v5014 = vunpack.c.l.b16 %v4495
    %v5015 = vunpack.c.l.b16 %v4496
    %v5016 = vunpack.c.l.b16 %v4497
    %v5017 = vunpack.c.l.b16 %v4498
    %v5018 = vunpack.c.l.b16 %v4499
    %v5019 = vunpack.c.l.b16 %v4500
    %v5020 = vunpack.c.l.b16 %v4501
    %v5021 = vunpack.c.l.b16 %v4502
    %v5022 = vunpack.c.l.b16 %v4503
    %v5023 = vunpack.c.l.b16 %v4504
    %v5024 = vunpack.c.l.b16 %v4505
    %v5025 = vunpack.c.l.b16 %v4506
    %v5026 = vunpack.c.l.b16 %v4507
    %v5027 = vunpack.c.l.b16 %v4508
    %v5028 = vunpack.c.l.b16 %v4509
    %v5029 = vunpack.c.l.b16 %v4510
    %v5030 = vunpack.c.l.b16 %v4511
    %v5031 = vunpack.c.l.b16 %v4512
    %v5032 = vunpack.c.l.b16 %v4513
    %v5033 = vunpack.c.l.b16 %v4514
    %v5034 = vunpack.c.l.b16 %v4515
    %v5035 = vunpack.c.l.b16 %v4516
    %v5036 = vunpack.c.l.b16 %v4517
    %v5037 = vunpack.c.l.b16 %v4518
    %v5038 = vunpack.c.l.b16 %v4519
    %v5039 = vunpack.c.l.b16 %v4520
    %v5040 = vunpack.c.l.b16 %v4521
    %v5041 = vunpack.c.l.b16 %v4522
    %v5042 = vunpack.c.l.b16 %v4523
    %v5043 = vunpack.c.l.b16 %v4524
    %v5044 = vunpack.c.l.b16 %v4525
    %v5045 = vunpack.c.l.b16 %v4526
    %v5046 = vunpack.c.l.b16 %v4527
    %v5047 = vunpack.c.l.b16 %v4528
    %v5048 = vunpack.c.l.b16 %v4529
    %v5049 = vunpack.c.l.b16 %v4530
    %v5050 = vunpack.c.l.b16 %v4531
    %v5051 = vunpack.c.l.b16 %v4532
    %v5052 = vunpack.c.l.b16 %v4533
    %v5053 = vunpack.c.l.b16 %v4534
    %v5054 = vunpack.c.l.b16 %v4535
    %v5055 = vunpack.c.l.b16 %v4536
    %v5056 = vunpack.c.l.b16 %v4537
    %v5057 = vunpack.c.l.b16 %v4538
    %v5058 = vunpack.c.l.b16 %v4539
    %v5059 = vunpack.c.l.b16 %v4540
    %v5060 = vunpack.c.l.b16 %v4541
    %v5061 = vunpack.c.l.b16 %v4542
    %v5062 = vunpack.c.l.b16 %v4543
    %v5063 = vunpack.c.l.b16 %v4544
    %v5064 = vunpack.c.l.b16 %v4545
    %v5065 = vunpack.c.l.b16 %v4546
    %v5066 = vunpack.c.l.b16 %v4547
    %v5067 = vunpack.c.l.b16 %v4548
    %v5068 = vunpack.c.l.b16 %v4549
    %v5069 = vunpack.c.l.b16 %v4550
    %v5070 = vunpack.c.l.b16 %v4551
    %v5071 = vunpack.c.l.b16 %v4552
    %v5072 = vunpack.c.l.b16 %v4553
    %v5073 = vunpack.c.l.b16 %v4554
    %v5074 = vunpack.c.l.b16 %v4555
    %v5075 = vunpack.c.l.b16 %v4556
    %v5076 = vunpack.c.l.b16 %v4557
    %v5077 = vunpack.c.l.b16 %v4558
    %v5078 = vunpack.c.l.b16 %v4559
    %v5079 = vunpack.c.l.b16 %v4560
    %v5080 = vunpack.c.l.b16 %v4561
    %v5081 = vunpack.c.l.b16 %v4562
    %v5082 = vunpack.c.l.b16 %v4563
    %v5083 = vunpack.c.l.b16 %v4564
    %v5084 = vunpack.c.l.b16 %v4565
    %v5085 = vunpack.c.l.b16 %v4566
    %v5086 = vunpack.c.l.b16 %v4567
    %v5087 = vunpack.c.l.b16 %v4568
    %v5088 = vunpack.c.l.b16 %v4569
    %v5089 = vunpack.c.l.b16 %v4570
    %v5090 = vunpack.c.l.b16 %v4571
    %v5091 = vunpack.c.l.b16 %v4572
    %v5092 = vunpack.c.l.b16 %v4573
    %v5093 = vunpack.c.l.b16 %v4574
    %v5094 = vunpack.c.l.b16 %v4575
    %v5095 = vunpack.c.l.b16 %v4576
    %v5096 = vunpack.c.l.b16 %v4577
    %v5097 = vunpack.c.l.b16 %v4578
    %v5098 = vunpack.c.l.b16 %v4579
    %v5099 = vunpack.c.l.b16 %v4580
    %v5100 = vunpack.c.l.b16 %v4581
    %v5101 = vunpack.c.l.b16 %v4582
    %v5102 = vunpack.c.l.b16 %v4583
    %v5103 = vunpack.c.l.b16 %v4584
    %v5104 = vunpack.c.l.b16 %v4585
    %v5105 = vunpack.c.l.b16 %v4586
    %v5106 = vunpack.c.l.b16 %v4587
    %v5107 = vunpack.c.l.b16 %v4588
    %v5108 = vunpack.c.l.b16 %v4589
    %v5109 = vunpack.c.l.b16 %v4590
    %v5110 = vunpack.c.l.b16 %v4591
    %v5111 = vunpack.c.l.b16 %v4592
    %v5112 = vunpack.c.l.b16 %v4593
    %v5113 = vunpack.c.l.b16 %v4594
    %v5114 = vunpack.c.l.b16 %v4595
    %v5115 = vunpack.c.l.b16 %v4596
    %v5116 = vunpack.c.l.b16 %v4597
    %v5117 = vunpack.c.l.b16 %v4598
    %v5118 = vunpack.c.l.b16 %v4599
    %v5119 = vunpack.c.l.b16 %v4600
    %v5120 = vunpack.c.l.b16 %v4601
    %v5121 = vunpack.c.l.b16 %v4602
    %v5122 = vunpack.c.l.b16 %v4603
    %v5123 = vunpack.c.l.b16 %v4604
    %v5124 = vunpack.c.l.b16 %v4605
    %v5125 = vunpack.c.l.b16 %v4606
    %v5126 = vunpack.c.l.b16 %v4607
    %v5127 = vunpack.c.l.b16 %v4608
    %v5128 = vunpack.c.l.b16 %v4609
    %v5129 = vunpack.c.l.b16 %v4610
    %v5130 = vunpack.c.l.b16 %v4611
    %v5131 = vunpack.c.l.b16 %v4612
    %v5132 = vunpack.c.l.b16 %v4613
    %v5133 = vunpack.c.l.b16 %v4614
    %v5134 = vunpack.c.l.b16 %v4615
    %v5135 = vunpack.c.l.b16 %v4616
    %v5136 = vunpack.c.l.b16 %v4617
    %v5137 = vunpack.c.l.b16 %v4618
    %v5138 = vunpack.c.l.b16 %v4619
    %v5139 = vunpack.c.l.b16 %v4620
    %v5140 = vunpack.c.l.b16 %v4621
    %v5141 = vunpack.c.l.b16 %v4622
    %v5142 = vunpack.c.l.b16 %v4623
    %v5143 = vunpack.c.l.b16 %v4624
    %v5144 = vunpack.c.l.b16 %v4625
    %v5145 = vunpack.c.l.b16 %v4626
    %v5146 = vunpack.c.l.b16 %v4627
    %v5147 = vunpack.c.l.b16 %v4628
    %v5148 = vunpack.c.l.b16 %v4629
    %v5149 = vunpack.c.l.b16 %v4630
    %v5150 = vunpack.c.l.b16 %v4631
    %v5151 = vunpack.c.l.b16 %v4632
    %v5152 = vunpack.c.l.b16 %v4633
    %v5153 = vunpack.c.l.b16 %v4634
    %v5154 = vunpack.c.l.b16 %v4635
    %v5155 = vunpack.c.l.b16 %v4636
    %v5156 = vunpack.c.l.b16 %v4637
    %v5157 = vunpack.c.l.b16 %v4638
    %v5158 = vunpack.c.l.b16 %v4639
    %v5159 = vunpack.c.l.b16 %v4640
    %v5160 = vunpack.c.l.b16 %v4641
    %v5161 = vunpack.c.l.b16 %v4642
    %v5162 = vunpack.c.l.b16 %v4643
    %v5163 = vpack.c.b16 %v4908, %v4907
    %v5164 = vpack.c.b16 %v4910, %v4909
    %v5165 = vpack.c.b16 %v4912, %v4911
    %v5166 = vpack.c.b16 %v4914, %v4913
    %v5167 = vpack.c.b16 %v4916, %v4915
    %v5168 = vpack.c.b16 %v4918, %v4917
    %v5169 = vpack.c.b16 %v4920, %v4919
    %v5170 = vpack.c.b16 %v4922, %v4921
    %v5171 = vpack.c.b16 %v4924, %v4923
    %v5172 = vpack.c.b16 %v4926, %v4925
    %v5173 = vpack.c.b16 %v4928, %v4927
    %v5174 = vpack.c.b16 %v4930, %v4929
    %v5175 = vpack.c.b16 %v4932, %v4931
    %v5176 = vpack.c.b16 %v4934, %v4933
    %v5177 = vpack.c.b16 %v4936, %v4935
    %v5178 = vpack.c.b16 %v4938, %v4937
    %v5179 = vpack.c.b16 %v4940, %v4939
    %v5180 = vpack.c.b16 %v4942, %v4941
    %v5181 = vpack.c.b16 %v4944, %v4943
    %v5182 = vpack.c.b16 %v4946, %v4945
    %v5183 = vpack.c.b16 %v4948, %v4947
    %v5184 = vpack.c.b16 %v4950, %v4949
    %v5185 = vpack.c.b16 %v4952, %v4951
    %v5186 = vpack.c.b16 %v4954, %v4953
    %v5187 = vpack.c.b16 %v4956, %v4955
    %v5188 = vpack.c.b16 %v4958, %v4957
    %v5189 = vpack.c.b16 %v4960, %v4959
    %v5190 = vpack.c.b16 %v4962, %v4961
    %v5191 = vpack.c.b16 %v4964, %v4963
    %v5192 = vpack.c.b16 %v4966, %v4965
    %v5193 = vpack.c.b16 %v4968, %v4967
    %v5194 = vpack.c.b16 %v4970, %v4969
    %v5195 = vpack.c.b16 %v4972, %v4971
    %v5196 = vpack.c.b16 %v4974, %v4973
    %v5197 = vpack.c.b16 %v4976, %v4975
    %v5198 = vpack.c.b16 %v4978, %v4977
    %v5199 = vpack.c.b16 %v4980, %v4979
    %v5200 = vpack.c.b16 %v4982, %v4981
    %v5201 = vpack.c.b16 %v4984, %v4983
    %v5202 = vpack.c.b16 %v4986, %v4985
    %v5203 = vpack.c.b16 %v4988, %v4987
    %v5204 = vpack.c.b16 %v4990, %v4989
    %v5205 = vpack.c.b16 %v4992, %v4991
    %v5206 = vpack.c.b16 %v4994, %v4993
    %v5207 = vpack.c.b16 %v4996, %v4995
    %v5208 = vpack.c.b16 %v4998, %v4997
    %v5209 = vpack.c.b16 %v5000, %v4999
    %v5210 = vpack.c.b16 %v5002, %v5001
    %v5211 = vpack.c.b16 %v5004, %v5003
    %v5212 = vpack.c.b16 %v5006, %v5005
    %v5213 = vpack.c.b16 %v5008, %v5007
    %v5214 = vpack.c.b16 %v5010, %v5009
    %v5215 = vpack.c.b16 %v5012, %v5011
    %v5216 = vpack.c.b16 %v5014, %v5013
    %v5217 = vpack.c.b16 %v5016, %v5015
    %v5218 = vpack.c.b16 %v5018, %v5017
    %v5219 = vpack.c.b16 %v5020, %v5019
    %v5220 = vpack.c.b16 %v5022, %v5021
    %v5221 = vpack.c.b16 %v5024, %v5023
    %v5222 = vpack.c.b16 %v5026, %v5025
    %v5223 = vpack.c.b16 %v5028, %v5027
    %v5224 = vpack.c.b16 %v5030, %v5029
    %v5225 = vpack.c.b16 %v5032, %v5031
    %v5226 = vpack.c.b16 %v5034, %v5033
    %v5227 = vpack.c.b16 %v5036, %v5035
    %v5228 = vpack.c.b16 %v5038, %v5037
    %v5229 = vpack.c.b16 %v5040, %v5039
    %v5230 = vpack.c.b16 %v5042, %v5041
    %v5231 = vpack.c.b16 %v5044, %v5043
    %v5232 = vpack.c.b16 %v5046, %v5045
    %v5233 = vpack.c.b16 %v5048, %v5047
    %v5234 = vpack.c.b16 %v5050, %v5049
    %v5235 = vpack.c.b16 %v5052, %v5051
    %v5236 = vpack.c.b16 %v5054, %v5053
    %v5237 = vpack.c.b16 %v5056, %v5055
    %v5238 = vpack.c.b16 %v5058, %v5057
    %v5239 = vpack.c.b16 %v5060, %v5059
    %v5240 = vpack.c.b16 %v5062, %v5061
    %v5241 = vpack.c.b16 %v5064, %v5063
    %v5242 = vpack.c.b16 %v5066, %v5065
    %v5243 = vpack.c.b16 %v5068, %v5067
    %v5244 = vpack.c.b16 %v5070, %v5069
    %v5245 = vpack.c.b16 %v5072, %v5071
    %v5246 = vpack.c.b16 %v5074, %v5073
    %v5247 = vpack.c.b16 %v5076, %v5075
    %v5248 = vpack.c.b16 %v5078, %v5077
    %v5249 = vpack.c.b16 %v5080, %v5079
    %v5250 = vpack.c.b16 %v5082, %v5081
    %v5251 = vpack.c.b16 %v5084, %v5083
    %v5252 = vpack.c.b16 %v5086, %v5085
    %v5253 = vpack.c.b16 %v5088, %v5087
    %v5254 = vpack.c.b16 %v5090, %v5089
    %v5255 = vpack.c.b16 %v5092, %v5091
    %v5256 = vpack.c.b16 %v5094, %v5093
    %v5257 = vpack.c.b16 %v5096, %v5095
    %v5258 = vpack.c.b16 %v5098, %v5097
    %v5259 = vpack.c.b16 %v5100, %v5099
    %v5260 = vpack.c.b16 %v5102, %v5101
    %v5261 = vpack.c.b16 %v5104, %v5103
    %v5262 = vpack.c.b16 %v5106, %v5105
    %v5263 = vpack.c.b16 %v5108, %v5107
    %v5264 = vpack.c.b16 %v5110, %v5109
    %v5265 = vpack.c.b16 %v5112, %v5111
    %v5266 = vpack.c.b16 %v5114, %v5113
    %v5267 = vpack.c.b16 %v5116, %v5115
    %v5268 = vpack.c.b16 %v5118, %v5117
    %v5269 = vpack.c.b16 %v5120, %v5119
    %v5270 = vpack.c.b16 %v5122, %v5121
    %v5271 = vpack.c.b16 %v5124, %v5123
    %v5272 = vpack.c.b16 %v5126, %v5125
    %v5273 = vpack.c.b16 %v5128, %v5127
    %v5274 = vpack.c.b16 %v5130, %v5129
    %v5275 = vpack.c.b16 %v5132, %v5131
    %v5276 = vpack.c.b16 %v5134, %v5133
    %v5277 = vpack.c.b16 %v5136, %v5135
    %v5278 = vpack.c.b16 %v5138, %v5137
    %v5279 = vpack.c.b16 %v5140, %v5139
    %v5280 = vpack.c.b16 %v5142, %v5141
    %v5281 = vpack.c.b16 %v5144, %v5143
    %v5282 = vpack.c.b16 %v5146, %v5145
    %v5283 = vpack.c.b16 %v5148, %v5147
    %v5284 = vpack.c.b16 %v5150, %v5149
    %v5285 = vpack.c.b16 %v5152, %v5151
    %v5286 = vpack.c.b16 %v5154, %v5153
    %v5287 = vpack.c.b16 %v5156, %v5155
    %v5288 = vpack.c.b16 %v5158, %v5157
    %v5289 = vpack.c.b16 %v5160, %v5159
    %v5290 = vpack.c.b16 %v5162, %v5161
    %5419 = vmatprep.subr.bf16.mxu0 0
    %5420 = vmatpush1.bf16.msra.mxu0 %v5170
    %5421 = vmatprep.subr.bf16.mxu0 0
    %5422 = vmatpush1.bf16.msra.mxu0 %v5169
    %5423 = vmatprep.subr.bf16.mxu0 0
    %5424 = vmatpush1.bf16.msra.mxu0 %v5168
    %5425 = vmatprep.subr.bf16.mxu0 0
    %5426 = vmatpush1.bf16.msra.mxu0 %v5167
    %5427 = vmatprep.subr.bf16.mxu0 0
    %5428 = vmatpush1.bf16.msra.mxu0 %v5166
    %5429 = vmatprep.subr.bf16.mxu0 0
    %5430 = vmatpush1.bf16.msra.mxu0 %v5165
    %5431 = vmatprep.subr.bf16.mxu0 0
    %5432 = vmatpush1.bf16.msra.mxu0 %v5164
    %5433 = vmatprep.subr.bf16.mxu0 0
    %5434 = vmatpush1.bf16.msra.mxu0 %v5163
    %5435 = vmatprep.subr.bf16.mxu0 0
    %5436 = vmatpush2.bf16.msra.mxu0 %v5178
    %5437 = vmatprep.subr.bf16.mxu0 0
    %5438 = vmatpush2.bf16.msra.mxu0 %v5177
    %5439 = vmatprep.subr.bf16.mxu0 0
    %5440 = vmatpush2.bf16.msra.mxu0 %v5176
    %5441 = vmatprep.subr.bf16.mxu0 0
    %5442 = vmatpush2.bf16.msra.mxu0 %v5175
    %5443 = vmatprep.subr.bf16.mxu0 0
    %5444 = vmatpush2.bf16.msra.mxu0 %v5174
    %5445 = vmatprep.subr.bf16.mxu0 0
    %5446 = vmatpush2.bf16.msra.mxu0 %v5173
    %5447 = vmatprep.subr.bf16.mxu0 0
    %5448 = vmatpush2.bf16.msra.mxu0 %v5172
    %5449 = vmatprep.subr.bf16.mxu0 0
    %5450 = vmatpush2.bf16.msra.mxu0 %v5171
    %5451 = vmatprep.mubr.bf16.mxu0 %v4373
    %5452 = vmatmul.mubr.bf16.gmra.mxu0 %v4372
    %v5453 = vpop.f32.mrf.mxu0
    %v5454 = vadd.f32 %v4649, %v5453
    %v5455 = vpop.f32.mrf.mxu0
    %v5456 = vpop.f32.mrf.mxu0
    %v5457 = vadd.f32 %v4649, %v5456
    %v5458 = vpop.f32.mrf.mxu0
    %5459 = vdwg.mxu0
    %5460 = vmatprep.subr.bf16.mxu0 0
    %5461 = vmatpush1.bf16.msra.mxu0 %v5186
    %5462 = vmatprep.subr.bf16.mxu0 0
    %5463 = vmatpush1.bf16.msra.mxu0 %v5185
    %5464 = vmatprep.subr.bf16.mxu0 0
    %5465 = vmatpush1.bf16.msra.mxu0 %v5184
    %5466 = vmatprep.subr.bf16.mxu0 0
    %5467 = vmatpush1.bf16.msra.mxu0 %v5183
    %5468 = vmatprep.subr.bf16.mxu0 0
    %5469 = vmatpush1.bf16.msra.mxu0 %v5182
    %5470 = vmatprep.subr.bf16.mxu0 0
    %5471 = vmatpush1.bf16.msra.mxu0 %v5181
    %5472 = vmatprep.subr.bf16.mxu0 0
    %5473 = vmatpush1.bf16.msra.mxu0 %v5180
    %5474 = vmatprep.subr.bf16.mxu0 0
    %5475 = vmatpush1.bf16.msra.mxu0 %v5179
    %5476 = vmatprep.subr.bf16.mxu0 0
    %5477 = vmatpush2.bf16.msra.mxu0 %v5194
    %5478 = vmatprep.subr.bf16.mxu0 0
    %5479 = vmatpush2.bf16.msra.mxu0 %v5193
    %5480 = vmatprep.subr.bf16.mxu0 0
    %5481 = vmatpush2.bf16.msra.mxu0 %v5192
    %5482 = vmatprep.subr.bf16.mxu0 0
    %5483 = vmatpush2.bf16.msra.mxu0 %v5191
    %5484 = vmatprep.subr.bf16.mxu0 0
    %5485 = vmatpush2.bf16.msra.mxu0 %v5190
    %5486 = vmatprep.subr.bf16.mxu0 0
    %5487 = vmatpush2.bf16.msra.mxu0 %v5189
    %5488 = vmatprep.subr.bf16.mxu0 0
    %5489 = vmatpush2.bf16.msra.mxu0 %v5188
    %5490 = vmatprep.subr.bf16.mxu0 0
    %5491 = vmatpush2.bf16.msra.mxu0 %v5187
    %5492 = vmatprep.mubr.bf16.mxu0 %v4375
    %5493 = vmatmul.mubr.bf16.gmra.mxu0 %v4374
    %v5494 = vpop.f32.mrf.mxu0
    %v5495 = vadd.f32 %v5454, %v5494
    %v5496 = vpop.f32.mrf.mxu0
    %v5497 = vpop.f32.mrf.mxu0
    %v5498 = vadd.f32 %v5457, %v5497
    %v5499 = vpop.f32.mrf.mxu0
    %5500 = vdwg.mxu0
    %5501 = vmatprep.subr.bf16.mxu0 0
    %5502 = vmatpush1.bf16.msra.mxu0 %v5202
    %5503 = vmatprep.subr.bf16.mxu0 0
    %5504 = vmatpush1.bf16.msra.mxu0 %v5201
    %5505 = vmatprep.subr.bf16.mxu0 0
    %5506 = vmatpush1.bf16.msra.mxu0 %v5200
    %5507 = vmatprep.subr.bf16.mxu0 0
    %5508 = vmatpush1.bf16.msra.mxu0 %v5199
    %5509 = vmatprep.subr.bf16.mxu0 0
    %5510 = vmatpush1.bf16.msra.mxu0 %v5198
    %5511 = vmatprep.subr.bf16.mxu0 0
    %5512 = vmatpush1.bf16.msra.mxu0 %v5197
    %5513 = vmatprep.subr.bf16.mxu0 0
    %5514 = vmatpush1.bf16.msra.mxu0 %v5196
    %5515 = vmatprep.subr.bf16.mxu0 0
    %5516 = vmatpush1.bf16.msra.mxu0 %v5195
    %5517 = vmatprep.subr.bf16.mxu0 0
    %5518 = vmatpush2.bf16.msra.mxu0 %v5210
    %5519 = vmatprep.subr.bf16.mxu0 0
    %5520 = vmatpush2.bf16.msra.mxu0 %v5209
    %5521 = vmatprep.subr.bf16.mxu0 0
    %5522 = vmatpush2.bf16.msra.mxu0 %v5208
    %5523 = vmatprep.subr.bf16.mxu0 0
    %5524 = vmatpush2.bf16.msra.mxu0 %v5207
    %5525 = vmatprep.subr.bf16.mxu0 0
    %5526 = vmatpush2.bf16.msra.mxu0 %v5206
    %5527 = vmatprep.subr.bf16.mxu0 0
    %5528 = vmatpush2.bf16.msra.mxu0 %v5205
    %5529 = vmatprep.subr.bf16.mxu0 0
    %5530 = vmatpush2.bf16.msra.mxu0 %v5204
    %5531 = vmatprep.subr.bf16.mxu0 0
    %5532 = vmatpush2.bf16.msra.mxu0 %v5203
    %5533 = vmatprep.mubr.bf16.mxu0 %v4377
    %5534 = vmatmul.mubr.bf16.gmra.mxu0 %v4376
    %v5535 = vpop.f32.mrf.mxu0
    %v5536 = vadd.f32 %v5495, %v5535
    %v5537 = vpop.f32.mrf.mxu0
    %v5538 = vpop.f32.mrf.mxu0
    %v5539 = vadd.f32 %v5498, %v5538
    %v5540 = vpop.f32.mrf.mxu0
    %5541 = vdwg.mxu0
    %5542 = vmatprep.subr.bf16.mxu0 0
    %5543 = vmatpush1.bf16.msra.mxu0 %v5218
    %5544 = vmatprep.subr.bf16.mxu0 0
    %5545 = vmatpush1.bf16.msra.mxu0 %v5217
    %5546 = vmatprep.subr.bf16.mxu0 0
    %5547 = vmatpush1.bf16.msra.mxu0 %v5216
    %5548 = vmatprep.subr.bf16.mxu0 0
    %5549 = vmatpush1.bf16.msra.mxu0 %v5215
    %5550 = vmatprep.subr.bf16.mxu0 0
    %5551 = vmatpush1.bf16.msra.mxu0 %v5214
    %5552 = vmatprep.subr.bf16.mxu0 0
    %5553 = vmatpush1.bf16.msra.mxu0 %v5213
    %5554 = vmatprep.subr.bf16.mxu0 0
    %5555 = vmatpush1.bf16.msra.mxu0 %v5212
    %5556 = vmatprep.subr.bf16.mxu0 0
    %5557 = vmatpush1.bf16.msra.mxu0 %v5211
    %5558 = vmatprep.subr.bf16.mxu0 0
    %5559 = vmatpush2.bf16.msra.mxu0 %v5226
    %5560 = vmatprep.subr.bf16.mxu0 0
    %5561 = vmatpush2.bf16.msra.mxu0 %v5225
    %5562 = vmatprep.subr.bf16.mxu0 0
    %5563 = vmatpush2.bf16.msra.mxu0 %v5224
    %5564 = vmatprep.subr.bf16.mxu0 0
    %5565 = vmatpush2.bf16.msra.mxu0 %v5223
    %5566 = vmatprep.subr.bf16.mxu0 0
    %5567 = vmatpush2.bf16.msra.mxu0 %v5222
    %5568 = vmatprep.subr.bf16.mxu0 0
    %5569 = vmatpush2.bf16.msra.mxu0 %v5221
    %5570 = vmatprep.subr.bf16.mxu0 0
    %5571 = vmatpush2.bf16.msra.mxu0 %v5220
    %5572 = vmatprep.subr.bf16.mxu0 0
    %5573 = vmatpush2.bf16.msra.mxu0 %v5219
    %5574 = vmatprep.mubr.bf16.mxu0 %v4379
    %5575 = vmatmul.mubr.bf16.gmra.mxu0 %v4378
    %v5576 = vpop.f32.mrf.mxu0
    %v5577 = vadd.f32 %v5536, %v5576
    %v5578 = vpop.f32.mrf.mxu0
    %v5579 = vpop.f32.mrf.mxu0
    %v5580 = vadd.f32 %v5539, %v5579
    %v5581 = vpop.f32.mrf.mxu0
    %5582 = vdwg.mxu0
    %5583 = vmatprep.subr.bf16.mxu0 0
    %5584 = vmatpush1.bf16.msra.mxu0 %v5234
    %5585 = vmatprep.subr.bf16.mxu0 0
    %5586 = vmatpush1.bf16.msra.mxu0 %v5233
    %5587 = vmatprep.subr.bf16.mxu0 0
    %5588 = vmatpush1.bf16.msra.mxu0 %v5232
    %5589 = vmatprep.subr.bf16.mxu0 0
    %5590 = vmatpush1.bf16.msra.mxu0 %v5231
    %5591 = vmatprep.subr.bf16.mxu0 0
    %5592 = vmatpush1.bf16.msra.mxu0 %v5230
    %5593 = vmatprep.subr.bf16.mxu0 0
    %5594 = vmatpush1.bf16.msra.mxu0 %v5229
    %5595 = vmatprep.subr.bf16.mxu0 0
    %5596 = vmatpush1.bf16.msra.mxu0 %v5228
    %5597 = vmatprep.subr.bf16.mxu0 0
    %5598 = vmatpush1.bf16.msra.mxu0 %v5227
    %5599 = vmatprep.subr.bf16.mxu0 0
    %5600 = vmatpush2.bf16.msra.mxu0 %v5242
    %5601 = vmatprep.subr.bf16.mxu0 0
    %5602 = vmatpush2.bf16.msra.mxu0 %v5241
    %5603 = vmatprep.subr.bf16.mxu0 0
    %5604 = vmatpush2.bf16.msra.mxu0 %v5240
    %5605 = vmatprep.subr.bf16.mxu0 0
    %5606 = vmatpush2.bf16.msra.mxu0 %v5239
    %5607 = vmatprep.subr.bf16.mxu0 0
    %5608 = vmatpush2.bf16.msra.mxu0 %v5238
    %5609 = vmatprep.subr.bf16.mxu0 0
    %5610 = vmatpush2.bf16.msra.mxu0 %v5237
    %5611 = vmatprep.subr.bf16.mxu0 0
    %5612 = vmatpush2.bf16.msra.mxu0 %v5236
    %5613 = vmatprep.subr.bf16.mxu0 0
    %5614 = vmatpush2.bf16.msra.mxu0 %v5235
    %5615 = vmatprep.mubr.bf16.mxu0 %v4381
    %5616 = vmatmul.mubr.bf16.gmra.mxu0 %v4380
    %v5617 = vpop.f32.mrf.mxu0
    %v5618 = vadd.f32 %v5577, %v5617
    %v5619 = vpop.f32.mrf.mxu0
    %v5620 = vpop.f32.mrf.mxu0
    %v5621 = vadd.f32 %v5580, %v5620
    %v5622 = vpop.f32.mrf.mxu0
    %5623 = vdwg.mxu0
    %5624 = vmatprep.subr.bf16.mxu0 0
    %5625 = vmatpush1.bf16.msra.mxu0 %v5250
    %5626 = vmatprep.subr.bf16.mxu0 0
    %5627 = vmatpush1.bf16.msra.mxu0 %v5249
    %5628 = vmatprep.subr.bf16.mxu0 0
    %5629 = vmatpush1.bf16.msra.mxu0 %v5248
    %5630 = vmatprep.subr.bf16.mxu0 0
    %5631 = vmatpush1.bf16.msra.mxu0 %v5247
    %5632 = vmatprep.subr.bf16.mxu0 0
    %5633 = vmatpush1.bf16.msra.mxu0 %v5246
    %5634 = vmatprep.subr.bf16.mxu0 0
    %5635 = vmatpush1.bf16.msra.mxu0 %v5245
    %5636 = vmatprep.subr.bf16.mxu0 0
    %5637 = vmatpush1.bf16.msra.mxu0 %v5244
    %5638 = vmatprep.subr.bf16.mxu0 0
    %5639 = vmatpush1.bf16.msra.mxu0 %v5243
    %5640 = vmatprep.subr.bf16.mxu0 0
    %5641 = vmatpush2.bf16.msra.mxu0 %v5258
    %5642 = vmatprep.subr.bf16.mxu0 0
    %5643 = vmatpush2.bf16.msra.mxu0 %v5257
    %5644 = vmatprep.subr.bf16.mxu0 0
    %5645 = vmatpush2.bf16.msra.mxu0 %v5256
    %5646 = vmatprep.subr.bf16.mxu0 0
    %5647 = vmatpush2.bf16.msra.mxu0 %v5255
    %5648 = vmatprep.subr.bf16.mxu0 0
    %5649 = vmatpush2.bf16.msra.mxu0 %v5254
    %5650 = vmatprep.subr.bf16.mxu0 0
    %5651 = vmatpush2.bf16.msra.mxu0 %v5253
    %5652 = vmatprep.subr.bf16.mxu0 0
    %5653 = vmatpush2.bf16.msra.mxu0 %v5252
    %5654 = vmatprep.subr.bf16.mxu0 0
    %5655 = vmatpush2.bf16.msra.mxu0 %v5251
    %5656 = vmatprep.mubr.bf16.mxu0 %v4383
    %5657 = vmatmul.mubr.bf16.gmra.mxu0 %v4382
    %v5658 = vpop.f32.mrf.mxu0
    %v5659 = vadd.f32 %v5618, %v5658
    %v5660 = vpop.f32.mrf.mxu0
    %v5661 = vpop.f32.mrf.mxu0
    %v5662 = vadd.f32 %v5621, %v5661
    %v5663 = vpop.f32.mrf.mxu0
    %5664 = vdwg.mxu0
    %5665 = vmatprep.subr.bf16.mxu0 0
    %5666 = vmatpush1.bf16.msra.mxu0 %v5266
    %5667 = vmatprep.subr.bf16.mxu0 0
    %5668 = vmatpush1.bf16.msra.mxu0 %v5265
    %5669 = vmatprep.subr.bf16.mxu0 0
    %5670 = vmatpush1.bf16.msra.mxu0 %v5264
    %5671 = vmatprep.subr.bf16.mxu0 0
    %5672 = vmatpush1.bf16.msra.mxu0 %v5263
    %5673 = vmatprep.subr.bf16.mxu0 0
    %5674 = vmatpush1.bf16.msra.mxu0 %v5262
    %5675 = vmatprep.subr.bf16.mxu0 0
    %5676 = vmatpush1.bf16.msra.mxu0 %v5261
    %5677 = vmatprep.subr.bf16.mxu0 0
    %5678 = vmatpush1.bf16.msra.mxu0 %v5260
    %5679 = vmatprep.subr.bf16.mxu0 0
    %5680 = vmatpush1.bf16.msra.mxu0 %v5259
    %5681 = vmatprep.subr.bf16.mxu0 0
    %5682 = vmatpush2.bf16.msra.mxu0 %v5274
    %5683 = vmatprep.subr.bf16.mxu0 0
    %5684 = vmatpush2.bf16.msra.mxu0 %v5273
    %5685 = vmatprep.subr.bf16.mxu0 0
    %5686 = vmatpush2.bf16.msra.mxu0 %v5272
    %5687 = vmatprep.subr.bf16.mxu0 0
    %5688 = vmatpush2.bf16.msra.mxu0 %v5271
    %5689 = vmatprep.subr.bf16.mxu0 0
    %5690 = vmatpush2.bf16.msra.mxu0 %v5270
    %5691 = vmatprep.subr.bf16.mxu0 0
    %5692 = vmatpush2.bf16.msra.mxu0 %v5269
    %5693 = vmatprep.subr.bf16.mxu0 0
    %5694 = vmatpush2.bf16.msra.mxu0 %v5268
    %5695 = vmatprep.subr.bf16.mxu0 0
    %5696 = vmatpush2.bf16.msra.mxu0 %v5267
    %5697 = vmatprep.mubr.bf16.mxu0 %v4385
    %5698 = vmatmul.mubr.bf16.gmra.mxu0 %v4384
    %v5699 = vpop.f32.mrf.mxu0
    %v5700 = vadd.f32 %v5659, %v5699
    %v5701 = vpop.f32.mrf.mxu0
    %v5702 = vpop.f32.mrf.mxu0
    %v5703 = vadd.f32 %v5662, %v5702
    %v5704 = vpop.f32.mrf.mxu0
    %5705 = vdwg.mxu0
    %5706 = vmatprep.subr.bf16.mxu0 0
    %5707 = vmatpush1.bf16.msra.mxu0 %v5282
    %5708 = vmatprep.subr.bf16.mxu0 0
    %5709 = vmatpush1.bf16.msra.mxu0 %v5281
    %5710 = vmatprep.subr.bf16.mxu0 0
    %5711 = vmatpush1.bf16.msra.mxu0 %v5280
    %5712 = vmatprep.subr.bf16.mxu0 0
    %5713 = vmatpush1.bf16.msra.mxu0 %v5279
    %5714 = vmatprep.subr.bf16.mxu0 0
    %5715 = vmatpush1.bf16.msra.mxu0 %v5278
    %5716 = vmatprep.subr.bf16.mxu0 0
    %5717 = vmatpush1.bf16.msra.mxu0 %v5277
    %5718 = vmatprep.subr.bf16.mxu0 0
    %5719 = vmatpush1.bf16.msra.mxu0 %v5276
    %5720 = vmatprep.subr.bf16.mxu0 0
    %5721 = vmatpush1.bf16.msra.mxu0 %v5275
    %5722 = vmatprep.subr.bf16.mxu0 0
    %5723 = vmatpush2.bf16.msra.mxu0 %v5290
    %5724 = vmatprep.subr.bf16.mxu0 0
    %5725 = vmatpush2.bf16.msra.mxu0 %v5289
    %5726 = vmatprep.subr.bf16.mxu0 0
    %5727 = vmatpush2.bf16.msra.mxu0 %v5288
    %5728 = vmatprep.subr.bf16.mxu0 0
    %5729 = vmatpush2.bf16.msra.mxu0 %v5287
    %5730 = vmatprep.subr.bf16.mxu0 0
    %5731 = vmatpush2.bf16.msra.mxu0 %v5286
    %5732 = vmatprep.subr.bf16.mxu0 0
    %5733 = vmatpush2.bf16.msra.mxu0 %v5285
    %5734 = vmatprep.subr.bf16.mxu0 0
    %5735 = vmatpush2.bf16.msra.mxu0 %v5284
    %5736 = vmatprep.subr.bf16.mxu0 0
    %5737 = vmatpush2.bf16.msra.mxu0 %v5283
    %5738 = vmatprep.mubr.bf16.mxu0 %v4387
    %5739 = vmatmul.mubr.bf16.gmra.mxu0 %v4386
    %v5740 = vpop.f32.mrf.mxu0
    %v5741 = vadd.f32 %v5700, %v5740
    %v5742 = vpop.f32.mrf.mxu0
    %v5743 = vpop.f32.mrf.mxu0
    %v5744 = vadd.f32 %v5703, %v5743
    %v5745 = vpop.f32.mrf.mxu0
    %5746 = vdwg.mxu0
    %v5747 = vadd.f32 %v3714, %v5741
    %v5748 = vadd.f32 %v3715, %v5744
    %v5749 = vld [vmem:[#allocation33] sm:$0x1]
    %v5750 = vld [vmem:[#allocation34] sm:$0x1]
    %v5751 = vsel %vm3079, %v5747, 0.0
    %5752 = vadd.xlane.f32.xlu0 %v5751
    %v5753 = vpop.xlane.xlu0 %5752
    %v5754 = vsel %vm3079, %v5748, 0.0
    %5755 = vadd.xlane.f32.xlu0 %v5754
    %v5756 = vpop.xlane.xlu0 %5755
    %v5757 = vmul.f32 %v5753, %v3679
    %v5758 = vmul.f32 %v5756, %v3679
    %v5759 = vsub.f32 %v5747, %v5757
    %v5760 = vsub.f32 %v5748, %v5758
    %v5761 = vmul.f32 %v5759, %v5759
    %v5762 = vmul.f32 %v5760, %v5760
    %v5763 = vsel %vm3079, %v5761, 0.0
    %5764 = vadd.xlane.f32.xlu0 %v5763
    %v5765 = vpop.xlane.xlu0 %5764
    %v5766 = vsel %vm3079, %v5762, 0.0
    %5767 = vadd.xlane.f32.xlu0 %v5766
    %v5768 = vpop.xlane.xlu0 %5767
    %v5769 = vmul.f32 %v5765, %v3679
    %v5770 = vmul.f32 %v5768, %v3679
    %v5771 = vadd.f32 %v5769, 1e-05
    %v5772 = vadd.f32 %v5770, 1e-05
    %v5773 = vrsqrt.pop %v5771
    %v5774 = vrsqrt.pop %v5772
    %v5775 = vmul.f32 %v5759, %v5773
    %v5776 = vmul.f32 %v5760, %v5774
    %v5778 = vlaneseq
    %v5779 = vshrl.u32 %v5778, 7
    %v5780 = vsub.s32 0, %v5779
    %v5781 = vrot.slane %v5749, %v5780
    %v5783 = vmul.f32 %v5775, %v5781
    %v5784 = vmul.f32 %v5776, %v5781
    %v5786 = vlaneseq
    %v5787 = vshrl.u32 %v5786, 7
    %v5788 = vsub.s32 0, %v5787
    %v5789 = vrot.slane %v5750, %v5788
    %v5791 = vadd.f32 %v5783, %v5789
    %v5792 = vadd.f32 %v5784, %v5789
    %v5794 = vrot.slane %v5792, 7
    %vm5796 = vcmask 1040384
    %v5797 = vsel %vm5796, %v5791, %v5794
    %v5799 = vrot.slane %v5791, 1
    %v5801 = vsel %vm5796, %v5799, %v5792
    %v5802 = vrot.slane %v5791, 2
    %v5804 = vrot.slane %v5792, 1
    %v5806 = vsel %vm5796, %v5802, %v5804
    %v5807 = vrot.slane %v5791, 3
    %v5809 = vrot.slane %v5792, 2
    %v5811 = vsel %vm5796, %v5807, %v5809
    %v5812 = vrot.slane %v5791, 4
    %v5814 = vrot.slane %v5792, 3
    %v5816 = vsel %vm5796, %v5812, %v5814
    %v5817 = vrot.slane %v5791, 5
    %v5819 = vrot.slane %v5792, 4
    %v5821 = vsel %vm5796, %v5817, %v5819
    %v5822 = vrot.slane %v5791, 6
    %v5824 = vrot.slane %v5792, 5
    %v5826 = vsel %vm5796, %v5822, %v5824
    %v5827 = vrot.slane %v5791, 7
    %v5829 = vrot.slane %v5792, 6
    %v5831 = vsel %vm5796, %v5827, %v5829
    %5833 = vrot.lane.b32.xlu0 %v5801, 32
    %v5834 = vpop.permute.xlu0 %5833
    %5837 = vrot.lane.b32.xlu0 %v5806, 64
    %v5838 = vpop.permute.xlu0 %5837
    %5841 = vrot.lane.b32.xlu0 %v5811, 96
    %v5842 = vpop.permute.xlu0 %5841
    %5845 = vrot.lane.b32.xlu0 %v5821, 32
    %v5846 = vpop.permute.xlu0 %5845
    %5849 = vrot.lane.b32.xlu0 %v5826, 64
    %v5850 = vpop.permute.xlu0 %5849
    %5853 = vrot.lane.b32.xlu0 %v5831, 96
    %v5854 = vpop.permute.xlu0 %5853
    %v5856 = vsel %vm3079, %v5797, %v5834
    %vm5857 = vcmask 523264
    %v5858 = vsel %vm5857, %v5856, %v5838
    %vm5859 = vcmask 785408
    %v5860 = vsel %vm5859, %v5858, %v5842
    %v5861 = vsel %vm3079, %v5816, %v5846
    %v5862 = vsel %vm5857, %v5861, %v5850
    %v5863 = vsel %vm5859, %v5862, %v5854
    %v5864 = vld [vmem:[%s5] sm:$0xff]
    %v5865 = vld [vmem:[%s5 + $0x8] sm:$0xff]
    %v5866 = vpack.c.bf16 %v5860, %v5860
    %v5867 = vpack.c.bf16 %v5863, %v5863
    %v5868 = vld [vmem:[%s61] sm:$0xff]
    %v5869 = vld [vmem:[%s61 + $0x8] sm:$0xff]
    %v5870 = vld [vmem:[%s61 + $0x10] sm:$0xff]
    %v5871 = vld [vmem:[%s61 + $0x18] sm:$0xff]
    %v5872 = vld [vmem:[%s61 + $0x20] sm:$0xff]
    %v5873 = vld [vmem:[%s61 + $0x28] sm:$0xff]
    %v5874 = vld [vmem:[%s61 + $0x30] sm:$0xff]
    %v5875 = vld [vmem:[%s61 + $0x38] sm:$0xff]
    %v5876 = vld [vmem:[%s61 + $0x40] sm:$0xff]
    %v5877 = vld [vmem:[%s61 + $0x48] sm:$0xff]
    %v5878 = vld [vmem:[%s61 + $0x50] sm:$0xff]
    %v5879 = vld [vmem:[%s61 + $0x58] sm:$0xff]
    %v5880 = vld [vmem:[%s61 + $0x60] sm:$0xff]
    %v5881 = vld [vmem:[%s61 + $0x68] sm:$0xff]
    %v5882 = vld [vmem:[%s61 + $0x70] sm:$0xff]
    %v5883 = vld [vmem:[%s61 + $0x78] sm:$0xff]
    %v5884 = vld [vmem:[%s61 + $0x80] sm:$0xff]
    %v5885 = vld [vmem:[%s61 + $0x88] sm:$0xff]
    %v5886 = vld [vmem:[%s61 + $0x90] sm:$0xff]
    %v5887 = vld [vmem:[%s61 + $0x98] sm:$0xff]
    %v5888 = vld [vmem:[%s61 + $0xa0] sm:$0xff]
    %v5889 = vld [vmem:[%s61 + $0xa8] sm:$0xff]
    %v5890 = vld [vmem:[%s61 + $0xb0] sm:$0xff]
    %v5891 = vld [vmem:[%s61 + $0xb8] sm:$0xff]
    %v5892 = vld [vmem:[%s61 + $0xc0] sm:$0xff]
    %v5893 = vld [vmem:[%s61 + $0xc8] sm:$0xff]
    %v5894 = vld [vmem:[%s61 + $0xd0] sm:$0xff]
    %v5895 = vld [vmem:[%s61 + $0xd8] sm:$0xff]
    %v5896 = vld [vmem:[%s61 + $0xe0] sm:$0xff]
    %v5897 = vld [vmem:[%s61 + $0xe8] sm:$0xff]
    %v5898 = vld [vmem:[%s61 + $0xf0] sm:$0xff]
    %v5899 = vld [vmem:[%s61 + $0xf8] sm:$0xff]
    %v5900 = vld [vmem:[%s61 + $0x100] sm:$0xff]
    %v5901 = vld [vmem:[%s61 + $0x108] sm:$0xff]
    %v5902 = vld [vmem:[%s61 + $0x110] sm:$0xff]
    %v5903 = vld [vmem:[%s61 + $0x118] sm:$0xff]
    %v5904 = vld [vmem:[%s61 + $0x120] sm:$0xff]
    %v5905 = vld [vmem:[%s61 + $0x128] sm:$0xff]
    %v5906 = vld [vmem:[%s61 + $0x130] sm:$0xff]
    %v5907 = vld [vmem:[%s61 + $0x138] sm:$0xff]
    %v5908 = vld [vmem:[%s61 + $0x140] sm:$0xff]
    %v5909 = vld [vmem:[%s61 + $0x148] sm:$0xff]
    %v5910 = vld [vmem:[%s61 + $0x150] sm:$0xff]
    %v5911 = vld [vmem:[%s61 + $0x158] sm:$0xff]
    %v5912 = vld [vmem:[%s61 + $0x160] sm:$0xff]
    %v5913 = vld [vmem:[%s61 + $0x168] sm:$0xff]
    %v5914 = vld [vmem:[%s61 + $0x170] sm:$0xff]
    %v5915 = vld [vmem:[%s61 + $0x178] sm:$0xff]
    %v5916 = vld [vmem:[%s61 + $0x180] sm:$0xff]
    %v5917 = vld [vmem:[%s61 + $0x188] sm:$0xff]
    %v5918 = vld [vmem:[%s61 + $0x190] sm:$0xff]
    %v5919 = vld [vmem:[%s61 + $0x198] sm:$0xff]
    %v5920 = vld [vmem:[%s61 + $0x1a0] sm:$0xff]
    %v5921 = vld [vmem:[%s61 + $0x1a8] sm:$0xff]
    %v5922 = vld [vmem:[%s61 + $0x1b0] sm:$0xff]
    %v5923 = vld [vmem:[%s61 + $0x1b8] sm:$0xff]
    %v5924 = vld [vmem:[%s61 + $0x1c0] sm:$0xff]
    %v5925 = vld [vmem:[%s61 + $0x1c8] sm:$0xff]
    %v5926 = vld [vmem:[%s61 + $0x1d0] sm:$0xff]
    %v5927 = vld [vmem:[%s61 + $0x1d8] sm:$0xff]
    %v5928 = vld [vmem:[%s61 + $0x1e0] sm:$0xff]
    %v5929 = vld [vmem:[%s61 + $0x1e8] sm:$0xff]
    %v5930 = vld [vmem:[%s61 + $0x1f0] sm:$0xff]
    %v5931 = vld [vmem:[%s61 + $0x1f8] sm:$0xff]
    %v5934 = vcombine.high %v5864, %v5864
    %v5936 = vunpack.c.l.s4 1983009808
    %v5937 = vunpack.c.0.s8 %v5936
    %v5938 = vlaneseq
    %v5939 = vshrl.u32 %v5938, 7
    %v5940 = vsub.s32 %v5937, %v5939
    %v5941 = vrot.slane %v5864, %v5940
    %v5943 = vunpack.c.l.s4 1983009808
    %v5944 = vunpack.c.0.s8 %v5943
    %v5945 = vlaneseq
    %v5946 = vshrl.u32 %v5945, 7
    %v5947 = vsub.s32 %v5944, %v5946
    %v5948 = vrot.slane %v5934, %v5947
    %v5949 = vcombine.high %v5941, %v5941
    %v5950 = vcombine.high %v5948, %v5948
    %v5951 = vcombine.high %v5865, %v5865
    %v5953 = vunpack.c.l.s4 1983009808
    %v5954 = vunpack.c.0.s8 %v5953
    %v5955 = vlaneseq
    %v5956 = vshrl.u32 %v5955, 7
    %v5957 = vsub.s32 %v5954, %v5956
    %v5958 = vrot.slane %v5865, %v5957
    %v5960 = vunpack.c.l.s4 1983009808
    %v5961 = vunpack.c.0.s8 %v5960
    %v5962 = vlaneseq
    %v5963 = vshrl.u32 %v5962, 7
    %v5964 = vsub.s32 %v5961, %v5963
    %v5965 = vrot.slane %v5951, %v5964
    %v5966 = vcombine.high %v5958, %v5958
    %v5967 = vcombine.high %v5965, %v5965
    %v5976 = vpack.c.bf16 %v5941, %v5941
    %v5977 = vpack.c.bf16 %v5949, %v5949
    %v5978 = vpack.c.bf16 %v5948, %v5948
    %v5979 = vpack.c.bf16 %v5950, %v5950
    %v5980 = vpack.c.bf16 %v5958, %v5958
    %v5981 = vpack.c.bf16 %v5966, %v5966
    %v5982 = vpack.c.bf16 %v5965, %v5965
    %v5983 = vpack.c.bf16 %v5967, %v5967
    %v5984 = vld [vmem:[#allocation36] sm:$0xff]
    %v5985 = vld [vmem:[#allocation36 + $0x8] sm:$0xff]
    %v5986 = vld [vmem:[#allocation36 + $0x10] sm:$0xff]
    %v5987 = vld [vmem:[#allocation36 + $0x18] sm:$0xff]
    %v5988 = vld [vmem:[#allocation36 + $0x20] sm:$0xff]
    %v5989 = vld [vmem:[#allocation36 + $0x28] sm:$0xff]
    %v5990 = vld [vmem:[#allocation36 + $0x30] sm:$0xff]
    %v5991 = vld [vmem:[#allocation36 + $0x38] sm:$0xff]
    %v5992 = vld [vmem:[#allocation36 + $0x40] sm:$0xff]
    %v5993 = vld [vmem:[#allocation36 + $0x48] sm:$0xff]
    %v5994 = vld [vmem:[#allocation36 + $0x50] sm:$0xff]
    %v5995 = vld [vmem:[#allocation36 + $0x58] sm:$0xff]
    %v5996 = vld [vmem:[#allocation36 + $0x60] sm:$0xff]
    %v5997 = vld [vmem:[#allocation36 + $0x68] sm:$0xff]
    %v5998 = vld [vmem:[#allocation36 + $0x70] sm:$0xff]
    %v5999 = vld [vmem:[#allocation36 + $0x78] sm:$0xff]
    %v6000 = vld [vmem:[#allocation36 + $0x80] sm:$0xff]
    %v6001 = vld [vmem:[#allocation36 + $0x88] sm:$0xff]
    %v6002 = vld [vmem:[#allocation36 + $0x90] sm:$0xff]
    %v6003 = vld [vmem:[#allocation36 + $0x98] sm:$0xff]
    %v6004 = vld [vmem:[#allocation36 + $0xa0] sm:$0xff]
    %v6005 = vld [vmem:[#allocation36 + $0xa8] sm:$0xff]
    %v6006 = vld [vmem:[#allocation36 + $0xb0] sm:$0xff]
    %v6007 = vld [vmem:[#allocation36 + $0xb8] sm:$0xff]
    %v6008 = vld [vmem:[#allocation36 + $0xc0] sm:$0xff]
    %v6009 = vld [vmem:[#allocation36 + $0xc8] sm:$0xff]
    %v6010 = vld [vmem:[#allocation36 + $0xd0] sm:$0xff]
    %v6011 = vld [vmem:[#allocation36 + $0xd8] sm:$0xff]
    %v6012 = vld [vmem:[#allocation36 + $0xe0] sm:$0xff]
    %v6013 = vld [vmem:[#allocation36 + $0xe8] sm:$0xff]
    %v6014 = vld [vmem:[#allocation36 + $0xf0] sm:$0xff]
    %v6015 = vld [vmem:[#allocation36 + $0xf8] sm:$0xff]
    %v6016 = vld [vmem:[#allocation36 + $0x100] sm:$0xff]
    %v6017 = vld [vmem:[#allocation36 + $0x108] sm:$0xff]
    %v6018 = vld [vmem:[#allocation36 + $0x110] sm:$0xff]
    %v6019 = vld [vmem:[#allocation36 + $0x118] sm:$0xff]
    %v6020 = vld [vmem:[#allocation36 + $0x120] sm:$0xff]
    %v6021 = vld [vmem:[#allocation36 + $0x128] sm:$0xff]
    %v6022 = vld [vmem:[#allocation36 + $0x130] sm:$0xff]
    %v6023 = vld [vmem:[#allocation36 + $0x138] sm:$0xff]
    %v6024 = vld [vmem:[#allocation36 + $0x140] sm:$0xff]
    %v6025 = vld [vmem:[#allocation36 + $0x148] sm:$0xff]
    %v6026 = vld [vmem:[#allocation36 + $0x150] sm:$0xff]
    %v6027 = vld [vmem:[#allocation36 + $0x158] sm:$0xff]
    %v6028 = vld [vmem:[#allocation36 + $0x160] sm:$0xff]
    %v6029 = vld [vmem:[#allocation36 + $0x168] sm:$0xff]
    %v6030 = vld [vmem:[#allocation36 + $0x170] sm:$0xff]
    %v6031 = vld [vmem:[#allocation36 + $0x178] sm:$0xff]
    %v6032 = vld [vmem:[#allocation36 + $0x180] sm:$0xff]
    %v6033 = vld [vmem:[#allocation36 + $0x188] sm:$0xff]
    %v6034 = vld [vmem:[#allocation36 + $0x190] sm:$0xff]
    %v6035 = vld [vmem:[#allocation36 + $0x198] sm:$0xff]
    %v6036 = vld [vmem:[#allocation36 + $0x1a0] sm:$0xff]
    %v6037 = vld [vmem:[#allocation36 + $0x1a8] sm:$0xff]
    %v6038 = vld [vmem:[#allocation36 + $0x1b0] sm:$0xff]
    %v6039 = vld [vmem:[#allocation36 + $0x1b8] sm:$0xff]
    %v6040 = vld [vmem:[#allocation36 + $0x1c0] sm:$0xff]
    %v6041 = vld [vmem:[#allocation36 + $0x1c8] sm:$0xff]
    %v6042 = vld [vmem:[#allocation36 + $0x1d0] sm:$0xff]
    %v6043 = vld [vmem:[#allocation36 + $0x1d8] sm:$0xff]
    %v6044 = vld [vmem:[#allocation36 + $0x1e0] sm:$0xff]
    %v6045 = vld [vmem:[#allocation36 + $0x1e8] sm:$0xff]
    %v6046 = vld [vmem:[#allocation36 + $0x1f0] sm:$0xff]
    %v6047 = vld [vmem:[#allocation36 + $0x1f8] sm:$0xff]
    %v6048 = vld [vmem:[#allocation36 + $0x200] sm:$0xff]
    %v6049 = vld [vmem:[#allocation36 + $0x208] sm:$0xff]
    %v6050 = vld [vmem:[#allocation36 + $0x210] sm:$0xff]
    %v6051 = vld [vmem:[#allocation36 + $0x218] sm:$0xff]
    %v6052 = vld [vmem:[#allocation36 + $0x220] sm:$0xff]
    %v6053 = vld [vmem:[#allocation36 + $0x228] sm:$0xff]
    %v6054 = vld [vmem:[#allocation36 + $0x230] sm:$0xff]
    %v6055 = vld [vmem:[#allocation36 + $0x238] sm:$0xff]
    %v6056 = vld [vmem:[#allocation36 + $0x240] sm:$0xff]
    %v6057 = vld [vmem:[#allocation36 + $0x248] sm:$0xff]
    %v6058 = vld [vmem:[#allocation36 + $0x250] sm:$0xff]
    %v6059 = vld [vmem:[#allocation36 + $0x258] sm:$0xff]
    %v6060 = vld [vmem:[#allocation36 + $0x260] sm:$0xff]
    %v6061 = vld [vmem:[#allocation36 + $0x268] sm:$0xff]
    %v6062 = vld [vmem:[#allocation36 + $0x270] sm:$0xff]
    %v6063 = vld [vmem:[#allocation36 + $0x278] sm:$0xff]
    %v6064 = vld [vmem:[#allocation36 + $0x280] sm:$0xff]
    %v6065 = vld [vmem:[#allocation36 + $0x288] sm:$0xff]
    %v6066 = vld [vmem:[#allocation36 + $0x290] sm:$0xff]
    %v6067 = vld [vmem:[#allocation36 + $0x298] sm:$0xff]
    %v6068 = vld [vmem:[#allocation36 + $0x2a0] sm:$0xff]
    %v6069 = vld [vmem:[#allocation36 + $0x2a8] sm:$0xff]
    %v6070 = vld [vmem:[#allocation36 + $0x2b0] sm:$0xff]
    %v6071 = vld [vmem:[#allocation36 + $0x2b8] sm:$0xff]
    %v6072 = vld [vmem:[#allocation36 + $0x2c0] sm:$0xff]
    %v6073 = vld [vmem:[#allocation36 + $0x2c8] sm:$0xff]
    %v6074 = vld [vmem:[#allocation36 + $0x2d0] sm:$0xff]
    %v6075 = vld [vmem:[#allocation36 + $0x2d8] sm:$0xff]
    %v6076 = vld [vmem:[#allocation36 + $0x2e0] sm:$0xff]
    %v6077 = vld [vmem:[#allocation36 + $0x2e8] sm:$0xff]
    %v6078 = vld [vmem:[#allocation36 + $0x2f0] sm:$0xff]
    %v6079 = vld [vmem:[#allocation36 + $0x2f8] sm:$0xff]
    %v6080 = vld [vmem:[#allocation36 + $0x300] sm:$0xff]
    %v6081 = vld [vmem:[#allocation36 + $0x308] sm:$0xff]
    %v6082 = vld [vmem:[#allocation36 + $0x310] sm:$0xff]
    %v6083 = vld [vmem:[#allocation36 + $0x318] sm:$0xff]
    %v6084 = vld [vmem:[#allocation36 + $0x320] sm:$0xff]
    %v6085 = vld [vmem:[#allocation36 + $0x328] sm:$0xff]
    %v6086 = vld [vmem:[#allocation36 + $0x330] sm:$0xff]
    %v6087 = vld [vmem:[#allocation36 + $0x338] sm:$0xff]
    %v6088 = vld [vmem:[#allocation36 + $0x340] sm:$0xff]
    %v6089 = vld [vmem:[#allocation36 + $0x348] sm:$0xff]
    %v6090 = vld [vmem:[#allocation36 + $0x350] sm:$0xff]
    %v6091 = vld [vmem:[#allocation36 + $0x358] sm:$0xff]
    %v6092 = vld [vmem:[#allocation36 + $0x360] sm:$0xff]
    %v6093 = vld [vmem:[#allocation36 + $0x368] sm:$0xff]
    %v6094 = vld [vmem:[#allocation36 + $0x370] sm:$0xff]
    %v6095 = vld [vmem:[#allocation36 + $0x378] sm:$0xff]
    %v6096 = vld [vmem:[#allocation36 + $0x380] sm:$0xff]
    %v6097 = vld [vmem:[#allocation36 + $0x388] sm:$0xff]
    %v6098 = vld [vmem:[#allocation36 + $0x390] sm:$0xff]
    %v6099 = vld [vmem:[#allocation36 + $0x398] sm:$0xff]
    %v6100 = vld [vmem:[#allocation36 + $0x3a0] sm:$0xff]
    %v6101 = vld [vmem:[#allocation36 + $0x3a8] sm:$0xff]
    %v6102 = vld [vmem:[#allocation36 + $0x3b0] sm:$0xff]
    %v6103 = vld [vmem:[#allocation36 + $0x3b8] sm:$0xff]
    %v6104 = vld [vmem:[#allocation36 + $0x3c0] sm:$0xff]
    %v6105 = vld [vmem:[#allocation36 + $0x3c8] sm:$0xff]
    %v6106 = vld [vmem:[#allocation36 + $0x3d0] sm:$0xff]
    %v6107 = vld [vmem:[#allocation36 + $0x3d8] sm:$0xff]
    %v6108 = vld [vmem:[#allocation36 + $0x3e0] sm:$0xff]
    %v6109 = vld [vmem:[#allocation36 + $0x3e8] sm:$0xff]
    %v6110 = vld [vmem:[#allocation36 + $0x3f0] sm:$0xff]
    %v6111 = vld [vmem:[#allocation36 + $0x3f8] sm:$0xff]
    %v6112 = vld [vmem:[#allocation36 + $0x400] sm:$0xff]
    %v6113 = vld [vmem:[#allocation36 + $0x408] sm:$0xff]
    %v6114 = vld [vmem:[#allocation36 + $0x410] sm:$0xff]
    %v6115 = vld [vmem:[#allocation36 + $0x418] sm:$0xff]
    %v6116 = vld [vmem:[#allocation36 + $0x420] sm:$0xff]
    %v6117 = vld [vmem:[#allocation36 + $0x428] sm:$0xff]
    %v6118 = vld [vmem:[#allocation36 + $0x430] sm:$0xff]
    %v6119 = vld [vmem:[#allocation36 + $0x438] sm:$0xff]
    %v6120 = vld [vmem:[#allocation36 + $0x440] sm:$0xff]
    %v6121 = vld [vmem:[#allocation36 + $0x448] sm:$0xff]
    %v6122 = vld [vmem:[#allocation36 + $0x450] sm:$0xff]
    %v6123 = vld [vmem:[#allocation36 + $0x458] sm:$0xff]
    %v6124 = vld [vmem:[#allocation36 + $0x460] sm:$0xff]
    %v6125 = vld [vmem:[#allocation36 + $0x468] sm:$0xff]
    %v6126 = vld [vmem:[#allocation36 + $0x470] sm:$0xff]
    %v6127 = vld [vmem:[#allocation36 + $0x478] sm:$0xff]
    %v6128 = vld [vmem:[#allocation36 + $0x480] sm:$0xff]
    %v6129 = vld [vmem:[#allocation36 + $0x488] sm:$0xff]
    %v6130 = vld [vmem:[#allocation36 + $0x490] sm:$0xff]
    %v6131 = vld [vmem:[#allocation36 + $0x498] sm:$0xff]
    %v6132 = vld [vmem:[#allocation36 + $0x4a0] sm:$0xff]
    %v6133 = vld [vmem:[#allocation36 + $0x4a8] sm:$0xff]
    %v6134 = vld [vmem:[#allocation36 + $0x4b0] sm:$0xff]
    %v6135 = vld [vmem:[#allocation36 + $0x4b8] sm:$0xff]
    %v6136 = vld [vmem:[#allocation36 + $0x4c0] sm:$0xff]
    %v6137 = vld [vmem:[#allocation36 + $0x4c8] sm:$0xff]
    %v6138 = vld [vmem:[#allocation36 + $0x4d0] sm:$0xff]
    %v6139 = vld [vmem:[#allocation36 + $0x4d8] sm:$0xff]
    %v6140 = vld [vmem:[#allocation36 + $0x4e0] sm:$0xff]
    %v6141 = vld [vmem:[#allocation36 + $0x4e8] sm:$0xff]
    %v6142 = vld [vmem:[#allocation36 + $0x4f0] sm:$0xff]
    %v6143 = vld [vmem:[#allocation36 + $0x4f8] sm:$0xff]
    %v6144 = vld [vmem:[#allocation36 + $0x500] sm:$0xff]
    %v6145 = vld [vmem:[#allocation36 + $0x508] sm:$0xff]
    %v6146 = vld [vmem:[#allocation36 + $0x510] sm:$0xff]
    %v6147 = vld [vmem:[#allocation36 + $0x518] sm:$0xff]
    %v6148 = vld [vmem:[#allocation36 + $0x520] sm:$0xff]
    %v6149 = vld [vmem:[#allocation36 + $0x528] sm:$0xff]
    %v6150 = vld [vmem:[#allocation36 + $0x530] sm:$0xff]
    %v6151 = vld [vmem:[#allocation36 + $0x538] sm:$0xff]
    %v6152 = vld [vmem:[#allocation36 + $0x540] sm:$0xff]
    %v6153 = vld [vmem:[#allocation36 + $0x548] sm:$0xff]
    %v6154 = vld [vmem:[#allocation36 + $0x550] sm:$0xff]
    %v6155 = vld [vmem:[#allocation36 + $0x558] sm:$0xff]
    %v6156 = vld [vmem:[#allocation36 + $0x560] sm:$0xff]
    %v6157 = vld [vmem:[#allocation36 + $0x568] sm:$0xff]
    %v6158 = vld [vmem:[#allocation36 + $0x570] sm:$0xff]
    %v6159 = vld [vmem:[#allocation36 + $0x578] sm:$0xff]
    %v6160 = vld [vmem:[#allocation36 + $0x580] sm:$0xff]
    %v6161 = vld [vmem:[#allocation36 + $0x588] sm:$0xff]
    %v6162 = vld [vmem:[#allocation36 + $0x590] sm:$0xff]
    %v6163 = vld [vmem:[#allocation36 + $0x598] sm:$0xff]
    %v6164 = vld [vmem:[#allocation36 + $0x5a0] sm:$0xff]
    %v6165 = vld [vmem:[#allocation36 + $0x5a8] sm:$0xff]
    %v6166 = vld [vmem:[#allocation36 + $0x5b0] sm:$0xff]
    %v6167 = vld [vmem:[#allocation36 + $0x5b8] sm:$0xff]
    %v6168 = vld [vmem:[#allocation36 + $0x5c0] sm:$0xff]
    %v6169 = vld [vmem:[#allocation36 + $0x5c8] sm:$0xff]
    %v6170 = vld [vmem:[#allocation36 + $0x5d0] sm:$0xff]
    %v6171 = vld [vmem:[#allocation36 + $0x5d8] sm:$0xff]
    %v6172 = vld [vmem:[#allocation36 + $0x5e0] sm:$0xff]
    %v6173 = vld [vmem:[#allocation36 + $0x5e8] sm:$0xff]
    %v6174 = vld [vmem:[#allocation36 + $0x5f0] sm:$0xff]
    %v6175 = vld [vmem:[#allocation36 + $0x5f8] sm:$0xff]
    %v6176 = vld [vmem:[#allocation36 + $0x600] sm:$0xff]
    %v6177 = vld [vmem:[#allocation36 + $0x608] sm:$0xff]
    %v6178 = vld [vmem:[#allocation36 + $0x610] sm:$0xff]
    %v6179 = vld [vmem:[#allocation36 + $0x618] sm:$0xff]
    %v6180 = vld [vmem:[#allocation36 + $0x620] sm:$0xff]
    %v6181 = vld [vmem:[#allocation36 + $0x628] sm:$0xff]
    %v6182 = vld [vmem:[#allocation36 + $0x630] sm:$0xff]
    %v6183 = vld [vmem:[#allocation36 + $0x638] sm:$0xff]
    %v6184 = vld [vmem:[#allocation36 + $0x640] sm:$0xff]
    %v6185 = vld [vmem:[#allocation36 + $0x648] sm:$0xff]
    %v6186 = vld [vmem:[#allocation36 + $0x650] sm:$0xff]
    %v6187 = vld [vmem:[#allocation36 + $0x658] sm:$0xff]
    %v6188 = vld [vmem:[#allocation36 + $0x660] sm:$0xff]
    %v6189 = vld [vmem:[#allocation36 + $0x668] sm:$0xff]
    %v6190 = vld [vmem:[#allocation36 + $0x670] sm:$0xff]
    %v6191 = vld [vmem:[#allocation36 + $0x678] sm:$0xff]
    %v6192 = vld [vmem:[#allocation36 + $0x680] sm:$0xff]
    %v6193 = vld [vmem:[#allocation36 + $0x688] sm:$0xff]
    %v6194 = vld [vmem:[#allocation36 + $0x690] sm:$0xff]
    %v6195 = vld [vmem:[#allocation36 + $0x698] sm:$0xff]
    %v6196 = vld [vmem:[#allocation36 + $0x6a0] sm:$0xff]
    %v6197 = vld [vmem:[#allocation36 + $0x6a8] sm:$0xff]
    %v6198 = vld [vmem:[#allocation36 + $0x6b0] sm:$0xff]
    %v6199 = vld [vmem:[#allocation36 + $0x6b8] sm:$0xff]
    %v6200 = vld [vmem:[#allocation36 + $0x6c0] sm:$0xff]
    %v6201 = vld [vmem:[#allocation36 + $0x6c8] sm:$0xff]
    %v6202 = vld [vmem:[#allocation36 + $0x6d0] sm:$0xff]
    %v6203 = vld [vmem:[#allocation36 + $0x6d8] sm:$0xff]
    %v6204 = vld [vmem:[#allocation36 + $0x6e0] sm:$0xff]
    %v6205 = vld [vmem:[#allocation36 + $0x6e8] sm:$0xff]
    %v6206 = vld [vmem:[#allocation36 + $0x6f0] sm:$0xff]
    %v6207 = vld [vmem:[#allocation36 + $0x6f8] sm:$0xff]
    %v6208 = vld [vmem:[#allocation36 + $0x700] sm:$0xff]
    %v6209 = vld [vmem:[#allocation36 + $0x708] sm:$0xff]
    %v6210 = vld [vmem:[#allocation36 + $0x710] sm:$0xff]
    %v6211 = vld [vmem:[#allocation36 + $0x718] sm:$0xff]
    %v6212 = vld [vmem:[#allocation36 + $0x720] sm:$0xff]
    %v6213 = vld [vmem:[#allocation36 + $0x728] sm:$0xff]
    %v6214 = vld [vmem:[#allocation36 + $0x730] sm:$0xff]
    %v6215 = vld [vmem:[#allocation36 + $0x738] sm:$0xff]
    %v6216 = vld [vmem:[#allocation36 + $0x740] sm:$0xff]
    %v6217 = vld [vmem:[#allocation36 + $0x748] sm:$0xff]
    %v6218 = vld [vmem:[#allocation36 + $0x750] sm:$0xff]
    %v6219 = vld [vmem:[#allocation36 + $0x758] sm:$0xff]
    %v6220 = vld [vmem:[#allocation36 + $0x760] sm:$0xff]
    %v6221 = vld [vmem:[#allocation36 + $0x768] sm:$0xff]
    %v6222 = vld [vmem:[#allocation36 + $0x770] sm:$0xff]
    %v6223 = vld [vmem:[#allocation36 + $0x778] sm:$0xff]
    %v6224 = vld [vmem:[#allocation36 + $0x780] sm:$0xff]
    %v6225 = vld [vmem:[#allocation36 + $0x788] sm:$0xff]
    %v6226 = vld [vmem:[#allocation36 + $0x790] sm:$0xff]
    %v6227 = vld [vmem:[#allocation36 + $0x798] sm:$0xff]
    %v6228 = vld [vmem:[#allocation36 + $0x7a0] sm:$0xff]
    %v6229 = vld [vmem:[#allocation36 + $0x7a8] sm:$0xff]
    %v6230 = vld [vmem:[#allocation36 + $0x7b0] sm:$0xff]
    %v6231 = vld [vmem:[#allocation36 + $0x7b8] sm:$0xff]
    %v6232 = vld [vmem:[#allocation36 + $0x7c0] sm:$0xff]
    %v6233 = vld [vmem:[#allocation36 + $0x7c8] sm:$0xff]
    %v6234 = vld [vmem:[#allocation36 + $0x7d0] sm:$0xff]
    %v6235 = vld [vmem:[#allocation36 + $0x7d8] sm:$0xff]
    %v6236 = vld [vmem:[#allocation36 + $0x7e0] sm:$0xff]
    %v6237 = vld [vmem:[#allocation36 + $0x7e8] sm:$0xff]
    %v6238 = vld [vmem:[#allocation36 + $0x7f0] sm:$0xff]
    %v6239 = vld [vmem:[#allocation36 + $0x7f8] sm:$0xff]
    %v6496 = vunpack.c.l.b16 %v5984
    %v6497 = vunpack.c.h.b16 %v5984
    %v6498 = vunpack.c.l.b16 %v5985
    %v6499 = vunpack.c.h.b16 %v5985
    %v6500 = vunpack.c.l.b16 %v5986
    %v6501 = vunpack.c.h.b16 %v5986
    %v6502 = vunpack.c.l.b16 %v5987
    %v6503 = vunpack.c.h.b16 %v5987
    %v6504 = vunpack.c.l.b16 %v5988
    %v6505 = vunpack.c.h.b16 %v5988
    %v6506 = vunpack.c.l.b16 %v5989
    %v6507 = vunpack.c.h.b16 %v5989
    %v6508 = vunpack.c.l.b16 %v5990
    %v6509 = vunpack.c.h.b16 %v5990
    %v6510 = vunpack.c.l.b16 %v5991
    %v6511 = vunpack.c.h.b16 %v5991
    %v6512 = vunpack.c.l.b16 %v5992
    %v6513 = vunpack.c.h.b16 %v5992
    %v6514 = vunpack.c.l.b16 %v5993
    %v6515 = vunpack.c.h.b16 %v5993
    %v6516 = vunpack.c.l.b16 %v5994
    %v6517 = vunpack.c.h.b16 %v5994
    %v6518 = vunpack.c.l.b16 %v5995
    %v6519 = vunpack.c.h.b16 %v5995
    %v6520 = vunpack.c.l.b16 %v5996
    %v6521 = vunpack.c.h.b16 %v5996
    %v6522 = vunpack.c.l.b16 %v5997
    %v6523 = vunpack.c.h.b16 %v5997
    %v6524 = vunpack.c.l.b16 %v5998
    %v6525 = vunpack.c.h.b16 %v5998
    %v6526 = vunpack.c.l.b16 %v5999
    %v6527 = vunpack.c.h.b16 %v5999
    %v6528 = vunpack.c.l.b16 %v6000
    %v6529 = vunpack.c.h.b16 %v6000
    %v6530 = vunpack.c.l.b16 %v6001
    %v6531 = vunpack.c.h.b16 %v6001
    %v6532 = vunpack.c.l.b16 %v6002
    %v6533 = vunpack.c.h.b16 %v6002
    %v6534 = vunpack.c.l.b16 %v6003
    %v6535 = vunpack.c.h.b16 %v6003
    %v6536 = vunpack.c.l.b16 %v6004
    %v6537 = vunpack.c.h.b16 %v6004
    %v6538 = vunpack.c.l.b16 %v6005
    %v6539 = vunpack.c.h.b16 %v6005
    %v6540 = vunpack.c.l.b16 %v6006
    %v6541 = vunpack.c.h.b16 %v6006
    %v6542 = vunpack.c.l.b16 %v6007
    %v6543 = vunpack.c.h.b16 %v6007
    %v6544 = vunpack.c.l.b16 %v6008
    %v6545 = vunpack.c.h.b16 %v6008
    %v6546 = vunpack.c.l.b16 %v6009
    %v6547 = vunpack.c.h.b16 %v6009
    %v6548 = vunpack.c.l.b16 %v6010
    %v6549 = vunpack.c.h.b16 %v6010
    %v6550 = vunpack.c.l.b16 %v6011
    %v6551 = vunpack.c.h.b16 %v6011
    %v6552 = vunpack.c.l.b16 %v6012
    %v6553 = vunpack.c.h.b16 %v6012
    %v6554 = vunpack.c.l.b16 %v6013
    %v6555 = vunpack.c.h.b16 %v6013
    %v6556 = vunpack.c.l.b16 %v6014
    %v6557 = vunpack.c.h.b16 %v6014
    %v6558 = vunpack.c.l.b16 %v6015
    %v6559 = vunpack.c.h.b16 %v6015
    %v6560 = vunpack.c.l.b16 %v6016
    %v6561 = vunpack.c.h.b16 %v6016
    %v6562 = vunpack.c.l.b16 %v6017
    %v6563 = vunpack.c.h.b16 %v6017
    %v6564 = vunpack.c.l.b16 %v6018
    %v6565 = vunpack.c.h.b16 %v6018
    %v6566 = vunpack.c.l.b16 %v6019
    %v6567 = vunpack.c.h.b16 %v6019
    %v6568 = vunpack.c.l.b16 %v6020
    %v6569 = vunpack.c.h.b16 %v6020
    %v6570 = vunpack.c.l.b16 %v6021
    %v6571 = vunpack.c.h.b16 %v6021
    %v6572 = vunpack.c.l.b16 %v6022
    %v6573 = vunpack.c.h.b16 %v6022
    %v6574 = vunpack.c.l.b16 %v6023
    %v6575 = vunpack.c.h.b16 %v6023
    %v6576 = vunpack.c.l.b16 %v6024
    %v6577 = vunpack.c.h.b16 %v6024
    %v6578 = vunpack.c.l.b16 %v6025
    %v6579 = vunpack.c.h.b16 %v6025
    %v6580 = vunpack.c.l.b16 %v6026
    %v6581 = vunpack.c.h.b16 %v6026
    %v6582 = vunpack.c.l.b16 %v6027
    %v6583 = vunpack.c.h.b16 %v6027
    %v6584 = vunpack.c.l.b16 %v6028
    %v6585 = vunpack.c.h.b16 %v6028
    %v6586 = vunpack.c.l.b16 %v6029
    %v6587 = vunpack.c.h.b16 %v6029
    %v6588 = vunpack.c.l.b16 %v6030
    %v6589 = vunpack.c.h.b16 %v6030
    %v6590 = vunpack.c.l.b16 %v6031
    %v6591 = vunpack.c.h.b16 %v6031
    %v6592 = vunpack.c.l.b16 %v6032
    %v6593 = vunpack.c.h.b16 %v6032
    %v6594 = vunpack.c.l.b16 %v6033
    %v6595 = vunpack.c.h.b16 %v6033
    %v6596 = vunpack.c.l.b16 %v6034
    %v6597 = vunpack.c.h.b16 %v6034
    %v6598 = vunpack.c.l.b16 %v6035
    %v6599 = vunpack.c.h.b16 %v6035
    %v6600 = vunpack.c.l.b16 %v6036
    %v6601 = vunpack.c.h.b16 %v6036
    %v6602 = vunpack.c.l.b16 %v6037
    %v6603 = vunpack.c.h.b16 %v6037
    %v6604 = vunpack.c.l.b16 %v6038
    %v6605 = vunpack.c.h.b16 %v6038
    %v6606 = vunpack.c.l.b16 %v6039
    %v6607 = vunpack.c.h.b16 %v6039
    %v6608 = vunpack.c.l.b16 %v6040
    %v6609 = vunpack.c.h.b16 %v6040
    %v6610 = vunpack.c.l.b16 %v6041
    %v6611 = vunpack.c.h.b16 %v6041
    %v6612 = vunpack.c.l.b16 %v6042
    %v6613 = vunpack.c.h.b16 %v6042
    %v6614 = vunpack.c.l.b16 %v6043
    %v6615 = vunpack.c.h.b16 %v6043
    %v6616 = vunpack.c.l.b16 %v6044
    %v6617 = vunpack.c.h.b16 %v6044
    %v6618 = vunpack.c.l.b16 %v6045
    %v6619 = vunpack.c.h.b16 %v6045
    %v6620 = vunpack.c.l.b16 %v6046
    %v6621 = vunpack.c.h.b16 %v6046
    %v6622 = vunpack.c.l.b16 %v6047
    %v6623 = vunpack.c.h.b16 %v6047
    %v6624 = vunpack.c.l.b16 %v6048
    %v6625 = vunpack.c.h.b16 %v6048
    %v6626 = vunpack.c.l.b16 %v6049
    %v6627 = vunpack.c.h.b16 %v6049
    %v6628 = vunpack.c.l.b16 %v6050
    %v6629 = vunpack.c.h.b16 %v6050
    %v6630 = vunpack.c.l.b16 %v6051
    %v6631 = vunpack.c.h.b16 %v6051
    %v6632 = vunpack.c.l.b16 %v6052
    %v6633 = vunpack.c.h.b16 %v6052
    %v6634 = vunpack.c.l.b16 %v6053
    %v6635 = vunpack.c.h.b16 %v6053
    %v6636 = vunpack.c.l.b16 %v6054
    %v6637 = vunpack.c.h.b16 %v6054
    %v6638 = vunpack.c.l.b16 %v6055
    %v6639 = vunpack.c.h.b16 %v6055
    %v6640 = vunpack.c.l.b16 %v6056
    %v6641 = vunpack.c.h.b16 %v6056
    %v6642 = vunpack.c.l.b16 %v6057
    %v6643 = vunpack.c.h.b16 %v6057
    %v6644 = vunpack.c.l.b16 %v6058
    %v6645 = vunpack.c.h.b16 %v6058
    %v6646 = vunpack.c.l.b16 %v6059
    %v6647 = vunpack.c.h.b16 %v6059
    %v6648 = vunpack.c.l.b16 %v6060
    %v6649 = vunpack.c.h.b16 %v6060
    %v6650 = vunpack.c.l.b16 %v6061
    %v6651 = vunpack.c.h.b16 %v6061
    %v6652 = vunpack.c.l.b16 %v6062
    %v6653 = vunpack.c.h.b16 %v6062
    %v6654 = vunpack.c.l.b16 %v6063
    %v6655 = vunpack.c.h.b16 %v6063
    %v6656 = vunpack.c.l.b16 %v6064
    %v6657 = vunpack.c.h.b16 %v6064
    %v6658 = vunpack.c.l.b16 %v6065
    %v6659 = vunpack.c.h.b16 %v6065
    %v6660 = vunpack.c.l.b16 %v6066
    %v6661 = vunpack.c.h.b16 %v6066
    %v6662 = vunpack.c.l.b16 %v6067
    %v6663 = vunpack.c.h.b16 %v6067
    %v6664 = vunpack.c.l.b16 %v6068
    %v6665 = vunpack.c.h.b16 %v6068
    %v6666 = vunpack.c.l.b16 %v6069
    %v6667 = vunpack.c.h.b16 %v6069
    %v6668 = vunpack.c.l.b16 %v6070
    %v6669 = vunpack.c.h.b16 %v6070
    %v6670 = vunpack.c.l.b16 %v6071
    %v6671 = vunpack.c.h.b16 %v6071
    %v6672 = vunpack.c.l.b16 %v6072
    %v6673 = vunpack.c.h.b16 %v6072
    %v6674 = vunpack.c.l.b16 %v6073
    %v6675 = vunpack.c.h.b16 %v6073
    %v6676 = vunpack.c.l.b16 %v6074
    %v6677 = vunpack.c.h.b16 %v6074
    %v6678 = vunpack.c.l.b16 %v6075
    %v6679 = vunpack.c.h.b16 %v6075
    %v6680 = vunpack.c.l.b16 %v6076
    %v6681 = vunpack.c.h.b16 %v6076
    %v6682 = vunpack.c.l.b16 %v6077
    %v6683 = vunpack.c.h.b16 %v6077
    %v6684 = vunpack.c.l.b16 %v6078
    %v6685 = vunpack.c.h.b16 %v6078
    %v6686 = vunpack.c.l.b16 %v6079
    %v6687 = vunpack.c.h.b16 %v6079
    %v6688 = vunpack.c.l.b16 %v6080
    %v6689 = vunpack.c.h.b16 %v6080
    %v6690 = vunpack.c.l.b16 %v6081
    %v6691 = vunpack.c.h.b16 %v6081
    %v6692 = vunpack.c.l.b16 %v6082
    %v6693 = vunpack.c.h.b16 %v6082
    %v6694 = vunpack.c.l.b16 %v6083
    %v6695 = vunpack.c.h.b16 %v6083
    %v6696 = vunpack.c.l.b16 %v6084
    %v6697 = vunpack.c.h.b16 %v6084
    %v6698 = vunpack.c.l.b16 %v6085
    %v6699 = vunpack.c.h.b16 %v6085
    %v6700 = vunpack.c.l.b16 %v6086
    %v6701 = vunpack.c.h.b16 %v6086
    %v6702 = vunpack.c.l.b16 %v6087
    %v6703 = vunpack.c.h.b16 %v6087
    %v6704 = vunpack.c.l.b16 %v6088
    %v6705 = vunpack.c.h.b16 %v6088
    %v6706 = vunpack.c.l.b16 %v6089
    %v6707 = vunpack.c.h.b16 %v6089
    %v6708 = vunpack.c.l.b16 %v6090
    %v6709 = vunpack.c.h.b16 %v6090
    %v6710 = vunpack.c.l.b16 %v6091
    %v6711 = vunpack.c.h.b16 %v6091
    %v6712 = vunpack.c.l.b16 %v6092
    %v6713 = vunpack.c.h.b16 %v6092
    %v6714 = vunpack.c.l.b16 %v6093
    %v6715 = vunpack.c.h.b16 %v6093
    %v6716 = vunpack.c.l.b16 %v6094
    %v6717 = vunpack.c.h.b16 %v6094
    %v6718 = vunpack.c.l.b16 %v6095
    %v6719 = vunpack.c.h.b16 %v6095
    %v6720 = vunpack.c.l.b16 %v6096
    %v6721 = vunpack.c.h.b16 %v6096
    %v6722 = vunpack.c.l.b16 %v6097
    %v6723 = vunpack.c.h.b16 %v6097
    %v6724 = vunpack.c.l.b16 %v6098
    %v6725 = vunpack.c.h.b16 %v6098
    %v6726 = vunpack.c.l.b16 %v6099
    %v6727 = vunpack.c.h.b16 %v6099
    %v6728 = vunpack.c.l.b16 %v6100
    %v6729 = vunpack.c.h.b16 %v6100
    %v6730 = vunpack.c.l.b16 %v6101
    %v6731 = vunpack.c.h.b16 %v6101
    %v6732 = vunpack.c.l.b16 %v6102
    %v6733 = vunpack.c.h.b16 %v6102
    %v6734 = vunpack.c.l.b16 %v6103
    %v6735 = vunpack.c.h.b16 %v6103
    %v6736 = vunpack.c.l.b16 %v6104
    %v6737 = vunpack.c.h.b16 %v6104
    %v6738 = vunpack.c.l.b16 %v6105
    %v6739 = vunpack.c.h.b16 %v6105
    %v6740 = vunpack.c.l.b16 %v6106
    %v6741 = vunpack.c.h.b16 %v6106
    %v6742 = vunpack.c.l.b16 %v6107
    %v6743 = vunpack.c.h.b16 %v6107
    %v6744 = vunpack.c.l.b16 %v6108
    %v6745 = vunpack.c.h.b16 %v6108
    %v6746 = vunpack.c.l.b16 %v6109
    %v6747 = vunpack.c.h.b16 %v6109
    %v6748 = vunpack.c.l.b16 %v6110
    %v6749 = vunpack.c.h.b16 %v6110
    %v6750 = vunpack.c.l.b16 %v6111
    %v6751 = vunpack.c.h.b16 %v6111
    %v6752 = vunpack.c.l.b16 %v6112
    %v6753 = vunpack.c.h.b16 %v6112
    %v6754 = vunpack.c.l.b16 %v6113
    %v6755 = vunpack.c.h.b16 %v6113
    %v6756 = vunpack.c.l.b16 %v6114
    %v6757 = vunpack.c.h.b16 %v6114
    %v6758 = vunpack.c.l.b16 %v6115
    %v6759 = vunpack.c.h.b16 %v6115
    %v6760 = vunpack.c.l.b16 %v6116
    %v6761 = vunpack.c.h.b16 %v6116
    %v6762 = vunpack.c.l.b16 %v6117
    %v6763 = vunpack.c.h.b16 %v6117
    %v6764 = vunpack.c.l.b16 %v6118
    %v6765 = vunpack.c.h.b16 %v6118
    %v6766 = vunpack.c.l.b16 %v6119
    %v6767 = vunpack.c.h.b16 %v6119
    %v6768 = vunpack.c.l.b16 %v6120
    %v6769 = vunpack.c.h.b16 %v6120
    %v6770 = vunpack.c.l.b16 %v6121
    %v6771 = vunpack.c.h.b16 %v6121
    %v6772 = vunpack.c.l.b16 %v6122
    %v6773 = vunpack.c.h.b16 %v6122
    %v6774 = vunpack.c.l.b16 %v6123
    %v6775 = vunpack.c.h.b16 %v6123
    %v6776 = vunpack.c.l.b16 %v6124
    %v6777 = vunpack.c.h.b16 %v6124
    %v6778 = vunpack.c.l.b16 %v6125
    %v6779 = vunpack.c.h.b16 %v6125
    %v6780 = vunpack.c.l.b16 %v6126
    %v6781 = vunpack.c.h.b16 %v6126
    %v6782 = vunpack.c.l.b16 %v6127
    %v6783 = vunpack.c.h.b16 %v6127
    %v6784 = vunpack.c.l.b16 %v6128
    %v6785 = vunpack.c.h.b16 %v6128
    %v6786 = vunpack.c.l.b16 %v6129
    %v6787 = vunpack.c.h.b16 %v6129
    %v6788 = vunpack.c.l.b16 %v6130
    %v6789 = vunpack.c.h.b16 %v6130
    %v6790 = vunpack.c.l.b16 %v6131
    %v6791 = vunpack.c.h.b16 %v6131
    %v6792 = vunpack.c.l.b16 %v6132
    %v6793 = vunpack.c.h.b16 %v6132
    %v6794 = vunpack.c.l.b16 %v6133
    %v6795 = vunpack.c.h.b16 %v6133
    %v6796 = vunpack.c.l.b16 %v6134
    %v6797 = vunpack.c.h.b16 %v6134
    %v6798 = vunpack.c.l.b16 %v6135
    %v6799 = vunpack.c.h.b16 %v6135
    %v6800 = vunpack.c.l.b16 %v6136
    %v6801 = vunpack.c.h.b16 %v6136
    %v6802 = vunpack.c.l.b16 %v6137
    %v6803 = vunpack.c.h.b16 %v6137
    %v6804 = vunpack.c.l.b16 %v6138
    %v6805 = vunpack.c.h.b16 %v6138
    %v6806 = vunpack.c.l.b16 %v6139
    %v6807 = vunpack.c.h.b16 %v6139
    %v6808 = vunpack.c.l.b16 %v6140
    %v6809 = vunpack.c.h.b16 %v6140
    %v6810 = vunpack.c.l.b16 %v6141
    %v6811 = vunpack.c.h.b16 %v6141
    %v6812 = vunpack.c.l.b16 %v6142
    %v6813 = vunpack.c.h.b16 %v6142
    %v6814 = vunpack.c.l.b16 %v6143
    %v6815 = vunpack.c.h.b16 %v6143
    %v6816 = vunpack.c.l.b16 %v6144
    %v6817 = vunpack.c.h.b16 %v6144
    %v6818 = vunpack.c.l.b16 %v6145
    %v6819 = vunpack.c.h.b16 %v6145
    %v6820 = vunpack.c.l.b16 %v6146
    %v6821 = vunpack.c.h.b16 %v6146
    %v6822 = vunpack.c.l.b16 %v6147
    %v6823 = vunpack.c.h.b16 %v6147
    %v6824 = vunpack.c.l.b16 %v6148
    %v6825 = vunpack.c.h.b16 %v6148
    %v6826 = vunpack.c.l.b16 %v6149
    %v6827 = vunpack.c.h.b16 %v6149
    %v6828 = vunpack.c.l.b16 %v6150
    %v6829 = vunpack.c.h.b16 %v6150
    %v6830 = vunpack.c.l.b16 %v6151
    %v6831 = vunpack.c.h.b16 %v6151
    %v6832 = vunpack.c.l.b16 %v6152
    %v6833 = vunpack.c.h.b16 %v6152
    %v6834 = vunpack.c.l.b16 %v6153
    %v6835 = vunpack.c.h.b16 %v6153
    %v6836 = vunpack.c.l.b16 %v6154
    %v6837 = vunpack.c.h.b16 %v6154
    %v6838 = vunpack.c.l.b16 %v6155
    %v6839 = vunpack.c.h.b16 %v6155
    %v6840 = vunpack.c.l.b16 %v6156
    %v6841 = vunpack.c.h.b16 %v6156
    %v6842 = vunpack.c.l.b16 %v6157
    %v6843 = vunpack.c.h.b16 %v6157
    %v6844 = vunpack.c.l.b16 %v6158
    %v6845 = vunpack.c.h.b16 %v6158
    %v6846 = vunpack.c.l.b16 %v6159
    %v6847 = vunpack.c.h.b16 %v6159
    %v6848 = vunpack.c.l.b16 %v6160
    %v6849 = vunpack.c.h.b16 %v6160
    %v6850 = vunpack.c.l.b16 %v6161
    %v6851 = vunpack.c.h.b16 %v6161
    %v6852 = vunpack.c.l.b16 %v6162
    %v6853 = vunpack.c.h.b16 %v6162
    %v6854 = vunpack.c.l.b16 %v6163
    %v6855 = vunpack.c.h.b16 %v6163
    %v6856 = vunpack.c.l.b16 %v6164
    %v6857 = vunpack.c.h.b16 %v6164
    %v6858 = vunpack.c.l.b16 %v6165
    %v6859 = vunpack.c.h.b16 %v6165
    %v6860 = vunpack.c.l.b16 %v6166
    %v6861 = vunpack.c.h.b16 %v6166
    %v6862 = vunpack.c.l.b16 %v6167
    %v6863 = vunpack.c.h.b16 %v6167
    %v6864 = vunpack.c.l.b16 %v6168
    %v6865 = vunpack.c.h.b16 %v6168
    %v6866 = vunpack.c.l.b16 %v6169
    %v6867 = vunpack.c.h.b16 %v6169
    %v6868 = vunpack.c.l.b16 %v6170
    %v6869 = vunpack.c.h.b16 %v6170
    %v6870 = vunpack.c.l.b16 %v6171
    %v6871 = vunpack.c.h.b16 %v6171
    %v6872 = vunpack.c.l.b16 %v6172
    %v6873 = vunpack.c.h.b16 %v6172
    %v6874 = vunpack.c.l.b16 %v6173
    %v6875 = vunpack.c.h.b16 %v6173
    %v6876 = vunpack.c.l.b16 %v6174
    %v6877 = vunpack.c.h.b16 %v6174
    %v6878 = vunpack.c.l.b16 %v6175
    %v6879 = vunpack.c.h.b16 %v6175
    %v6880 = vunpack.c.l.b16 %v6176
    %v6881 = vunpack.c.h.b16 %v6176
    %v6882 = vunpack.c.l.b16 %v6177
    %v6883 = vunpack.c.h.b16 %v6177
    %v6884 = vunpack.c.l.b16 %v6178
    %v6885 = vunpack.c.h.b16 %v6178
    %v6886 = vunpack.c.l.b16 %v6179
    %v6887 = vunpack.c.h.b16 %v6179
    %v6888 = vunpack.c.l.b16 %v6180
    %v6889 = vunpack.c.h.b16 %v6180
    %v6890 = vunpack.c.l.b16 %v6181
    %v6891 = vunpack.c.h.b16 %v6181
    %v6892 = vunpack.c.l.b16 %v6182
    %v6893 = vunpack.c.h.b16 %v6182
    %v6894 = vunpack.c.l.b16 %v6183
    %v6895 = vunpack.c.h.b16 %v6183
    %v6896 = vunpack.c.l.b16 %v6184
    %v6897 = vunpack.c.h.b16 %v6184
    %v6898 = vunpack.c.l.b16 %v6185
    %v6899 = vunpack.c.h.b16 %v6185
    %v6900 = vunpack.c.l.b16 %v6186
    %v6901 = vunpack.c.h.b16 %v6186
    %v6902 = vunpack.c.l.b16 %v6187
    %v6903 = vunpack.c.h.b16 %v6187
    %v6904 = vunpack.c.l.b16 %v6188
    %v6905 = vunpack.c.h.b16 %v6188
    %v6906 = vunpack.c.l.b16 %v6189
    %v6907 = vunpack.c.h.b16 %v6189
    %v6908 = vunpack.c.l.b16 %v6190
    %v6909 = vunpack.c.h.b16 %v6190
    %v6910 = vunpack.c.l.b16 %v6191
    %v6911 = vunpack.c.h.b16 %v6191
    %v6912 = vunpack.c.l.b16 %v6192
    %v6913 = vunpack.c.h.b16 %v6192
    %v6914 = vunpack.c.l.b16 %v6193
    %v6915 = vunpack.c.h.b16 %v6193
    %v6916 = vunpack.c.l.b16 %v6194
    %v6917 = vunpack.c.h.b16 %v6194
    %v6918 = vunpack.c.l.b16 %v6195
    %v6919 = vunpack.c.h.b16 %v6195
    %v6920 = vunpack.c.l.b16 %v6196
    %v6921 = vunpack.c.h.b16 %v6196
    %v6922 = vunpack.c.l.b16 %v6197
    %v6923 = vunpack.c.h.b16 %v6197
    %v6924 = vunpack.c.l.b16 %v6198
    %v6925 = vunpack.c.h.b16 %v6198
    %v6926 = vunpack.c.l.b16 %v6199
    %v6927 = vunpack.c.h.b16 %v6199
    %v6928 = vunpack.c.l.b16 %v6200
    %v6929 = vunpack.c.h.b16 %v6200
    %v6930 = vunpack.c.l.b16 %v6201
    %v6931 = vunpack.c.h.b16 %v6201
    %v6932 = vunpack.c.l.b16 %v6202
    %v6933 = vunpack.c.h.b16 %v6202
    %v6934 = vunpack.c.l.b16 %v6203
    %v6935 = vunpack.c.h.b16 %v6203
    %v6936 = vunpack.c.l.b16 %v6204
    %v6937 = vunpack.c.h.b16 %v6204
    %v6938 = vunpack.c.l.b16 %v6205
    %v6939 = vunpack.c.h.b16 %v6205
    %v6940 = vunpack.c.l.b16 %v6206
    %v6941 = vunpack.c.h.b16 %v6206
    %v6942 = vunpack.c.l.b16 %v6207
    %v6943 = vunpack.c.h.b16 %v6207
    %v6944 = vunpack.c.l.b16 %v6208
    %v6945 = vunpack.c.h.b16 %v6208
    %v6946 = vunpack.c.l.b16 %v6209
    %v6947 = vunpack.c.h.b16 %v6209
    %v6948 = vunpack.c.l.b16 %v6210
    %v6949 = vunpack.c.h.b16 %v6210
    %v6950 = vunpack.c.l.b16 %v6211
    %v6951 = vunpack.c.h.b16 %v6211
    %v6952 = vunpack.c.l.b16 %v6212
    %v6953 = vunpack.c.h.b16 %v6212
    %v6954 = vunpack.c.l.b16 %v6213
    %v6955 = vunpack.c.h.b16 %v6213
    %v6956 = vunpack.c.l.b16 %v6214
    %v6957 = vunpack.c.h.b16 %v6214
    %v6958 = vunpack.c.l.b16 %v6215
    %v6959 = vunpack.c.h.b16 %v6215
    %v6960 = vunpack.c.l.b16 %v6216
    %v6961 = vunpack.c.h.b16 %v6216
    %v6962 = vunpack.c.l.b16 %v6217
    %v6963 = vunpack.c.h.b16 %v6217
    %v6964 = vunpack.c.l.b16 %v6218
    %v6965 = vunpack.c.h.b16 %v6218
    %v6966 = vunpack.c.l.b16 %v6219
    %v6967 = vunpack.c.h.b16 %v6219
    %v6968 = vunpack.c.l.b16 %v6220
    %v6969 = vunpack.c.h.b16 %v6220
    %v6970 = vunpack.c.l.b16 %v6221
    %v6971 = vunpack.c.h.b16 %v6221
    %v6972 = vunpack.c.l.b16 %v6222
    %v6973 = vunpack.c.h.b16 %v6222
    %v6974 = vunpack.c.l.b16 %v6223
    %v6975 = vunpack.c.h.b16 %v6223
    %v6976 = vunpack.c.l.b16 %v6224
    %v6977 = vunpack.c.h.b16 %v6224
    %v6978 = vunpack.c.l.b16 %v6225
    %v6979 = vunpack.c.h.b16 %v6225
    %v6980 = vunpack.c.l.b16 %v6226
    %v6981 = vunpack.c.h.b16 %v6226
    %v6982 = vunpack.c.l.b16 %v6227
    %v6983 = vunpack.c.h.b16 %v6227
    %v6984 = vunpack.c.l.b16 %v6228
    %v6985 = vunpack.c.h.b16 %v6228
    %v6986 = vunpack.c.l.b16 %v6229
    %v6987 = vunpack.c.h.b16 %v6229
    %v6988 = vunpack.c.l.b16 %v6230
    %v6989 = vunpack.c.h.b16 %v6230
    %v6990 = vunpack.c.l.b16 %v6231
    %v6991 = vunpack.c.h.b16 %v6231
    %v6992 = vunpack.c.l.b16 %v6232
    %v6993 = vunpack.c.h.b16 %v6232
    %v6994 = vunpack.c.l.b16 %v6233
    %v6995 = vunpack.c.h.b16 %v6233
    %v6996 = vunpack.c.l.b16 %v6234
    %v6997 = vunpack.c.h.b16 %v6234
    %v6998 = vunpack.c.l.b16 %v6235
    %v6999 = vunpack.c.h.b16 %v6235
    %v7000 = vunpack.c.l.b16 %v6236
    %v7001 = vunpack.c.h.b16 %v6236
    %v7002 = vunpack.c.l.b16 %v6237
    %v7003 = vunpack.c.h.b16 %v6237
    %v7004 = vunpack.c.l.b16 %v6238
    %v7005 = vunpack.c.h.b16 %v6238
    %v7006 = vunpack.c.l.b16 %v6239
    %v7007 = vunpack.c.h.b16 %v6239
    %v7008 = vpack.c.b16 %v6500, %v6496
    %v7009 = vpack.c.b16 %v6501, %v6497
    %v7010 = vpack.c.b16 %v6502, %v6498
    %v7011 = vpack.c.b16 %v6503, %v6499
    %v7012 = vpack.c.b16 %v6508, %v6504
    %v7013 = vpack.c.b16 %v6509, %v6505
    %v7014 = vpack.c.b16 %v6510, %v6506
    %v7015 = vpack.c.b16 %v6511, %v6507
    %v7016 = vpack.c.b16 %v6516, %v6512
    %v7017 = vpack.c.b16 %v6517, %v6513
    %v7018 = vpack.c.b16 %v6518, %v6514
    %v7019 = vpack.c.b16 %v6519, %v6515
    %v7020 = vpack.c.b16 %v6524, %v6520
    %v7021 = vpack.c.b16 %v6525, %v6521
    %v7022 = vpack.c.b16 %v6526, %v6522
    %v7023 = vpack.c.b16 %v6527, %v6523
    %v7024 = vpack.c.b16 %v6532, %v6528
    %v7025 = vpack.c.b16 %v6533, %v6529
    %v7026 = vpack.c.b16 %v6534, %v6530
    %v7027 = vpack.c.b16 %v6535, %v6531
    %v7028 = vpack.c.b16 %v6540, %v6536
    %v7029 = vpack.c.b16 %v6541, %v6537
    %v7030 = vpack.c.b16 %v6542, %v6538
    %v7031 = vpack.c.b16 %v6543, %v6539
    %v7032 = vpack.c.b16 %v6548, %v6544
    %v7033 = vpack.c.b16 %v6549, %v6545
    %v7034 = vpack.c.b16 %v6550, %v6546
    %v7035 = vpack.c.b16 %v6551, %v6547
    %v7036 = vpack.c.b16 %v6556, %v6552
    %v7037 = vpack.c.b16 %v6557, %v6553
    %v7038 = vpack.c.b16 %v6558, %v6554
    %v7039 = vpack.c.b16 %v6559, %v6555
    %v7040 = vpack.c.b16 %v6564, %v6560
    %v7041 = vpack.c.b16 %v6565, %v6561
    %v7042 = vpack.c.b16 %v6566, %v6562
    %v7043 = vpack.c.b16 %v6567, %v6563
    %v7044 = vpack.c.b16 %v6572, %v6568
    %v7045 = vpack.c.b16 %v6573, %v6569
    %v7046 = vpack.c.b16 %v6574, %v6570
    %v7047 = vpack.c.b16 %v6575, %v6571
    %v7048 = vpack.c.b16 %v6580, %v6576
    %v7049 = vpack.c.b16 %v6581, %v6577
    %v7050 = vpack.c.b16 %v6582, %v6578
    %v7051 = vpack.c.b16 %v6583, %v6579
    %v7052 = vpack.c.b16 %v6588, %v6584
    %v7053 = vpack.c.b16 %v6589, %v6585
    %v7054 = vpack.c.b16 %v6590, %v6586
    %v7055 = vpack.c.b16 %v6591, %v6587
    %v7056 = vpack.c.b16 %v6596, %v6592
    %v7057 = vpack.c.b16 %v6597, %v6593
    %v7058 = vpack.c.b16 %v6598, %v6594
    %v7059 = vpack.c.b16 %v6599, %v6595
    %v7060 = vpack.c.b16 %v6604, %v6600
    %v7061 = vpack.c.b16 %v6605, %v6601
    %v7062 = vpack.c.b16 %v6606, %v6602
    %v7063 = vpack.c.b16 %v6607, %v6603
    %v7064 = vpack.c.b16 %v6612, %v6608
    %v7065 = vpack.c.b16 %v6613, %v6609
    %v7066 = vpack.c.b16 %v6614, %v6610
    %v7067 = vpack.c.b16 %v6615, %v6611
    %v7068 = vpack.c.b16 %v6620, %v6616
    %v7069 = vpack.c.b16 %v6621, %v6617
    %v7070 = vpack.c.b16 %v6622, %v6618
    %v7071 = vpack.c.b16 %v6623, %v6619
    %v7072 = vpack.c.b16 %v6628, %v6624
    %v7073 = vpack.c.b16 %v6629, %v6625
    %v7074 = vpack.c.b16 %v6630, %v6626
    %v7075 = vpack.c.b16 %v6631, %v6627
    %v7076 = vpack.c.b16 %v6636, %v6632
    %v7077 = vpack.c.b16 %v6637, %v6633
    %v7078 = vpack.c.b16 %v6638, %v6634
    %v7079 = vpack.c.b16 %v6639, %v6635
    %v7080 = vpack.c.b16 %v6644, %v6640
    %v7081 = vpack.c.b16 %v6645, %v6641
    %v7082 = vpack.c.b16 %v6646, %v6642
    %v7083 = vpack.c.b16 %v6647, %v6643
    %v7084 = vpack.c.b16 %v6652, %v6648
    %v7085 = vpack.c.b16 %v6653, %v6649
    %v7086 = vpack.c.b16 %v6654, %v6650
    %v7087 = vpack.c.b16 %v6655, %v6651
    %v7088 = vpack.c.b16 %v6660, %v6656
    %v7089 = vpack.c.b16 %v6661, %v6657
    %v7090 = vpack.c.b16 %v6662, %v6658
    %v7091 = vpack.c.b16 %v6663, %v6659
    %v7092 = vpack.c.b16 %v6668, %v6664
    %v7093 = vpack.c.b16 %v6669, %v6665
    %v7094 = vpack.c.b16 %v6670, %v6666
    %v7095 = vpack.c.b16 %v6671, %v6667
    %v7096 = vpack.c.b16 %v6676, %v6672
    %v7097 = vpack.c.b16 %v6677, %v6673
    %v7098 = vpack.c.b16 %v6678, %v6674
    %v7099 = vpack.c.b16 %v6679, %v6675
    %v7100 = vpack.c.b16 %v6684, %v6680
    %v7101 = vpack.c.b16 %v6685, %v6681
    %v7102 = vpack.c.b16 %v6686, %v6682
    %v7103 = vpack.c.b16 %v6687, %v6683
    %v7104 = vpack.c.b16 %v6692, %v6688
    %v7105 = vpack.c.b16 %v6693, %v6689
    %v7106 = vpack.c.b16 %v6694, %v6690
    %v7107 = vpack.c.b16 %v6695, %v6691
    %v7108 = vpack.c.b16 %v6700, %v6696
    %v7109 = vpack.c.b16 %v6701, %v6697
    %v7110 = vpack.c.b16 %v6702, %v6698
    %v7111 = vpack.c.b16 %v6703, %v6699
    %v7112 = vpack.c.b16 %v6708, %v6704
    %v7113 = vpack.c.b16 %v6709, %v6705
    %v7114 = vpack.c.b16 %v6710, %v6706
    %v7115 = vpack.c.b16 %v6711, %v6707
    %v7116 = vpack.c.b16 %v6716, %v6712
    %v7117 = vpack.c.b16 %v6717, %v6713
    %v7118 = vpack.c.b16 %v6718, %v6714
    %v7119 = vpack.c.b16 %v6719, %v6715
    %v7120 = vpack.c.b16 %v6724, %v6720
    %v7121 = vpack.c.b16 %v6725, %v6721
    %v7122 = vpack.c.b16 %v6726, %v6722
    %v7123 = vpack.c.b16 %v6727, %v6723
    %v7124 = vpack.c.b16 %v6732, %v6728
    %v7125 = vpack.c.b16 %v6733, %v6729
    %v7126 = vpack.c.b16 %v6734, %v6730
    %v7127 = vpack.c.b16 %v6735, %v6731
    %v7128 = vpack.c.b16 %v6740, %v6736
    %v7129 = vpack.c.b16 %v6741, %v6737
    %v7130 = vpack.c.b16 %v6742, %v6738
    %v7131 = vpack.c.b16 %v6743, %v6739
    %v7132 = vpack.c.b16 %v6748, %v6744
    %v7133 = vpack.c.b16 %v6749, %v6745
    %v7134 = vpack.c.b16 %v6750, %v6746
    %v7135 = vpack.c.b16 %v6751, %v6747
    %v7136 = vpack.c.b16 %v6756, %v6752
    %v7137 = vpack.c.b16 %v6757, %v6753
    %v7138 = vpack.c.b16 %v6758, %v6754
    %v7139 = vpack.c.b16 %v6759, %v6755
    %v7140 = vpack.c.b16 %v6764, %v6760
    %v7141 = vpack.c.b16 %v6765, %v6761
    %v7142 = vpack.c.b16 %v6766, %v6762
    %v7143 = vpack.c.b16 %v6767, %v6763
    %v7144 = vpack.c.b16 %v6772, %v6768
    %v7145 = vpack.c.b16 %v6773, %v6769
    %v7146 = vpack.c.b16 %v6774, %v6770
    %v7147 = vpack.c.b16 %v6775, %v6771
    %v7148 = vpack.c.b16 %v6780, %v6776
    %v7149 = vpack.c.b16 %v6781, %v6777
    %v7150 = vpack.c.b16 %v6782, %v6778
    %v7151 = vpack.c.b16 %v6783, %v6779
    %v7152 = vpack.c.b16 %v6788, %v6784
    %v7153 = vpack.c.b16 %v6789, %v6785
    %v7154 = vpack.c.b16 %v6790, %v6786
    %v7155 = vpack.c.b16 %v6791, %v6787
    %v7156 = vpack.c.b16 %v6796, %v6792
    %v7157 = vpack.c.b16 %v6797, %v6793
    %v7158 = vpack.c.b16 %v6798, %v6794
    %v7159 = vpack.c.b16 %v6799, %v6795
    %v7160 = vpack.c.b16 %v6804, %v6800
    %v7161 = vpack.c.b16 %v6805, %v6801
    %v7162 = vpack.c.b16 %v6806, %v6802
    %v7163 = vpack.c.b16 %v6807, %v6803
    %v7164 = vpack.c.b16 %v6812, %v6808
    %v7165 = vpack.c.b16 %v6813, %v6809
    %v7166 = vpack.c.b16 %v6814, %v6810
    %v7167 = vpack.c.b16 %v6815, %v6811
    %v7168 = vpack.c.b16 %v6820, %v6816
    %v7169 = vpack.c.b16 %v6821, %v6817
    %v7170 = vpack.c.b16 %v6822, %v6818
    %v7171 = vpack.c.b16 %v6823, %v6819
    %v7172 = vpack.c.b16 %v6828, %v6824
    %v7173 = vpack.c.b16 %v6829, %v6825
    %v7174 = vpack.c.b16 %v6830, %v6826
    %v7175 = vpack.c.b16 %v6831, %v6827
    %v7176 = vpack.c.b16 %v6836, %v6832
    %v7177 = vpack.c.b16 %v6837, %v6833
    %v7178 = vpack.c.b16 %v6838, %v6834
    %v7179 = vpack.c.b16 %v6839, %v6835
    %v7180 = vpack.c.b16 %v6844, %v6840
    %v7181 = vpack.c.b16 %v6845, %v6841
    %v7182 = vpack.c.b16 %v6846, %v6842
    %v7183 = vpack.c.b16 %v6847, %v6843
    %v7184 = vpack.c.b16 %v6852, %v6848
    %v7185 = vpack.c.b16 %v6853, %v6849
    %v7186 = vpack.c.b16 %v6854, %v6850
    %v7187 = vpack.c.b16 %v6855, %v6851
    %v7188 = vpack.c.b16 %v6860, %v6856
    %v7189 = vpack.c.b16 %v6861, %v6857
    %v7190 = vpack.c.b16 %v6862, %v6858
    %v7191 = vpack.c.b16 %v6863, %v6859
    %v7192 = vpack.c.b16 %v6868, %v6864
    %v7193 = vpack.c.b16 %v6869, %v6865
    %v7194 = vpack.c.b16 %v6870, %v6866
    %v7195 = vpack.c.b16 %v6871, %v6867
    %v7196 = vpack.c.b16 %v6876, %v6872
    %v7197 = vpack.c.b16 %v6877, %v6873
    %v7198 = vpack.c.b16 %v6878, %v6874
    %v7199 = vpack.c.b16 %v6879, %v6875
    %v7200 = vpack.c.b16 %v6884, %v6880
    %v7201 = vpack.c.b16 %v6885, %v6881
    %v7202 = vpack.c.b16 %v6886, %v6882
    %v7203 = vpack.c.b16 %v6887, %v6883
    %v7204 = vpack.c.b16 %v6892, %v6888
    %v7205 = vpack.c.b16 %v6893, %v6889
    %v7206 = vpack.c.b16 %v6894, %v6890
    %v7207 = vpack.c.b16 %v6895, %v6891
    %v7208 = vpack.c.b16 %v6900, %v6896
    %v7209 = vpack.c.b16 %v6901, %v6897
    %v7210 = vpack.c.b16 %v6902, %v6898
    %v7211 = vpack.c.b16 %v6903, %v6899
    %v7212 = vpack.c.b16 %v6908, %v6904
    %v7213 = vpack.c.b16 %v6909, %v6905
    %v7214 = vpack.c.b16 %v6910, %v6906
    %v7215 = vpack.c.b16 %v6911, %v6907
    %v7216 = vpack.c.b16 %v6916, %v6912
    %v7217 = vpack.c.b16 %v6917, %v6913
    %v7218 = vpack.c.b16 %v6918, %v6914
    %v7219 = vpack.c.b16 %v6919, %v6915
    %v7220 = vpack.c.b16 %v6924, %v6920
    %v7221 = vpack.c.b16 %v6925, %v6921
    %v7222 = vpack.c.b16 %v6926, %v6922
    %v7223 = vpack.c.b16 %v6927, %v6923
    %v7224 = vpack.c.b16 %v6932, %v6928
    %v7225 = vpack.c.b16 %v6933, %v6929
    %v7226 = vpack.c.b16 %v6934, %v6930
    %v7227 = vpack.c.b16 %v6935, %v6931
    %v7228 = vpack.c.b16 %v6940, %v6936
    %v7229 = vpack.c.b16 %v6941, %v6937
    %v7230 = vpack.c.b16 %v6942, %v6938
    %v7231 = vpack.c.b16 %v6943, %v6939
    %v7232 = vpack.c.b16 %v6948, %v6944
    %v7233 = vpack.c.b16 %v6949, %v6945
    %v7234 = vpack.c.b16 %v6950, %v6946
    %v7235 = vpack.c.b16 %v6951, %v6947
    %v7236 = vpack.c.b16 %v6956, %v6952
    %v7237 = vpack.c.b16 %v6957, %v6953
    %v7238 = vpack.c.b16 %v6958, %v6954
    %v7239 = vpack.c.b16 %v6959, %v6955
    %v7240 = vpack.c.b16 %v6964, %v6960
    %v7241 = vpack.c.b16 %v6965, %v6961
    %v7242 = vpack.c.b16 %v6966, %v6962
    %v7243 = vpack.c.b16 %v6967, %v6963
    %v7244 = vpack.c.b16 %v6972, %v6968
    %v7245 = vpack.c.b16 %v6973, %v6969
    %v7246 = vpack.c.b16 %v6974, %v6970
    %v7247 = vpack.c.b16 %v6975, %v6971
    %v7248 = vpack.c.b16 %v6980, %v6976
    %v7249 = vpack.c.b16 %v6981, %v6977
    %v7250 = vpack.c.b16 %v6982, %v6978
    %v7251 = vpack.c.b16 %v6983, %v6979
    %v7252 = vpack.c.b16 %v6988, %v6984
    %v7253 = vpack.c.b16 %v6989, %v6985
    %v7254 = vpack.c.b16 %v6990, %v6986
    %v7255 = vpack.c.b16 %v6991, %v6987
    %v7256 = vpack.c.b16 %v6996, %v6992
    %v7257 = vpack.c.b16 %v6997, %v6993
    %v7258 = vpack.c.b16 %v6998, %v6994
    %v7259 = vpack.c.b16 %v6999, %v6995
    %v7260 = vpack.c.b16 %v7004, %v7000
    %v7261 = vpack.c.b16 %v7005, %v7001
    %v7262 = vpack.c.b16 %v7006, %v7002
    %v7263 = vpack.c.b16 %v7007, %v7003
    %7520 = vmatprep.subr.bf16.mxu0 %v7037
    %7521 = vmatpush1.bf16.msra.mxu0 %v7036
    %7522 = vmatprep.subr.bf16.mxu0 %v7033
    %7523 = vmatpush1.bf16.msra.mxu0 %v7032
    %7524 = vmatprep.subr.bf16.mxu0 %v7029
    %7525 = vmatpush1.bf16.msra.mxu0 %v7028
    %7526 = vmatprep.subr.bf16.mxu0 %v7025
    %7527 = vmatpush1.bf16.msra.mxu0 %v7024
    %7528 = vmatprep.subr.bf16.mxu0 %v7021
    %7529 = vmatpush1.bf16.msra.mxu0 %v7020
    %7530 = vmatprep.subr.bf16.mxu0 %v7017
    %7531 = vmatpush1.bf16.msra.mxu0 %v7016
    %7532 = vmatprep.subr.bf16.mxu0 %v7013
    %7533 = vmatpush1.bf16.msra.mxu0 %v7012
    %7534 = vmatprep.subr.bf16.mxu0 %v7009
    %7535 = vmatpush1.bf16.msra.mxu0 %v7008
    %7536 = vmatprep.subr.bf16.mxu0 %v7069
    %7537 = vmatpush2.bf16.msra.mxu0 %v7068
    %7538 = vmatprep.subr.bf16.mxu0 %v7065
    %7539 = vmatpush2.bf16.msra.mxu0 %v7064
    %7540 = vmatprep.subr.bf16.mxu0 %v7061
    %7541 = vmatpush2.bf16.msra.mxu0 %v7060
    %7542 = vmatprep.subr.bf16.mxu0 %v7057
    %7543 = vmatpush2.bf16.msra.mxu0 %v7056
    %7544 = vmatprep.subr.bf16.mxu0 %v7053
    %7545 = vmatpush2.bf16.msra.mxu0 %v7052
    %7546 = vmatprep.subr.bf16.mxu0 %v7049
    %7547 = vmatpush2.bf16.msra.mxu0 %v7048
    %7548 = vmatprep.subr.bf16.mxu0 %v7045
    %7549 = vmatpush2.bf16.msra.mxu0 %v7044
    %7550 = vmatprep.subr.bf16.mxu0 %v7041
    %7551 = vmatpush2.bf16.msra.mxu0 %v7040
    %7552 = vmatprep.mubr.bf16.mxu0 %v5977
    %7553 = vmatmul.mubr.bf16.gmra.mxu0 %v5976
    %v7554 = vpop.f32.mrf.mxu0
    %v7555 = vadd.f32 0.0, %v7554
    %v7556 = vpop.f32.mrf.mxu0
    %v7557 = vadd.f32 0.0, %v7556
    %v7558 = vpop.f32.mrf.mxu0
    %v7559 = vpop.f32.mrf.mxu0
    %7560 = vdwg.mxu0
    %7561 = vmatprep.subr.bf16.mxu0 %v7101
    %7562 = vmatpush1.bf16.msra.mxu0 %v7100
    %7563 = vmatprep.subr.bf16.mxu0 %v7097
    %7564 = vmatpush1.bf16.msra.mxu0 %v7096
    %7565 = vmatprep.subr.bf16.mxu0 %v7093
    %7566 = vmatpush1.bf16.msra.mxu0 %v7092
    %7567 = vmatprep.subr.bf16.mxu0 %v7089
    %7568 = vmatpush1.bf16.msra.mxu0 %v7088
    %7569 = vmatprep.subr.bf16.mxu0 %v7085
    %7570 = vmatpush1.bf16.msra.mxu0 %v7084
    %7571 = vmatprep.subr.bf16.mxu0 %v7081
    %7572 = vmatpush1.bf16.msra.mxu0 %v7080
    %7573 = vmatprep.subr.bf16.mxu0 %v7077
    %7574 = vmatpush1.bf16.msra.mxu0 %v7076
    %7575 = vmatprep.subr.bf16.mxu0 %v7073
    %7576 = vmatpush1.bf16.msra.mxu0 %v7072
    %7577 = vmatprep.subr.bf16.mxu0 %v7133
    %7578 = vmatpush2.bf16.msra.mxu0 %v7132
    %7579 = vmatprep.subr.bf16.mxu0 %v7129
    %7580 = vmatpush2.bf16.msra.mxu0 %v7128
    %7581 = vmatprep.subr.bf16.mxu0 %v7125
    %7582 = vmatpush2.bf16.msra.mxu0 %v7124
    %7583 = vmatprep.subr.bf16.mxu0 %v7121
    %7584 = vmatpush2.bf16.msra.mxu0 %v7120
    %7585 = vmatprep.subr.bf16.mxu0 %v7117
    %7586 = vmatpush2.bf16.msra.mxu0 %v7116
    %7587 = vmatprep.subr.bf16.mxu0 %v7113
    %7588 = vmatpush2.bf16.msra.mxu0 %v7112
    %7589 = vmatprep.subr.bf16.mxu0 %v7109
    %7590 = vmatpush2.bf16.msra.mxu0 %v7108
    %7591 = vmatprep.subr.bf16.mxu0 %v7105
    %7592 = vmatpush2.bf16.msra.mxu0 %v7104
    %7593 = vmatprep.mubr.bf16.mxu0 %v5979
    %7594 = vmatmul.mubr.bf16.gmra.mxu0 %v5978
    %v7595 = vpop.f32.mrf.mxu0
    %v7596 = vadd.f32 %v7555, %v7595
    %v7597 = vpop.f32.mrf.mxu0
    %v7598 = vadd.f32 %v7557, %v7597
    %v7599 = vpop.f32.mrf.mxu0
    %v7600 = vpop.f32.mrf.mxu0
    %7601 = vdwg.mxu0
    %7602 = vmatprep.subr.bf16.mxu0 %v7165
    %7603 = vmatpush1.bf16.msra.mxu0 %v7164
    %7604 = vmatprep.subr.bf16.mxu0 %v7161
    %7605 = vmatpush1.bf16.msra.mxu0 %v7160
    %7606 = vmatprep.subr.bf16.mxu0 %v7157
    %7607 = vmatpush1.bf16.msra.mxu0 %v7156
    %7608 = vmatprep.subr.bf16.mxu0 %v7153
    %7609 = vmatpush1.bf16.msra.mxu0 %v7152
    %7610 = vmatprep.subr.bf16.mxu0 %v7149
    %7611 = vmatpush1.bf16.msra.mxu0 %v7148
    %7612 = vmatprep.subr.bf16.mxu0 %v7145
    %7613 = vmatpush1.bf16.msra.mxu0 %v7144
    %7614 = vmatprep.subr.bf16.mxu0 %v7141
    %7615 = vmatpush1.bf16.msra.mxu0 %v7140
    %7616 = vmatprep.subr.bf16.mxu0 %v7137
    %7617 = vmatpush1.bf16.msra.mxu0 %v7136
    %7618 = vmatprep.subr.bf16.mxu0 %v7197
    %7619 = vmatpush2.bf16.msra.mxu0 %v7196
    %7620 = vmatprep.subr.bf16.mxu0 %v7193
    %7621 = vmatpush2.bf16.msra.mxu0 %v7192
    %7622 = vmatprep.subr.bf16.mxu0 %v7189
    %7623 = vmatpush2.bf16.msra.mxu0 %v7188
    %7624 = vmatprep.subr.bf16.mxu0 %v7185
    %7625 = vmatpush2.bf16.msra.mxu0 %v7184
    %7626 = vmatprep.subr.bf16.mxu0 %v7181
    %7627 = vmatpush2.bf16.msra.mxu0 %v7180
    %7628 = vmatprep.subr.bf16.mxu0 %v7177
    %7629 = vmatpush2.bf16.msra.mxu0 %v7176
    %7630 = vmatprep.subr.bf16.mxu0 %v7173
    %7631 = vmatpush2.bf16.msra.mxu0 %v7172
    %7632 = vmatprep.subr.bf16.mxu0 %v7169
    %7633 = vmatpush2.bf16.msra.mxu0 %v7168
    %7634 = vmatprep.mubr.bf16.mxu0 %v5981
    %7635 = vmatmul.mubr.bf16.gmra.mxu0 %v5980
    %v7636 = vpop.f32.mrf.mxu0
    %v7637 = vadd.f32 %v7596, %v7636
    %v7638 = vpop.f32.mrf.mxu0
    %v7639 = vadd.f32 %v7598, %v7638
    %v7640 = vpop.f32.mrf.mxu0
    %v7641 = vpop.f32.mrf.mxu0
    %7642 = vdwg.mxu0
    %7643 = vmatprep.subr.bf16.mxu0 %v7229
    %7644 = vmatpush1.bf16.msra.mxu0 %v7228
    %7645 = vmatprep.subr.bf16.mxu0 %v7225
    %7646 = vmatpush1.bf16.msra.mxu0 %v7224
    %7647 = vmatprep.subr.bf16.mxu0 %v7221
    %7648 = vmatpush1.bf16.msra.mxu0 %v7220
    %7649 = vmatprep.subr.bf16.mxu0 %v7217
    %7650 = vmatpush1.bf16.msra.mxu0 %v7216
    %7651 = vmatprep.subr.bf16.mxu0 %v7213
    %7652 = vmatpush1.bf16.msra.mxu0 %v7212
    %7653 = vmatprep.subr.bf16.mxu0 %v7209
    %7654 = vmatpush1.bf16.msra.mxu0 %v7208
    %7655 = vmatprep.subr.bf16.mxu0 %v7205
    %7656 = vmatpush1.bf16.msra.mxu0 %v7204
    %7657 = vmatprep.subr.bf16.mxu0 %v7201
    %7658 = vmatpush1.bf16.msra.mxu0 %v7200
    %7659 = vmatprep.subr.bf16.mxu0 %v7261
    %7660 = vmatpush2.bf16.msra.mxu0 %v7260
    %7661 = vmatprep.subr.bf16.mxu0 %v7257
    %7662 = vmatpush2.bf16.msra.mxu0 %v7256
    %7663 = vmatprep.subr.bf16.mxu0 %v7253
    %7664 = vmatpush2.bf16.msra.mxu0 %v7252
    %7665 = vmatprep.subr.bf16.mxu0 %v7249
    %7666 = vmatpush2.bf16.msra.mxu0 %v7248
    %7667 = vmatprep.subr.bf16.mxu0 %v7245
    %7668 = vmatpush2.bf16.msra.mxu0 %v7244
    %7669 = vmatprep.subr.bf16.mxu0 %v7241
    %7670 = vmatpush2.bf16.msra.mxu0 %v7240
    %7671 = vmatprep.subr.bf16.mxu0 %v7237
    %7672 = vmatpush2.bf16.msra.mxu0 %v7236
    %7673 = vmatprep.subr.bf16.mxu0 %v7233
    %7674 = vmatpush2.bf16.msra.mxu0 %v7232
    %7675 = vmatprep.mubr.bf16.mxu0 %v5983
    %7676 = vmatmul.mubr.bf16.gmra.mxu0 %v5982
    %v7677 = vpop.f32.mrf.mxu0
    %v7678 = vadd.f32 %v7637, %v7677
    %v7679 = vpop.f32.mrf.mxu0
    %v7680 = vadd.f32 %v7639, %v7679
    %v7681 = vpop.f32.mrf.mxu0
    %v7682 = vpop.f32.mrf.mxu0
    %7683 = vdwg.mxu0
    %7684 = vmatprep.subr.bf16.mxu0 %v7039
    %7685 = vmatpush1.bf16.msra.mxu0 %v7038
    %7686 = vmatprep.subr.bf16.mxu0 %v7035
    %7687 = vmatpush1.bf16.msra.mxu0 %v7034
    %7688 = vmatprep.subr.bf16.mxu0 %v7031
    %7689 = vmatpush1.bf16.msra.mxu0 %v7030
    %7690 = vmatprep.subr.bf16.mxu0 %v7027
    %7691 = vmatpush1.bf16.msra.mxu0 %v7026
    %7692 = vmatprep.subr.bf16.mxu0 %v7023
    %7693 = vmatpush1.bf16.msra.mxu0 %v7022
    %7694 = vmatprep.subr.bf16.mxu0 %v7019
    %7695 = vmatpush1.bf16.msra.mxu0 %v7018
    %7696 = vmatprep.subr.bf16.mxu0 %v7015
    %7697 = vmatpush1.bf16.msra.mxu0 %v7014
    %7698 = vmatprep.subr.bf16.mxu0 %v7011
    %7699 = vmatpush1.bf16.msra.mxu0 %v7010
    %7700 = vmatprep.subr.bf16.mxu0 %v7071
    %7701 = vmatpush2.bf16.msra.mxu0 %v7070
    %7702 = vmatprep.subr.bf16.mxu0 %v7067
    %7703 = vmatpush2.bf16.msra.mxu0 %v7066
    %7704 = vmatprep.subr.bf16.mxu0 %v7063
    %7705 = vmatpush2.bf16.msra.mxu0 %v7062
    %7706 = vmatprep.subr.bf16.mxu0 %v7059
    %7707 = vmatpush2.bf16.msra.mxu0 %v7058
    %7708 = vmatprep.subr.bf16.mxu0 %v7055
    %7709 = vmatpush2.bf16.msra.mxu0 %v7054
    %7710 = vmatprep.subr.bf16.mxu0 %v7051
    %7711 = vmatpush2.bf16.msra.mxu0 %v7050
    %7712 = vmatprep.subr.bf16.mxu0 %v7047
    %7713 = vmatpush2.bf16.msra.mxu0 %v7046
    %7714 = vmatprep.subr.bf16.mxu0 %v7043
    %7715 = vmatpush2.bf16.msra.mxu0 %v7042
    %7716 = vmatprep.mubr.bf16.mxu0 %v5977
    %7717 = vmatmul.mubr.bf16.gmra.mxu0 %v5976
    %v7718 = vpop.f32.mrf.mxu0
    %v7719 = vadd.f32 0.0, %v7718
    %v7720 = vpop.f32.mrf.mxu0
    %v7721 = vadd.f32 0.0, %v7720
    %v7722 = vpop.f32.mrf.mxu0
    %v7723 = vpop.f32.mrf.mxu0
    %7724 = vdwg.mxu0
    %7725 = vmatprep.subr.bf16.mxu0 %v7103
    %7726 = vmatpush1.bf16.msra.mxu0 %v7102
    %7727 = vmatprep.subr.bf16.mxu0 %v7099
    %7728 = vmatpush1.bf16.msra.mxu0 %v7098
    %7729 = vmatprep.subr.bf16.mxu0 %v7095
    %7730 = vmatpush1.bf16.msra.mxu0 %v7094
    %7731 = vmatprep.subr.bf16.mxu0 %v7091
    %7732 = vmatpush1.bf16.msra.mxu0 %v7090
    %7733 = vmatprep.subr.bf16.mxu0 %v7087
    %7734 = vmatpush1.bf16.msra.mxu0 %v7086
    %7735 = vmatprep.subr.bf16.mxu0 %v7083
    %7736 = vmatpush1.bf16.msra.mxu0 %v7082
    %7737 = vmatprep.subr.bf16.mxu0 %v7079
    %7738 = vmatpush1.bf16.msra.mxu0 %v7078
    %7739 = vmatprep.subr.bf16.mxu0 %v7075
    %7740 = vmatpush1.bf16.msra.mxu0 %v7074
    %7741 = vmatprep.subr.bf16.mxu0 %v7135
    %7742 = vmatpush2.bf16.msra.mxu0 %v7134
    %7743 = vmatprep.subr.bf16.mxu0 %v7131
    %7744 = vmatpush2.bf16.msra.mxu0 %v7130
    %7745 = vmatprep.subr.bf16.mxu0 %v7127
    %7746 = vmatpush2.bf16.msra.mxu0 %v7126
    %7747 = vmatprep.subr.bf16.mxu0 %v7123
    %7748 = vmatpush2.bf16.msra.mxu0 %v7122
    %7749 = vmatprep.subr.bf16.mxu0 %v7119
    %7750 = vmatpush2.bf16.msra.mxu0 %v7118
    %7751 = vmatprep.subr.bf16.mxu0 %v7115
    %7752 = vmatpush2.bf16.msra.mxu0 %v7114
    %7753 = vmatprep.subr.bf16.mxu0 %v7111
    %7754 = vmatpush2.bf16.msra.mxu0 %v7110
    %7755 = vmatprep.subr.bf16.mxu0 %v7107
    %7756 = vmatpush2.bf16.msra.mxu0 %v7106
    %7757 = vmatprep.mubr.bf16.mxu0 %v5979
    %7758 = vmatmul.mubr.bf16.gmra.mxu0 %v5978
    %v7759 = vpop.f32.mrf.mxu0
    %v7760 = vadd.f32 %v7719, %v7759
    %v7761 = vpop.f32.mrf.mxu0
    %v7762 = vadd.f32 %v7721, %v7761
    %v7763 = vpop.f32.mrf.mxu0
    %v7764 = vpop.f32.mrf.mxu0
    %7765 = vdwg.mxu0
    %7766 = vmatprep.subr.bf16.mxu0 %v7167
    %7767 = vmatpush1.bf16.msra.mxu0 %v7166
    %7768 = vmatprep.subr.bf16.mxu0 %v7163
    %7769 = vmatpush1.bf16.msra.mxu0 %v7162
    %7770 = vmatprep.subr.bf16.mxu0 %v7159
    %7771 = vmatpush1.bf16.msra.mxu0 %v7158
    %7772 = vmatprep.subr.bf16.mxu0 %v7155
    %7773 = vmatpush1.bf16.msra.mxu0 %v7154
    %7774 = vmatprep.subr.bf16.mxu0 %v7151
    %7775 = vmatpush1.bf16.msra.mxu0 %v7150
    %7776 = vmatprep.subr.bf16.mxu0 %v7147
    %7777 = vmatpush1.bf16.msra.mxu0 %v7146
    %7778 = vmatprep.subr.bf16.mxu0 %v7143
    %7779 = vmatpush1.bf16.msra.mxu0 %v7142
    %7780 = vmatprep.subr.bf16.mxu0 %v7139
    %7781 = vmatpush1.bf16.msra.mxu0 %v7138
    %7782 = vmatprep.subr.bf16.mxu0 %v7199
    %7783 = vmatpush2.bf16.msra.mxu0 %v7198
    %7784 = vmatprep.subr.bf16.mxu0 %v7195
    %7785 = vmatpush2.bf16.msra.mxu0 %v7194
    %7786 = vmatprep.subr.bf16.mxu0 %v7191
    %7787 = vmatpush2.bf16.msra.mxu0 %v7190
    %7788 = vmatprep.subr.bf16.mxu0 %v7187
    %7789 = vmatpush2.bf16.msra.mxu0 %v7186
    %7790 = vmatprep.subr.bf16.mxu0 %v7183
    %7791 = vmatpush2.bf16.msra.mxu0 %v7182
    %7792 = vmatprep.subr.bf16.mxu0 %v7179
    %7793 = vmatpush2.bf16.msra.mxu0 %v7178
    %7794 = vmatprep.subr.bf16.mxu0 %v7175
    %7795 = vmatpush2.bf16.msra.mxu0 %v7174
    %7796 = vmatprep.subr.bf16.mxu0 %v7171
    %7797 = vmatpush2.bf16.msra.mxu0 %v7170
    %7798 = vmatprep.mubr.bf16.mxu0 %v5981
    %7799 = vmatmul.mubr.bf16.gmra.mxu0 %v5980
    %v7800 = vpop.f32.mrf.mxu0
    %v7801 = vadd.f32 %v7760, %v7800
    %v7802 = vpop.f32.mrf.mxu0
    %v7803 = vadd.f32 %v7762, %v7802
    %v7804 = vpop.f32.mrf.mxu0
    %v7805 = vpop.f32.mrf.mxu0
    %7806 = vdwg.mxu0
    %7807 = vmatprep.subr.bf16.mxu0 %v7231
    %7808 = vmatpush1.bf16.msra.mxu0 %v7230
    %7809 = vmatprep.subr.bf16.mxu0 %v7227
    %7810 = vmatpush1.bf16.msra.mxu0 %v7226
    %7811 = vmatprep.subr.bf16.mxu0 %v7223
    %7812 = vmatpush1.bf16.msra.mxu0 %v7222
    %7813 = vmatprep.subr.bf16.mxu0 %v7219
    %7814 = vmatpush1.bf16.msra.mxu0 %v7218
    %7815 = vmatprep.subr.bf16.mxu0 %v7215
    %7816 = vmatpush1.bf16.msra.mxu0 %v7214
    %7817 = vmatprep.subr.bf16.mxu0 %v7211
    %7818 = vmatpush1.bf16.msra.mxu0 %v7210
    %7819 = vmatprep.subr.bf16.mxu0 %v7207
    %7820 = vmatpush1.bf16.msra.mxu0 %v7206
    %7821 = vmatprep.subr.bf16.mxu0 %v7203
    %7822 = vmatpush1.bf16.msra.mxu0 %v7202
    %7823 = vmatprep.subr.bf16.mxu0 %v7263
    %7824 = vmatpush2.bf16.msra.mxu0 %v7262
    %7825 = vmatprep.subr.bf16.mxu0 %v7259
    %7826 = vmatpush2.bf16.msra.mxu0 %v7258
    %7827 = vmatprep.subr.bf16.mxu0 %v7255
    %7828 = vmatpush2.bf16.msra.mxu0 %v7254
    %7829 = vmatprep.subr.bf16.mxu0 %v7251
    %7830 = vmatpush2.bf16.msra.mxu0 %v7250
    %7831 = vmatprep.subr.bf16.mxu0 %v7247
    %7832 = vmatpush2.bf16.msra.mxu0 %v7246
    %7833 = vmatprep.subr.bf16.mxu0 %v7243
    %7834 = vmatpush2.bf16.msra.mxu0 %v7242
    %7835 = vmatprep.subr.bf16.mxu0 %v7239
    %7836 = vmatpush2.bf16.msra.mxu0 %v7238
    %7837 = vmatprep.subr.bf16.mxu0 %v7235
    %7838 = vmatpush2.bf16.msra.mxu0 %v7234
    %7839 = vmatprep.mubr.bf16.mxu0 %v5983
    %7840 = vmatmul.mubr.bf16.gmra.mxu0 %v5982
    %v7841 = vpop.f32.mrf.mxu0
    %v7842 = vadd.f32 %v7801, %v7841
    %v7843 = vpop.f32.mrf.mxu0
    %v7844 = vadd.f32 %v7803, %v7843
    %v7845 = vpop.f32.mrf.mxu0
    %v7846 = vpop.f32.mrf.mxu0
    %7847 = vdwg.mxu0
    %v7912 = vunpack.c.l.b16 %v5868
    %v7913 = vunpack.c.h.b16 %v5868
    %v7914 = vunpack.c.l.b16 %v5869
    %v7915 = vunpack.c.h.b16 %v5869
    %v7916 = vunpack.c.l.b16 %v5870
    %v7917 = vunpack.c.h.b16 %v5870
    %v7918 = vunpack.c.l.b16 %v5871
    %v7919 = vunpack.c.h.b16 %v5871
    %v7920 = vunpack.c.l.b16 %v5872
    %v7921 = vunpack.c.h.b16 %v5872
    %v7922 = vunpack.c.l.b16 %v5873
    %v7923 = vunpack.c.h.b16 %v5873
    %v7924 = vunpack.c.l.b16 %v5874
    %v7925 = vunpack.c.h.b16 %v5874
    %v7926 = vunpack.c.l.b16 %v5875
    %v7927 = vunpack.c.h.b16 %v5875
    %v7928 = vunpack.c.l.b16 %v5876
    %v7929 = vunpack.c.h.b16 %v5876
    %v7930 = vunpack.c.l.b16 %v5877
    %v7931 = vunpack.c.h.b16 %v5877
    %v7932 = vunpack.c.l.b16 %v5878
    %v7933 = vunpack.c.h.b16 %v5878
    %v7934 = vunpack.c.l.b16 %v5879
    %v7935 = vunpack.c.h.b16 %v5879
    %v7936 = vunpack.c.l.b16 %v5880
    %v7937 = vunpack.c.h.b16 %v5880
    %v7938 = vunpack.c.l.b16 %v5881
    %v7939 = vunpack.c.h.b16 %v5881
    %v7940 = vunpack.c.l.b16 %v5882
    %v7941 = vunpack.c.h.b16 %v5882
    %v7942 = vunpack.c.l.b16 %v5883
    %v7943 = vunpack.c.h.b16 %v5883
    %v7944 = vunpack.c.l.b16 %v5884
    %v7945 = vunpack.c.h.b16 %v5884
    %v7946 = vunpack.c.l.b16 %v5885
    %v7947 = vunpack.c.h.b16 %v5885
    %v7948 = vunpack.c.l.b16 %v5886
    %v7949 = vunpack.c.h.b16 %v5886
    %v7950 = vunpack.c.l.b16 %v5887
    %v7951 = vunpack.c.h.b16 %v5887
    %v7952 = vunpack.c.l.b16 %v5888
    %v7953 = vunpack.c.h.b16 %v5888
    %v7954 = vunpack.c.l.b16 %v5889
    %v7955 = vunpack.c.h.b16 %v5889
    %v7956 = vunpack.c.l.b16 %v5890
    %v7957 = vunpack.c.h.b16 %v5890
    %v7958 = vunpack.c.l.b16 %v5891
    %v7959 = vunpack.c.h.b16 %v5891
    %v7960 = vunpack.c.l.b16 %v5892
    %v7961 = vunpack.c.h.b16 %v5892
    %v7962 = vunpack.c.l.b16 %v5893
    %v7963 = vunpack.c.h.b16 %v5893
    %v7964 = vunpack.c.l.b16 %v5894
    %v7965 = vunpack.c.h.b16 %v5894
    %v7966 = vunpack.c.l.b16 %v5895
    %v7967 = vunpack.c.h.b16 %v5895
    %v7968 = vunpack.c.l.b16 %v5896
    %v7969 = vunpack.c.h.b16 %v5896
    %v7970 = vunpack.c.l.b16 %v5897
    %v7971 = vunpack.c.h.b16 %v5897
    %v7972 = vunpack.c.l.b16 %v5898
    %v7973 = vunpack.c.h.b16 %v5898
    %v7974 = vunpack.c.l.b16 %v5899
    %v7975 = vunpack.c.h.b16 %v5899
    %v7976 = vunpack.c.l.b16 %v5900
    %v7977 = vunpack.c.h.b16 %v5900
    %v7978 = vunpack.c.l.b16 %v5901
    %v7979 = vunpack.c.h.b16 %v5901
    %v7980 = vunpack.c.l.b16 %v5902
    %v7981 = vunpack.c.h.b16 %v5902
    %v7982 = vunpack.c.l.b16 %v5903
    %v7983 = vunpack.c.h.b16 %v5903
    %v7984 = vunpack.c.l.b16 %v5904
    %v7985 = vunpack.c.h.b16 %v5904
    %v7986 = vunpack.c.l.b16 %v5905
    %v7987 = vunpack.c.h.b16 %v5905
    %v7988 = vunpack.c.l.b16 %v5906
    %v7989 = vunpack.c.h.b16 %v5906
    %v7990 = vunpack.c.l.b16 %v5907
    %v7991 = vunpack.c.h.b16 %v5907
    %v7992 = vunpack.c.l.b16 %v5908
    %v7993 = vunpack.c.h.b16 %v5908
    %v7994 = vunpack.c.l.b16 %v5909
    %v7995 = vunpack.c.h.b16 %v5909
    %v7996 = vunpack.c.l.b16 %v5910
    %v7997 = vunpack.c.h.b16 %v5910
    %v7998 = vunpack.c.l.b16 %v5911
    %v7999 = vunpack.c.h.b16 %v5911
    %v8000 = vunpack.c.l.b16 %v5912
    %v8001 = vunpack.c.h.b16 %v5912
    %v8002 = vunpack.c.l.b16 %v5913
    %v8003 = vunpack.c.h.b16 %v5913
    %v8004 = vunpack.c.l.b16 %v5914
    %v8005 = vunpack.c.h.b16 %v5914
    %v8006 = vunpack.c.l.b16 %v5915
    %v8007 = vunpack.c.h.b16 %v5915
    %v8008 = vunpack.c.l.b16 %v5916
    %v8009 = vunpack.c.h.b16 %v5916
    %v8010 = vunpack.c.l.b16 %v5917
    %v8011 = vunpack.c.h.b16 %v5917
    %v8012 = vunpack.c.l.b16 %v5918
    %v8013 = vunpack.c.h.b16 %v5918
    %v8014 = vunpack.c.l.b16 %v5919
    %v8015 = vunpack.c.h.b16 %v5919
    %v8016 = vunpack.c.l.b16 %v5920
    %v8017 = vunpack.c.h.b16 %v5920
    %v8018 = vunpack.c.l.b16 %v5921
    %v8019 = vunpack.c.h.b16 %v5921
    %v8020 = vunpack.c.l.b16 %v5922
    %v8021 = vunpack.c.h.b16 %v5922
    %v8022 = vunpack.c.l.b16 %v5923
    %v8023 = vunpack.c.h.b16 %v5923
    %v8024 = vunpack.c.l.b16 %v5924
    %v8025 = vunpack.c.h.b16 %v5924
    %v8026 = vunpack.c.l.b16 %v5925
    %v8027 = vunpack.c.h.b16 %v5925
    %v8028 = vunpack.c.l.b16 %v5926
    %v8029 = vunpack.c.h.b16 %v5926
    %v8030 = vunpack.c.l.b16 %v5927
    %v8031 = vunpack.c.h.b16 %v5927
    %v8032 = vunpack.c.l.b16 %v5928
    %v8033 = vunpack.c.h.b16 %v5928
    %v8034 = vunpack.c.l.b16 %v5929
    %v8035 = vunpack.c.h.b16 %v5929
    %v8036 = vunpack.c.l.b16 %v5930
    %v8037 = vunpack.c.h.b16 %v5930
    %v8038 = vunpack.c.l.b16 %v5931
    %v8039 = vunpack.c.h.b16 %v5931
    %v8040 = vpack.c.b16 %v7916, %v7912
    %v8041 = vpack.c.b16 %v7917, %v7913
    %v8042 = vpack.c.b16 %v7918, %v7914
    %v8043 = vpack.c.b16 %v7919, %v7915
    %v8044 = vpack.c.b16 %v7924, %v7920
    %v8045 = vpack.c.b16 %v7925, %v7921
    %v8046 = vpack.c.b16 %v7926, %v7922
    %v8047 = vpack.c.b16 %v7927, %v7923
    %v8048 = vpack.c.b16 %v7932, %v7928
    %v8049 = vpack.c.b16 %v7933, %v7929
    %v8050 = vpack.c.b16 %v7934, %v7930
    %v8051 = vpack.c.b16 %v7935, %v7931
    %v8052 = vpack.c.b16 %v7940, %v7936
    %v8053 = vpack.c.b16 %v7941, %v7937
    %v8054 = vpack.c.b16 %v7942, %v7938
    %v8055 = vpack.c.b16 %v7943, %v7939
    %v8056 = vpack.c.b16 %v7948, %v7944
    %v8057 = vpack.c.b16 %v7949, %v7945
    %v8058 = vpack.c.b16 %v7950, %v7946
    %v8059 = vpack.c.b16 %v7951, %v7947
    %v8060 = vpack.c.b16 %v7956, %v7952
    %v8061 = vpack.c.b16 %v7957, %v7953
    %v8062 = vpack.c.b16 %v7958, %v7954
    %v8063 = vpack.c.b16 %v7959, %v7955
    %v8064 = vpack.c.b16 %v7964, %v7960
    %v8065 = vpack.c.b16 %v7965, %v7961
    %v8066 = vpack.c.b16 %v7966, %v7962
    %v8067 = vpack.c.b16 %v7967, %v7963
    %v8068 = vpack.c.b16 %v7972, %v7968
    %v8069 = vpack.c.b16 %v7973, %v7969
    %v8070 = vpack.c.b16 %v7974, %v7970
    %v8071 = vpack.c.b16 %v7975, %v7971
    %v8072 = vpack.c.b16 %v7980, %v7976
    %v8073 = vpack.c.b16 %v7981, %v7977
    %v8074 = vpack.c.b16 %v7982, %v7978
    %v8075 = vpack.c.b16 %v7983, %v7979
    %v8076 = vpack.c.b16 %v7988, %v7984
    %v8077 = vpack.c.b16 %v7989, %v7985
    %v8078 = vpack.c.b16 %v7990, %v7986
    %v8079 = vpack.c.b16 %v7991, %v7987
    %v8080 = vpack.c.b16 %v7996, %v7992
    %v8081 = vpack.c.b16 %v7997, %v7993
    %v8082 = vpack.c.b16 %v7998, %v7994
    %v8083 = vpack.c.b16 %v7999, %v7995
    %v8084 = vpack.c.b16 %v8004, %v8000
    %v8085 = vpack.c.b16 %v8005, %v8001
    %v8086 = vpack.c.b16 %v8006, %v8002
    %v8087 = vpack.c.b16 %v8007, %v8003
    %v8088 = vpack.c.b16 %v8012, %v8008
    %v8089 = vpack.c.b16 %v8013, %v8009
    %v8090 = vpack.c.b16 %v8014, %v8010
    %v8091 = vpack.c.b16 %v8015, %v8011
    %v8092 = vpack.c.b16 %v8020, %v8016
    %v8093 = vpack.c.b16 %v8021, %v8017
    %v8094 = vpack.c.b16 %v8022, %v8018
    %v8095 = vpack.c.b16 %v8023, %v8019
    %v8096 = vpack.c.b16 %v8028, %v8024
    %v8097 = vpack.c.b16 %v8029, %v8025
    %v8098 = vpack.c.b16 %v8030, %v8026
    %v8099 = vpack.c.b16 %v8031, %v8027
    %v8100 = vpack.c.b16 %v8036, %v8032
    %v8101 = vpack.c.b16 %v8037, %v8033
    %v8102 = vpack.c.b16 %v8038, %v8034
    %v8103 = vpack.c.b16 %v8039, %v8035
    %8168 = vmatprep.subr.bf16.mxu0 %v8069
    %8169 = vmatpush1.bf16.msra.mxu0 %v8068
    %8170 = vmatprep.subr.bf16.mxu0 %v8065
    %8171 = vmatpush1.bf16.msra.mxu0 %v8064
    %8172 = vmatprep.subr.bf16.mxu0 %v8061
    %8173 = vmatpush1.bf16.msra.mxu0 %v8060
    %8174 = vmatprep.subr.bf16.mxu0 %v8057
    %8175 = vmatpush1.bf16.msra.mxu0 %v8056
    %8176 = vmatprep.subr.bf16.mxu0 %v8053
    %8177 = vmatpush1.bf16.msra.mxu0 %v8052
    %8178 = vmatprep.subr.bf16.mxu0 %v8049
    %8179 = vmatpush1.bf16.msra.mxu0 %v8048
    %8180 = vmatprep.subr.bf16.mxu0 %v8045
    %8181 = vmatpush1.bf16.msra.mxu0 %v8044
    %8182 = vmatprep.subr.bf16.mxu0 %v8041
    %8183 = vmatpush1.bf16.msra.mxu0 %v8040
    %8184 = vmatprep.subr.bf16.mxu0 %v8101
    %8185 = vmatpush2.bf16.msra.mxu0 %v8100
    %8186 = vmatprep.subr.bf16.mxu0 %v8097
    %8187 = vmatpush2.bf16.msra.mxu0 %v8096
    %8188 = vmatprep.subr.bf16.mxu0 %v8093
    %8189 = vmatpush2.bf16.msra.mxu0 %v8092
    %8190 = vmatprep.subr.bf16.mxu0 %v8089
    %8191 = vmatpush2.bf16.msra.mxu0 %v8088
    %8192 = vmatprep.subr.bf16.mxu0 %v8085
    %8193 = vmatpush2.bf16.msra.mxu0 %v8084
    %8194 = vmatprep.subr.bf16.mxu0 %v8081
    %8195 = vmatpush2.bf16.msra.mxu0 %v8080
    %8196 = vmatprep.subr.bf16.mxu0 %v8077
    %8197 = vmatpush2.bf16.msra.mxu0 %v8076
    %8198 = vmatprep.subr.bf16.mxu0 %v8073
    %8199 = vmatpush2.bf16.msra.mxu0 %v8072
    %8200 = vmatprep.mubr.bf16.mxu0 %v5867
    %8201 = vmatmul.mubr.bf16.gmra.mxu0 %v5866
    %v8202 = vpop.f32.mrf.mxu0
    %v8203 = vadd.f32 %v7678, %v8202
    %v8204 = vpop.f32.mrf.mxu0
    %v8205 = vadd.f32 %v7680, %v8204
    %v8206 = vpop.f32.mrf.mxu0
    %v8207 = vpop.f32.mrf.mxu0
    %8208 = vdwg.mxu0
    %8209 = vmatprep.subr.bf16.mxu0 %v8071
    %8210 = vmatpush1.bf16.msra.mxu0 %v8070
    %8211 = vmatprep.subr.bf16.mxu0 %v8067
    %8212 = vmatpush1.bf16.msra.mxu0 %v8066
    %8213 = vmatprep.subr.bf16.mxu0 %v8063
    %8214 = vmatpush1.bf16.msra.mxu0 %v8062
    %8215 = vmatprep.subr.bf16.mxu0 %v8059
    %8216 = vmatpush1.bf16.msra.mxu0 %v8058
    %8217 = vmatprep.subr.bf16.mxu0 %v8055
    %8218 = vmatpush1.bf16.msra.mxu0 %v8054
    %8219 = vmatprep.subr.bf16.mxu0 %v8051
    %8220 = vmatpush1.bf16.msra.mxu0 %v8050
    %8221 = vmatprep.subr.bf16.mxu0 %v8047
    %8222 = vmatpush1.bf16.msra.mxu0 %v8046
    %8223 = vmatprep.subr.bf16.mxu0 %v8043
    %8224 = vmatpush1.bf16.msra.mxu0 %v8042
    %8225 = vmatprep.subr.bf16.mxu0 %v8103
    %8226 = vmatpush2.bf16.msra.mxu0 %v8102
    %8227 = vmatprep.subr.bf16.mxu0 %v8099
    %8228 = vmatpush2.bf16.msra.mxu0 %v8098
    %8229 = vmatprep.subr.bf16.mxu0 %v8095
    %8230 = vmatpush2.bf16.msra.mxu0 %v8094
    %8231 = vmatprep.subr.bf16.mxu0 %v8091
    %8232 = vmatpush2.bf16.msra.mxu0 %v8090
    %8233 = vmatprep.subr.bf16.mxu0 %v8087
    %8234 = vmatpush2.bf16.msra.mxu0 %v8086
    %8235 = vmatprep.subr.bf16.mxu0 %v8083
    %8236 = vmatpush2.bf16.msra.mxu0 %v8082
    %8237 = vmatprep.subr.bf16.mxu0 %v8079
    %8238 = vmatpush2.bf16.msra.mxu0 %v8078
    %8239 = vmatprep.subr.bf16.mxu0 %v8075
    %8240 = vmatpush2.bf16.msra.mxu0 %v8074
    %8241 = vmatprep.mubr.bf16.mxu0 %v5867
    %8242 = vmatmul.mubr.bf16.gmra.mxu0 %v5866
    %v8243 = vpop.f32.mrf.mxu0
    %v8244 = vadd.f32 %v7842, %v8243
    %v8245 = vpop.f32.mrf.mxu0
    %v8246 = vadd.f32 %v7844, %v8245
    %v8247 = vpop.f32.mrf.mxu0
    %v8248 = vpop.f32.mrf.mxu0
    %8249 = vdwg.mxu0
    %v8250 = vld [vmem:[#allocation37] sm:$0xf]
    %v8252 = vlaneseq
    %v8253 = vshrl.u32 %v8252, 7
    %v8254 = vsub.s32 0, %v8253
    %v8255 = vrot.slane %v8250, %v8254
    %v8256 = vlaneseq
    %v8257 = vshrl.u32 %v8256, 7
    %v8258 = vsub.s32 1, %v8257
    %v8259 = vrot.slane %v8250, %v8258
    %v8260 = vlaneseq
    %v8261 = vshrl.u32 %v8260, 7
    %v8262 = vsub.s32 2, %v8261
    %v8263 = vrot.slane %v8250, %v8262
    %v8264 = vlaneseq
    %v8265 = vshrl.u32 %v8264, 7
    %v8266 = vsub.s32 3, %v8265
    %v8267 = vrot.slane %v8250, %v8266
    %v8272 = vadd.f32 %v8203, %v8255
    %v8273 = vadd.f32 %v8205, %v8259
    %v8274 = vadd.f32 %v8244, %v8263
    %v8275 = vadd.f32 %v8246, %v8267
    %v8276 = vmax.f32 %v8272, 0.0
    %v8277 = vmax.f32 %v8273, 0.0
    %v8278 = vmax.f32 %v8274, 0.0
    %v8279 = vmax.f32 %v8275, 0.0
    %v8280 = vpack.c.bf16 %v8276, %v8276
    %v8281 = vpack.c.bf16 %v8277, %v8277
    %v8282 = vld [vmem:[%s67] sm:$0xff]
    %v8283 = vld [vmem:[%s67 + $0x8] sm:$0xff]
    %v8284 = vld [vmem:[%s67 + $0x10] sm:$0xff]
    %v8285 = vld [vmem:[%s67 + $0x18] sm:$0xff]
    %v8286 = vld [vmem:[%s67 + $0x20] sm:$0xff]
    %v8287 = vld [vmem:[%s67 + $0x28] sm:$0xff]
    %v8288 = vld [vmem:[%s67 + $0x30] sm:$0xff]
    %v8289 = vld [vmem:[%s67 + $0x38] sm:$0xff]
    %v8290 = vld [vmem:[%s67 + $0x40] sm:$0xff]
    %v8291 = vld [vmem:[%s67 + $0x48] sm:$0xff]
    %v8292 = vld [vmem:[%s67 + $0x50] sm:$0xff]
    %v8293 = vld [vmem:[%s67 + $0x58] sm:$0xff]
    %v8294 = vld [vmem:[%s67 + $0x60] sm:$0xff]
    %v8295 = vld [vmem:[%s67 + $0x68] sm:$0xff]
    %v8296 = vld [vmem:[%s67 + $0x70] sm:$0xff]
    %v8297 = vld [vmem:[%s67 + $0x78] sm:$0xff]
    %v8298 = vld [vmem:[%s67 + $0x80] sm:$0xff]
    %v8299 = vld [vmem:[%s67 + $0x88] sm:$0xff]
    %v8300 = vld [vmem:[%s67 + $0x90] sm:$0xff]
    %v8301 = vld [vmem:[%s67 + $0x98] sm:$0xff]
    %v8302 = vld [vmem:[%s67 + $0xa0] sm:$0xff]
    %v8303 = vld [vmem:[%s67 + $0xa8] sm:$0xff]
    %v8304 = vld [vmem:[%s67 + $0xb0] sm:$0xff]
    %v8305 = vld [vmem:[%s67 + $0xb8] sm:$0xff]
    %v8306 = vld [vmem:[%s67 + $0xc0] sm:$0xff]
    %v8307 = vld [vmem:[%s67 + $0xc8] sm:$0xff]
    %v8308 = vld [vmem:[%s67 + $0xd0] sm:$0xff]
    %v8309 = vld [vmem:[%s67 + $0xd8] sm:$0xff]
    %v8310 = vld [vmem:[%s67 + $0xe0] sm:$0xff]
    %v8311 = vld [vmem:[%s67 + $0xe8] sm:$0xff]
    %v8312 = vld [vmem:[%s67 + $0xf0] sm:$0xff]
    %v8313 = vld [vmem:[%s67 + $0xf8] sm:$0xff]
    %v8314 = vld [vmem:[%s67 + $0x100] sm:$0xff]
    %v8315 = vld [vmem:[%s67 + $0x108] sm:$0xff]
    %v8316 = vld [vmem:[%s67 + $0x110] sm:$0xff]
    %v8317 = vld [vmem:[%s67 + $0x118] sm:$0xff]
    %v8318 = vld [vmem:[%s67 + $0x120] sm:$0xff]
    %v8319 = vld [vmem:[%s67 + $0x128] sm:$0xff]
    %v8320 = vld [vmem:[%s67 + $0x130] sm:$0xff]
    %v8321 = vld [vmem:[%s67 + $0x138] sm:$0xff]
    %v8322 = vld [vmem:[%s67 + $0x140] sm:$0xff]
    %v8323 = vld [vmem:[%s67 + $0x148] sm:$0xff]
    %v8324 = vld [vmem:[%s67 + $0x150] sm:$0xff]
    %v8325 = vld [vmem:[%s67 + $0x158] sm:$0xff]
    %v8326 = vld [vmem:[%s67 + $0x160] sm:$0xff]
    %v8327 = vld [vmem:[%s67 + $0x168] sm:$0xff]
    %v8328 = vld [vmem:[%s67 + $0x170] sm:$0xff]
    %v8329 = vld [vmem:[%s67 + $0x178] sm:$0xff]
    %v8330 = vld [vmem:[%s67 + $0x180] sm:$0xff]
    %v8331 = vld [vmem:[%s67 + $0x188] sm:$0xff]
    %v8332 = vld [vmem:[%s67 + $0x190] sm:$0xff]
    %v8333 = vld [vmem:[%s67 + $0x198] sm:$0xff]
    %v8334 = vld [vmem:[%s67 + $0x1a0] sm:$0xff]
    %v8335 = vld [vmem:[%s67 + $0x1a8] sm:$0xff]
    %v8336 = vld [vmem:[%s67 + $0x1b0] sm:$0xff]
    %v8337 = vld [vmem:[%s67 + $0x1b8] sm:$0xff]
    %v8338 = vld [vmem:[%s67 + $0x1c0] sm:$0xff]
    %v8339 = vld [vmem:[%s67 + $0x1c8] sm:$0xff]
    %v8340 = vld [vmem:[%s67 + $0x1d0] sm:$0xff]
    %v8341 = vld [vmem:[%s67 + $0x1d8] sm:$0xff]
    %v8342 = vld [vmem:[%s67 + $0x1e0] sm:$0xff]
    %v8343 = vld [vmem:[%s67 + $0x1e8] sm:$0xff]
    %v8344 = vld [vmem:[%s67 + $0x1f0] sm:$0xff]
    %v8345 = vld [vmem:[%s67 + $0x1f8] sm:$0xff]
    %v8346 = vld [vmem:[%s67 + $0x200] sm:$0xff]
    %v8347 = vld [vmem:[%s67 + $0x208] sm:$0xff]
    %v8348 = vld [vmem:[%s67 + $0x210] sm:$0xff]
    %v8349 = vld [vmem:[%s67 + $0x218] sm:$0xff]
    %v8350 = vld [vmem:[%s67 + $0x220] sm:$0xff]
    %v8351 = vld [vmem:[%s67 + $0x228] sm:$0xff]
    %v8352 = vld [vmem:[%s67 + $0x230] sm:$0xff]
    %v8353 = vld [vmem:[%s67 + $0x238] sm:$0xff]
    %v8354 = vld [vmem:[%s67 + $0x240] sm:$0xff]
    %v8355 = vld [vmem:[%s67 + $0x248] sm:$0xff]
    %v8356 = vld [vmem:[%s67 + $0x250] sm:$0xff]
    %v8357 = vld [vmem:[%s67 + $0x258] sm:$0xff]
    %v8358 = vld [vmem:[%s67 + $0x260] sm:$0xff]
    %v8359 = vld [vmem:[%s67 + $0x268] sm:$0xff]
    %v8360 = vld [vmem:[%s67 + $0x270] sm:$0xff]
    %v8361 = vld [vmem:[%s67 + $0x278] sm:$0xff]
    %v8362 = vld [vmem:[%s67 + $0x280] sm:$0xff]
    %v8363 = vld [vmem:[%s67 + $0x288] sm:$0xff]
    %v8364 = vld [vmem:[%s67 + $0x290] sm:$0xff]
    %v8365 = vld [vmem:[%s67 + $0x298] sm:$0xff]
    %v8366 = vld [vmem:[%s67 + $0x2a0] sm:$0xff]
    %v8367 = vld [vmem:[%s67 + $0x2a8] sm:$0xff]
    %v8368 = vld [vmem:[%s67 + $0x2b0] sm:$0xff]
    %v8369 = vld [vmem:[%s67 + $0x2b8] sm:$0xff]
    %v8370 = vld [vmem:[%s67 + $0x2c0] sm:$0xff]
    %v8371 = vld [vmem:[%s67 + $0x2c8] sm:$0xff]
    %v8372 = vld [vmem:[%s67 + $0x2d0] sm:$0xff]
    %v8373 = vld [vmem:[%s67 + $0x2d8] sm:$0xff]
    %v8374 = vld [vmem:[%s67 + $0x2e0] sm:$0xff]
    %v8375 = vld [vmem:[%s67 + $0x2e8] sm:$0xff]
    %v8376 = vld [vmem:[%s67 + $0x2f0] sm:$0xff]
    %v8377 = vld [vmem:[%s67 + $0x2f8] sm:$0xff]
    %v8378 = vld [vmem:[%s67 + $0x300] sm:$0xff]
    %v8379 = vld [vmem:[%s67 + $0x308] sm:$0xff]
    %v8380 = vld [vmem:[%s67 + $0x310] sm:$0xff]
    %v8381 = vld [vmem:[%s67 + $0x318] sm:$0xff]
    %v8382 = vld [vmem:[%s67 + $0x320] sm:$0xff]
    %v8383 = vld [vmem:[%s67 + $0x328] sm:$0xff]
    %v8384 = vld [vmem:[%s67 + $0x330] sm:$0xff]
    %v8385 = vld [vmem:[%s67 + $0x338] sm:$0xff]
    %v8386 = vld [vmem:[%s67 + $0x340] sm:$0xff]
    %v8387 = vld [vmem:[%s67 + $0x348] sm:$0xff]
    %v8388 = vld [vmem:[%s67 + $0x350] sm:$0xff]
    %v8389 = vld [vmem:[%s67 + $0x358] sm:$0xff]
    %v8390 = vld [vmem:[%s67 + $0x360] sm:$0xff]
    %v8391 = vld [vmem:[%s67 + $0x368] sm:$0xff]
    %v8392 = vld [vmem:[%s67 + $0x370] sm:$0xff]
    %v8393 = vld [vmem:[%s67 + $0x378] sm:$0xff]
    %v8394 = vld [vmem:[%s67 + $0x380] sm:$0xff]
    %v8395 = vld [vmem:[%s67 + $0x388] sm:$0xff]
    %v8396 = vld [vmem:[%s67 + $0x390] sm:$0xff]
    %v8397 = vld [vmem:[%s67 + $0x398] sm:$0xff]
    %v8398 = vld [vmem:[%s67 + $0x3a0] sm:$0xff]
    %v8399 = vld [vmem:[%s67 + $0x3a8] sm:$0xff]
    %v8400 = vld [vmem:[%s67 + $0x3b0] sm:$0xff]
    %v8401 = vld [vmem:[%s67 + $0x3b8] sm:$0xff]
    %v8402 = vld [vmem:[%s67 + $0x3c0] sm:$0xff]
    %v8403 = vld [vmem:[%s67 + $0x3c8] sm:$0xff]
    %v8404 = vld [vmem:[%s67 + $0x3d0] sm:$0xff]
    %v8405 = vld [vmem:[%s67 + $0x3d8] sm:$0xff]
    %v8406 = vld [vmem:[%s67 + $0x3e0] sm:$0xff]
    %v8407 = vld [vmem:[%s67 + $0x3e8] sm:$0xff]
    %v8408 = vld [vmem:[%s67 + $0x3f0] sm:$0xff]
    %v8409 = vld [vmem:[%s67 + $0x3f8] sm:$0xff]
    %v8410 = vld [vmem:[%s67 + $0x400] sm:$0xff]
    %v8411 = vld [vmem:[%s67 + $0x408] sm:$0xff]
    %v8412 = vld [vmem:[%s67 + $0x410] sm:$0xff]
    %v8413 = vld [vmem:[%s67 + $0x418] sm:$0xff]
    %v8414 = vld [vmem:[%s67 + $0x420] sm:$0xff]
    %v8415 = vld [vmem:[%s67 + $0x428] sm:$0xff]
    %v8416 = vld [vmem:[%s67 + $0x430] sm:$0xff]
    %v8417 = vld [vmem:[%s67 + $0x438] sm:$0xff]
    %v8418 = vld [vmem:[%s67 + $0x440] sm:$0xff]
    %v8419 = vld [vmem:[%s67 + $0x448] sm:$0xff]
    %v8420 = vld [vmem:[%s67 + $0x450] sm:$0xff]
    %v8421 = vld [vmem:[%s67 + $0x458] sm:$0xff]
    %v8422 = vld [vmem:[%s67 + $0x460] sm:$0xff]
    %v8423 = vld [vmem:[%s67 + $0x468] sm:$0xff]
    %v8424 = vld [vmem:[%s67 + $0x470] sm:$0xff]
    %v8425 = vld [vmem:[%s67 + $0x478] sm:$0xff]
    %v8426 = vld [vmem:[%s67 + $0x480] sm:$0xff]
    %v8427 = vld [vmem:[%s67 + $0x488] sm:$0xff]
    %v8428 = vld [vmem:[%s67 + $0x490] sm:$0xff]
    %v8429 = vld [vmem:[%s67 + $0x498] sm:$0xff]
    %v8430 = vld [vmem:[%s67 + $0x4a0] sm:$0xff]
    %v8431 = vld [vmem:[%s67 + $0x4a8] sm:$0xff]
    %v8432 = vld [vmem:[%s67 + $0x4b0] sm:$0xff]
    %v8433 = vld [vmem:[%s67 + $0x4b8] sm:$0xff]
    %v8434 = vld [vmem:[%s67 + $0x4c0] sm:$0xff]
    %v8435 = vld [vmem:[%s67 + $0x4c8] sm:$0xff]
    %v8436 = vld [vmem:[%s67 + $0x4d0] sm:$0xff]
    %v8437 = vld [vmem:[%s67 + $0x4d8] sm:$0xff]
    %v8438 = vld [vmem:[%s67 + $0x4e0] sm:$0xff]
    %v8439 = vld [vmem:[%s67 + $0x4e8] sm:$0xff]
    %v8440 = vld [vmem:[%s67 + $0x4f0] sm:$0xff]
    %v8441 = vld [vmem:[%s67 + $0x4f8] sm:$0xff]
    %v8442 = vld [vmem:[#allocation39] sm:$0xff]
    %v8443 = vld [vmem:[#allocation39 + $0x8] sm:$0x3]
    %v8446 = vlaneseq
    %v8447 = vshrl.u32 %v8446, 7
    %v8448 = vsub.s32 0, %v8447
    %v8449 = vrot.slane %v8442, %v8448
    %v8450 = vlaneseq
    %v8451 = vshrl.u32 %v8450, 7
    %v8452 = vsub.s32 1, %v8451
    %v8453 = vrot.slane %v8442, %v8452
    %v8454 = vlaneseq
    %v8455 = vshrl.u32 %v8454, 7
    %v8456 = vsub.s32 2, %v8455
    %v8457 = vrot.slane %v8442, %v8456
    %v8458 = vlaneseq
    %v8459 = vshrl.u32 %v8458, 7
    %v8460 = vsub.s32 3, %v8459
    %v8461 = vrot.slane %v8442, %v8460
    %v8462 = vlaneseq
    %v8463 = vshrl.u32 %v8462, 7
    %v8464 = vsub.s32 4, %v8463
    %v8465 = vrot.slane %v8442, %v8464
    %v8466 = vlaneseq
    %v8467 = vshrl.u32 %v8466, 7
    %v8468 = vsub.s32 5, %v8467
    %v8469 = vrot.slane %v8442, %v8468
    %v8470 = vlaneseq
    %v8471 = vshrl.u32 %v8470, 7
    %v8472 = vsub.s32 6, %v8471
    %v8473 = vrot.slane %v8442, %v8472
    %v8474 = vlaneseq
    %v8475 = vshrl.u32 %v8474, 7
    %v8476 = vsub.s32 7, %v8475
    %v8477 = vrot.slane %v8442, %v8476
    %v8478 = vlaneseq
    %v8479 = vshrl.u32 %v8478, 7
    %v8480 = vsub.s32 0, %v8479
    %v8481 = vrot.slane %v8443, %v8480
    %v8482 = vlaneseq
    %v8483 = vshrl.u32 %v8482, 7
    %v8484 = vsub.s32 1, %v8483
    %v8485 = vrot.slane %v8443, %v8484
    %v8656 = vunpack.c.l.b16 %v8282
    %v8657 = vunpack.c.h.b16 %v8282
    %v8658 = vunpack.c.l.b16 %v8283
    %v8659 = vunpack.c.h.b16 %v8283
    %v8660 = vunpack.c.l.b16 %v8284
    %v8661 = vunpack.c.h.b16 %v8284
    %v8662 = vunpack.c.l.b16 %v8285
    %v8663 = vunpack.c.h.b16 %v8285
    %v8664 = vunpack.c.l.b16 %v8286
    %v8665 = vunpack.c.h.b16 %v8286
    %v8666 = vunpack.c.l.b16 %v8287
    %v8667 = vunpack.c.h.b16 %v8287
    %v8668 = vunpack.c.l.b16 %v8288
    %v8669 = vunpack.c.h.b16 %v8288
    %v8670 = vunpack.c.l.b16 %v8289
    %v8671 = vunpack.c.h.b16 %v8289
    %v8672 = vunpack.c.l.b16 %v8290
    %v8673 = vunpack.c.h.b16 %v8290
    %v8674 = vunpack.c.l.b16 %v8291
    %v8675 = vunpack.c.h.b16 %v8291
    %v8676 = vunpack.c.l.b16 %v8292
    %v8677 = vunpack.c.h.b16 %v8292
    %v8678 = vunpack.c.l.b16 %v8293
    %v8679 = vunpack.c.h.b16 %v8293
    %v8680 = vunpack.c.l.b16 %v8294
    %v8681 = vunpack.c.h.b16 %v8294
    %v8682 = vunpack.c.l.b16 %v8295
    %v8683 = vunpack.c.h.b16 %v8295
    %v8684 = vunpack.c.l.b16 %v8296
    %v8685 = vunpack.c.h.b16 %v8296
    %v8686 = vunpack.c.l.b16 %v8297
    %v8687 = vunpack.c.h.b16 %v8297
    %v8688 = vunpack.c.l.b16 %v8298
    %v8689 = vunpack.c.h.b16 %v8298
    %v8690 = vunpack.c.l.b16 %v8299
    %v8691 = vunpack.c.h.b16 %v8299
    %v8692 = vunpack.c.l.b16 %v8300
    %v8693 = vunpack.c.h.b16 %v8300
    %v8694 = vunpack.c.l.b16 %v8301
    %v8695 = vunpack.c.h.b16 %v8301
    %v8696 = vunpack.c.l.b16 %v8302
    %v8697 = vunpack.c.h.b16 %v8302
    %v8698 = vunpack.c.l.b16 %v8303
    %v8699 = vunpack.c.h.b16 %v8303
    %v8700 = vunpack.c.l.b16 %v8304
    %v8701 = vunpack.c.h.b16 %v8304
    %v8702 = vunpack.c.l.b16 %v8305
    %v8703 = vunpack.c.h.b16 %v8305
    %v8704 = vunpack.c.l.b16 %v8306
    %v8705 = vunpack.c.h.b16 %v8306
    %v8706 = vunpack.c.l.b16 %v8307
    %v8707 = vunpack.c.h.b16 %v8307
    %v8708 = vunpack.c.l.b16 %v8308
    %v8709 = vunpack.c.h.b16 %v8308
    %v8710 = vunpack.c.l.b16 %v8309
    %v8711 = vunpack.c.h.b16 %v8309
    %v8712 = vunpack.c.l.b16 %v8310
    %v8713 = vunpack.c.h.b16 %v8310
    %v8714 = vunpack.c.l.b16 %v8311
    %v8715 = vunpack.c.h.b16 %v8311
    %v8716 = vunpack.c.l.b16 %v8312
    %v8717 = vunpack.c.h.b16 %v8312
    %v8718 = vunpack.c.l.b16 %v8313
    %v8719 = vunpack.c.h.b16 %v8313
    %v8720 = vunpack.c.l.b16 %v8314
    %v8721 = vunpack.c.h.b16 %v8314
    %v8722 = vunpack.c.l.b16 %v8315
    %v8723 = vunpack.c.h.b16 %v8315
    %v8724 = vunpack.c.l.b16 %v8316
    %v8725 = vunpack.c.h.b16 %v8316
    %v8726 = vunpack.c.l.b16 %v8317
    %v8727 = vunpack.c.h.b16 %v8317
    %v8728 = vunpack.c.l.b16 %v8318
    %v8729 = vunpack.c.h.b16 %v8318
    %v8730 = vunpack.c.l.b16 %v8319
    %v8731 = vunpack.c.h.b16 %v8319
    %v8732 = vunpack.c.l.b16 %v8320
    %v8733 = vunpack.c.h.b16 %v8320
    %v8734 = vunpack.c.l.b16 %v8321
    %v8735 = vunpack.c.h.b16 %v8321
    %v8736 = vunpack.c.l.b16 %v8322
    %v8737 = vunpack.c.h.b16 %v8322
    %v8738 = vunpack.c.l.b16 %v8323
    %v8739 = vunpack.c.h.b16 %v8323
    %v8740 = vunpack.c.l.b16 %v8324
    %v8741 = vunpack.c.h.b16 %v8324
    %v8742 = vunpack.c.l.b16 %v8325
    %v8743 = vunpack.c.h.b16 %v8325
    %v8744 = vunpack.c.l.b16 %v8326
    %v8745 = vunpack.c.h.b16 %v8326
    %v8746 = vunpack.c.l.b16 %v8327
    %v8747 = vunpack.c.h.b16 %v8327
    %v8748 = vunpack.c.l.b16 %v8328
    %v8749 = vunpack.c.h.b16 %v8328
    %v8750 = vunpack.c.l.b16 %v8329
    %v8751 = vunpack.c.h.b16 %v8329
    %v8752 = vunpack.c.l.b16 %v8330
    %v8753 = vunpack.c.h.b16 %v8330
    %v8754 = vunpack.c.l.b16 %v8331
    %v8755 = vunpack.c.h.b16 %v8331
    %v8756 = vunpack.c.l.b16 %v8332
    %v8757 = vunpack.c.h.b16 %v8332
    %v8758 = vunpack.c.l.b16 %v8333
    %v8759 = vunpack.c.h.b16 %v8333
    %v8760 = vunpack.c.l.b16 %v8334
    %v8761 = vunpack.c.h.b16 %v8334
    %v8762 = vunpack.c.l.b16 %v8335
    %v8763 = vunpack.c.h.b16 %v8335
    %v8764 = vunpack.c.l.b16 %v8336
    %v8765 = vunpack.c.h.b16 %v8336
    %v8766 = vunpack.c.l.b16 %v8337
    %v8767 = vunpack.c.h.b16 %v8337
    %v8768 = vunpack.c.l.b16 %v8338
    %v8769 = vunpack.c.h.b16 %v8338
    %v8770 = vunpack.c.l.b16 %v8339
    %v8771 = vunpack.c.h.b16 %v8339
    %v8772 = vunpack.c.l.b16 %v8340
    %v8773 = vunpack.c.h.b16 %v8340
    %v8774 = vunpack.c.l.b16 %v8341
    %v8775 = vunpack.c.h.b16 %v8341
    %v8776 = vunpack.c.l.b16 %v8342
    %v8777 = vunpack.c.h.b16 %v8342
    %v8778 = vunpack.c.l.b16 %v8343
    %v8779 = vunpack.c.h.b16 %v8343
    %v8780 = vunpack.c.l.b16 %v8344
    %v8781 = vunpack.c.h.b16 %v8344
    %v8782 = vunpack.c.l.b16 %v8345
    %v8783 = vunpack.c.h.b16 %v8345
    %v8784 = vunpack.c.l.b16 %v8346
    %v8785 = vunpack.c.h.b16 %v8346
    %v8786 = vunpack.c.l.b16 %v8347
    %v8787 = vunpack.c.h.b16 %v8347
    %v8788 = vunpack.c.l.b16 %v8348
    %v8789 = vunpack.c.h.b16 %v8348
    %v8790 = vunpack.c.l.b16 %v8349
    %v8791 = vunpack.c.h.b16 %v8349
    %v8792 = vunpack.c.l.b16 %v8350
    %v8793 = vunpack.c.h.b16 %v8350
    %v8794 = vunpack.c.l.b16 %v8351
    %v8795 = vunpack.c.h.b16 %v8351
    %v8796 = vunpack.c.l.b16 %v8352
    %v8797 = vunpack.c.h.b16 %v8352
    %v8798 = vunpack.c.l.b16 %v8353
    %v8799 = vunpack.c.h.b16 %v8353
    %v8800 = vunpack.c.l.b16 %v8354
    %v8801 = vunpack.c.h.b16 %v8354
    %v8802 = vunpack.c.l.b16 %v8355
    %v8803 = vunpack.c.h.b16 %v8355
    %v8804 = vunpack.c.l.b16 %v8356
    %v8805 = vunpack.c.h.b16 %v8356
    %v8806 = vunpack.c.l.b16 %v8357
    %v8807 = vunpack.c.h.b16 %v8357
    %v8808 = vunpack.c.l.b16 %v8358
    %v8809 = vunpack.c.h.b16 %v8358
    %v8810 = vunpack.c.l.b16 %v8359
    %v8811 = vunpack.c.h.b16 %v8359
    %v8812 = vunpack.c.l.b16 %v8360
    %v8813 = vunpack.c.h.b16 %v8360
    %v8814 = vunpack.c.l.b16 %v8361
    %v8815 = vunpack.c.h.b16 %v8361
    %v8816 = vunpack.c.l.b16 %v8362
    %v8817 = vunpack.c.h.b16 %v8362
    %v8818 = vunpack.c.l.b16 %v8363
    %v8819 = vunpack.c.h.b16 %v8363
    %v8820 = vunpack.c.l.b16 %v8364
    %v8821 = vunpack.c.h.b16 %v8364
    %v8822 = vunpack.c.l.b16 %v8365
    %v8823 = vunpack.c.h.b16 %v8365
    %v8824 = vunpack.c.l.b16 %v8366
    %v8825 = vunpack.c.h.b16 %v8366
    %v8826 = vunpack.c.l.b16 %v8367
    %v8827 = vunpack.c.h.b16 %v8367
    %v8828 = vunpack.c.l.b16 %v8368
    %v8829 = vunpack.c.h.b16 %v8368
    %v8830 = vunpack.c.l.b16 %v8369
    %v8831 = vunpack.c.h.b16 %v8369
    %v8832 = vunpack.c.l.b16 %v8370
    %v8833 = vunpack.c.h.b16 %v8370
    %v8834 = vunpack.c.l.b16 %v8371
    %v8835 = vunpack.c.h.b16 %v8371
    %v8836 = vunpack.c.l.b16 %v8372
    %v8837 = vunpack.c.h.b16 %v8372
    %v8838 = vunpack.c.l.b16 %v8373
    %v8839 = vunpack.c.h.b16 %v8373
    %v8840 = vunpack.c.l.b16 %v8374
    %v8841 = vunpack.c.h.b16 %v8374
    %v8842 = vunpack.c.l.b16 %v8375
    %v8843 = vunpack.c.h.b16 %v8375
    %v8844 = vunpack.c.l.b16 %v8376
    %v8845 = vunpack.c.h.b16 %v8376
    %v8846 = vunpack.c.l.b16 %v8377
    %v8847 = vunpack.c.h.b16 %v8377
    %v8848 = vunpack.c.l.b16 %v8378
    %v8849 = vunpack.c.h.b16 %v8378
    %v8850 = vunpack.c.l.b16 %v8379
    %v8851 = vunpack.c.h.b16 %v8379
    %v8852 = vunpack.c.l.b16 %v8380
    %v8853 = vunpack.c.h.b16 %v8380
    %v8854 = vunpack.c.l.b16 %v8381
    %v8855 = vunpack.c.h.b16 %v8381
    %v8856 = vunpack.c.l.b16 %v8382
    %v8857 = vunpack.c.h.b16 %v8382
    %v8858 = vunpack.c.l.b16 %v8383
    %v8859 = vunpack.c.h.b16 %v8383
    %v8860 = vunpack.c.l.b16 %v8384
    %v8861 = vunpack.c.h.b16 %v8384
    %v8862 = vunpack.c.l.b16 %v8385
    %v8863 = vunpack.c.h.b16 %v8385
    %v8864 = vunpack.c.l.b16 %v8386
    %v8865 = vunpack.c.h.b16 %v8386
    %v8866 = vunpack.c.l.b16 %v8387
    %v8867 = vunpack.c.h.b16 %v8387
    %v8868 = vunpack.c.l.b16 %v8388
    %v8869 = vunpack.c.h.b16 %v8388
    %v8870 = vunpack.c.l.b16 %v8389
    %v8871 = vunpack.c.h.b16 %v8389
    %v8872 = vunpack.c.l.b16 %v8390
    %v8873 = vunpack.c.h.b16 %v8390
    %v8874 = vunpack.c.l.b16 %v8391
    %v8875 = vunpack.c.h.b16 %v8391
    %v8876 = vunpack.c.l.b16 %v8392
    %v8877 = vunpack.c.h.b16 %v8392
    %v8878 = vunpack.c.l.b16 %v8393
    %v8879 = vunpack.c.h.b16 %v8393
    %v8880 = vunpack.c.l.b16 %v8394
    %v8881 = vunpack.c.h.b16 %v8394
    %v8882 = vunpack.c.l.b16 %v8395
    %v8883 = vunpack.c.h.b16 %v8395
    %v8884 = vunpack.c.l.b16 %v8396
    %v8885 = vunpack.c.h.b16 %v8396
    %v8886 = vunpack.c.l.b16 %v8397
    %v8887 = vunpack.c.h.b16 %v8397
    %v8888 = vunpack.c.l.b16 %v8398
    %v8889 = vunpack.c.h.b16 %v8398
    %v8890 = vunpack.c.l.b16 %v8399
    %v8891 = vunpack.c.h.b16 %v8399
    %v8892 = vunpack.c.l.b16 %v8400
    %v8893 = vunpack.c.h.b16 %v8400
    %v8894 = vunpack.c.l.b16 %v8401
    %v8895 = vunpack.c.h.b16 %v8401
    %v8896 = vunpack.c.l.b16 %v8402
    %v8897 = vunpack.c.h.b16 %v8402
    %v8898 = vunpack.c.l.b16 %v8403
    %v8899 = vunpack.c.h.b16 %v8403
    %v8900 = vunpack.c.l.b16 %v8404
    %v8901 = vunpack.c.h.b16 %v8404
    %v8902 = vunpack.c.l.b16 %v8405
    %v8903 = vunpack.c.h.b16 %v8405
    %v8904 = vunpack.c.l.b16 %v8406
    %v8905 = vunpack.c.h.b16 %v8406
    %v8906 = vunpack.c.l.b16 %v8407
    %v8907 = vunpack.c.h.b16 %v8407
    %v8908 = vunpack.c.l.b16 %v8408
    %v8909 = vunpack.c.h.b16 %v8408
    %v8910 = vunpack.c.l.b16 %v8409
    %v8911 = vunpack.c.h.b16 %v8409
    %v8912 = vunpack.c.l.b16 %v8410
    %v8913 = vunpack.c.h.b16 %v8410
    %v8914 = vunpack.c.l.b16 %v8411
    %v8915 = vunpack.c.h.b16 %v8411
    %v8916 = vunpack.c.l.b16 %v8412
    %v8917 = vunpack.c.h.b16 %v8412
    %v8918 = vunpack.c.l.b16 %v8413
    %v8919 = vunpack.c.h.b16 %v8413
    %v8920 = vunpack.c.l.b16 %v8414
    %v8921 = vunpack.c.h.b16 %v8414
    %v8922 = vunpack.c.l.b16 %v8415
    %v8923 = vunpack.c.h.b16 %v8415
    %v8924 = vunpack.c.l.b16 %v8416
    %v8925 = vunpack.c.h.b16 %v8416
    %v8926 = vunpack.c.l.b16 %v8417
    %v8927 = vunpack.c.h.b16 %v8417
    %v8928 = vunpack.c.l.b16 %v8418
    %v8929 = vunpack.c.h.b16 %v8418
    %v8930 = vunpack.c.l.b16 %v8419
    %v8931 = vunpack.c.h.b16 %v8419
    %v8932 = vunpack.c.l.b16 %v8420
    %v8933 = vunpack.c.h.b16 %v8420
    %v8934 = vunpack.c.l.b16 %v8421
    %v8935 = vunpack.c.h.b16 %v8421
    %v8936 = vunpack.c.l.b16 %v8422
    %v8937 = vunpack.c.h.b16 %v8422
    %v8938 = vunpack.c.l.b16 %v8423
    %v8939 = vunpack.c.h.b16 %v8423
    %v8940 = vunpack.c.l.b16 %v8424
    %v8941 = vunpack.c.h.b16 %v8424
    %v8942 = vunpack.c.l.b16 %v8425
    %v8943 = vunpack.c.h.b16 %v8425
    %v8944 = vunpack.c.l.b16 %v8426
    %v8945 = vunpack.c.h.b16 %v8426
    %v8946 = vunpack.c.l.b16 %v8427
    %v8947 = vunpack.c.h.b16 %v8427
    %v8948 = vunpack.c.l.b16 %v8428
    %v8949 = vunpack.c.h.b16 %v8428
    %v8950 = vunpack.c.l.b16 %v8429
    %v8951 = vunpack.c.h.b16 %v8429
    %v8952 = vunpack.c.l.b16 %v8430
    %v8953 = vunpack.c.h.b16 %v8430
    %v8954 = vunpack.c.l.b16 %v8431
    %v8955 = vunpack.c.h.b16 %v8431
    %v8956 = vunpack.c.l.b16 %v8432
    %v8957 = vunpack.c.h.b16 %v8432
    %v8958 = vunpack.c.l.b16 %v8433
    %v8959 = vunpack.c.h.b16 %v8433
    %v8960 = vunpack.c.l.b16 %v8434
    %v8961 = vunpack.c.h.b16 %v8434
    %v8962 = vunpack.c.l.b16 %v8435
    %v8963 = vunpack.c.h.b16 %v8435
    %v8964 = vunpack.c.l.b16 %v8436
    %v8965 = vunpack.c.h.b16 %v8436
    %v8966 = vunpack.c.l.b16 %v8437
    %v8967 = vunpack.c.h.b16 %v8437
    %v8968 = vunpack.c.l.b16 %v8438
    %v8969 = vunpack.c.h.b16 %v8438
    %v8970 = vunpack.c.l.b16 %v8439
    %v8971 = vunpack.c.h.b16 %v8439
    %v8972 = vunpack.c.l.b16 %v8440
    %v8973 = vunpack.c.h.b16 %v8440
    %v8974 = vunpack.c.l.b16 %v8441
    %v8975 = vunpack.c.h.b16 %v8441
    %v8976 = vpack.c.b16 %v8666, %v8656
    %v8977 = vpack.c.b16 %v8667, %v8657
    %v8978 = vpack.c.b16 %v8668, %v8658
    %v8979 = vpack.c.b16 %v8669, %v8659
    %v8980 = vpack.c.b16 %v8670, %v8660
    %v8981 = vpack.c.b16 %v8671, %v8661
    %v8982 = vpack.c.b16 %v8672, %v8662
    %v8983 = vpack.c.b16 %v8673, %v8663
    %v8984 = vpack.c.b16 %v8674, %v8664
    %v8985 = vpack.c.b16 %v8675, %v8665
    %v8986 = vpack.c.b16 %v8686, %v8676
    %v8987 = vpack.c.b16 %v8687, %v8677
    %v8988 = vpack.c.b16 %v8688, %v8678
    %v8989 = vpack.c.b16 %v8689, %v8679
    %v8990 = vpack.c.b16 %v8690, %v8680
    %v8991 = vpack.c.b16 %v8691, %v8681
    %v8992 = vpack.c.b16 %v8692, %v8682
    %v8993 = vpack.c.b16 %v8693, %v8683
    %v8994 = vpack.c.b16 %v8694, %v8684
    %v8995 = vpack.c.b16 %v8695, %v8685
    %v8996 = vpack.c.b16 %v8706, %v8696
    %v8997 = vpack.c.b16 %v8707, %v8697
    %v8998 = vpack.c.b16 %v8708, %v8698
    %v8999 = vpack.c.b16 %v8709, %v8699
    %v9000 = vpack.c.b16 %v8710, %v8700
    %v9001 = vpack.c.b16 %v8711, %v8701
    %v9002 = vpack.c.b16 %v8712, %v8702
    %v9003 = vpack.c.b16 %v8713, %v8703
    %v9004 = vpack.c.b16 %v8714, %v8704
    %v9005 = vpack.c.b16 %v8715, %v8705
    %v9006 = vpack.c.b16 %v8726, %v8716
    %v9007 = vpack.c.b16 %v8727, %v8717
    %v9008 = vpack.c.b16 %v8728, %v8718
    %v9009 = vpack.c.b16 %v8729, %v8719
    %v9010 = vpack.c.b16 %v8730, %v8720
    %v9011 = vpack.c.b16 %v8731, %v8721
    %v9012 = vpack.c.b16 %v8732, %v8722
    %v9013 = vpack.c.b16 %v8733, %v8723
    %v9014 = vpack.c.b16 %v8734, %v8724
    %v9015 = vpack.c.b16 %v8735, %v8725
    %v9016 = vpack.c.b16 %v8746, %v8736
    %v9017 = vpack.c.b16 %v8747, %v8737
    %v9018 = vpack.c.b16 %v8748, %v8738
    %v9019 = vpack.c.b16 %v8749, %v8739
    %v9020 = vpack.c.b16 %v8750, %v8740
    %v9021 = vpack.c.b16 %v8751, %v8741
    %v9022 = vpack.c.b16 %v8752, %v8742
    %v9023 = vpack.c.b16 %v8753, %v8743
    %v9024 = vpack.c.b16 %v8754, %v8744
    %v9025 = vpack.c.b16 %v8755, %v8745
    %v9026 = vpack.c.b16 %v8766, %v8756
    %v9027 = vpack.c.b16 %v8767, %v8757
    %v9028 = vpack.c.b16 %v8768, %v8758
    %v9029 = vpack.c.b16 %v8769, %v8759
    %v9030 = vpack.c.b16 %v8770, %v8760
    %v9031 = vpack.c.b16 %v8771, %v8761
    %v9032 = vpack.c.b16 %v8772, %v8762
    %v9033 = vpack.c.b16 %v8773, %v8763
    %v9034 = vpack.c.b16 %v8774, %v8764
    %v9035 = vpack.c.b16 %v8775, %v8765
    %v9036 = vpack.c.b16 %v8786, %v8776
    %v9037 = vpack.c.b16 %v8787, %v8777
    %v9038 = vpack.c.b16 %v8788, %v8778
    %v9039 = vpack.c.b16 %v8789, %v8779
    %v9040 = vpack.c.b16 %v8790, %v8780
    %v9041 = vpack.c.b16 %v8791, %v8781
    %v9042 = vpack.c.b16 %v8792, %v8782
    %v9043 = vpack.c.b16 %v8793, %v8783
    %v9044 = vpack.c.b16 %v8794, %v8784
    %v9045 = vpack.c.b16 %v8795, %v8785
    %v9046 = vpack.c.b16 %v8806, %v8796
    %v9047 = vpack.c.b16 %v8807, %v8797
    %v9048 = vpack.c.b16 %v8808, %v8798
    %v9049 = vpack.c.b16 %v8809, %v8799
    %v9050 = vpack.c.b16 %v8810, %v8800
    %v9051 = vpack.c.b16 %v8811, %v8801
    %v9052 = vpack.c.b16 %v8812, %v8802
    %v9053 = vpack.c.b16 %v8813, %v8803
    %v9054 = vpack.c.b16 %v8814, %v8804
    %v9055 = vpack.c.b16 %v8815, %v8805
    %v9056 = vpack.c.b16 %v8826, %v8816
    %v9057 = vpack.c.b16 %v8827, %v8817
    %v9058 = vpack.c.b16 %v8828, %v8818
    %v9059 = vpack.c.b16 %v8829, %v8819
    %v9060 = vpack.c.b16 %v8830, %v8820
    %v9061 = vpack.c.b16 %v8831, %v8821
    %v9062 = vpack.c.b16 %v8832, %v8822
    %v9063 = vpack.c.b16 %v8833, %v8823
    %v9064 = vpack.c.b16 %v8834, %v8824
    %v9065 = vpack.c.b16 %v8835, %v8825
    %v9066 = vpack.c.b16 %v8846, %v8836
    %v9067 = vpack.c.b16 %v8847, %v8837
    %v9068 = vpack.c.b16 %v8848, %v8838
    %v9069 = vpack.c.b16 %v8849, %v8839
    %v9070 = vpack.c.b16 %v8850, %v8840
    %v9071 = vpack.c.b16 %v8851, %v8841
    %v9072 = vpack.c.b16 %v8852, %v8842
    %v9073 = vpack.c.b16 %v8853, %v8843
    %v9074 = vpack.c.b16 %v8854, %v8844
    %v9075 = vpack.c.b16 %v8855, %v8845
    %v9076 = vpack.c.b16 %v8866, %v8856
    %v9077 = vpack.c.b16 %v8867, %v8857
    %v9078 = vpack.c.b16 %v8868, %v8858
    %v9079 = vpack.c.b16 %v8869, %v8859
    %v9080 = vpack.c.b16 %v8870, %v8860
    %v9081 = vpack.c.b16 %v8871, %v8861
    %v9082 = vpack.c.b16 %v8872, %v8862
    %v9083 = vpack.c.b16 %v8873, %v8863
    %v9084 = vpack.c.b16 %v8874, %v8864
    %v9085 = vpack.c.b16 %v8875, %v8865
    %v9086 = vpack.c.b16 %v8886, %v8876
    %v9087 = vpack.c.b16 %v8887, %v8877
    %v9088 = vpack.c.b16 %v8888, %v8878
    %v9089 = vpack.c.b16 %v8889, %v8879
    %v9090 = vpack.c.b16 %v8890, %v8880
    %v9091 = vpack.c.b16 %v8891, %v8881
    %v9092 = vpack.c.b16 %v8892, %v8882
    %v9093 = vpack.c.b16 %v8893, %v8883
    %v9094 = vpack.c.b16 %v8894, %v8884
    %v9095 = vpack.c.b16 %v8895, %v8885
    %v9096 = vpack.c.b16 %v8906, %v8896
    %v9097 = vpack.c.b16 %v8907, %v8897
    %v9098 = vpack.c.b16 %v8908, %v8898
    %v9099 = vpack.c.b16 %v8909, %v8899
    %v9100 = vpack.c.b16 %v8910, %v8900
    %v9101 = vpack.c.b16 %v8911, %v8901
    %v9102 = vpack.c.b16 %v8912, %v8902
    %v9103 = vpack.c.b16 %v8913, %v8903
    %v9104 = vpack.c.b16 %v8914, %v8904
    %v9105 = vpack.c.b16 %v8915, %v8905
    %v9106 = vpack.c.b16 %v8926, %v8916
    %v9107 = vpack.c.b16 %v8927, %v8917
    %v9108 = vpack.c.b16 %v8928, %v8918
    %v9109 = vpack.c.b16 %v8929, %v8919
    %v9110 = vpack.c.b16 %v8930, %v8920
    %v9111 = vpack.c.b16 %v8931, %v8921
    %v9112 = vpack.c.b16 %v8932, %v8922
    %v9113 = vpack.c.b16 %v8933, %v8923
    %v9114 = vpack.c.b16 %v8934, %v8924
    %v9115 = vpack.c.b16 %v8935, %v8925
    %v9116 = vpack.c.b16 %v8946, %v8936
    %v9117 = vpack.c.b16 %v8947, %v8937
    %v9118 = vpack.c.b16 %v8948, %v8938
    %v9119 = vpack.c.b16 %v8949, %v8939
    %v9120 = vpack.c.b16 %v8950, %v8940
    %v9121 = vpack.c.b16 %v8951, %v8941
    %v9122 = vpack.c.b16 %v8952, %v8942
    %v9123 = vpack.c.b16 %v8953, %v8943
    %v9124 = vpack.c.b16 %v8954, %v8944
    %v9125 = vpack.c.b16 %v8955, %v8945
    %v9126 = vpack.c.b16 %v8966, %v8956
    %v9127 = vpack.c.b16 %v8967, %v8957
    %v9128 = vpack.c.b16 %v8968, %v8958
    %v9129 = vpack.c.b16 %v8969, %v8959
    %v9130 = vpack.c.b16 %v8970, %v8960
    %v9131 = vpack.c.b16 %v8971, %v8961
    %v9132 = vpack.c.b16 %v8972, %v8962
    %v9133 = vpack.c.b16 %v8973, %v8963
    %v9134 = vpack.c.b16 %v8974, %v8964
    %v9135 = vpack.c.b16 %v8975, %v8965
    %9296 = vmatprep.subr.bf16.mxu0 %v9047
    %9297 = vmatpush1.bf16.msra.mxu0 %v9046
    %9298 = vmatprep.subr.bf16.mxu0 %v9037
    %9299 = vmatpush1.bf16.msra.mxu0 %v9036
    %9300 = vmatprep.subr.bf16.mxu0 %v9027
    %9301 = vmatpush1.bf16.msra.mxu0 %v9026
    %9302 = vmatprep.subr.bf16.mxu0 %v9017
    %9303 = vmatpush1.bf16.msra.mxu0 %v9016
    %9304 = vmatprep.subr.bf16.mxu0 %v9007
    %9305 = vmatpush1.bf16.msra.mxu0 %v9006
    %9306 = vmatprep.subr.bf16.mxu0 %v8997
    %9307 = vmatpush1.bf16.msra.mxu0 %v8996
    %9308 = vmatprep.subr.bf16.mxu0 %v8987
    %9309 = vmatpush1.bf16.msra.mxu0 %v8986
    %9310 = vmatprep.subr.bf16.mxu0 %v8977
    %9311 = vmatpush1.bf16.msra.mxu0 %v8976
    %9312 = vmatprep.subr.bf16.mxu0 %v9127
    %9313 = vmatpush2.bf16.msra.mxu0 %v9126
    %9314 = vmatprep.subr.bf16.mxu0 %v9117
    %9315 = vmatpush2.bf16.msra.mxu0 %v9116
    %9316 = vmatprep.subr.bf16.mxu0 %v9107
    %9317 = vmatpush2.bf16.msra.mxu0 %v9106
    %9318 = vmatprep.subr.bf16.mxu0 %v9097
    %9319 = vmatpush2.bf16.msra.mxu0 %v9096
    %9320 = vmatprep.subr.bf16.mxu0 %v9087
    %9321 = vmatpush2.bf16.msra.mxu0 %v9086
    %9322 = vmatprep.subr.bf16.mxu0 %v9077
    %9323 = vmatpush2.bf16.msra.mxu0 %v9076
    %9324 = vmatprep.subr.bf16.mxu0 %v9067
    %9325 = vmatpush2.bf16.msra.mxu0 %v9066
    %9326 = vmatprep.subr.bf16.mxu0 %v9057
    %9327 = vmatpush2.bf16.msra.mxu0 %v9056
    %9328 = vmatprep.mubr.bf16.mxu0 %v8281
    %9329 = vmatmul.mubr.bf16.gmra.mxu0 %v8280
    %v9330 = vpop.f32.mrf.mxu0
    %v9331 = vadd.f32 %v8449, %v9330
    %v9332 = vpop.f32.mrf.mxu0
    %v9333 = vadd.f32 %v8453, %v9332
    %v9334 = vpop.f32.mrf.mxu0
    %v9335 = vpop.f32.mrf.mxu0
    %9336 = vdwg.mxu0
    %9337 = vmatprep.subr.bf16.mxu0 %v9049
    %9338 = vmatpush1.bf16.msra.mxu0 %v9048
    %9339 = vmatprep.subr.bf16.mxu0 %v9039
    %9340 = vmatpush1.bf16.msra.mxu0 %v9038
    %9341 = vmatprep.subr.bf16.mxu0 %v9029
    %9342 = vmatpush1.bf16.msra.mxu0 %v9028
    %9343 = vmatprep.subr.bf16.mxu0 %v9019
    %9344 = vmatpush1.bf16.msra.mxu0 %v9018
    %9345 = vmatprep.subr.bf16.mxu0 %v9009
    %9346 = vmatpush1.bf16.msra.mxu0 %v9008
    %9347 = vmatprep.subr.bf16.mxu0 %v8999
    %9348 = vmatpush1.bf16.msra.mxu0 %v8998
    %9349 = vmatprep.subr.bf16.mxu0 %v8989
    %9350 = vmatpush1.bf16.msra.mxu0 %v8988
    %9351 = vmatprep.subr.bf16.mxu0 %v8979
    %9352 = vmatpush1.bf16.msra.mxu0 %v8978
    %9353 = vmatprep.subr.bf16.mxu0 %v9129
    %9354 = vmatpush2.bf16.msra.mxu0 %v9128
    %9355 = vmatprep.subr.bf16.mxu0 %v9119
    %9356 = vmatpush2.bf16.msra.mxu0 %v9118
    %9357 = vmatprep.subr.bf16.mxu0 %v9109
    %9358 = vmatpush2.bf16.msra.mxu0 %v9108
    %9359 = vmatprep.subr.bf16.mxu0 %v9099
    %9360 = vmatpush2.bf16.msra.mxu0 %v9098
    %9361 = vmatprep.subr.bf16.mxu0 %v9089
    %9362 = vmatpush2.bf16.msra.mxu0 %v9088
    %9363 = vmatprep.subr.bf16.mxu0 %v9079
    %9364 = vmatpush2.bf16.msra.mxu0 %v9078
    %9365 = vmatprep.subr.bf16.mxu0 %v9069
    %9366 = vmatpush2.bf16.msra.mxu0 %v9068
    %9367 = vmatprep.subr.bf16.mxu0 %v9059
    %9368 = vmatpush2.bf16.msra.mxu0 %v9058
    %9369 = vmatprep.mubr.bf16.mxu0 %v8281
    %9370 = vmatmul.mubr.bf16.gmra.mxu0 %v8280
    %v9371 = vpop.f32.mrf.mxu0
    %v9372 = vadd.f32 %v8457, %v9371
    %v9373 = vpop.f32.mrf.mxu0
    %v9374 = vadd.f32 %v8461, %v9373
    %v9375 = vpop.f32.mrf.mxu0
    %v9376 = vpop.f32.mrf.mxu0
    %9377 = vdwg.mxu0
    %9378 = vmatprep.subr.bf16.mxu0 %v9051
    %9379 = vmatpush1.bf16.msra.mxu0 %v9050
    %9380 = vmatprep.subr.bf16.mxu0 %v9041
    %9381 = vmatpush1.bf16.msra.mxu0 %v9040
    %9382 = vmatprep.subr.bf16.mxu0 %v9031
    %9383 = vmatpush1.bf16.msra.mxu0 %v9030
    %9384 = vmatprep.subr.bf16.mxu0 %v9021
    %9385 = vmatpush1.bf16.msra.mxu0 %v9020
    %9386 = vmatprep.subr.bf16.mxu0 %v9011
    %9387 = vmatpush1.bf16.msra.mxu0 %v9010
    %9388 = vmatprep.subr.bf16.mxu0 %v9001
    %9389 = vmatpush1.bf16.msra.mxu0 %v9000
    %9390 = vmatprep.subr.bf16.mxu0 %v8991
    %9391 = vmatpush1.bf16.msra.mxu0 %v8990
    %9392 = vmatprep.subr.bf16.mxu0 %v8981
    %9393 = vmatpush1.bf16.msra.mxu0 %v8980
    %9394 = vmatprep.subr.bf16.mxu0 %v9131
    %9395 = vmatpush2.bf16.msra.mxu0 %v9130
    %9396 = vmatprep.subr.bf16.mxu0 %v9121
    %9397 = vmatpush2.bf16.msra.mxu0 %v9120
    %9398 = vmatprep.subr.bf16.mxu0 %v9111
    %9399 = vmatpush2.bf16.msra.mxu0 %v9110
    %9400 = vmatprep.subr.bf16.mxu0 %v9101
    %9401 = vmatpush2.bf16.msra.mxu0 %v9100
    %9402 = vmatprep.subr.bf16.mxu0 %v9091
    %9403 = vmatpush2.bf16.msra.mxu0 %v9090
    %9404 = vmatprep.subr.bf16.mxu0 %v9081
    %9405 = vmatpush2.bf16.msra.mxu0 %v9080
    %9406 = vmatprep.subr.bf16.mxu0 %v9071
    %9407 = vmatpush2.bf16.msra.mxu0 %v9070
    %9408 = vmatprep.subr.bf16.mxu0 %v9061
    %9409 = vmatpush2.bf16.msra.mxu0 %v9060
    %9410 = vmatprep.mubr.bf16.mxu0 %v8281
    %9411 = vmatmul.mubr.bf16.gmra.mxu0 %v8280
    %v9412 = vpop.f32.mrf.mxu0
    %v9413 = vadd.f32 %v8465, %v9412
    %v9414 = vpop.f32.mrf.mxu0
    %v9415 = vadd.f32 %v8469, %v9414
    %v9416 = vpop.f32.mrf.mxu0
    %v9417 = vpop.f32.mrf.mxu0
    %9418 = vdwg.mxu0
    %9419 = vmatprep.subr.bf16.mxu0 %v9053
    %9420 = vmatpush1.bf16.msra.mxu0 %v9052
    %9421 = vmatprep.subr.bf16.mxu0 %v9043
    %9422 = vmatpush1.bf16.msra.mxu0 %v9042
    %9423 = vmatprep.subr.bf16.mxu0 %v9033
    %9424 = vmatpush1.bf16.msra.mxu0 %v9032
    %9425 = vmatprep.subr.bf16.mxu0 %v9023
    %9426 = vmatpush1.bf16.msra.mxu0 %v9022
    %9427 = vmatprep.subr.bf16.mxu0 %v9013
    %9428 = vmatpush1.bf16.msra.mxu0 %v9012
    %9429 = vmatprep.subr.bf16.mxu0 %v9003
    %9430 = vmatpush1.bf16.msra.mxu0 %v9002
    %9431 = vmatprep.subr.bf16.mxu0 %v8993
    %9432 = vmatpush1.bf16.msra.mxu0 %v8992
    %9433 = vmatprep.subr.bf16.mxu0 %v8983
    %9434 = vmatpush1.bf16.msra.mxu0 %v8982
    %9435 = vmatprep.subr.bf16.mxu0 %v9133
    %9436 = vmatpush2.bf16.msra.mxu0 %v9132
    %9437 = vmatprep.subr.bf16.mxu0 %v9123
    %9438 = vmatpush2.bf16.msra.mxu0 %v9122
    %9439 = vmatprep.subr.bf16.mxu0 %v9113
    %9440 = vmatpush2.bf16.msra.mxu0 %v9112
    %9441 = vmatprep.subr.bf16.mxu0 %v9103
    %9442 = vmatpush2.bf16.msra.mxu0 %v9102
    %9443 = vmatprep.subr.bf16.mxu0 %v9093
    %9444 = vmatpush2.bf16.msra.mxu0 %v9092
    %9445 = vmatprep.subr.bf16.mxu0 %v9083
    %9446 = vmatpush2.bf16.msra.mxu0 %v9082
    %9447 = vmatprep.subr.bf16.mxu0 %v9073
    %9448 = vmatpush2.bf16.msra.mxu0 %v9072
    %9449 = vmatprep.subr.bf16.mxu0 %v9063
    %9450 = vmatpush2.bf16.msra.mxu0 %v9062
    %9451 = vmatprep.mubr.bf16.mxu0 %v8281
    %9452 = vmatmul.mubr.bf16.gmra.mxu0 %v8280
    %v9453 = vpop.f32.mrf.mxu0
    %v9454 = vadd.f32 %v8473, %v9453
    %v9455 = vpop.f32.mrf.mxu0
    %v9456 = vadd.f32 %v8477, %v9455
    %v9457 = vpop.f32.mrf.mxu0
    %v9458 = vpop.f32.mrf.mxu0
    %9459 = vdwg.mxu0
    %9460 = vmatprep.subr.bf16.mxu0 %v9055
    %9461 = vmatpush1.bf16.msra.mxu0 %v9054
    %9462 = vmatprep.subr.bf16.mxu0 %v9045
    %9463 = vmatpush1.bf16.msra.mxu0 %v9044
    %9464 = vmatprep.subr.bf16.mxu0 %v9035
    %9465 = vmatpush1.bf16.msra.mxu0 %v9034
    %9466 = vmatprep.subr.bf16.mxu0 %v9025
    %9467 = vmatpush1.bf16.msra.mxu0 %v9024
    %9468 = vmatprep.subr.bf16.mxu0 %v9015
    %9469 = vmatpush1.bf16.msra.mxu0 %v9014
    %9470 = vmatprep.subr.bf16.mxu0 %v9005
    %9471 = vmatpush1.bf16.msra.mxu0 %v9004
    %9472 = vmatprep.subr.bf16.mxu0 %v8995
    %9473 = vmatpush1.bf16.msra.mxu0 %v8994
    %9474 = vmatprep.subr.bf16.mxu0 %v8985
    %9475 = vmatpush1.bf16.msra.mxu0 %v8984
    %9476 = vmatprep.subr.bf16.mxu0 %v9135
    %9477 = vmatpush2.bf16.msra.mxu0 %v9134
    %9478 = vmatprep.subr.bf16.mxu0 %v9125
    %9479 = vmatpush2.bf16.msra.mxu0 %v9124
    %9480 = vmatprep.subr.bf16.mxu0 %v9115
    %9481 = vmatpush2.bf16.msra.mxu0 %v9114
    %9482 = vmatprep.subr.bf16.mxu0 %v9105
    %9483 = vmatpush2.bf16.msra.mxu0 %v9104
    %9484 = vmatprep.subr.bf16.mxu0 %v9095
    %9485 = vmatpush2.bf16.msra.mxu0 %v9094
    %9486 = vmatprep.subr.bf16.mxu0 %v9085
    %9487 = vmatpush2.bf16.msra.mxu0 %v9084
    %9488 = vmatprep.subr.bf16.mxu0 %v9075
    %9489 = vmatpush2.bf16.msra.mxu0 %v9074
    %9490 = vmatprep.subr.bf16.mxu0 %v9065
    %9491 = vmatpush2.bf16.msra.mxu0 %v9064
    %9492 = vmatprep.mubr.bf16.mxu0 %v8281
    %9493 = vmatmul.mubr.bf16.gmra.mxu0 %v8280
    %v9494 = vpop.f32.mrf.mxu0
    %v9495 = vadd.f32 %v8481, %v9494
    %v9496 = vpop.f32.mrf.mxu0
    %v9497 = vadd.f32 %v8485, %v9496
    %v9498 = vpop.f32.mrf.mxu0
    %v9499 = vpop.f32.mrf.mxu0
    %9500 = vdwg.mxu0
    %v9511 = vcombine.low %v9331, %v9333
    %v9512 = vcombine.low %v9372, %v9374
    %v9514 = vunpack.c.l.s4 1983009808
    %v9515 = vunpack.c.0.s8 %v9514
    %v9516 = vlaneseq
    %v9517 = vshrl.u32 %v9516, 7
    %v9518 = vsub.s32 %v9515, %v9517
    %v9519 = vrot.slane %v9511, %v9518
    %v9521 = vunpack.c.l.s4 1983009808
    %v9522 = vunpack.c.0.s8 %v9521
    %v9523 = vlaneseq
    %v9524 = vshrl.u32 %v9523, 7
    %v9525 = vsub.s32 %v9522, %v9524
    %v9526 = vrot.slane %v9512, %v9525
    %v9527 = vcombine.low %v9519, %v9526
    %v9528 = vcombine.low %v9413, %v9415
    %v9529 = vcombine.low %v9454, %v9456
    %v9531 = vunpack.c.l.s4 1983009808
    %v9532 = vunpack.c.0.s8 %v9531
    %v9533 = vlaneseq
    %v9534 = vshrl.u32 %v9533, 7
    %v9535 = vsub.s32 %v9532, %v9534
    %v9536 = vrot.slane %v9528, %v9535
    %v9538 = vunpack.c.l.s4 1983009808
    %v9539 = vunpack.c.0.s8 %v9538
    %v9540 = vlaneseq
    %v9541 = vshrl.u32 %v9540, 7
    %v9542 = vsub.s32 %v9539, %v9541
    %v9543 = vrot.slane %v9529, %v9542
    %v9544 = vcombine.low %v9536, %v9543
    %v9545 = vcombine.low %v9495, %v9497
    %v9547 = vunpack.c.l.s4 1983009808
    %v9548 = vunpack.c.0.s8 %v9547
    %v9549 = vlaneseq
    %v9550 = vshrl.u32 %v9549, 7
    %v9551 = vsub.s32 %v9548, %v9550
    %v9552 = vrot.slane %v9545, %v9551
    %9556 = vst [vmem:[#allocation46] sm:$0xff] %v9527
    %9557 = vst [vmem:[#allocation46 + $0x8] sm:$0xff] %v9544
    %9558 = vst [vmem:[#allocation46 + $0x10] sm:$0xf] %v9552
    %v9559 = vsub.f32 %v9331, %v5860
    %v9560 = vsub.f32 %v9333, %v5863
    %v9561 = vsub.f32 %v9372, %v5941
    %v9562 = vsub.f32 %v9374, %v5949
    %v9563 = vsub.f32 %v9413, %v5948
    %v9564 = vsub.f32 %v9415, %v5950
    %v9565 = vsub.f32 %v9454, %v5958
    %v9566 = vsub.f32 %v9456, %v5966
    %v9567 = vsub.f32 %v9495, %v5965
    %v9568 = vsub.f32 %v9497, %v5967
    %v9569 = vmul.f32 %v9559, %v9559
    %v9570 = vmul.f32 %v9560, %v9560
    %v9571 = vsel %vm3057, %v9569, 0.0
    %v9572 = vsel %vm3057, %v9570, 0.0
    %v9573 = vadd.f32 %v9571, %v9572
    %9574 = vadd.xlane.f32.xlu0 %v9573
    %v9575 = vpop.xlane.xlu0 %9574
    %v9576 = vmul.f32 %v9561, %v9561
    %v9577 = vmul.f32 %v9562, %v9562
    %v9578 = vmul.f32 %v9563, %v9563
    %v9579 = vmul.f32 %v9564, %v9564
    %v9580 = vmul.f32 %v9565, %v9565
    %v9581 = vmul.f32 %v9566, %v9566
    %v9582 = vmul.f32 %v9567, %v9567
    %v9583 = vmul.f32 %v9568, %v9568
    %v9584 = vsel %vm3057, %v9576, 0.0
    %v9585 = vsel %vm3057, %v9577, 0.0
    %v9586 = vadd.f32 %v9584, %v9585
    %v9587 = vsel %vm3057, %v9578, 0.0
    %v9588 = vadd.f32 %v9586, %v9587
    %v9589 = vsel %vm3057, %v9579, 0.0
    %v9590 = vadd.f32 %v9588, %v9589
    %v9591 = vsel %vm3057, %v9580, 0.0
    %v9592 = vadd.f32 %v9590, %v9591
    %v9593 = vsel %vm3057, %v9581, 0.0
    %v9594 = vadd.f32 %v9592, %v9593
    %v9595 = vsel %vm3057, %v9582, 0.0
    %v9596 = vadd.f32 %v9594, %v9595
    %v9597 = vsel %vm3057, %v9583, 0.0
    %v9598 = vadd.f32 %v9596, %v9597
    %9599 = vadd.xlane.f32.xlu0 %v9598
    %v9600 = vpop.xlane.xlu0 %9599
    %v9601 = vadd.f32 %v9575, %v9600
    %v9602 = vsel %vm3057, %v9601, 0.0
    %v9603 = vrot.slane %v9602, 4
    %v9604 = vadd.f32 %v9602, %v9603
    %v9605 = vrot.slane %v9604, 2
    %v9606 = vadd.f32 %v9604, %v9605
    %v9607 = vrot.slane %v9606, 1
    %v9608 = vadd.f32 %v9606, %v9607
    %v9609 = vrcp.pop 2560.0
    %v9610 = vmul.f32 %v9608, %v9609
    %v9611 = vand.u32 2147483647, %v8276
    %v9612 = vand.u32 2147483647, %v8277
    %v9613 = vsel %vm3057, %v9611, 0.0
    %v9614 = vsel %vm3057, %v9612, 0.0
    %v9615 = vadd.f32 %v9613, %v9614
    %9616 = vadd.xlane.f32.xlu0 %v9615
    %v9617 = vpop.xlane.xlu0 %9616
    %v9618 = vsel %vm3057, %v9617, 0.0
    %v9619 = vrot.slane %v9618, 4
    %v9620 = vadd.f32 %v9618, %v9619
    %v9621 = vrot.slane %v9620, 2
    %v9622 = vadd.f32 %v9620, %v9621
    %v9623 = vrot.slane %v9622, 1
    %v9624 = vadd.f32 %v9622, %v9623
    %v9625 = vrcp.pop 512.0
    %v9626 = vmul.f32 %v9624, %v9625
    %v9627 = vmul.f32 %v9626, 0.001
    %v9628 = vadd.f32 %v9610, %v9627
    %v9629 = vld [vmem:[%s71] sm:$0xff]
    %v9630 = vld [vmem:[%s71 + $0x8] sm:$0xff]
    %v9631 = vld [vmem:[%s71 + $0x10] sm:$0xff]
    %v9632 = vld [vmem:[%s71 + $0x18] sm:$0xff]
    %v9633 = vld [vmem:[%s71 + $0x20] sm:$0xff]
    %v9634 = vld [vmem:[%s71 + $0x28] sm:$0xff]
    %v9635 = vld [vmem:[%s71 + $0x30] sm:$0xff]
    %v9636 = vld [vmem:[%s71 + $0x38] sm:$0xff]
    %v9637 = vld [vmem:[%s71 + $0x40] sm:$0xff]
    %v9638 = vld [vmem:[%s71 + $0x48] sm:$0xff]
    %v9639 = vld [vmem:[%s71 + $0x50] sm:$0xff]
    %v9640 = vld [vmem:[%s71 + $0x58] sm:$0xff]
    %v9641 = vld [vmem:[%s71 + $0x60] sm:$0xff]
    %v9642 = vld [vmem:[%s71 + $0x68] sm:$0xff]
    %v9643 = vld [vmem:[%s71 + $0x70] sm:$0xff]
    %v9644 = vld [vmem:[%s71 + $0x78] sm:$0xff]
    %v9645 = vld [vmem:[#allocation40] sm:$0x1]
    %v9647 = vlaneseq
    %v9648 = vshrl.u32 %v9647, 7
    %v9649 = vsub.s32 0, %v9648
    %v9650 = vrot.slane %v9645, %v9649
    %9652 = vmatprep.subr.mxu0 0.0
    %9653 = vmatpush1.msra.mxu0 %v9644
    %9654 = vmatprep.subr.mxu0 0.0
    %9655 = vmatpush1.msra.mxu0 %v9643
    %9656 = vmatprep.subr.mxu0 0.0
    %9657 = vmatpush1.msra.mxu0 %v9642
    %9658 = vmatprep.subr.mxu0 0.0
    %9659 = vmatpush1.msra.mxu0 %v9641
    %9660 = vmatprep.subr.mxu0 0.0
    %9661 = vmatpush1.msra.mxu0 %v9640
    %9662 = vmatprep.subr.mxu0 0.0
    %9663 = vmatpush1.msra.mxu0 %v9639
    %9664 = vmatprep.subr.mxu0 0.0
    %9665 = vmatpush1.msra.mxu0 %v9638
    %9666 = vmatprep.subr.mxu0 0.0
    %9667 = vmatpush1.msra.mxu0 %v9637
    %9668 = vmatprep.subr.mxu0 0.0
    %9669 = vmatpush1.msra.mxu0 %v9636
    %9670 = vmatprep.subr.mxu0 0.0
    %9671 = vmatpush1.msra.mxu0 %v9635
    %9672 = vmatprep.subr.mxu0 0.0
    %9673 = vmatpush1.msra.mxu0 %v9634
    %9674 = vmatprep.subr.mxu0 0.0
    %9675 = vmatpush1.msra.mxu0 %v9633
    %9676 = vmatprep.subr.mxu0 0.0
    %9677 = vmatpush1.msra.mxu0 %v9632
    %9678 = vmatprep.subr.mxu0 0.0
    %9679 = vmatpush1.msra.mxu0 %v9631
    %9680 = vmatprep.subr.mxu0 0.0
    %9681 = vmatpush1.msra.mxu0 %v9630
    %9682 = vmatprep.subr.mxu0 0.0
    %9683 = vmatpush1.msra.mxu0 %v9629
    %9684 = vmatprep.subr.mxu0 0.0
    %9685 = vmatpush2.msra.mxu0 0.0
    %9686 = vmatprep.subr.mxu0 0.0
    %9687 = vmatpush2.msra.mxu0 0.0
    %9688 = vmatprep.subr.mxu0 0.0
    %9689 = vmatpush2.msra.mxu0 0.0
    %9690 = vmatprep.subr.mxu0 0.0
    %9691 = vmatpush2.msra.mxu0 0.0
    %9692 = vmatprep.subr.mxu0 0.0
    %9693 = vmatpush2.msra.mxu0 0.0
    %9694 = vmatprep.subr.mxu0 0.0
    %9695 = vmatpush2.msra.mxu0 0.0
    %9696 = vmatprep.subr.mxu0 0.0
    %9697 = vmatpush2.msra.mxu0 0.0
    %9698 = vmatprep.subr.mxu0 0.0
    %9699 = vmatpush2.msra.mxu0 0.0
    %9700 = vmatprep.subr.mxu0 0.0
    %9701 = vmatpush2.msra.mxu0 0.0
    %9702 = vmatprep.subr.mxu0 0.0
    %9703 = vmatpush2.msra.mxu0 0.0
    %9704 = vmatprep.subr.mxu0 0.0
    %9705 = vmatpush2.msra.mxu0 0.0
    %9706 = vmatprep.subr.mxu0 0.0
    %9707 = vmatpush2.msra.mxu0 0.0
    %9708 = vmatprep.subr.mxu0 0.0
    %9709 = vmatpush2.msra.mxu0 0.0
    %9710 = vmatprep.subr.mxu0 0.0
    %9711 = vmatpush2.msra.mxu0 0.0
    %9712 = vmatprep.subr.mxu0 0.0
    %9713 = vmatpush2.msra.mxu0 0.0
    %9714 = vmatprep.subr.mxu0 0.0
    %9715 = vmatpush2.msra.mxu0 0.0
    %9716 = vmatprep.mubr.f32.mxu0 0.0
    %9717 = vmatmul.mubr.f32.gmra.mxu0 %v8278
    %v9718 = vpop.f32.mrf.mxu0
    %v9719 = vadd.f32 %v9650, %v9718
    %v9720 = vpop.f32.mrf.mxu0
    %9721 = vdwg.mxu0
    %v9722 = vmax.f32 %v9719, 0.0
    %v9723 = vld [vmem:[%s75] sm:$0xff]
    %v9724 = vld [vmem:[%s75 + $0x8] sm:$0xff]
    %v9725 = vld [vmem:[#allocation42] sm:$0x1]
    %v9727 = vlaneseq
    %v9728 = vshrl.u32 %v9727, 7
    %v9729 = vsub.s32 0, %v9728
    %v9730 = vrot.slane %v9725, %v9729
    %v9733 = vsel %vm539, %v9722, 0
    %9735 = vmatprep.subr.mxu0 0.0
    %9736 = vmatpush1.msra.mxu0 0.0
    %9737 = vmatprep.subr.mxu0 0.0
    %9738 = vmatpush1.msra.mxu0 0.0
    %9739 = vmatprep.subr.mxu0 0.0
    %9740 = vmatpush1.msra.mxu0 0.0
    %9741 = vmatprep.subr.mxu0 0.0
    %9742 = vmatpush1.msra.mxu0 0.0
    %9743 = vmatprep.subr.mxu0 0.0
    %9744 = vmatpush1.msra.mxu0 0.0
    %9745 = vmatprep.subr.mxu0 0.0
    %9746 = vmatpush1.msra.mxu0 0.0
    %9747 = vmatprep.subr.mxu0 0.0
    %9748 = vmatpush1.msra.mxu0 0.0
    %9749 = vmatprep.subr.mxu0 0.0
    %9750 = vmatpush1.msra.mxu0 0.0
    %9751 = vmatprep.subr.mxu0 0.0
    %9752 = vmatpush1.msra.mxu0 0.0
    %9753 = vmatprep.subr.mxu0 0.0
    %9754 = vmatpush1.msra.mxu0 0.0
    %9755 = vmatprep.subr.mxu0 0.0
    %9756 = vmatpush1.msra.mxu0 0.0
    %9757 = vmatprep.subr.mxu0 0.0
    %9758 = vmatpush1.msra.mxu0 0.0
    %9759 = vmatprep.subr.mxu0 0.0
    %9760 = vmatpush1.msra.mxu0 0.0
    %9761 = vmatprep.subr.mxu0 0.0
    %9762 = vmatpush1.msra.mxu0 0.0
    %9763 = vmatprep.subr.mxu0 0.0
    %9764 = vmatpush1.msra.mxu0 %v9724
    %9765 = vmatprep.subr.mxu0 0.0
    %9766 = vmatpush1.msra.mxu0 %v9723
    %9767 = vmatprep.subr.mxu0 0.0
    %9768 = vmatpush2.msra.mxu0 0.0
    %9769 = vmatprep.subr.mxu0 0.0
    %9770 = vmatpush2.msra.mxu0 0.0
    %9771 = vmatprep.subr.mxu0 0.0
    %9772 = vmatpush2.msra.mxu0 0.0
    %9773 = vmatprep.subr.mxu0 0.0
    %9774 = vmatpush2.msra.mxu0 0.0
    %9775 = vmatprep.subr.mxu0 0.0
    %9776 = vmatpush2.msra.mxu0 0.0
    %9777 = vmatprep.subr.mxu0 0.0
    %9778 = vmatpush2.msra.mxu0 0.0
    %9779 = vmatprep.subr.mxu0 0.0
    %9780 = vmatpush2.msra.mxu0 0.0
    %9781 = vmatprep.subr.mxu0 0.0
    %9782 = vmatpush2.msra.mxu0 0.0
    %9783 = vmatprep.subr.mxu0 0.0
    %9784 = vmatpush2.msra.mxu0 0.0
    %9785 = vmatprep.subr.mxu0 0.0
    %9786 = vmatpush2.msra.mxu0 0.0
    %9787 = vmatprep.subr.mxu0 0.0
    %9788 = vmatpush2.msra.mxu0 0.0
    %9789 = vmatprep.subr.mxu0 0.0
    %9790 = vmatpush2.msra.mxu0 0.0
    %9791 = vmatprep.subr.mxu0 0.0
    %9792 = vmatpush2.msra.mxu0 0.0
    %9793 = vmatprep.subr.mxu0 0.0
    %9794 = vmatpush2.msra.mxu0 0.0
    %9795 = vmatprep.subr.mxu0 0.0
    %9796 = vmatpush2.msra.mxu0 0.0
    %9797 = vmatprep.subr.mxu0 0.0
    %9798 = vmatpush2.msra.mxu0 0.0
    %9799 = vmatprep.mubr.f32.mxu0 0.0
    %9800 = vmatmul.mubr.f32.gmra.mxu0 %v9733
    %v9801 = vpop.f32.mrf.mxu0
    %v9802 = vadd.f32 %v9730, %v9801
    %v9803 = vpop.f32.mrf.mxu0
    %9804 = vdwg.mxu0
    %v9805 = vld [vmem:[%s79] sm:$0xff]
    %v9806 = vld [vmem:[%s79 + $0x8] sm:$0xff]
    %v9807 = vld [vmem:[%s79 + $0x10] sm:$0xff]
    %v9808 = vld [vmem:[%s79 + $0x18] sm:$0xff]
    %v9809 = vld [vmem:[%s79 + $0x20] sm:$0xff]
    %v9810 = vld [vmem:[%s79 + $0x28] sm:$0xff]
    %v9811 = vld [vmem:[%s79 + $0x30] sm:$0xff]
    %v9812 = vld [vmem:[%s79 + $0x38] sm:$0xff]
    %v9813 = vld [vmem:[%s79 + $0x40] sm:$0xff]
    %v9814 = vld [vmem:[%s79 + $0x48] sm:$0xff]
    %v9815 = vld [vmem:[%s79 + $0x50] sm:$0xff]
    %v9816 = vld [vmem:[%s79 + $0x58] sm:$0xff]
    %v9817 = vld [vmem:[%s79 + $0x60] sm:$0xff]
    %v9818 = vld [vmem:[%s79 + $0x68] sm:$0xff]
    %v9819 = vld [vmem:[%s79 + $0x70] sm:$0xff]
    %v9820 = vld [vmem:[%s79 + $0x78] sm:$0xff]
    %v9821 = vld [vmem:[#allocation43] sm:$0x1]
    %v9823 = vlaneseq
    %v9824 = vshrl.u32 %v9823, 7
    %v9825 = vsub.s32 0, %v9824
    %v9826 = vrot.slane %v9821, %v9825
    %9828 = vmatprep.subr.mxu0 0.0
    %9829 = vmatpush1.msra.mxu0 %v9820
    %9830 = vmatprep.subr.mxu0 0.0
    %9831 = vmatpush1.msra.mxu0 %v9819
    %9832 = vmatprep.subr.mxu0 0.0
    %9833 = vmatpush1.msra.mxu0 %v9818
    %9834 = vmatprep.subr.mxu0 0.0
    %9835 = vmatpush1.msra.mxu0 %v9817
    %9836 = vmatprep.subr.mxu0 0.0
    %9837 = vmatpush1.msra.mxu0 %v9816
    %9838 = vmatprep.subr.mxu0 0.0
    %9839 = vmatpush1.msra.mxu0 %v9815
    %9840 = vmatprep.subr.mxu0 0.0
    %9841 = vmatpush1.msra.mxu0 %v9814
    %9842 = vmatprep.subr.mxu0 0.0
    %9843 = vmatpush1.msra.mxu0 %v9813
    %9844 = vmatprep.subr.mxu0 0.0
    %9845 = vmatpush1.msra.mxu0 %v9812
    %9846 = vmatprep.subr.mxu0 0.0
    %9847 = vmatpush1.msra.mxu0 %v9811
    %9848 = vmatprep.subr.mxu0 0.0
    %9849 = vmatpush1.msra.mxu0 %v9810
    %9850 = vmatprep.subr.mxu0 0.0
    %9851 = vmatpush1.msra.mxu0 %v9809
    %9852 = vmatprep.subr.mxu0 0.0
    %9853 = vmatpush1.msra.mxu0 %v9808
    %9854 = vmatprep.subr.mxu0 0.0
    %9855 = vmatpush1.msra.mxu0 %v9807
    %9856 = vmatprep.subr.mxu0 0.0
    %9857 = vmatpush1.msra.mxu0 %v9806
    %9858 = vmatprep.subr.mxu0 0.0
    %9859 = vmatpush1.msra.mxu0 %v9805
    %9860 = vmatprep.subr.mxu0 0.0
    %9861 = vmatpush2.msra.mxu0 0.0
    %9862 = vmatprep.subr.mxu0 0.0
    %9863 = vmatpush2.msra.mxu0 0.0
    %9864 = vmatprep.subr.mxu0 0.0
    %9865 = vmatpush2.msra.mxu0 0.0
    %9866 = vmatprep.subr.mxu0 0.0
    %9867 = vmatpush2.msra.mxu0 0.0
    %9868 = vmatprep.subr.mxu0 0.0
    %9869 = vmatpush2.msra.mxu0 0.0
    %9870 = vmatprep.subr.mxu0 0.0
    %9871 = vmatpush2.msra.mxu0 0.0
    %9872 = vmatprep.subr.mxu0 0.0
    %9873 = vmatpush2.msra.mxu0 0.0
    %9874 = vmatprep.subr.mxu0 0.0
    %9875 = vmatpush2.msra.mxu0 0.0
    %9876 = vmatprep.subr.mxu0 0.0
    %9877 = vmatpush2.msra.mxu0 0.0
    %9878 = vmatprep.subr.mxu0 0.0
    %9879 = vmatpush2.msra.mxu0 0.0
    %9880 = vmatprep.subr.mxu0 0.0
    %9881 = vmatpush2.msra.mxu0 0.0
    %9882 = vmatprep.subr.mxu0 0.0
    %9883 = vmatpush2.msra.mxu0 0.0
    %9884 = vmatprep.subr.mxu0 0.0
    %9885 = vmatpush2.msra.mxu0 0.0
    %9886 = vmatprep.subr.mxu0 0.0
    %9887 = vmatpush2.msra.mxu0 0.0
    %9888 = vmatprep.subr.mxu0 0.0
    %9889 = vmatpush2.msra.mxu0 0.0
    %9890 = vmatprep.subr.mxu0 0.0
    %9891 = vmatpush2.msra.mxu0 0.0
    %9892 = vmatprep.mubr.f32.mxu0 0.0
    %9893 = vmatmul.mubr.f32.gmra.mxu0 %v8279
    %v9894 = vpop.f32.mrf.mxu0
    %v9895 = vadd.f32 %v9826, %v9894
    %v9896 = vpop.f32.mrf.mxu0
    %9897 = vdwg.mxu0
    %v9898 = vmax.f32 %v9895, 0.0
    %v9899 = vld [vmem:[%s83] sm:$0xff]
    %v9900 = vld [vmem:[%s83 + $0x8] sm:$0xff]
    %v9901 = vld [vmem:[#allocation45] sm:$0x1]
    %v9903 = vlaneseq
    %v9904 = vshrl.u32 %v9903, 7
    %v9905 = vsub.s32 0, %v9904
    %v9906 = vrot.slane %v9901, %v9905
    %v9909 = vsel %vm539, %v9898, 0
    %9911 = vmatprep.subr.mxu0 0.0
    %9912 = vmatpush1.msra.mxu0 0.0
    %9913 = vmatprep.subr.mxu0 0.0
    %9914 = vmatpush1.msra.mxu0 0.0
    %9915 = vmatprep.subr.mxu0 0.0
    %9916 = vmatpush1.msra.mxu0 0.0
    %9917 = vmatprep.subr.mxu0 0.0
    %9918 = vmatpush1.msra.mxu0 0.0
    %9919 = vmatprep.subr.mxu0 0.0
    %9920 = vmatpush1.msra.mxu0 0.0
    %9921 = vmatprep.subr.mxu0 0.0
    %9922 = vmatpush1.msra.mxu0 0.0
    %9923 = vmatprep.subr.mxu0 0.0
    %9924 = vmatpush1.msra.mxu0 0.0
    %9925 = vmatprep.subr.mxu0 0.0
    %9926 = vmatpush1.msra.mxu0 0.0
    %9927 = vmatprep.subr.mxu0 0.0
    %9928 = vmatpush1.msra.mxu0 0.0
    %9929 = vmatprep.subr.mxu0 0.0
    %9930 = vmatpush1.msra.mxu0 0.0
    %9931 = vmatprep.subr.mxu0 0.0
    %9932 = vmatpush1.msra.mxu0 0.0
    %9933 = vmatprep.subr.mxu0 0.0
    %9934 = vmatpush1.msra.mxu0 0.0
    %9935 = vmatprep.subr.mxu0 0.0
    %9936 = vmatpush1.msra.mxu0 0.0
    %9937 = vmatprep.subr.mxu0 0.0
    %9938 = vmatpush1.msra.mxu0 0.0
    %9939 = vmatprep.subr.mxu0 0.0
    %9940 = vmatpush1.msra.mxu0 %v9900
    %9941 = vmatprep.subr.mxu0 0.0
    %9942 = vmatpush1.msra.mxu0 %v9899
    %9943 = vmatprep.subr.mxu0 0.0
    %9944 = vmatpush2.msra.mxu0 0.0
    %9945 = vmatprep.subr.mxu0 0.0
    %9946 = vmatpush2.msra.mxu0 0.0
    %9947 = vmatprep.subr.mxu0 0.0
    %9948 = vmatpush2.msra.mxu0 0.0
    %9949 = vmatprep.subr.mxu0 0.0
    %9950 = vmatpush2.msra.mxu0 0.0
    %9951 = vmatprep.subr.mxu0 0.0
    %9952 = vmatpush2.msra.mxu0 0.0
    %9953 = vmatprep.subr.mxu0 0.0
    %9954 = vmatpush2.msra.mxu0 0.0
    %9955 = vmatprep.subr.mxu0 0.0
    %9956 = vmatpush2.msra.mxu0 0.0
    %9957 = vmatprep.subr.mxu0 0.0
    %9958 = vmatpush2.msra.mxu0 0.0
    %9959 = vmatprep.subr.mxu0 0.0
    %9960 = vmatpush2.msra.mxu0 0.0
    %9961 = vmatprep.subr.mxu0 0.0
    %9962 = vmatpush2.msra.mxu0 0.0
    %9963 = vmatprep.subr.mxu0 0.0
    %9964 = vmatpush2.msra.mxu0 0.0
    %9965 = vmatprep.subr.mxu0 0.0
    %9966 = vmatpush2.msra.mxu0 0.0
    %9967 = vmatprep.subr.mxu0 0.0
    %9968 = vmatpush2.msra.mxu0 0.0
    %9969 = vmatprep.subr.mxu0 0.0
    %9970 = vmatpush2.msra.mxu0 0.0
    %9971 = vmatprep.subr.mxu0 0.0
    %9972 = vmatpush2.msra.mxu0 0.0
    %9973 = vmatprep.subr.mxu0 0.0
    %9974 = vmatpush2.msra.mxu0 0.0
    %9975 = vmatprep.mubr.f32.mxu0 0.0
    %9976 = vmatmul.mubr.f32.gmra.mxu0 %v9909
    %v9977 = vpop.f32.mrf.mxu0
    %v9978 = vadd.f32 %v9906, %v9977
    %v9979 = vpop.f32.mrf.mxu0
    %9980 = vdwg.mxu0
    %vm9981 = vcmask 25600
    %v9982 = vsel %vm9981, %v9978, -inf
    %9983 = vmax.xlane.f32.xlu0 %v9982
    %v9984 = vpop.xlane.xlu0 %9983
    %v9985 = vsub.f32 %v9978, %v9984
    %v9986 = vmul.f32 %v9985, 1.442695
    %v9987 = vpow.pop %v9986
    %v9988 = vsel %vm9981, %v9987, 0.0
    %9989 = vadd.xlane.f32.xlu0 %v9988
    %v9990 = vpop.xlane.xlu0 %9989
    %v9991 = vrcp.pop %v9990
    %v9992 = vmul.f32 %v9987, %v9991
    %9993 = vst.msk [vmem:[%s89] sm:$0xff] %vm539, 0.0
    %9994 = vst.msk [vmem:[%s89 + $0x8] sm:$0xff] %vm539, 0.0
    %9995 = vst.msk [vmem:[%s89 + $0x10] sm:$0xff] %vm539, 0.0
    %9996 = vst.msk [vmem:[%s89 + $0x18] sm:$0xff] %vm539, 0.0
    %9997 = vst.msk [vmem:[%s89 + $0x20] sm:$0xff] %vm539, 0.0
    %9998 = vst.msk [vmem:[%s89 + $0x28] sm:$0xff] %vm539, 0.0
    %9999 = vst.msk [vmem:[%s89 + $0x30] sm:$0xff] %vm539, 0.0
    %10000 = vst.msk [vmem:[%s89 + $0x38] sm:$0xff] %vm539, 0.0
    %10001 = vst.msk [vmem:[%s89] sm:$0xff] %vm972, %v1026
    %10002 = vst.msk [vmem:[%s89 + $0x8] sm:$0xff] %vm972, %v1027
    %10003 = vst.msk [vmem:[%s89 + $0x10] sm:$0xff] %vm972, %v1028
    %10004 = vst.msk [vmem:[%s89 + $0x18] sm:$0xff] %vm972, %v1029
    %10005 = vst.msk [vmem:[%s89 + $0x20] sm:$0xff] %vm972, %v1030
    %10006 = vst.msk [vmem:[%s89 + $0x28] sm:$0xff] %vm972, %v1031
    %10007 = vst.msk [vmem:[%s89 + $0x30] sm:$0xff] %vm972, %v1032
    %10008 = vst.msk [vmem:[%s89 + $0x38] sm:$0xff] %vm972, %v1033
    %10010 = vrot.lane.b32.xlu0 %v9978, 2
    %v10011 = vpop.permute.xlu0 %10010
    %vm10013 = vcmask 42000
    %10014 = vst.msk [vmem:[%s89] sm:$0x3] %vm10013, %v10011
    %10016 = vrot.lane.b32.xlu0 %v9802, 6
    %v10017 = vpop.permute.xlu0 %10016
    %vm10019 = vcmask 74800
    %10020 = vst.msk [vmem:[%s89] sm:$0x3] %vm10019, %v10017
    %10022 = vrot.lane.b32.xlu0 %v9992, 10
    %v10023 = vpop.permute.xlu0 %10022
    %vm10025 = vcmask 107600
    %10026 = vst.msk [vmem:[%s89] sm:$0x3] %vm10025, %v10023
    %vm10027 = vcmask 114800
    %10028 = vst.msk [vmem:[%s89] sm:$0x1] %vm10027, %v9628
    // Predicated region
    $region282: #{our_model_forward.1} parent=1 // pred_check
      _
    $region283: #{our_model_forward.1} parent=1 // pred_check_branch
      %10030 = sbr.rel (0) target = $region285
    $region284: #{our_model_forward.1} parent=1 // pred_region
      %s10032 = ssub.s32 320, 320
      %10033 = vsyncadd [#allocation6], %s10032
      %s10035 = sshll.u32 [#allocation46], 4
      %s10036 = int_to_ptr.vmem [resolvable:$true] %s10035
      %10038 = dma.vmem_to_hbm [thread:$0]  %s10036, 320, %s87, [#allocation6]
    $region285: #{our_model_forward.1} parent=1 // pred_fallthru
      _
    // Predicated region
    $region286: #{our_model_forward.1} parent=1 // pred_check
      _
    $region287: #{our_model_forward.1} parent=1 // pred_check_branch
      %10040 = sbr.rel (0) target = $region289
    $region288: #{our_model_forward.1} parent=1 // pred_region
      _
    $region289: #{our_model_forward.1} parent=1 // pred_fallthru
      _
    // Predicated region
    $region290: #{our_model_forward.1} parent=1 // pred_check
      _
    $region291: #{our_model_forward.1} parent=1 // pred_check_branch
      %10042 = sbr.rel (0) target = $region293
    $region292: #{our_model_forward.1} parent=1 // pred_region
      %10043 = dma.done [#allocation6], 320
    $region293: #{our_model_forward.1} parent=1 // pred_fallthru
      _
    // Predicated region
    $region294: #{our_model_forward.1} parent=1 // pred_check
      _
    $region295: #{our_model_forward.1} parent=1 // pred_check_branch
      %10045 = sbr.rel (0) target = $region297
    $region296: #{our_model_forward.1} parent=1 // pred_region
      _
    $region297: #{our_model_forward.1} parent=1 // pred_fallthru
      _
    %10046 = vsyncpa [#allocation5], 1
    %10047 = vsyncpa [#allocation8], 1
    %10048 = vsyncpa [#allocation11], 1
    %10049 = vsyncpa [#allocation14], 1
    %10050 = vsyncpa [#allocation17], 1
    %10051 = vsyncpa [#allocation20], 1
    %10052 = vsyncpa [#allocation23], 1
    %10053 = vsyncpa [#allocation26], 1
    %10054 = vsyncpa [#allocation29], 1
    %10055 = vsyncpa [#allocation32], 1
    %10056 = vsyncpa [#allocation35], 1
    %10057 = vsyncpa [#allocation38], 1
    %10058 = vsyncpa [#allocation41], 1
    %10059 = vsyncpa [#allocation44], 1
    %10060 = vsyncpa [#allocation6], 1

</llo_original>
